<compile_context>
chip_gen: v7x
topology: tpu7x:2x2x1
jax: 0.10.0
libtpu: 0.0.40
codegen_flags: <defaults>
</compile_context>

<pallas_src>
import jax
import jax.numpy as jnp
from jax.experimental import pallas as pl
from jax.experimental.pallas import tpu as pltpu

_NEG = -1e30  # Python float (a jnp scalar here becomes a captured kernel constant).
              # Safe: every 3x3x3 pool window contains at least one real element.


# ----------------------------------------------------------------------------
# Kernel
# ----------------------------------------------------------------------------
def _make_kernel(Dt, H, W, Cin, c0, c1a, c1b, c2a, c2b, c3, mxu_dtype):
    M = Dt * H * W                 # rows of one output D-slab
    Mw = (Dt + 2) * H * W          # rows of the haloed window
    cpw = c0 + c1a + c2a
    sdt = mxu_dtype                # scratch dtype: cast once, before the 3x/9x tap reads

    def aff_relu(y, s_ref, b_ref):             # folded BN + ReLU (f32, VPU)
        return jnp.maximum(y * s_ref[...] + b_ref[...], 0.0)

    def sep_conv(pwin_ref, tpad_ref, wt_ref, st_ref, bt_ref,
                 ws_ref, ss_ref, bs_ref, ca, cb):
        # (3,1,1) temporal conv: 3 per-tap dots into one f32 accumulator
        # (slices the padded scratch ref per tap -- no im2col copy).
        acc = jnp.zeros((M, cb), jnp.float32)
        for k in range(3):
            xk = pwin_ref[k:k + Dt].reshape(M, ca)
            acc = acc + jnp.dot(xk, wt_ref[k], preferred_element_type=jnp.float32)
        tm = aff_relu(acc, st_ref, bt_ref).reshape(Dt, H, W, cb).astype(sdt)

        # (1,3,3) spatial conv: 1-wide zero halo in scratch, 9 per-tap dots.
        zrow = jnp.zeros((Dt, 1, W + 2, cb), sdt)
        zcol = jnp.zeros((Dt, H + 2, 1, cb), sdt)
        tpad_ref[:, 0:1, :, :] = zrow
        tpad_ref[:, H + 1:H + 2, :, :] = zrow
        tpad_ref[:, :, 0:1, :] = zcol
        tpad_ref[:, :, W + 1:W + 2, :] = zcol
        tpad_ref[:, 1:H + 1, 1:W + 1, :] = tm
        acc2 = jnp.zeros((M, cb), jnp.float32)
        for kh in range(3):
            for kw in range(3):
                xs = tpad_ref[:, kh:kh + H, kw:kw + W, :].reshape(M, cb)
                acc2 = acc2 + jnp.dot(xs, ws_ref[kh, kw],
                                      preferred_element_type=jnp.float32)
        return aff_relu(acc2, ss_ref, bs_ref).reshape(Dt, H, W, cb)

    def kernel(xa_ref, xb_ref,
               wpw_ref, spw_ref, bpw_ref,
               w1t_ref, s1t_ref, b1t_ref, w1s_ref, s1s_ref, b1s_ref,
               w2t_ref, s2t_ref, b2t_ref, w2s_ref, s2s_ref, b2s_ref,
               w3_ref, s3_ref, b3_ref,
               out_ref,
               p1_ref, p2_ref, t1_ref, t2_ref, xpad_ref):
        t = pl.program_id(1)
        nt = pl.num_programs(1)

        # (Dt+2)-frame window of x for this D tile (1-frame halo on each side).
        xw = jnp.concatenate([xa_ref[0], xb_ref[0]], axis=0)        # (Dt+2, H, W, Cin)

        # ---- Stage A: fused 1x1x1 conv [branch0 | b1 reduce | b2 reduce] --------
        y = jnp.dot(xw.reshape(Mw, Cin).astype(mxu_dtype), wpw_ref[...],
                    preferred_element_type=jnp.float32)
        y = aff_relu(y, spw_ref, bpw_ref).reshape(Dt + 2, H, W, cpw)
        out_ref[0, :, :, :, 0:c0] = y[1:Dt + 1, :, :, 0:c0].astype(out_ref.dtype)

        # branch1 / branch2 pointwise outputs (with D halo) -> scratch (MXU dtype).
        p1_ref[...] = y[:, :, :, c0:c0 + c1a].astype(sdt)
        p2_ref[...] = y[:, :, :, c0 + c1a:cpw].astype(sdt)

        # ---- Branch3 pool input window: 1-wide -inf halo in H/W ------------------
        nrow = jnp.full((Dt + 2, 1, W + 2, Cin), _NEG, sdt)
        ncol = jnp.full((Dt + 2, H + 2, 1, Cin), _NEG, sdt)
        xpad_ref[:, 0:1, :, :] = nrow
        xpad_ref[:, H + 1:H + 2, :, :] = nrow
        xpad_ref[:, :, 0:1, :] = ncol
        xpad_ref[:, :, W + 1:W + 2, :] = ncol
        xpad_ref[:, 1:H + 1, 1:W + 1, :] = xw.astype(sdt)

        # ---- Global D boundaries: conv halo frames -> 0, pool halo frames -> -inf
        @pl.when(t == 0)
        def _():
            p1_ref[0:1] = jnp.zeros((1, H, W, c1a), sdt)
            p2_ref[0:1] = jnp.zeros((1, H, W, c2a), sdt)
            xpad_ref[0:1] = jnp.full((1, H + 2, W + 2, Cin), _NEG, sdt)

        @pl.when(t == nt - 1)
        def _():
            p1_ref[Dt + 1:Dt + 2] = jnp.zeros((1, H, W, c1a), sdt)
            p2_ref[Dt + 1:Dt + 2] = jnp.zeros((1, H, W, c2a), sdt)
            xpad_ref[Dt + 1:Dt + 2] = jnp.full((1, H + 2, W + 2, Cin), _NEG, sdt)

        # ---- Branch1 / branch2 separable convs (un-fused, per-tap dots) ----------
        b1 = sep_conv(p1_ref, t1_ref, w1t_ref, s1t_ref, b1t_ref,
                      w1s_ref, s1s_ref, b1s_ref, c1a, c1b)
        out_ref[0, :, :, :, c0:c0 + c1b] = b1.astype(out_ref.dtype)
        b2 = sep_conv(p2_ref, t2_ref, w2t_ref, s2t_ref, b2t_ref,
                      w2s_ref, s2s_ref, b2s_ref, c2a, c2b)
        out_ref[0, :, :, :, c0 + c1b:c0 + c1b + c2b] = b2.astype(out_ref.dtype)

        # ---- Branch3: 3x3x3 max pool (stride 1, pad 1) + 1x1x1 conv ---------------
        yd = jnp.maximum(jnp.maximum(xpad_ref[0:Dt], xpad_ref[1:Dt + 1]),
                         xpad_ref[2:Dt + 2])
        yh = jnp.maximum(jnp.maximum(yd[:, 0:H], yd[:, 1:H + 1]), yd[:, 2:H + 2])
        yw = jnp.maximum(jnp.maximum(yh[:, :, 0:W], yh[:, :, 1:W + 1]),
                         yh[:, :, 2:W + 2])                           # (Dt, H, W, Cin)
        p3 = jnp.dot(yw.reshape(M, Cin).astype(mxu_dtype), w3_ref[...],
                     preferred_element_type=jnp.float32)
        b3 = aff_relu(p3, s3_ref, b3_ref).reshape(Dt, H, W, c3)
        out_ref[0, :, :, :, c0 + c1b + c2b:] = b3.astype(out_ref.dtype)

    return kernel


# ----------------------------------------------------------------------------
# Host-side helpers
# ----------------------------------------------------------------------------
def _prep_params(params, mxu_dtype):
    (w0, s0, b0,
     w1a, s1a, b1a, w1t, s1t, b1t, w1s, s1s, b1s,
     w2a, s2a, b2a, w2t, s2t, b2t, w2s, s2s, b2s,
     w3, s3, b3) = params
    # Keep the 1x1x1 fusion (no zero padding): x @ [w0 | w1a | w2a].
    wpw = jnp.concatenate([w0, w1a, w2a], axis=-1).astype(mxu_dtype)
    spw = jnp.concatenate([s0, s1a, s2a], axis=-1)
    bpw = jnp.concatenate([b0, b1a, b2a], axis=-1)
    return (wpw, spw, bpw,
            w1t.astype(mxu_dtype), s1t, b1t, w1s.astype(mxu_dtype), s1s, b1s,
            w2t.astype(mxu_dtype), s2t, b2t, w2s.astype(mxu_dtype), s2s, b2s,
            w3.astype(mxu_dtype), s3, b3)


def _pick_vmem_limit():
    # v5e/v6e: 128 MiB physical VMEM, v7x: 64 MiB -- leave headroom either way.
    try:
        info = pltpu.get_tpu_info()
        cap = int(getattr(info, "vmem_capacity_bytes", 0) or 0)
        if cap > 0:
            return int(min(cap - 16 * 1024 * 1024, 112 * 1024 * 1024))
    except Exception:
        pass
    return 48 * 1024 * 1024


def _pick_d_tile(D, max_frames=8):
    # Largest even divisor of D (even so the 2-frame halo block is Blocked-indexable),
    # capped to keep the per-step slab well inside VMEM at real S3D shapes.
    for d in range(min(D, max_frames), 1, -1):
        if D % d == 0 and d % 2 == 0:
            return d
    raise NotImplementedError(f"D-tiling needs an even divisor of D (D={D})")


# ----------------------------------------------------------------------------
# Public wrappers
# ----------------------------------------------------------------------------
def inception_block_ndhwc(x, params, *, d_tile=None, mxu_dtype=jnp.bfloat16):
    """x: (N, D, H, W, C) float32 channels-last.  Preferred entry point (no transposes)."""
    N, D, H, W, Cin = x.shape
    if d_tile is None:
        d_tile = _pick_d_tile(D)
    assert D % d_tile == 0 and d_tile % 2 == 0, (D, d_tile)
    T = D // d_tile

    w0, w1a, w1t_ = params[0], params[3], params[6]
    w2a, w2t_, w3_ = params[12], params[15], params[21]
    c0, c1a, c1b = w0.shape[-1], w1a.shape[-1], w1t_.shape[-1]
    c2a, c2b, c3 = w2a.shape[-1], w2t_.shape[-1], w3_.shape[-1]
    ctot = c0 + c1b + c2b + c3

    fused = _prep_params(params, mxu_dtype)
    kernel = _make_kernel(d_tile, H, W, Cin, c0, c1a, c1b, c2a, c2b, c3, mxu_dtype)

    # One zero frame of padding on each side of D; the pad frames are only ever read
    # as halo and are overridden in-kernel at the global boundaries.
    x_p = jnp.pad(x.astype(jnp.float32), ((0, 0), (1, 1), (0, 0), (0, 0), (0, 0)))

    x_spec = pl.BlockSpec((1, d_tile, H, W, Cin), lambda n, t: (n, t, 0, 0, 0))
    halo_blk = d_tile // 2   # 2-frame halo block: element offset (t+1)*d_tile
    xh_spec = pl.BlockSpec((1, 2, H, W, Cin),
                           lambda n, t: (n, (t + 1) * halo_blk, 0, 0, 0))

    def const_spec(a):
        nd = a.ndim
        return pl.BlockSpec(a.shape, lambda n, t: (0,) * nd)   # DMA'd once (constant index)

    in_specs = [x_spec, xh_spec] + [const_spec(a) for a in fused]
    out_spec = pl.BlockSpec((1, d_tile, H, W, ctot), lambda n, t: (n, t, 0, 0, 0))

    sdt = mxu_dtype
    scratch = [
        pltpu.VMEM((d_tile + 2, H, W, c1a), sdt),            # branch1 pointwise (+D halo)
        pltpu.VMEM((d_tile + 2, H, W, c2a), sdt),            # branch2 pointwise (+D halo)
        pltpu.VMEM((d_tile, H + 2, W + 2, c1b), sdt),        # branch1 temporal out (+HW halo)
        pltpu.VMEM((d_tile, H + 2, W + 2, c2b), sdt),        # branch2 temporal out (+HW halo)
        pltpu.VMEM((d_tile + 2, H + 2, W + 2, Cin), sdt),    # pool window (+D/H/W halo)
    ]

    M = N * D * H * W
    flops = 2 * M * (Cin * (c0 + c1a + c2a) + 3 * (c1a * c1b + c2a * c2b)
                     + 9 * (c1b * c1b + c2b * c2b) + Cin * c3)
    wbytes = sum(int(a.size) * a.dtype.itemsize for a in fused)
    cost = pl.CostEstimate(flops=int(flops), transcendentals=0,
                           bytes_accessed=int(4 * M * (Cin + ctot) + wbytes))

    return pl.pallas_call(
        kernel,
        out_shape=jax.ShapeDtypeStruct((N, D, H, W, ctot), jnp.float32),
        grid_spec=pltpu.PrefetchScalarGridSpec(
            num_scalar_prefetch=0,
            grid=(N, T),
            in_specs=in_specs,
            out_specs=out_spec,
            scratch_shapes=scratch),
        compiler_params=pltpu.CompilerParams(
            dimension_semantics=("parallel", "parallel"),   # >=2 parallel iters even at N=1
            vmem_limit_bytes=_pick_vmem_limit()),
        cost_estimate=cost,
    )(x_p, x_p, *fused)


def inception_block(x_ncdhw, params, *, d_tile=None, mxu_dtype=jnp.bfloat16):
    """PyTorch-layout wrapper: (N, C, D, H, W) in / out.  Prefer inception_block_ndhwc
    inside a channels-last model to avoid the two HBM transpose round trips."""
    x = jnp.transpose(x_ncdhw, (0, 2, 3, 4, 1))
    y = inception_block_ndhwc(x, params, d_tile=d_tile, mxu_dtype=mxu_dtype)
    return jnp.transpose(y, (0, 4, 1, 2, 3))


# ----------------------------------------------------------------------------
# Synthetic parameters + pure-JAX reference
# ----------------------------------------------------------------------------
def make_params(key, input_dim, c0, c1a, c1b, c2a, c2b, c3, eps=1e-5):
    """Deterministic synthetic weights; BN folded to per-channel (scale, bias)."""
    keys = iter(jax.random.split(key, 40))

    def conv_w(shape, fan_in):
        return jax.random.normal(next(keys), shape, jnp.float32) / jnp.sqrt(float(fan_in))

    def bn(c):
        gamma = jax.random.uniform(next(keys), (c,), jnp.float32, 0.5, 1.5)
        beta = jax.random.normal(next(keys), (c,), jnp.float32) * 0.1
        mean = jax.random.normal(next(keys), (c,), jnp.float32) * 0.1
        var = jax.random.uniform(next(keys), (c,), jnp.float32, 0.5, 1.5)
        scale = gamma / jnp.sqrt(var + eps)
        bias = beta - mean * scale
        return scale.reshape(1, c), bias.reshape(1, c)

    w0 = conv_w((input_dim, c0), input_dim); s0, b0 = bn(c0)
    w1a = conv_w((input_dim, c1a), input_dim); s1a, b1a = bn(c1a)
    w1t = conv_w((3, c1a, c1b), 3 * c1a);      s1t, b1t = bn(c1b)
    w1s = conv_w((3, 3, c1b, c1b), 9 * c1b);   s1s, b1s = bn(c1b)
    w2a = conv_w((input_dim, c2a), input_dim); s2a, b2a = bn(c2a)
    w2t = conv_w((3, c2a, c2b), 3 * c2a);      s2t, b2t = bn(c2b)
    w2s = conv_w((3, 3, c2b, c2b), 9 * c2b);   s2s, b2s = bn(c2b)
    w3 = conv_w((input_dim, c3), input_dim);   s3, b3 = bn(c3)

    return (w0, s0, b0,
            w1a, s1a, b1a, w1t, s1t, b1t, w1s, s1s, b1s,
            w2a, s2a, b2a, w2t, s2t, b2t, w2s, s2s, b2s,
            w3, s3, b3)


def _ref_inception(x_ncdhw, params):
    """Pure-JAX reference (lax.conv / reduce_window) for correctness checking."""
    x = jnp.transpose(x_ncdhw, (0, 2, 3, 4, 1)).astype(jnp.float32)
    (w0, s0, b0,
     w1a, s1a, b1a, w1t, s1t, b1t, w1s, s1s, b1s,
     w2a, s2a, b2a, w2t, s2t, b2t, w2s, s2s, b2s,
     w3, s3, b3) = params
    dn = ('NDHWC', 'DHWIO', 'NDHWC')

    def conv(inp, w5, pad, s, b):
        y = jax.lax.conv_general_dilated(inp, w5, (1, 1, 1), pad, dimension_numbers=dn)
        return jnp.maximum(y * s.reshape(1, 1, 1, 1, -1) + b.reshape(1, 1, 1, 1, -1), 0.0)

    def pw(inp, w, s, b):
        return conv(inp, w.reshape(1, 1, 1, *w.shape), [(0, 0)] * 3, s, b)

    def tconv(inp, w, s, b):
        return conv(inp, w.reshape(3, 1, 1, *w.shape[1:]), [(1, 1), (0, 0), (0, 0)], s, b)

    def sconv(inp, w, s, b):
        return conv(inp, w.reshape(1, 3, 3, *w.shape[2:]), [(0, 0), (1, 1), (1, 1)], s, b)

    b0o = pw(x, w0, s0, b0)
    b1o = sconv(tconv(pw(x, w1a, s1a, b1a), w1t, s1t, b1t), w1s, s1s, b1s)
    b2o = sconv(tconv(pw(x, w2a, s2a, b2a), w2t, s2t, b2t), w2s, s2s, b2s)
    p = jax.lax.reduce_window(x, -jnp.inf, jax.lax.max,
                              (1, 3, 3, 3, 1), (1, 1, 1, 1, 1),
                              [(0, 0), (1, 1), (1, 1), (1, 1), (0, 0)])
    b3o = pw(p, w3, s3, b3)
    y = jnp.concatenate([b0o, b1o, b2o, b3o], axis=-1)
    return jnp.transpose(y, (0, 4, 1, 2, 3))


if __name__ == "__main__":
    key = jax.random.PRNGKey(0)
    kx, kp = jax.random.split(key)

    # Small shapes: N=2, Cin=8, D=4, H=W=8 (NCDHW input, matching PyTorch Conv3d).
    N, Cin, D, H, W = 2, 8, 4, 8, 8
    c0, c1a, c1b, c2a, c2b, c3 = 8, 8, 16, 8, 16, 8

    x = jax.random.normal(kx, (N, Cin, D, H, W), jnp.float32)
    params = make_params(kp, Cin, c0, c1a, c1b, c2a, c2b, c3)
    ref = jax.block_until_ready(_ref_inception(x, params))

    # f32 MXU path with two D tiles -> exercises the cross-tile halo exchange.
    out = jax.block_until_ready(
        inception_block(x, params, d_tile=2, mxu_dtype=jnp.float32))
    assert out.shape == (N, c0 + c1b + c2b + c3, D, H, W), out.shape
    err = float(jnp.max(jnp.abs(out - ref)))
    if not bool(jnp.allclose(out, ref, rtol=1e-2, atol=1e-2)):
        raise AssertionError(f"f32 Pallas output mismatch vs reference, max abs err = {err}")

    # bf16 MXU path (default), single D tile -> exercises the one-tile boundary path.
    out_bf = jax.block_until_ready(inception_block(x, params))
    err_bf = float(jnp.max(jnp.abs(out_bf - ref)))
    if not bool(jnp.allclose(out_bf, ref, rtol=1e-1, atol=1e-1)):
        raise AssertionError(f"bf16 Pallas output mismatch vs reference, max abs err = {err_bf}")

    print("KERNEL_OK")
</pallas_src>

<mosaic_0001>
module attributes {stable_mosaic.version = 11 : i64} {
  func.func @kernel(%arg0: i32, %arg1: i32, %arg2: memref<1x2x8x8x8xf32, #tpu.memory_space<vmem>>, %arg3: memref<1x2x8x8x8xf32, #tpu.memory_space<vmem>>, %arg4: memref<8x24xf32, #tpu.memory_space<vmem>>, %arg5: memref<1x24xf32, #tpu.memory_space<vmem>>, %arg6: memref<1x24xf32, #tpu.memory_space<vmem>>, %arg7: memref<3x8x16xf32, #tpu.memory_space<vmem>>, %arg8: memref<1x16xf32, #tpu.memory_space<vmem>>, %arg9: memref<1x16xf32, #tpu.memory_space<vmem>>, %arg10: memref<3x3x16x16xf32, #tpu.memory_space<vmem>>, %arg11: memref<1x16xf32, #tpu.memory_space<vmem>>, %arg12: memref<1x16xf32, #tpu.memory_space<vmem>>, %arg13: memref<3x8x16xf32, #tpu.memory_space<vmem>>, %arg14: memref<1x16xf32, #tpu.memory_space<vmem>>, %arg15: memref<1x16xf32, #tpu.memory_space<vmem>>, %arg16: memref<3x3x16x16xf32, #tpu.memory_space<vmem>>, %arg17: memref<1x16xf32, #tpu.memory_space<vmem>>, %arg18: memref<1x16xf32, #tpu.memory_space<vmem>>, %arg19: memref<8x8xf32, #tpu.memory_space<vmem>>, %arg20: memref<1x8xf32, #tpu.memory_space<vmem>>, %arg21: memref<1x8xf32, #tpu.memory_space<vmem>>, %arg22: memref<1x2x8x8x48xf32, #tpu.memory_space<vmem>>, %arg23: memref<4x8x8x8xf32, #tpu.memory_space<vmem>>, %arg24: memref<4x8x8x8xf32, #tpu.memory_space<vmem>>, %arg25: memref<2x10x10x16xf32, #tpu.memory_space<vmem>>, %arg26: memref<2x10x10x16xf32, #tpu.memory_space<vmem>>, %arg27: memref<4x10x10x8xf32, #tpu.memory_space<vmem>>) attributes {dimension_semantics = [#tpu.dimension_semantics<parallel>, #tpu.dimension_semantics<parallel>], iteration_bounds = array<i64: 2, 2>, scalar_prefetch = 0 : i64, scratch_operands = 5 : i64, tpu.core_type = #tpu.core_type<tc>, window_params = [{transform_indices = @transform_0, window_bounds = array<i64: 1, 2, 8, 8, 8>}, {transform_indices = @transform_1, window_bounds = array<i64: 1, 2, 8, 8, 8>}, {pipeline_mode = #tpu.pipeline_mode<synchronous>, transform_indices = @transform_2, window_bounds = array<i64: 8, 24>}, {pipeline_mode = #tpu.pipeline_mode<synchronous>, transform_indices = @transform_3, window_bounds = array<i64: 1, 24>}, {pipeline_mode = #tpu.pipeline_mode<synchronous>, transform_indices = @transform_4, window_bounds = array<i64: 1, 24>}, {pipeline_mode = #tpu.pipeline_mode<synchronous>, transform_indices = @transform_5, window_bounds = array<i64: 3, 8, 16>}, {pipeline_mode = #tpu.pipeline_mode<synchronous>, transform_indices = @transform_6, window_bounds = array<i64: 1, 16>}, {pipeline_mode = #tpu.pipeline_mode<synchronous>, transform_indices = @transform_7, window_bounds = array<i64: 1, 16>}, {pipeline_mode = #tpu.pipeline_mode<synchronous>, transform_indices = @transform_8, window_bounds = array<i64: 3, 3, 16, 16>}, {pipeline_mode = #tpu.pipeline_mode<synchronous>, transform_indices = @transform_9, window_bounds = array<i64: 1, 16>}, {pipeline_mode = #tpu.pipeline_mode<synchronous>, transform_indices = @transform_10, window_bounds = array<i64: 1, 16>}, {pipeline_mode = #tpu.pipeline_mode<synchronous>, transform_indices = @transform_11, window_bounds = array<i64: 3, 8, 16>}, {pipeline_mode = #tpu.pipeline_mode<synchronous>, transform_indices = @transform_12, window_bounds = array<i64: 1, 16>}, {pipeline_mode = #tpu.pipeline_mode<synchronous>, transform_indices = @transform_13, window_bounds = array<i64: 1, 16>}, {pipeline_mode = #tpu.pipeline_mode<synchronous>, transform_indices = @transform_14, window_bounds = array<i64: 3, 3, 16, 16>}, {pipeline_mode = #tpu.pipeline_mode<synchronous>, transform_indices = @transform_15, window_bounds = array<i64: 1, 16>}, {pipeline_mode = #tpu.pipeline_mode<synchronous>, transform_indices = @transform_16, window_bounds = array<i64: 1, 16>}, {pipeline_mode = #tpu.pipeline_mode<synchronous>, transform_indices = @transform_17, window_bounds = array<i64: 8, 8>}, {pipeline_mode = #tpu.pipeline_mode<synchronous>, transform_indices = @transform_18, window_bounds = array<i64: 1, 8>}, {pipeline_mode = #tpu.pipeline_mode<synchronous>, transform_indices = @transform_19, window_bounds = array<i64: 1, 8>}, {transform_indices = @transform_20, window_bounds = array<i64: 1, 2, 8, 8, 48>}]} {
    %c0 = arith.constant 0 : index
    %c0_0 = arith.constant 0 : index
    %c0_1 = arith.constant 0 : index
    %c0_2 = arith.constant 0 : index
    %c0_3 = arith.constant 0 : index
    %0 = vector.load %arg2[%c0, %c0_0, %c0_1, %c0_2, %c0_3] : memref<1x2x8x8x8xf32, #tpu.memory_space<vmem>>, vector<1x2x8x8x8xf32>
    %1 = vector.shape_cast %0 : vector<1x2x8x8x8xf32> to vector<2x8x8x8xf32>
    %c0_4 = arith.constant 0 : index
    %c0_5 = arith.constant 0 : index
    %c0_6 = arith.constant 0 : index
    %c0_7 = arith.constant 0 : index
    %c0_8 = arith.constant 0 : index
    %2 = vector.load %arg3[%c0_4, %c0_5, %c0_6, %c0_7, %c0_8] : memref<1x2x8x8x8xf32, #tpu.memory_space<vmem>>, vector<1x2x8x8x8xf32>
    %3 = vector.shape_cast %2 : vector<1x2x8x8x8xf32> to vector<2x8x8x8xf32>
    %4 = tpu.concatenate %1, %3 in 0 : vector<2x8x8x8xf32>, vector<2x8x8x8xf32> -> vector<4x8x8x8xf32>
    %5 = vector.shape_cast %4 : vector<4x8x8x8xf32> to vector<256x8xf32>
    %c0_9 = arith.constant 0 : index
    %c0_10 = arith.constant 0 : index
    %6 = vector.load %arg4[%c0_9, %c0_10] : memref<8x24xf32, #tpu.memory_space<vmem>>, vector<8x24xf32>
    %cst = arith.constant dense<0.000000e+00> : vector<256x24xf32>
    %7 = tpu.matmul %5, %6, %cst {dimension_numbers = #tpu.dot_dimension_numbers<[1], [0], [0], [1], [0, 0, 1, 1], [], []>} : vector<256x8xf32>, vector<8x24xf32>, vector<256x24xf32> -> vector<256x24xf32>
    %c0_11 = arith.constant 0 : index
    %c0_12 = arith.constant 0 : index
    %8 = vector.load %arg5[%c0_11, %c0_12] : memref<1x24xf32, #tpu.memory_space<vmem>>, vector<1x24xf32>
    %9 = vector.broadcast %8 : vector<1x24xf32> to vector<256x24xf32>
    %10 = arith.mulf %7, %9 : vector<256x24xf32>
    %c0_13 = arith.constant 0 : index
    %c0_14 = arith.constant 0 : index
    %11 = vector.load %arg6[%c0_13, %c0_14] : memref<1x24xf32, #tpu.memory_space<vmem>>, vector<1x24xf32>
    %12 = vector.broadcast %11 : vector<1x24xf32> to vector<256x24xf32>
    %13 = arith.addf %10, %12 : vector<256x24xf32>
    %cst_15 = arith.constant 0.000000e+00 : f32
    %14 = vector.broadcast %cst_15 : f32 to vector<256x24xf32>
    %15 = arith.maximumf %13, %14 : vector<256x24xf32>
    %16 = vector.shape_cast %15 : vector<256x24xf32> to vector<4x8x8x24xf32>
    %17 = vector.extract_strided_slice %16 {offsets = [1, 0, 0, 0], sizes = [2, 8, 8, 8], strides = [1, 1, 1, 1]} : vector<4x8x8x24xf32> to vector<2x8x8x8xf32>
    %c0_16 = arith.constant 0 : index
    %c0_17 = arith.constant 0 : index
    %c0_18 = arith.constant 0 : index
    %c0_19 = arith.constant 0 : index
    %c0_20 = arith.constant 0 : index
    %18 = vector.load %arg22[%c0_16, %c0_17, %c0_18, %c0_19, %c0_20] : memref<1x2x8x8x48xf32, #tpu.memory_space<vmem>>, vector<1x2x8x8x8xf32>
    %19 = vector.shape_cast %18 : vector<1x2x8x8x8xf32> to vector<2x8x8x8xf32>
    %20 = vector.shape_cast %17 : vector<2x8x8x8xf32> to vector<1x2x8x8x8xf32>
    tpu.vector_store %arg22[%c0_16, %c0_17, %c0_18, %c0_19, %c0_20], %20 {strides = array<i32>} : memref<1x2x8x8x48xf32, #tpu.memory_space<vmem>>, vector<1x2x8x8x8xf32>,
    %21 = vector.extract_strided_slice %16 {offsets = [0, 0, 0, 8], sizes = [4, 8, 8, 8], strides = [1, 1, 1, 1]} : vector<4x8x8x24xf32> to vector<4x8x8x8xf32>
    %c0_21 = arith.constant 0 : index
    %c0_22 = arith.constant 0 : index
    %c0_23 = arith.constant 0 : index
    %c0_24 = arith.constant 0 : index
    %22 = vector.load %arg23[%c0_21, %c0_22, %c0_23, %c0_24] : memref<4x8x8x8xf32, #tpu.memory_space<vmem>>, vector<4x8x8x8xf32>
    tpu.vector_store %arg23[%c0_21, %c0_22, %c0_23, %c0_24], %21 {strides = array<i32>} : memref<4x8x8x8xf32, #tpu.memory_space<vmem>>, vector<4x8x8x8xf32>,
    %23 = vector.extract_strided_slice %16 {offsets = [0, 0, 0, 16], sizes = [4, 8, 8, 8], strides = [1, 1, 1, 1]} : vector<4x8x8x24xf32> to vector<4x8x8x8xf32>
    %c0_25 = arith.constant 0 : index
    %c0_26 = arith.constant 0 : index
    %c0_27 = arith.constant 0 : index
    %c0_28 = arith.constant 0 : index
    %24 = vector.load %arg24[%c0_25, %c0_26, %c0_27, %c0_28] : memref<4x8x8x8xf32, #tpu.memory_space<vmem>>, vector<4x8x8x8xf32>
    tpu.vector_store %arg24[%c0_25, %c0_26, %c0_27, %c0_28], %23 {strides = array<i32>} : memref<4x8x8x8xf32, #tpu.memory_space<vmem>>, vector<4x8x8x8xf32>,
    %cst_29 = arith.constant -1.000000e+30 : f32
    %25 = vector.broadcast %cst_29 : f32 to vector<4x1x10x8xf32>
    %cst_30 = arith.constant -1.000000e+30 : f32
    %26 = vector.broadcast %cst_30 : f32 to vector<4x10x1x8xf32>
    %c0_31 = arith.constant 0 : index
    %c0_32 = arith.constant 0 : index
    %c0_33 = arith.constant 0 : index
    %c0_34 = arith.constant 0 : index
    %27 = vector.load %arg27[%c0_31, %c0_32, %c0_33, %c0_34] : memref<4x10x10x8xf32, #tpu.memory_space<vmem>>, vector<4x1x10x8xf32>
    tpu.vector_store %arg27[%c0_31, %c0_32, %c0_33, %c0_34], %25 {strides = array<i32>} : memref<4x10x10x8xf32, #tpu.memory_space<vmem>>, vector<4x1x10x8xf32>,
    %c0_35 = arith.constant 0 : index
    %c9 = arith.constant 9 : index
    %c0_36 = arith.constant 0 : index
    %c0_37 = arith.constant 0 : index
    %28 = vector.load %arg27[%c0_35, %c9, %c0_36, %c0_37] : memref<4x10x10x8xf32, #tpu.memory_space<vmem>>, vector<4x1x10x8xf32>
    tpu.vector_store %arg27[%c0_35, %c9, %c0_36, %c0_37], %25 {strides = array<i32>} : memref<4x10x10x8xf32, #tpu.memory_space<vmem>>, vector<4x1x10x8xf32>,
    %c0_38 = arith.constant 0 : index
    %c0_39 = arith.constant 0 : index
    %c0_40 = arith.constant 0 : index
    %c0_41 = arith.constant 0 : index
    %29 = vector.load %arg27[%c0_38, %c0_39, %c0_40, %c0_41] : memref<4x10x10x8xf32, #tpu.memory_space<vmem>>, vector<4x10x1x8xf32>
    tpu.vector_store %arg27[%c0_38, %c0_39, %c0_40, %c0_41], %26 {strides = array<i32>} : memref<4x10x10x8xf32, #tpu.memory_space<vmem>>, vector<4x10x1x8xf32>,
    %c0_42 = arith.constant 0 : index
    %c0_43 = arith.constant 0 : index
    %c9_44 = arith.constant 9 : index
    %c0_45 = arith.constant 0 : index
    %30 = vector.load %arg27[%c0_42, %c0_43, %c9_44, %c0_45] : memref<4x10x10x8xf32, #tpu.memory_space<vmem>>, vector<4x10x1x8xf32>
    tpu.vector_store %arg27[%c0_42, %c0_43, %c9_44, %c0_45], %26 {strides = array<i32>} : memref<4x10x10x8xf32, #tpu.memory_space<vmem>>, vector<4x10x1x8xf32>,
    %c0_46 = arith.constant 0 : index
    %c1 = arith.constant 1 : index
    %c1_47 = arith.constant 1 : index
    %c0_48 = arith.constant 0 : index
    %31 = vector.load %arg27[%c0_46, %c1, %c1_47, %c0_48] : memref<4x10x10x8xf32, #tpu.memory_space<vmem>>, vector<4x8x8x8xf32>
    tpu.vector_store %arg27[%c0_46, %c1, %c1_47, %c0_48], %4 {strides = array<i32>} : memref<4x10x10x8xf32, #tpu.memory_space<vmem>>, vector<4x8x8x8xf32>,
    %c0_i32 = arith.constant 0 : i32
    %32 = arith.cmpi eq, %arg1, %c0_i32 : i32
    %33 = arith.extui %32 : i1 to i32
    %c0_i32_49 = arith.constant 0 : i32
    %34 = arith.cmpi ne, %33, %c0_i32_49 : i32
    scf.if %34 {
      %cst_360 = arith.constant 0.000000e+00 : f32
      %272 = vector.broadcast %cst_360 : f32 to vector<1x8x8x8xf32>
      %c0_361 = arith.constant 0 : index
      %c0_362 = arith.constant 0 : index
      %c0_363 = arith.constant 0 : index
      %c0_364 = arith.constant 0 : index
      %273 = vector.load %arg23[%c0_361, %c0_362, %c0_363, %c0_364] : memref<4x8x8x8xf32, #tpu.memory_space<vmem>>, vector<1x8x8x8xf32>
      tpu.vector_store %arg23[%c0_361, %c0_362, %c0_363, %c0_364], %272 {strides = array<i32>} : memref<4x8x8x8xf32, #tpu.memory_space<vmem>>, vector<1x8x8x8xf32>,
      %cst_365 = arith.constant 0.000000e+00 : f32
      %274 = vector.broadcast %cst_365 : f32 to vector<1x8x8x8xf32>
      %c0_366 = arith.constant 0 : index
      %c0_367 = arith.constant 0 : index
      %c0_368 = arith.constant 0 : index
      %c0_369 = arith.constant 0 : index
      %275 = vector.load %arg24[%c0_366, %c0_367, %c0_368, %c0_369] : memref<4x8x8x8xf32, #tpu.memory_space<vmem>>, vector<1x8x8x8xf32>
      tpu.vector_store %arg24[%c0_366, %c0_367, %c0_368, %c0_369], %274 {strides = array<i32>} : memref<4x8x8x8xf32, #tpu.memory_space<vmem>>, vector<1x8x8x8xf32>,
      %cst_370 = arith.constant -1.000000e+30 : f32
      %276 = vector.broadcast %cst_370 : f32 to vector<1x10x10x8xf32>
      %c0_371 = arith.constant 0 : index
      %c0_372 = arith.constant 0 : index
      %c0_373 = arith.constant 0 : index
      %c0_374 = arith.constant 0 : index
      %277 = vector.load %arg27[%c0_371, %c0_372, %c0_373, %c0_374] : memref<4x10x10x8xf32, #tpu.memory_space<vmem>>, vector<1x10x10x8xf32>
      tpu.vector_store %arg27[%c0_371, %c0_372, %c0_373, %c0_374], %276 {strides = array<i32>} : memref<4x10x10x8xf32, #tpu.memory_space<vmem>>, vector<1x10x10x8xf32>,
    } else {
    }
    %c1_i32 = arith.constant 1 : i32
    %35 = arith.cmpi eq, %arg1, %c1_i32 : i32
    %36 = arith.extui %35 : i1 to i32
    %c0_i32_50 = arith.constant 0 : i32
    %37 = arith.cmpi ne, %36, %c0_i32_50 : i32
    scf.if %37 {
      %cst_360 = arith.constant 0.000000e+00 : f32
      %272 = vector.broadcast %cst_360 : f32 to vector<1x8x8x8xf32>
      %c3 = arith.constant 3 : index
      %c0_361 = arith.constant 0 : index
      %c0_362 = arith.constant 0 : index
      %c0_363 = arith.constant 0 : index
      %273 = vector.load %arg23[%c3, %c0_361, %c0_362, %c0_363] : memref<4x8x8x8xf32, #tpu.memory_space<vmem>>, vector<1x8x8x8xf32>
      tpu.vector_store %arg23[%c3, %c0_361, %c0_362, %c0_363], %272 {strides = array<i32>} : memref<4x8x8x8xf32, #tpu.memory_space<vmem>>, vector<1x8x8x8xf32>,
      %cst_364 = arith.constant 0.000000e+00 : f32
      %274 = vector.broadcast %cst_364 : f32 to vector<1x8x8x8xf32>
      %c3_365 = arith.constant 3 : index
      %c0_366 = arith.constant 0 : index
      %c0_367 = arith.constant 0 : index
      %c0_368 = arith.constant 0 : index
      %275 = vector.load %arg24[%c3_365, %c0_366, %c0_367, %c0_368] : memref<4x8x8x8xf32, #tpu.memory_space<vmem>>, vector<1x8x8x8xf32>
      tpu.vector_store %arg24[%c3_365, %c0_366, %c0_367, %c0_368], %274 {strides = array<i32>} : memref<4x8x8x8xf32, #tpu.memory_space<vmem>>, vector<1x8x8x8xf32>,
      %cst_369 = arith.constant -1.000000e+30 : f32
      %276 = vector.broadcast %cst_369 : f32 to vector<1x10x10x8xf32>
      %c3_370 = arith.constant 3 : index
      %c0_371 = arith.constant 0 : index
      %c0_372 = arith.constant 0 : index
      %c0_373 = arith.constant 0 : index
      %277 = vector.load %arg27[%c3_370, %c0_371, %c0_372, %c0_373] : memref<4x10x10x8xf32, #tpu.memory_space<vmem>>, vector<1x10x10x8xf32>
      tpu.vector_store %arg27[%c3_370, %c0_371, %c0_372, %c0_373], %276 {strides = array<i32>} : memref<4x10x10x8xf32, #tpu.memory_space<vmem>>, vector<1x10x10x8xf32>,
    } else {
    }
    %cst_51 = arith.constant 0.000000e+00 : f32
    %38 = vector.broadcast %cst_51 : f32 to vector<128x16xf32>
    %c0_52 = arith.constant 0 : index
    %c0_53 = arith.constant 0 : index
    %c0_54 = arith.constant 0 : index
    %c0_55 = arith.constant 0 : index
    %39 = vector.load %arg23[%c0_52, %c0_53, %c0_54, %c0_55] : memref<4x8x8x8xf32, #tpu.memory_space<vmem>>, vector<2x8x8x8xf32>
    %40 = vector.shape_cast %39 : vector<2x8x8x8xf32> to vector<128x8xf32>
    %c0_56 = arith.constant 0 : index
    %c0_57 = arith.constant 0 : index
    %c0_58 = arith.constant 0 : index
    %41 = vector.load %arg7[%c0_56, %c0_57, %c0_58] : memref<3x8x16xf32, #tpu.memory_space<vmem>>, vector<1x8x16xf32>
    %42 = vector.shape_cast %41 : vector<1x8x16xf32> to vector<8x16xf32>
    %cst_59 = arith.constant dense<0.000000e+00> : vector<128x16xf32>
    %43 = tpu.matmul %40, %42, %cst_59 {dimension_numbers = #tpu.dot_dimension_numbers<[1], [0], [0], [1], [0, 0, 1, 1], [], []>} : vector<128x8xf32>, vector<8x16xf32>, vector<128x16xf32> -> vector<128x16xf32>
    %44 = arith.addf %38, %43 : vector<128x16xf32>
    %c1_60 = arith.constant 1 : index
    %c0_61 = arith.constant 0 : index
    %c0_62 = arith.constant 0 : index
    %c0_63 = arith.constant 0 : index
    %45 = vector.load %arg23[%c1_60, %c0_61, %c0_62, %c0_63] : memref<4x8x8x8xf32, #tpu.memory_space<vmem>>, vector<2x8x8x8xf32>
    %46 = vector.shape_cast %45 : vector<2x8x8x8xf32> to vector<128x8xf32>
    %c1_64 = arith.constant 1 : index
    %c0_65 = arith.constant 0 : index
    %c0_66 = arith.constant 0 : index
    %47 = vector.load %arg7[%c1_64, %c0_65, %c0_66] : memref<3x8x16xf32, #tpu.memory_space<vmem>>, vector<1x8x16xf32>
    %48 = vector.shape_cast %47 : vector<1x8x16xf32> to vector<8x16xf32>
    %cst_67 = arith.constant dense<0.000000e+00> : vector<128x16xf32>
    %49 = tpu.matmul %46, %48, %cst_67 {dimension_numbers = #tpu.dot_dimension_numbers<[1], [0], [0], [1], [0, 0, 1, 1], [], []>} : vector<128x8xf32>, vector<8x16xf32>, vector<128x16xf32> -> vector<128x16xf32>
    %50 = arith.addf %44, %49 : vector<128x16xf32>
    %c2 = arith.constant 2 : index
    %c0_68 = arith.constant 0 : index
    %c0_69 = arith.constant 0 : index
    %c0_70 = arith.constant 0 : index
    %51 = vector.load %arg23[%c2, %c0_68, %c0_69, %c0_70] : memref<4x8x8x8xf32, #tpu.memory_space<vmem>>, vector<2x8x8x8xf32>
    %52 = vector.shape_cast %51 : vector<2x8x8x8xf32> to vector<128x8xf32>
    %c2_71 = arith.constant 2 : index
    %c0_72 = arith.constant 0 : index
    %c0_73 = arith.constant 0 : index
    %53 = vector.load %arg7[%c2_71, %c0_72, %c0_73] : memref<3x8x16xf32, #tpu.memory_space<vmem>>, vector<1x8x16xf32>
    %54 = vector.shape_cast %53 : vector<1x8x16xf32> to vector<8x16xf32>
    %cst_74 = arith.constant dense<0.000000e+00> : vector<128x16xf32>
    %55 = tpu.matmul %52, %54, %cst_74 {dimension_numbers = #tpu.dot_dimension_numbers<[1], [0], [0], [1], [0, 0, 1, 1], [], []>} : vector<128x8xf32>, vector<8x16xf32>, vector<128x16xf32> -> vector<128x16xf32>
    %56 = arith.addf %50, %55 : vector<128x16xf32>
    %c0_75 = arith.constant 0 : index
    %c0_76 = arith.constant 0 : index
    %57 = vector.load %arg8[%c0_75, %c0_76] : memref<1x16xf32, #tpu.memory_space<vmem>>, vector<1x16xf32>
    %58 = vector.broadcast %57 : vector<1x16xf32> to vector<128x16xf32>
    %59 = arith.mulf %56, %58 : vector<128x16xf32>
    %c0_77 = arith.constant 0 : index
    %c0_78 = arith.constant 0 : index
    %60 = vector.load %arg9[%c0_77, %c0_78] : memref<1x16xf32, #tpu.memory_space<vmem>>, vector<1x16xf32>
    %61 = vector.broadcast %60 : vector<1x16xf32> to vector<128x16xf32>
    %62 = arith.addf %59, %61 : vector<128x16xf32>
    %cst_79 = arith.constant 0.000000e+00 : f32
    %63 = vector.broadcast %cst_79 : f32 to vector<128x16xf32>
    %64 = arith.maximumf %62, %63 : vector<128x16xf32>
    %65 = vector.shape_cast %64 : vector<128x16xf32> to vector<2x8x8x16xf32>
    %cst_80 = arith.constant 0.000000e+00 : f32
    %66 = vector.broadcast %cst_80 : f32 to vector<2x1x10x16xf32>
    %cst_81 = arith.constant 0.000000e+00 : f32
    %67 = vector.broadcast %cst_81 : f32 to vector<2x10x1x16xf32>
    %c0_82 = arith.constant 0 : index
    %c0_83 = arith.constant 0 : index
    %c0_84 = arith.constant 0 : index
    %c0_85 = arith.constant 0 : index
    %68 = vector.load %arg25[%c0_82, %c0_83, %c0_84, %c0_85] : memref<2x10x10x16xf32, #tpu.memory_space<vmem>>, vector<2x1x10x16xf32>
    tpu.vector_store %arg25[%c0_82, %c0_83, %c0_84, %c0_85], %66 {strides = array<i32>} : memref<2x10x10x16xf32, #tpu.memory_space<vmem>>, vector<2x1x10x16xf32>,
    %c0_86 = arith.constant 0 : index
    %c9_87 = arith.constant 9 : index
    %c0_88 = arith.constant 0 : index
    %c0_89 = arith.constant 0 : index
    %69 = vector.load %arg25[%c0_86, %c9_87, %c0_88, %c0_89] : memref<2x10x10x16xf32, #tpu.memory_space<vmem>>, vector<2x1x10x16xf32>
    tpu.vector_store %arg25[%c0_86, %c9_87, %c0_88, %c0_89], %66 {strides = array<i32>} : memref<2x10x10x16xf32, #tpu.memory_space<vmem>>, vector<2x1x10x16xf32>,
    %c0_90 = arith.constant 0 : index
    %c0_91 = arith.constant 0 : index
    %c0_92 = arith.constant 0 : index
    %c0_93 = arith.constant 0 : index
    %70 = vector.load %arg25[%c0_90, %c0_91, %c0_92, %c0_93] : memref<2x10x10x16xf32, #tpu.memory_space<vmem>>, vector<2x10x1x16xf32>
    tpu.vector_store %arg25[%c0_90, %c0_91, %c0_92, %c0_93], %67 {strides = array<i32>} : memref<2x10x10x16xf32, #tpu.memory_space<vmem>>, vector<2x10x1x16xf32>,
    %c0_94 = arith.constant 0 : index
    %c0_95 = arith.constant 0 : index
    %c9_96 = arith.constant 9 : index
    %c0_97 = arith.constant 0 : index
    %71 = vector.load %arg25[%c0_94, %c0_95, %c9_96, %c0_97] : memref<2x10x10x16xf32, #tpu.memory_space<vmem>>, vector<2x10x1x16xf32>
    tpu.vector_store %arg25[%c0_94, %c0_95, %c9_96, %c0_97], %67 {strides = array<i32>} : memref<2x10x10x16xf32, #tpu.memory_space<vmem>>, vector<2x10x1x16xf32>,
    %c0_98 = arith.constant 0 : index
    %c1_99 = arith.constant 1 : index
    %c1_100 = arith.constant 1 : index
    %c0_101 = arith.constant 0 : index
    %72 = vector.load %arg25[%c0_98, %c1_99, %c1_100, %c0_101] : memref<2x10x10x16xf32, #tpu.memory_space<vmem>>, vector<2x8x8x16xf32>
    tpu.vector_store %arg25[%c0_98, %c1_99, %c1_100, %c0_101], %65 {strides = array<i32>} : memref<2x10x10x16xf32, #tpu.memory_space<vmem>>, vector<2x8x8x16xf32>,
    %cst_102 = arith.constant 0.000000e+00 : f32
    %73 = vector.broadcast %cst_102 : f32 to vector<128x16xf32>
    %c0_103 = arith.constant 0 : index
    %c0_104 = arith.constant 0 : index
    %c0_105 = arith.constant 0 : index
    %c0_106 = arith.constant 0 : index
    %74 = vector.load %arg25[%c0_103, %c0_104, %c0_105, %c0_106] : memref<2x10x10x16xf32, #tpu.memory_space<vmem>>, vector<2x8x8x16xf32>
    %75 = vector.shape_cast %74 : vector<2x8x8x16xf32> to vector<128x16xf32>
    %c0_107 = arith.constant 0 : index
    %c0_108 = arith.constant 0 : index
    %c0_109 = arith.constant 0 : index
    %c0_110 = arith.constant 0 : index
    %76 = vector.load %arg10[%c0_107, %c0_108, %c0_109, %c0_110] : memref<3x3x16x16xf32, #tpu.memory_space<vmem>>, vector<1x1x16x16xf32>
    %77 = vector.shape_cast %76 : vector<1x1x16x16xf32> to vector<16x16xf32>
    %cst_111 = arith.constant dense<0.000000e+00> : vector<128x16xf32>
    %78 = tpu.matmul %75, %77, %cst_111 {dimension_numbers = #tpu.dot_dimension_numbers<[1], [0], [0], [1], [0, 0, 1, 1], [], []>} : vector<128x16xf32>, vector<16x16xf32>, vector<128x16xf32> -> vector<128x16xf32>
    %79 = arith.addf %73, %78 : vector<128x16xf32>
    %c0_112 = arith.constant 0 : index
    %c0_113 = arith.constant 0 : index
    %c1_114 = arith.constant 1 : index
    %c0_115 = arith.constant 0 : index
    %80 = vector.load %arg25[%c0_112, %c0_113, %c1_114, %c0_115] : memref<2x10x10x16xf32, #tpu.memory_space<vmem>>, vector<2x8x8x16xf32>
    %81 = vector.shape_cast %80 : vector<2x8x8x16xf32> to vector<128x16xf32>
    %c0_116 = arith.constant 0 : index
    %c1_117 = arith.constant 1 : index
    %c0_118 = arith.constant 0 : index
    %c0_119 = arith.constant 0 : index
    %82 = vector.load %arg10[%c0_116, %c1_117, %c0_118, %c0_119] : memref<3x3x16x16xf32, #tpu.memory_space<vmem>>, vector<1x1x16x16xf32>
    %83 = vector.shape_cast %82 : vector<1x1x16x16xf32> to vector<16x16xf32>
    %cst_120 = arith.constant dense<0.000000e+00> : vector<128x16xf32>
    %84 = tpu.matmul %81, %83, %cst_120 {dimension_numbers = #tpu.dot_dimension_numbers<[1], [0], [0], [1], [0, 0, 1, 1], [], []>} : vector<128x16xf32>, vector<16x16xf32>, vector<128x16xf32> -> vector<128x16xf32>
    %85 = arith.addf %79, %84 : vector<128x16xf32>
    %c0_121 = arith.constant 0 : index
    %c0_122 = arith.constant 0 : index
    %c2_123 = arith.constant 2 : index
    %c0_124 = arith.constant 0 : index
    %86 = vector.load %arg25[%c0_121, %c0_122, %c2_123, %c0_124] : memref<2x10x10x16xf32, #tpu.memory_space<vmem>>, vector<2x8x8x16xf32>
    %87 = vector.shape_cast %86 : vector<2x8x8x16xf32> to vector<128x16xf32>
    %c0_125 = arith.constant 0 : index
    %c2_126 = arith.constant 2 : index
    %c0_127 = arith.constant 0 : index
    %c0_128 = arith.constant 0 : index
    %88 = vector.load %arg10[%c0_125, %c2_126, %c0_127, %c0_128] : memref<3x3x16x16xf32, #tpu.memory_space<vmem>>, vector<1x1x16x16xf32>
    %89 = vector.shape_cast %88 : vector<1x1x16x16xf32> to vector<16x16xf32>
    %cst_129 = arith.constant dense<0.000000e+00> : vector<128x16xf32>
    %90 = tpu.matmul %87, %89, %cst_129 {dimension_numbers = #tpu.dot_dimension_numbers<[1], [0], [0], [1], [0, 0, 1, 1], [], []>} : vector<128x16xf32>, vector<16x16xf32>, vector<128x16xf32> -> vector<128x16xf32>
    %91 = arith.addf %85, %90 : vector<128x16xf32>
    %c0_130 = arith.constant 0 : index
    %c1_131 = arith.constant 1 : index
    %c0_132 = arith.constant 0 : index
    %c0_133 = arith.constant 0 : index
    %92 = vector.load %arg25[%c0_130, %c1_131, %c0_132, %c0_133] : memref<2x10x10x16xf32, #tpu.memory_space<vmem>>, vector<2x8x8x16xf32>
    %93 = vector.shape_cast %92 : vector<2x8x8x16xf32> to vector<128x16xf32>
    %c1_134 = arith.constant 1 : index
    %c0_135 = arith.constant 0 : index
    %c0_136 = arith.constant 0 : index
    %c0_137 = arith.constant 0 : index
    %94 = vector.load %arg10[%c1_134, %c0_135, %c0_136, %c0_137] : memref<3x3x16x16xf32, #tpu.memory_space<vmem>>, vector<1x1x16x16xf32>
    %95 = vector.shape_cast %94 : vector<1x1x16x16xf32> to vector<16x16xf32>
    %cst_138 = arith.constant dense<0.000000e+00> : vector<128x16xf32>
    %96 = tpu.matmul %93, %95, %cst_138 {dimension_numbers = #tpu.dot_dimension_numbers<[1], [0], [0], [1], [0, 0, 1, 1], [], []>} : vector<128x16xf32>, vector<16x16xf32>, vector<128x16xf32> -> vector<128x16xf32>
    %97 = arith.addf %91, %96 : vector<128x16xf32>
    %c0_139 = arith.constant 0 : index
    %c1_140 = arith.constant 1 : index
    %c1_141 = arith.constant 1 : index
    %c0_142 = arith.constant 0 : index
    %98 = vector.load %arg25[%c0_139, %c1_140, %c1_141, %c0_142] : memref<2x10x10x16xf32, #tpu.memory_space<vmem>>, vector<2x8x8x16xf32>
    %99 = vector.shape_cast %98 : vector<2x8x8x16xf32> to vector<128x16xf32>
    %c1_143 = arith.constant 1 : index
    %c1_144 = arith.constant 1 : index
    %c0_145 = arith.constant 0 : index
    %c0_146 = arith.constant 0 : index
    %100 = vector.load %arg10[%c1_143, %c1_144, %c0_145, %c0_146] : memref<3x3x16x16xf32, #tpu.memory_space<vmem>>, vector<1x1x16x16xf32>
    %101 = vector.shape_cast %100 : vector<1x1x16x16xf32> to vector<16x16xf32>
    %cst_147 = arith.constant dense<0.000000e+00> : vector<128x16xf32>
    %102 = tpu.matmul %99, %101, %cst_147 {dimension_numbers = #tpu.dot_dimension_numbers<[1], [0], [0], [1], [0, 0, 1, 1], [], []>} : vector<128x16xf32>, vector<16x16xf32>, vector<128x16xf32> -> vector<128x16xf32>
    %103 = arith.addf %97, %102 : vector<128x16xf32>
    %c0_148 = arith.constant 0 : index
    %c1_149 = arith.constant 1 : index
    %c2_150 = arith.constant 2 : index
    %c0_151 = arith.constant 0 : index
    %104 = vector.load %arg25[%c0_148, %c1_149, %c2_150, %c0_151] : memref<2x10x10x16xf32, #tpu.memory_space<vmem>>, vector<2x8x8x16xf32>
    %105 = vector.shape_cast %104 : vector<2x8x8x16xf32> to vector<128x16xf32>
    %c1_152 = arith.constant 1 : index
    %c2_153 = arith.constant 2 : index
    %c0_154 = arith.constant 0 : index
    %c0_155 = arith.constant 0 : index
    %106 = vector.load %arg10[%c1_152, %c2_153, %c0_154, %c0_155] : memref<3x3x16x16xf32, #tpu.memory_space<vmem>>, vector<1x1x16x16xf32>
    %107 = vector.shape_cast %106 : vector<1x1x16x16xf32> to vector<16x16xf32>
    %cst_156 = arith.constant dense<0.000000e+00> : vector<128x16xf32>
    %108 = tpu.matmul %105, %107, %cst_156 {dimension_numbers = #tpu.dot_dimension_numbers<[1], [0], [0], [1], [0, 0, 1, 1], [], []>} : vector<128x16xf32>, vector<16x16xf32>, vector<128x16xf32> -> vector<128x16xf32>
    %109 = arith.addf %103, %108 : vector<128x16xf32>
    %c0_157 = arith.constant 0 : index
    %c2_158 = arith.constant 2 : index
    %c0_159 = arith.constant 0 : index
    %c0_160 = arith.constant 0 : index
    %110 = vector.load %arg25[%c0_157, %c2_158, %c0_159, %c0_160] : memref<2x10x10x16xf32, #tpu.memory_space<vmem>>, vector<2x8x8x16xf32>
    %111 = vector.shape_cast %110 : vector<2x8x8x16xf32> to vector<128x16xf32>
    %c2_161 = arith.constant 2 : index
    %c0_162 = arith.constant 0 : index
    %c0_163 = arith.constant 0 : index
    %c0_164 = arith.constant 0 : index
    %112 = vector.load %arg10[%c2_161, %c0_162, %c0_163, %c0_164] : memref<3x3x16x16xf32, #tpu.memory_space<vmem>>, vector<1x1x16x16xf32>
    %113 = vector.shape_cast %112 : vector<1x1x16x16xf32> to vector<16x16xf32>
    %cst_165 = arith.constant dense<0.000000e+00> : vector<128x16xf32>
    %114 = tpu.matmul %111, %113, %cst_165 {dimension_numbers = #tpu.dot_dimension_numbers<[1], [0], [0], [1], [0, 0, 1, 1], [], []>} : vector<128x16xf32>, vector<16x16xf32>, vector<128x16xf32> -> vector<128x16xf32>
    %115 = arith.addf %109, %114 : vector<128x16xf32>
    %c0_166 = arith.constant 0 : index
    %c2_167 = arith.constant 2 : index
    %c1_168 = arith.constant 1 : index
    %c0_169 = arith.constant 0 : index
    %116 = vector.load %arg25[%c0_166, %c2_167, %c1_168, %c0_169] : memref<2x10x10x16xf32, #tpu.memory_space<vmem>>, vector<2x8x8x16xf32>
    %117 = vector.shape_cast %116 : vector<2x8x8x16xf32> to vector<128x16xf32>
    %c2_170 = arith.constant 2 : index
    %c1_171 = arith.constant 1 : index
    %c0_172 = arith.constant 0 : index
    %c0_173 = arith.constant 0 : index
    %118 = vector.load %arg10[%c2_170, %c1_171, %c0_172, %c0_173] : memref<3x3x16x16xf32, #tpu.memory_space<vmem>>, vector<1x1x16x16xf32>
    %119 = vector.shape_cast %118 : vector<1x1x16x16xf32> to vector<16x16xf32>
    %cst_174 = arith.constant dense<0.000000e+00> : vector<128x16xf32>
    %120 = tpu.matmul %117, %119, %cst_174 {dimension_numbers = #tpu.dot_dimension_numbers<[1], [0], [0], [1], [0, 0, 1, 1], [], []>} : vector<128x16xf32>, vector<16x16xf32>, vector<128x16xf32> -> vector<128x16xf32>
    %121 = arith.addf %115, %120 : vector<128x16xf32>
    %c0_175 = arith.constant 0 : index
    %c2_176 = arith.constant 2 : index
    %c2_177 = arith.constant 2 : index
    %c0_178 = arith.constant 0 : index
    %122 = vector.load %arg25[%c0_175, %c2_176, %c2_177, %c0_178] : memref<2x10x10x16xf32, #tpu.memory_space<vmem>>, vector<2x8x8x16xf32>
    %123 = vector.shape_cast %122 : vector<2x8x8x16xf32> to vector<128x16xf32>
    %c2_179 = arith.constant 2 : index
    %c2_180 = arith.constant 2 : index
    %c0_181 = arith.constant 0 : index
    %c0_182 = arith.constant 0 : index
    %124 = vector.load %arg10[%c2_179, %c2_180, %c0_181, %c0_182] : memref<3x3x16x16xf32, #tpu.memory_space<vmem>>, vector<1x1x16x16xf32>
    %125 = vector.shape_cast %124 : vector<1x1x16x16xf32> to vector<16x16xf32>
    %cst_183 = arith.constant dense<0.000000e+00> : vector<128x16xf32>
    %126 = tpu.matmul %123, %125, %cst_183 {dimension_numbers = #tpu.dot_dimension_numbers<[1], [0], [0], [1], [0, 0, 1, 1], [], []>} : vector<128x16xf32>, vector<16x16xf32>, vector<128x16xf32> -> vector<128x16xf32>
    %127 = arith.addf %121, %126 : vector<128x16xf32>
    %c0_184 = arith.constant 0 : index
    %c0_185 = arith.constant 0 : index
    %128 = vector.load %arg11[%c0_184, %c0_185] : memref<1x16xf32, #tpu.memory_space<vmem>>, vector<1x16xf32>
    %129 = vector.broadcast %128 : vector<1x16xf32> to vector<128x16xf32>
    %130 = arith.mulf %127, %129 : vector<128x16xf32>
    %c0_186 = arith.constant 0 : index
    %c0_187 = arith.constant 0 : index
    %131 = vector.load %arg12[%c0_186, %c0_187] : memref<1x16xf32, #tpu.memory_space<vmem>>, vector<1x16xf32>
    %132 = vector.broadcast %131 : vector<1x16xf32> to vector<128x16xf32>
    %133 = arith.addf %130, %132 : vector<128x16xf32>
    %cst_188 = arith.constant 0.000000e+00 : f32
    %134 = vector.broadcast %cst_188 : f32 to vector<128x16xf32>
    %135 = arith.maximumf %133, %134 : vector<128x16xf32>
    %136 = vector.shape_cast %135 : vector<128x16xf32> to vector<2x8x8x16xf32>
    %c0_189 = arith.constant 0 : index
    %c0_190 = arith.constant 0 : index
    %c0_191 = arith.constant 0 : index
    %c0_192 = arith.constant 0 : index
    %c8 = arith.constant 8 : index
    %137 = vector.load %arg22[%c0_189, %c0_190, %c0_191, %c0_192, %c8] : memref<1x2x8x8x48xf32, #tpu.memory_space<vmem>>, vector<1x2x8x8x16xf32>
    %138 = vector.shape_cast %137 : vector<1x2x8x8x16xf32> to vector<2x8x8x16xf32>
    %139 = vector.shape_cast %136 : vector<2x8x8x16xf32> to vector<1x2x8x8x16xf32>
    tpu.vector_store %arg22[%c0_189, %c0_190, %c0_191, %c0_192, %c8], %139 {strides = array<i32>} : memref<1x2x8x8x48xf32, #tpu.memory_space<vmem>>, vector<1x2x8x8x16xf32>,
    %cst_193 = arith.constant 0.000000e+00 : f32
    %140 = vector.broadcast %cst_193 : f32 to vector<128x16xf32>
    %c0_194 = arith.constant 0 : index
    %c0_195 = arith.constant 0 : index
    %c0_196 = arith.constant 0 : index
    %c0_197 = arith.constant 0 : index
    %141 = vector.load %arg24[%c0_194, %c0_195, %c0_196, %c0_197] : memref<4x8x8x8xf32, #tpu.memory_space<vmem>>, vector<2x8x8x8xf32>
    %142 = vector.shape_cast %141 : vector<2x8x8x8xf32> to vector<128x8xf32>
    %c0_198 = arith.constant 0 : index
    %c0_199 = arith.constant 0 : index
    %c0_200 = arith.constant 0 : index
    %143 = vector.load %arg13[%c0_198, %c0_199, %c0_200] : memref<3x8x16xf32, #tpu.memory_space<vmem>>, vector<1x8x16xf32>
    %144 = vector.shape_cast %143 : vector<1x8x16xf32> to vector<8x16xf32>
    %cst_201 = arith.constant dense<0.000000e+00> : vector<128x16xf32>
    %145 = tpu.matmul %142, %144, %cst_201 {dimension_numbers = #tpu.dot_dimension_numbers<[1], [0], [0], [1], [0, 0, 1, 1], [], []>} : vector<128x8xf32>, vector<8x16xf32>, vector<128x16xf32> -> vector<128x16xf32>
    %146 = arith.addf %140, %145 : vector<128x16xf32>
    %c1_202 = arith.constant 1 : index
    %c0_203 = arith.constant 0 : index
    %c0_204 = arith.constant 0 : index
    %c0_205 = arith.constant 0 : index
    %147 = vector.load %arg24[%c1_202, %c0_203, %c0_204, %c0_205] : memref<4x8x8x8xf32, #tpu.memory_space<vmem>>, vector<2x8x8x8xf32>
    %148 = vector.shape_cast %147 : vector<2x8x8x8xf32> to vector<128x8xf32>
    %c1_206 = arith.constant 1 : index
    %c0_207 = arith.constant 0 : index
    %c0_208 = arith.constant 0 : index
    %149 = vector.load %arg13[%c1_206, %c0_207, %c0_208] : memref<3x8x16xf32, #tpu.memory_space<vmem>>, vector<1x8x16xf32>
    %150 = vector.shape_cast %149 : vector<1x8x16xf32> to vector<8x16xf32>
    %cst_209 = arith.constant dense<0.000000e+00> : vector<128x16xf32>
    %151 = tpu.matmul %148, %150, %cst_209 {dimension_numbers = #tpu.dot_dimension_numbers<[1], [0], [0], [1], [0, 0, 1, 1], [], []>} : vector<128x8xf32>, vector<8x16xf32>, vector<128x16xf32> -> vector<128x16xf32>
    %152 = arith.addf %146, %151 : vector<128x16xf32>
    %c2_210 = arith.constant 2 : index
    %c0_211 = arith.constant 0 : index
    %c0_212 = arith.constant 0 : index
    %c0_213 = arith.constant 0 : index
    %153 = vector.load %arg24[%c2_210, %c0_211, %c0_212, %c0_213] : memref<4x8x8x8xf32, #tpu.memory_space<vmem>>, vector<2x8x8x8xf32>
    %154 = vector.shape_cast %153 : vector<2x8x8x8xf32> to vector<128x8xf32>
    %c2_214 = arith.constant 2 : index
    %c0_215 = arith.constant 0 : index
    %c0_216 = arith.constant 0 : index
    %155 = vector.load %arg13[%c2_214, %c0_215, %c0_216] : memref<3x8x16xf32, #tpu.memory_space<vmem>>, vector<1x8x16xf32>
    %156 = vector.shape_cast %155 : vector<1x8x16xf32> to vector<8x16xf32>
    %cst_217 = arith.constant dense<0.000000e+00> : vector<128x16xf32>
    %157 = tpu.matmul %154, %156, %cst_217 {dimension_numbers = #tpu.dot_dimension_numbers<[1], [0], [0], [1], [0, 0, 1, 1], [], []>} : vector<128x8xf32>, vector<8x16xf32>, vector<128x16xf32> -> vector<128x16xf32>
    %158 = arith.addf %152, %157 : vector<128x16xf32>
    %c0_218 = arith.constant 0 : index
    %c0_219 = arith.constant 0 : index
    %159 = vector.load %arg14[%c0_218, %c0_219] : memref<1x16xf32, #tpu.memory_space<vmem>>, vector<1x16xf32>
    %160 = vector.broadcast %159 : vector<1x16xf32> to vector<128x16xf32>
    %161 = arith.mulf %158, %160 : vector<128x16xf32>
    %c0_220 = arith.constant 0 : index
    %c0_221 = arith.constant 0 : index
    %162 = vector.load %arg15[%c0_220, %c0_221] : memref<1x16xf32, #tpu.memory_space<vmem>>, vector<1x16xf32>
    %163 = vector.broadcast %162 : vector<1x16xf32> to vector<128x16xf32>
    %164 = arith.addf %161, %163 : vector<128x16xf32>
    %cst_222 = arith.constant 0.000000e+00 : f32
    %165 = vector.broadcast %cst_222 : f32 to vector<128x16xf32>
    %166 = arith.maximumf %164, %165 : vector<128x16xf32>
    %167 = vector.shape_cast %166 : vector<128x16xf32> to vector<2x8x8x16xf32>
    %cst_223 = arith.constant 0.000000e+00 : f32
    %168 = vector.broadcast %cst_223 : f32 to vector<2x1x10x16xf32>
    %cst_224 = arith.constant 0.000000e+00 : f32
    %169 = vector.broadcast %cst_224 : f32 to vector<2x10x1x16xf32>
    %c0_225 = arith.constant 0 : index
    %c0_226 = arith.constant 0 : index
    %c0_227 = arith.constant 0 : index
    %c0_228 = arith.constant 0 : index
    %170 = vector.load %arg26[%c0_225, %c0_226, %c0_227, %c0_228] : memref<2x10x10x16xf32, #tpu.memory_space<vmem>>, vector<2x1x10x16xf32>
    tpu.vector_store %arg26[%c0_225, %c0_226, %c0_227, %c0_228], %168 {strides = array<i32>} : memref<2x10x10x16xf32, #tpu.memory_space<vmem>>, vector<2x1x10x16xf32>,
    %c0_229 = arith.constant 0 : index
    %c9_230 = arith.constant 9 : index
    %c0_231 = arith.constant 0 : index
    %c0_232 = arith.constant 0 : index
    %171 = vector.load %arg26[%c0_229, %c9_230, %c0_231, %c0_232] : memref<2x10x10x16xf32, #tpu.memory_space<vmem>>, vector<2x1x10x16xf32>
    tpu.vector_store %arg26[%c0_229, %c9_230, %c0_231, %c0_232], %168 {strides = array<i32>} : memref<2x10x10x16xf32, #tpu.memory_space<vmem>>, vector<2x1x10x16xf32>,
    %c0_233 = arith.constant 0 : index
    %c0_234 = arith.constant 0 : index
    %c0_235 = arith.constant 0 : index
    %c0_236 = arith.constant 0 : index
    %172 = vector.load %arg26[%c0_233, %c0_234, %c0_235, %c0_236] : memref<2x10x10x16xf32, #tpu.memory_space<vmem>>, vector<2x10x1x16xf32>
    tpu.vector_store %arg26[%c0_233, %c0_234, %c0_235, %c0_236], %169 {strides = array<i32>} : memref<2x10x10x16xf32, #tpu.memory_space<vmem>>, vector<2x10x1x16xf32>,
    %c0_237 = arith.constant 0 : index
    %c0_238 = arith.constant 0 : index
    %c9_239 = arith.constant 9 : index
    %c0_240 = arith.constant 0 : index
    %173 = vector.load %arg26[%c0_237, %c0_238, %c9_239, %c0_240] : memref<2x10x10x16xf32, #tpu.memory_space<vmem>>, vector<2x10x1x16xf32>
    tpu.vector_store %arg26[%c0_237, %c0_238, %c9_239, %c0_240], %169 {strides = array<i32>} : memref<2x10x10x16xf32, #tpu.memory_space<vmem>>, vector<2x10x1x16xf32>,
    %c0_241 = arith.constant 0 : index
    %c1_242 = arith.constant 1 : index
    %c1_243 = arith.constant 1 : index
    %c0_244 = arith.constant 0 : index
    %174 = vector.load %arg26[%c0_241, %c1_242, %c1_243, %c0_244] : memref<2x10x10x16xf32, #tpu.memory_space<vmem>>, vector<2x8x8x16xf32>
    tpu.vector_store %arg26[%c0_241, %c1_242, %c1_243, %c0_244], %167 {strides = array<i32>} : memref<2x10x10x16xf32, #tpu.memory_space<vmem>>, vector<2x8x8x16xf32>,
    %cst_245 = arith.constant 0.000000e+00 : f32
    %175 = vector.broadcast %cst_245 : f32 to vector<128x16xf32>
    %c0_246 = arith.constant 0 : index
    %c0_247 = arith.constant 0 : index
    %c0_248 = arith.constant 0 : index
    %c0_249 = arith.constant 0 : index
    %176 = vector.load %arg26[%c0_246, %c0_247, %c0_248, %c0_249] : memref<2x10x10x16xf32, #tpu.memory_space<vmem>>, vector<2x8x8x16xf32>
    %177 = vector.shape_cast %176 : vector<2x8x8x16xf32> to vector<128x16xf32>
    %c0_250 = arith.constant 0 : index
    %c0_251 = arith.constant 0 : index
    %c0_252 = arith.constant 0 : index
    %c0_253 = arith.constant 0 : index
    %178 = vector.load %arg16[%c0_250, %c0_251, %c0_252, %c0_253] : memref<3x3x16x16xf32, #tpu.memory_space<vmem>>, vector<1x1x16x16xf32>
    %179 = vector.shape_cast %178 : vector<1x1x16x16xf32> to vector<16x16xf32>
    %cst_254 = arith.constant dense<0.000000e+00> : vector<128x16xf32>
    %180 = tpu.matmul %177, %179, %cst_254 {dimension_numbers = #tpu.dot_dimension_numbers<[1], [0], [0], [1], [0, 0, 1, 1], [], []>} : vector<128x16xf32>, vector<16x16xf32>, vector<128x16xf32> -> vector<128x16xf32>
    %181 = arith.addf %175, %180 : vector<128x16xf32>
    %c0_255 = arith.constant 0 : index
    %c0_256 = arith.constant 0 : index
    %c1_257 = arith.constant 1 : index
    %c0_258 = arith.constant 0 : index
    %182 = vector.load %arg26[%c0_255, %c0_256, %c1_257, %c0_258] : memref<2x10x10x16xf32, #tpu.memory_space<vmem>>, vector<2x8x8x16xf32>
    %183 = vector.shape_cast %182 : vector<2x8x8x16xf32> to vector<128x16xf32>
    %c0_259 = arith.constant 0 : index
    %c1_260 = arith.constant 1 : index
    %c0_261 = arith.constant 0 : index
    %c0_262 = arith.constant 0 : index
    %184 = vector.load %arg16[%c0_259, %c1_260, %c0_261, %c0_262] : memref<3x3x16x16xf32, #tpu.memory_space<vmem>>, vector<1x1x16x16xf32>
    %185 = vector.shape_cast %184 : vector<1x1x16x16xf32> to vector<16x16xf32>
    %cst_263 = arith.constant dense<0.000000e+00> : vector<128x16xf32>
    %186 = tpu.matmul %183, %185, %cst_263 {dimension_numbers = #tpu.dot_dimension_numbers<[1], [0], [0], [1], [0, 0, 1, 1], [], []>} : vector<128x16xf32>, vector<16x16xf32>, vector<128x16xf32> -> vector<128x16xf32>
    %187 = arith.addf %181, %186 : vector<128x16xf32>
    %c0_264 = arith.constant 0 : index
    %c0_265 = arith.constant 0 : index
    %c2_266 = arith.constant 2 : index
    %c0_267 = arith.constant 0 : index
    %188 = vector.load %arg26[%c0_264, %c0_265, %c2_266, %c0_267] : memref<2x10x10x16xf32, #tpu.memory_space<vmem>>, vector<2x8x8x16xf32>
    %189 = vector.shape_cast %188 : vector<2x8x8x16xf32> to vector<128x16xf32>
    %c0_268 = arith.constant 0 : index
    %c2_269 = arith.constant 2 : index
    %c0_270 = arith.constant 0 : index
    %c0_271 = arith.constant 0 : index
    %190 = vector.load %arg16[%c0_268, %c2_269, %c0_270, %c0_271] : memref<3x3x16x16xf32, #tpu.memory_space<vmem>>, vector<1x1x16x16xf32>
    %191 = vector.shape_cast %190 : vector<1x1x16x16xf32> to vector<16x16xf32>
    %cst_272 = arith.constant dense<0.000000e+00> : vector<128x16xf32>
    %192 = tpu.matmul %189, %191, %cst_272 {dimension_numbers = #tpu.dot_dimension_numbers<[1], [0], [0], [1], [0, 0, 1, 1], [], []>} : vector<128x16xf32>, vector<16x16xf32>, vector<128x16xf32> -> vector<128x16xf32>
    %193 = arith.addf %187, %192 : vector<128x16xf32>
    %c0_273 = arith.constant 0 : index
    %c1_274 = arith.constant 1 : index
    %c0_275 = arith.constant 0 : index
    %c0_276 = arith.constant 0 : index
    %194 = vector.load %arg26[%c0_273, %c1_274, %c0_275, %c0_276] : memref<2x10x10x16xf32, #tpu.memory_space<vmem>>, vector<2x8x8x16xf32>
    %195 = vector.shape_cast %194 : vector<2x8x8x16xf32> to vector<128x16xf32>
    %c1_277 = arith.constant 1 : index
    %c0_278 = arith.constant 0 : index
    %c0_279 = arith.constant 0 : index
    %c0_280 = arith.constant 0 : index
    %196 = vector.load %arg16[%c1_277, %c0_278, %c0_279, %c0_280] : memref<3x3x16x16xf32, #tpu.memory_space<vmem>>, vector<1x1x16x16xf32>
    %197 = vector.shape_cast %196 : vector<1x1x16x16xf32> to vector<16x16xf32>
    %cst_281 = arith.constant dense<0.000000e+00> : vector<128x16xf32>
    %198 = tpu.matmul %195, %197, %cst_281 {dimension_numbers = #tpu.dot_dimension_numbers<[1], [0], [0], [1], [0, 0, 1, 1], [], []>} : vector<128x16xf32>, vector<16x16xf32>, vector<128x16xf32> -> vector<128x16xf32>
    %199 = arith.addf %193, %198 : vector<128x16xf32>
    %c0_282 = arith.constant 0 : index
    %c1_283 = arith.constant 1 : index
    %c1_284 = arith.constant 1 : index
    %c0_285 = arith.constant 0 : index
    %200 = vector.load %arg26[%c0_282, %c1_283, %c1_284, %c0_285] : memref<2x10x10x16xf32, #tpu.memory_space<vmem>>, vector<2x8x8x16xf32>
    %201 = vector.shape_cast %200 : vector<2x8x8x16xf32> to vector<128x16xf32>
    %c1_286 = arith.constant 1 : index
    %c1_287 = arith.constant 1 : index
    %c0_288 = arith.constant 0 : index
    %c0_289 = arith.constant 0 : index
    %202 = vector.load %arg16[%c1_286, %c1_287, %c0_288, %c0_289] : memref<3x3x16x16xf32, #tpu.memory_space<vmem>>, vector<1x1x16x16xf32>
    %203 = vector.shape_cast %202 : vector<1x1x16x16xf32> to vector<16x16xf32>
    %cst_290 = arith.constant dense<0.000000e+00> : vector<128x16xf32>
    %204 = tpu.matmul %201, %203, %cst_290 {dimension_numbers = #tpu.dot_dimension_numbers<[1], [0], [0], [1], [0, 0, 1, 1], [], []>} : vector<128x16xf32>, vector<16x16xf32>, vector<128x16xf32> -> vector<128x16xf32>
    %205 = arith.addf %199, %204 : vector<128x16xf32>
    %c0_291 = arith.constant 0 : index
    %c1_292 = arith.constant 1 : index
    %c2_293 = arith.constant 2 : index
    %c0_294 = arith.constant 0 : index
    %206 = vector.load %arg26[%c0_291, %c1_292, %c2_293, %c0_294] : memref<2x10x10x16xf32, #tpu.memory_space<vmem>>, vector<2x8x8x16xf32>
    %207 = vector.shape_cast %206 : vector<2x8x8x16xf32> to vector<128x16xf32>
    %c1_295 = arith.constant 1 : index
    %c2_296 = arith.constant 2 : index
    %c0_297 = arith.constant 0 : index
    %c0_298 = arith.constant 0 : index
    %208 = vector.load %arg16[%c1_295, %c2_296, %c0_297, %c0_298] : memref<3x3x16x16xf32, #tpu.memory_space<vmem>>, vector<1x1x16x16xf32>
    %209 = vector.shape_cast %208 : vector<1x1x16x16xf32> to vector<16x16xf32>
    %cst_299 = arith.constant dense<0.000000e+00> : vector<128x16xf32>
    %210 = tpu.matmul %207, %209, %cst_299 {dimension_numbers = #tpu.dot_dimension_numbers<[1], [0], [0], [1], [0, 0, 1, 1], [], []>} : vector<128x16xf32>, vector<16x16xf32>, vector<128x16xf32> -> vector<128x16xf32>
    %211 = arith.addf %205, %210 : vector<128x16xf32>
    %c0_300 = arith.constant 0 : index
    %c2_301 = arith.constant 2 : index
    %c0_302 = arith.constant 0 : index
    %c0_303 = arith.constant 0 : index
    %212 = vector.load %arg26[%c0_300, %c2_301, %c0_302, %c0_303] : memref<2x10x10x16xf32, #tpu.memory_space<vmem>>, vector<2x8x8x16xf32>
    %213 = vector.shape_cast %212 : vector<2x8x8x16xf32> to vector<128x16xf32>
    %c2_304 = arith.constant 2 : index
    %c0_305 = arith.constant 0 : index
    %c0_306 = arith.constant 0 : index
    %c0_307 = arith.constant 0 : index
    %214 = vector.load %arg16[%c2_304, %c0_305, %c0_306, %c0_307] : memref<3x3x16x16xf32, #tpu.memory_space<vmem>>, vector<1x1x16x16xf32>
    %215 = vector.shape_cast %214 : vector<1x1x16x16xf32> to vector<16x16xf32>
    %cst_308 = arith.constant dense<0.000000e+00> : vector<128x16xf32>
    %216 = tpu.matmul %213, %215, %cst_308 {dimension_numbers = #tpu.dot_dimension_numbers<[1], [0], [0], [1], [0, 0, 1, 1], [], []>} : vector<128x16xf32>, vector<16x16xf32>, vector<128x16xf32> -> vector<128x16xf32>
    %217 = arith.addf %211, %216 : vector<128x16xf32>
    %c0_309 = arith.constant 0 : index
    %c2_310 = arith.constant 2 : index
    %c1_311 = arith.constant 1 : index
    %c0_312 = arith.constant 0 : index
    %218 = vector.load %arg26[%c0_309, %c2_310, %c1_311, %c0_312] : memref<2x10x10x16xf32, #tpu.memory_space<vmem>>, vector<2x8x8x16xf32>
    %219 = vector.shape_cast %218 : vector<2x8x8x16xf32> to vector<128x16xf32>
    %c2_313 = arith.constant 2 : index
    %c1_314 = arith.constant 1 : index
    %c0_315 = arith.constant 0 : index
    %c0_316 = arith.constant 0 : index
    %220 = vector.load %arg16[%c2_313, %c1_314, %c0_315, %c0_316] : memref<3x3x16x16xf32, #tpu.memory_space<vmem>>, vector<1x1x16x16xf32>
    %221 = vector.shape_cast %220 : vector<1x1x16x16xf32> to vector<16x16xf32>
    %cst_317 = arith.constant dense<0.000000e+00> : vector<128x16xf32>
    %222 = tpu.matmul %219, %221, %cst_317 {dimension_numbers = #tpu.dot_dimension_numbers<[1], [0], [0], [1], [0, 0, 1, 1], [], []>} : vector<128x16xf32>, vector<16x16xf32>, vector<128x16xf32> -> vector<128x16xf32>
    %223 = arith.addf %217, %222 : vector<128x16xf32>
    %c0_318 = arith.constant 0 : index
    %c2_319 = arith.constant 2 : index
    %c2_320 = arith.constant 2 : index
    %c0_321 = arith.constant 0 : index
    %224 = vector.load %arg26[%c0_318, %c2_319, %c2_320, %c0_321] : memref<2x10x10x16xf32, #tpu.memory_space<vmem>>, vector<2x8x8x16xf32>
    %225 = vector.shape_cast %224 : vector<2x8x8x16xf32> to vector<128x16xf32>
    %c2_322 = arith.constant 2 : index
    %c2_323 = arith.constant 2 : index
    %c0_324 = arith.constant 0 : index
    %c0_325 = arith.constant 0 : index
    %226 = vector.load %arg16[%c2_322, %c2_323, %c0_324, %c0_325] : memref<3x3x16x16xf32, #tpu.memory_space<vmem>>, vector<1x1x16x16xf32>
    %227 = vector.shape_cast %226 : vector<1x1x16x16xf32> to vector<16x16xf32>
    %cst_326 = arith.constant dense<0.000000e+00> : vector<128x16xf32>
    %228 = tpu.matmul %225, %227, %cst_326 {dimension_numbers = #tpu.dot_dimension_numbers<[1], [0], [0], [1], [0, 0, 1, 1], [], []>} : vector<128x16xf32>, vector<16x16xf32>, vector<128x16xf32> -> vector<128x16xf32>
    %229 = arith.addf %223, %228 : vector<128x16xf32>
    %c0_327 = arith.constant 0 : index
    %c0_328 = arith.constant 0 : index
    %230 = vector.load %arg17[%c0_327, %c0_328] : memref<1x16xf32, #tpu.memory_space<vmem>>, vector<1x16xf32>
    %231 = vector.broadcast %230 : vector<1x16xf32> to vector<128x16xf32>
    %232 = arith.mulf %229, %231 : vector<128x16xf32>
    %c0_329 = arith.constant 0 : index
    %c0_330 = arith.constant 0 : index
    %233 = vector.load %arg18[%c0_329, %c0_330] : memref<1x16xf32, #tpu.memory_space<vmem>>, vector<1x16xf32>
    %234 = vector.broadcast %233 : vector<1x16xf32> to vector<128x16xf32>
    %235 = arith.addf %232, %234 : vector<128x16xf32>
    %cst_331 = arith.constant 0.000000e+00 : f32
    %236 = vector.broadcast %cst_331 : f32 to vector<128x16xf32>
    %237 = arith.maximumf %235, %236 : vector<128x16xf32>
    %238 = vector.shape_cast %237 : vector<128x16xf32> to vector<2x8x8x16xf32>
    %c0_332 = arith.constant 0 : index
    %c0_333 = arith.constant 0 : index
    %c0_334 = arith.constant 0 : index
    %c0_335 = arith.constant 0 : index
    %c24 = arith.constant 24 : index
    %239 = vector.load %arg22[%c0_332, %c0_333, %c0_334, %c0_335, %c24] : memref<1x2x8x8x48xf32, #tpu.memory_space<vmem>>, vector<1x2x8x8x16xf32>
    %240 = vector.shape_cast %239 : vector<1x2x8x8x16xf32> to vector<2x8x8x16xf32>
    %241 = vector.shape_cast %238 : vector<2x8x8x16xf32> to vector<1x2x8x8x16xf32>
    tpu.vector_store %arg22[%c0_332, %c0_333, %c0_334, %c0_335, %c24], %241 {strides = array<i32>} : memref<1x2x8x8x48xf32, #tpu.memory_space<vmem>>, vector<1x2x8x8x16xf32>,
    %c0_336 = arith.constant 0 : index
    %c0_337 = arith.constant 0 : index
    %c0_338 = arith.constant 0 : index
    %c0_339 = arith.constant 0 : index
    %242 = vector.load %arg27[%c0_336, %c0_337, %c0_338, %c0_339] : memref<4x10x10x8xf32, #tpu.memory_space<vmem>>, vector<2x10x10x8xf32>
    %c1_340 = arith.constant 1 : index
    %c0_341 = arith.constant 0 : index
    %c0_342 = arith.constant 0 : index
    %c0_343 = arith.constant 0 : index
    %243 = vector.load %arg27[%c1_340, %c0_341, %c0_342, %c0_343] : memref<4x10x10x8xf32, #tpu.memory_space<vmem>>, vector<2x10x10x8xf32>
    %244 = arith.maximumf %242, %243 : vector<2x10x10x8xf32>
    %c2_344 = arith.constant 2 : index
    %c0_345 = arith.constant 0 : index
    %c0_346 = arith.constant 0 : index
    %c0_347 = arith.constant 0 : index
    %245 = vector.load %arg27[%c2_344, %c0_345, %c0_346, %c0_347] : memref<4x10x10x8xf32, #tpu.memory_space<vmem>>, vector<2x10x10x8xf32>
    %246 = arith.maximumf %244, %245 : vector<2x10x10x8xf32>
    %247 = vector.extract_strided_slice %246 {offsets = [0, 0, 0, 0], sizes = [2, 8, 10, 8], strides = [1, 1, 1, 1]} : vector<2x10x10x8xf32> to vector<2x8x10x8xf32>
    %248 = vector.extract_strided_slice %246 {offsets = [0, 1, 0, 0], sizes = [2, 8, 10, 8], strides = [1, 1, 1, 1]} : vector<2x10x10x8xf32> to vector<2x8x10x8xf32>
    %249 = arith.maximumf %247, %248 : vector<2x8x10x8xf32>
    %250 = vector.extract_strided_slice %246 {offsets = [0, 2, 0, 0], sizes = [2, 8, 10, 8], strides = [1, 1, 1, 1]} : vector<2x10x10x8xf32> to vector<2x8x10x8xf32>
    %251 = arith.maximumf %249, %250 : vector<2x8x10x8xf32>
    %252 = vector.extract_strided_slice %251 {offsets = [0, 0, 0, 0], sizes = [2, 8, 8, 8], strides = [1, 1, 1, 1]} : vector<2x8x10x8xf32> to vector<2x8x8x8xf32>
    %253 = vector.extract_strided_slice %251 {offsets = [0, 0, 1, 0], sizes = [2, 8, 8, 8], strides = [1, 1, 1, 1]} : vector<2x8x10x8xf32> to vector<2x8x8x8xf32>
    %254 = arith.maximumf %252, %253 : vector<2x8x8x8xf32>
    %255 = vector.extract_strided_slice %251 {offsets = [0, 0, 2, 0], sizes = [2, 8, 8, 8], strides = [1, 1, 1, 1]} : vector<2x8x10x8xf32> to vector<2x8x8x8xf32>
    %256 = arith.maximumf %254, %255 : vector<2x8x8x8xf32>
    %257 = vector.shape_cast %256 : vector<2x8x8x8xf32> to vector<128x8xf32>
    %c0_348 = arith.constant 0 : index
    %c0_349 = arith.constant 0 : index
    %258 = vector.load %arg19[%c0_348, %c0_349] : memref<8x8xf32, #tpu.memory_space<vmem>>, vector<8x8xf32>
    %cst_350 = arith.constant dense<0.000000e+00> : vector<128x8xf32>
    %259 = tpu.matmul %257, %258, %cst_350 {dimension_numbers = #tpu.dot_dimension_numbers<[1], [0], [0], [1], [0, 0, 1, 1], [], []>} : vector<128x8xf32>, vector<8x8xf32>, vector<128x8xf32> -> vector<128x8xf32>
    %c0_351 = arith.constant 0 : index
    %c0_352 = arith.constant 0 : index
    %260 = vector.load %arg20[%c0_351, %c0_352] : memref<1x8xf32, #tpu.memory_space<vmem>>, vector<1x8xf32>
    %261 = vector.broadcast %260 : vector<1x8xf32> to vector<128x8xf32>
    %262 = arith.mulf %259, %261 : vector<128x8xf32>
    %c0_353 = arith.constant 0 : index
    %c0_354 = arith.constant 0 : index
    %263 = vector.load %arg21[%c0_353, %c0_354] : memref<1x8xf32, #tpu.memory_space<vmem>>, vector<1x8xf32>
    %264 = vector.broadcast %263 : vector<1x8xf32> to vector<128x8xf32>
    %265 = arith.addf %262, %264 : vector<128x8xf32>
    %cst_355 = arith.constant 0.000000e+00 : f32
    %266 = vector.broadcast %cst_355 : f32 to vector<128x8xf32>
    %267 = arith.maximumf %265, %266 : vector<128x8xf32>
    %268 = vector.shape_cast %267 : vector<128x8xf32> to vector<2x8x8x8xf32>
    %c0_356 = arith.constant 0 : index
    %c0_357 = arith.constant 0 : index
    %c0_358 = arith.constant 0 : index
    %c0_359 = arith.constant 0 : index
    %c40 = arith.constant 40 : index
    %269 = vector.load %arg22[%c0_356, %c0_357, %c0_358, %c0_359, %c40] : memref<1x2x8x8x48xf32, #tpu.memory_space<vmem>>, vector<1x2x8x8x8xf32>
    %270 = vector.shape_cast %269 : vector<1x2x8x8x8xf32> to vector<2x8x8x8xf32>
    %271 = vector.shape_cast %268 : vector<2x8x8x8xf32> to vector<1x2x8x8x8xf32>
    tpu.vector_store %arg22[%c0_356, %c0_357, %c0_358, %c0_359, %c40], %271 {strides = array<i32>} : memref<1x2x8x8x48xf32, #tpu.memory_space<vmem>>, vector<1x2x8x8x8xf32>,
    return
  }
  func.func @transform_0(%arg0: i32, %arg1: i32) -> (i32, i32, i32, i32, i32) {
    %c0_i32 = arith.constant 0 : i32
    %c0_i32_0 = arith.constant 0 : i32
    %c0_i32_1 = arith.constant 0 : i32
    %c0_i32_2 = arith.constant 0 : i32
    return %arg0, %arg1, %c0_i32, %c0_i32_0, %c0_i32_1 : i32, i32, i32, i32, i32
  }
  func.func @transform_1(%arg0: i32, %arg1: i32) -> (i32, i32, i32, i32, i32) {
    %c1_i32 = arith.constant 1 : i32
    %0 = arith.addi %arg1, %c1_i32 : i32
    %c1_i32_0 = arith.constant 1 : i32
    %1 = arith.muli %0, %c1_i32_0 : i32
    %c0_i32 = arith.constant 0 : i32
    %c0_i32_1 = arith.constant 0 : i32
    %c0_i32_2 = arith.constant 0 : i32
    %c0_i32_3 = arith.constant 0 : i32
    return %arg0, %1, %c0_i32, %c0_i32_1, %c0_i32_2 : i32, i32, i32, i32, i32
  }
  func.func @transform_2(%arg0: i32, %arg1: i32) -> (i32, i32) {
    %c0_i32 = arith.constant 0 : i32
    %c0_i32_0 = arith.constant 0 : i32
    %c0_i32_1 = arith.constant 0 : i32
    return %c0_i32, %c0_i32_0 : i32, i32
  }
  func.func @transform_3(%arg0: i32, %arg1: i32) -> (i32, i32) {
    %c0_i32 = arith.constant 0 : i32
    %c0_i32_0 = arith.constant 0 : i32
    %c0_i32_1 = arith.constant 0 : i32
    return %c0_i32, %c0_i32_0 : i32, i32
  }
  func.func @transform_4(%arg0: i32, %arg1: i32) -> (i32, i32) {
    %c0_i32 = arith.constant 0 : i32
    %c0_i32_0 = arith.constant 0 : i32
    %c0_i32_1 = arith.constant 0 : i32
    return %c0_i32, %c0_i32_0 : i32, i32
  }
  func.func @transform_5(%arg0: i32, %arg1: i32) -> (i32, i32, i32) {
    %c0_i32 = arith.constant 0 : i32
    %c0_i32_0 = arith.constant 0 : i32
    %c0_i32_1 = arith.constant 0 : i32
    %c0_i32_2 = arith.constant 0 : i32
    return %c0_i32, %c0_i32_0, %c0_i32_1 : i32, i32, i32
  }
  func.func @transform_6(%arg0: i32, %arg1: i32) -> (i32, i32) {
    %c0_i32 = arith.constant 0 : i32
    %c0_i32_0 = arith.constant 0 : i32
    %c0_i32_1 = arith.constant 0 : i32
    return %c0_i32, %c0_i32_0 : i32, i32
  }
  func.func @transform_7(%arg0: i32, %arg1: i32) -> (i32, i32) {
    %c0_i32 = arith.constant 0 : i32
    %c0_i32_0 = arith.constant 0 : i32
    %c0_i32_1 = arith.constant 0 : i32
    return %c0_i32, %c0_i32_0 : i32, i32
  }
  func.func @transform_8(%arg0: i32, %arg1: i32) -> (i32, i32, i32, i32) {
    %c0_i32 = arith.constant 0 : i32
    %c0_i32_0 = arith.constant 0 : i32
    %c0_i32_1 = arith.constant 0 : i32
    %c0_i32_2 = arith.constant 0 : i32
    %c0_i32_3 = arith.constant 0 : i32
    return %c0_i32, %c0_i32_0, %c0_i32_1, %c0_i32_2 : i32, i32, i32, i32
  }
  func.func @transform_9(%arg0: i32, %arg1: i32) -> (i32, i32) {
    %c0_i32 = arith.constant 0 : i32
    %c0_i32_0 = arith.constant 0 : i32
    %c0_i32_1 = arith.constant 0 : i32
    return %c0_i32, %c0_i32_0 : i32, i32
  }
  func.func @transform_10(%arg0: i32, %arg1: i32) -> (i32, i32) {
    %c0_i32 = arith.constant 0 : i32
    %c0_i32_0 = arith.constant 0 : i32
    %c0_i32_1 = arith.constant 0 : i32
    return %c0_i32, %c0_i32_0 : i32, i32
  }
  func.func @transform_11(%arg0: i32, %arg1: i32) -> (i32, i32, i32) {
    %c0_i32 = arith.constant 0 : i32
    %c0_i32_0 = arith.constant 0 : i32
    %c0_i32_1 = arith.constant 0 : i32
    %c0_i32_2 = arith.constant 0 : i32
    return %c0_i32, %c0_i32_0, %c0_i32_1 : i32, i32, i32
  }
  func.func @transform_12(%arg0: i32, %arg1: i32) -> (i32, i32) {
    %c0_i32 = arith.constant 0 : i32
    %c0_i32_0 = arith.constant 0 : i32
    %c0_i32_1 = arith.constant 0 : i32
    return %c0_i32, %c0_i32_0 : i32, i32
  }
  func.func @transform_13(%arg0: i32, %arg1: i32) -> (i32, i32) {
    %c0_i32 = arith.constant 0 : i32
    %c0_i32_0 = arith.constant 0 : i32
    %c0_i32_1 = arith.constant 0 : i32
    return %c0_i32, %c0_i32_0 : i32, i32
  }
  func.func @transform_14(%arg0: i32, %arg1: i32) -> (i32, i32, i32, i32) {
    %c0_i32 = arith.constant 0 : i32
    %c0_i32_0 = arith.constant 0 : i32
    %c0_i32_1 = arith.constant 0 : i32
    %c0_i32_2 = arith.constant 0 : i32
    %c0_i32_3 = arith.constant 0 : i32
    return %c0_i32, %c0_i32_0, %c0_i32_1, %c0_i32_2 : i32, i32, i32, i32
  }
  func.func @transform_15(%arg0: i32, %arg1: i32) -> (i32, i32) {
    %c0_i32 = arith.constant 0 : i32
    %c0_i32_0 = arith.constant 0 : i32
    %c0_i32_1 = arith.constant 0 : i32
    return %c0_i32, %c0_i32_0 : i32, i32
  }
  func.func @transform_16(%arg0: i32, %arg1: i32) -> (i32, i32) {
    %c0_i32 = arith.constant 0 : i32
    %c0_i32_0 = arith.constant 0 : i32
    %c0_i32_1 = arith.constant 0 : i32
    return %c0_i32, %c0_i32_0 : i32, i32
  }
  func.func @transform_17(%arg0: i32, %arg1: i32) -> (i32, i32) {
    %c0_i32 = arith.constant 0 : i32
    %c0_i32_0 = arith.constant 0 : i32
    %c0_i32_1 = arith.constant 0 : i32
    return %c0_i32, %c0_i32_0 : i32, i32
  }
  func.func @transform_18(%arg0: i32, %arg1: i32) -> (i32, i32) {
    %c0_i32 = arith.constant 0 : i32
    %c0_i32_0 = arith.constant 0 : i32
    %c0_i32_1 = arith.constant 0 : i32
    return %c0_i32, %c0_i32_0 : i32, i32
  }
  func.func @transform_19(%arg0: i32, %arg1: i32) -> (i32, i32) {
    %c0_i32 = arith.constant 0 : i32
    %c0_i32_0 = arith.constant 0 : i32
    %c0_i32_1 = arith.constant 0 : i32
    return %c0_i32, %c0_i32_0 : i32, i32
  }
  func.func @transform_20(%arg0: i32, %arg1: i32) -> (i32, i32, i32, i32, i32) {
    %c0_i32 = arith.constant 0 : i32
    %c0_i32_0 = arith.constant 0 : i32
    %c0_i32_1 = arith.constant 0 : i32
    %c0_i32_2 = arith.constant 0 : i32
    return %arg0, %arg1, %c0_i32, %c0_i32_0, %c0_i32_1 : i32, i32, i32, i32, i32
  }
}

</mosaic_0001>

<llo_original>
// kernel: tpu_custom_call.1
$region0: #{tpu_custom_call.1}
  #allocation0 [shape = 'u32[]', space=smem, size = 0x4, offset = 0x4, fixed_abs, tag = 'smem constant byte address 0x4 - core index']
  #allocation1 [shape = 'u32[144,128]{1,0:T(1,128)}', space=vmem, size = 0x12000, scoped, tag = 'internal scratch']
  #allocation2 [shape = 'f32[4,8,8,8]{3,2,1,0:T(8,128)}', space=vmem, size = 0x20000, scoped, tag = 'scratch operand']
  #allocation3 [shape = 'f32[4,8,8,8]{3,2,1,0:T(8,128)}', space=vmem, size = 0x20000, scoped, tag = 'scratch operand']
  #allocation4 [shape = 'f32[2,10,10,16]{3,2,1,0:T(8,128)}', space=vmem, size = 0x28000, scoped, tag = 'scratch operand']
  #allocation5 [shape = 'f32[2,10,10,16]{3,2,1,0:T(8,128)}', space=vmem, size = 0x28000, scoped, tag = 'scratch operand']
  #allocation6 [shape = 'f32[4,10,10,8]{3,2,1,0:T(8,128)}', space=vmem, size = 0x50000, scoped, tag = 'scratch operand']
  %s0 = inlined_call_operand.hbm [shape: f32[2,6,8,8,8], index: 0, kind: input, shape index: {}]
  %s1 = inlined_call_operand.hbm [shape: f32[2,6,8,8,8], index: 1, kind: input, shape index: {}]
  %s2 = inlined_call_operand.hbm [shape: f32[8,24], index: 2, kind: input, shape index: {}]
  %s3 = inlined_call_operand.vmem [shape: f32[1,24], index: 3, kind: input, shape index: {}]
  %s4 = inlined_call_operand.vmem [shape: f32[1,24], index: 4, kind: input, shape index: {}]
  %s5 = inlined_call_operand.hbm [shape: f32[3,8,16], index: 5, kind: input, shape index: {}]
  %s6 = inlined_call_operand.vmem [shape: f32[1,16], index: 6, kind: input, shape index: {}]
  %s7 = inlined_call_operand.vmem [shape: f32[1,16], index: 7, kind: input, shape index: {}]
  %s8 = inlined_call_operand.hbm [shape: f32[3,3,16,16], index: 8, kind: input, shape index: {}]
  %s9 = inlined_call_operand.vmem [shape: f32[1,16], index: 9, kind: input, shape index: {}]
  %s10 = inlined_call_operand.vmem [shape: f32[1,16], index: 10, kind: input, shape index: {}]
  %s11 = inlined_call_operand.vmem [shape: f32[3,8,16], index: 11, kind: input, shape index: {}]
  %s12 = inlined_call_operand.vmem [shape: f32[1,16], index: 12, kind: input, shape index: {}]
  %s13 = inlined_call_operand.vmem [shape: f32[1,16], index: 13, kind: input, shape index: {}]
  %s14 = inlined_call_operand.hbm [shape: f32[3,3,16,16], index: 14, kind: input, shape index: {}]
  %s15 = inlined_call_operand.vmem [shape: f32[1,16], index: 15, kind: input, shape index: {}]
  %s16 = inlined_call_operand.vmem [shape: f32[1,16], index: 16, kind: input, shape index: {}]
  %s17 = inlined_call_operand.vmem [shape: f32[8,8], index: 17, kind: input, shape index: {}]
  %s18 = inlined_call_operand.vmem [shape: f32[1,8], index: 18, kind: input, shape index: {}]
  %s19 = inlined_call_operand.vmem [shape: f32[1,8], index: 19, kind: input, shape index: {}]
  %s20 = inlined_call_operand.hbm [shape: f32[2,4,8,8,48], index: 20, kind: output, shape index: {}]
  %s21 = sld [smem:[#allocation0]]
  $region145: #{tpu_custom_call.1} parent=0
    _
  %s23 = ssub.s32 1, %s21
  %s24 = scalar_select 0, %s23, %s21
  $region1: #{tpu_custom_call.1} parent=0
    #allocation7 [shape = 'u8[131072]{0}', space=vmem, size = 0x20000, scoped, tag = 'input window, operand 0']
    #allocation8 [shape = 's32[2]{0}', space=sflag, size = 0x8, scoped, tag = 'scoped memory for tpu_custom_call.1']
    #allocation9 [shape = 's32[2]{0}', space=sflag, size = 0x8, scoped, tag = 'scoped memory for tpu_custom_call.1']
    #allocation10 [shape = 'u8[131072]{0}', space=vmem, size = 0x20000, scoped, tag = 'input window, operand 1']
    #allocation11 [shape = 's32[2]{0}', space=sflag, size = 0x8, scoped, tag = 'scoped memory for tpu_custom_call.1']
    #allocation12 [shape = 'u8[4096]{0}', space=vmem, size = 0x1000, scoped, tag = 'input window, operand 2, single buffered']
    #allocation13 [shape = 'u8[12288]{0}', space=vmem, size = 0x3000, scoped, tag = 'input window, operand 5, single buffered']
    #allocation14 [shape = 's32[1]{0}', space=sflag, size = 0x4, scoped, tag = 'scoped memory for tpu_custom_call.1']
    #allocation15 [shape = 'u8[73728]{0}', space=vmem, size = 0x12000, scoped, tag = 'input window, operand 8, single buffered']
    #allocation16 [shape = 'u8[73728]{0}', space=vmem, size = 0x12000, scoped, tag = 'input window, operand 14, single buffered']
    #allocation17 [shape = 's32[1]{0}', space=sflag, size = 0x4, scoped, tag = 'scoped memory for tpu_custom_call.1']
    #allocation18 [shape = 'u8[131072]{0}', space=vmem, size = 0x20000, scoped, tag = 'output window, operand 0']
    %25 = vsyncpa [#allocation8], 0
    %s26 = scalar_lea.sflag [#allocation8], 1
    %27 = vsyncpa %s26, 0
    %28 = vsyncpa [#allocation11], 0
    %s29 = scalar_lea.sflag [#allocation11], 1
    %30 = vsyncpa %s29, 0
    %31 = vsyncpa [#allocation14], 0
    %32 = vsyncpa [#allocation17], 0
    %33 = vsyncpa [#allocation9], 0
    %s34 = scalar_lea.sflag [#allocation9], 1
    %35 = vsyncpa %s34, 0
    loop: start=0, step=1, limit=6
    $region2: #{tpu_custom_call.1} parent=1 // loop_pre_header
      _
    $region3: #{tpu_custom_call.1} parent=1 // loop_header
      %s37 = sphi 0, %s41
      %p38 = scmp.ge.s32.totalorder %s37, 6
      %s44 = sphi 0, %s56
      %s45 = sphi 0, %s52
      %s46 = sphi 0, %s44
      %s47 = sphi 0, %s45
      %s48 = sphi 0, %s46
      %s49 = sphi 0, %s47
      %s61 = sphi 0, %s63
      %s64 = sphi 0, %s61
      %s65 = sphi 0, %s64
      %s81 = sphi 0, %s65
      %s91 = sphi 0, %s93
      %s94 = sphi 0, %s91
      %s95 = sphi 0, %s94
      %s111 = sphi 0, %s95
      %s115 = sphi 0, %s115
      %s117 = sphi 0, %s115
      %s118 = sphi 0, %s117
      %s132 = sphi 0, %s118
      %s136 = sphi 0, %s136
      %s138 = sphi 0, %s136
      %s139 = sphi 0, %s138
      %s153 = sphi 0, %s139
      %s157 = sphi 0, %s157
      %s159 = sphi 0, %s157
      %s160 = sphi 0, %s159
      %s174 = sphi 0, %s160
      %s178 = sphi 0, %s178
      %s180 = sphi 0, %s178
      %s181 = sphi 0, %s180
      %s195 = sphi 0, %s181
      %s199 = sphi 0, %s199
      %s201 = sphi 0, %s199
      %s202 = sphi 0, %s201
      %s216 = sphi 0, %s202
      %s220 = sphi 0, %s220
      %s222 = sphi 0, %s220
      %s223 = sphi 0, %s222
      %s237 = sphi 0, %s223
      %s241 = sphi 0, %s241
      %s243 = sphi 0, %s241
      %s244 = sphi 0, %s243
      %s258 = sphi 0, %s244
      %s262 = sphi 0, %s262
      %s264 = sphi 0, %s262
      %s265 = sphi 0, %s264
      %s279 = sphi 0, %s265
      %s283 = sphi 0, %s283
      %s285 = sphi 0, %s283
      %s286 = sphi 0, %s285
      %s300 = sphi 0, %s286
      %s304 = sphi 0, %s304
      %s306 = sphi 0, %s304
      %s307 = sphi 0, %s306
      %s321 = sphi 0, %s307
      %s325 = sphi 0, %s325
      %s327 = sphi 0, %s325
      %s328 = sphi 0, %s327
      %s342 = sphi 0, %s328
      %s346 = sphi 0, %s346
      %s348 = sphi 0, %s346
      %s349 = sphi 0, %s348
      %s363 = sphi 0, %s349
      %s367 = sphi 0, %s367
      %s369 = sphi 0, %s367
      %s370 = sphi 0, %s369
      %s384 = sphi 0, %s370
      %s388 = sphi 0, %s388
      %s390 = sphi 0, %s388
      %s391 = sphi 0, %s390
      %s405 = sphi 0, %s391
      %s409 = sphi 0, %s409
      %s411 = sphi 0, %s409
      %s412 = sphi 0, %s411
      %s426 = sphi 0, %s412
      %s430 = sphi 0, %s430
      %s432 = sphi 0, %s430
      %s433 = sphi 0, %s432
      %s447 = sphi 0, %s433
      %s451 = sphi 0, %s451
      %s453 = sphi 0, %s451
      %s454 = sphi 0, %s453
      %s468 = sphi 0, %s454
      %s472 = sphi 0, %s472
      %s474 = sphi 0, %s472
      %s475 = sphi 0, %s474
      %s489 = sphi 0, %s475
      %s497 = sphi 0, %s499
      %s500 = sphi 0, %s497
      %s501 = sphi 0, %s500
      %s517 = sphi 0, %s501
    $region4: #{tpu_custom_call.1} parent=1 // loop_header_branch
      %40 = sbr.rel (%p38) target = $region8
    $region5: #{tpu_custom_call.1} parent=1 // loop_body
      %s42 = ssub.s32 %s37, 1
      %s43 = ssub.s32 %s37, 2
      %s50 = sadd.s32 1, %s45
      %p51 = scmp.ge.s32.totalorder %s50, 2
      %s52 = scalar_select %p51, 0, %s50
      %s53 = sadd.s32 1, %s44
      %s54 = scalar_select %p51, %s53, %s44
      %p55 = scmp.ge.s32.totalorder %s54, 2
      %s56 = scalar_select %p55, 0, %s54
      %s57 = ssub.s32 %s44, %s56
      %s58 = ssub.s32 %s45, %s52
      %s59 = sor.u32 %s57, %s58
      %p60 = scmp.eq.s32.totalorder %s59, 0
      %s62 = sadd.s32 %s61, 1
      %s63 = scalar_select %p60, %s61, %s62
      %p66 = pneg %p60
      %p67 = scmp.eq.s32.totalorder %s37, 3
      %p68 = por %p66, %p67
      %p69 = scmp.ne.s32.totalorder %s61, %s64
      %p70 = scmp.eq.s32.totalorder %s37, 0
      %p71 = por %p69, %p70
      %p72 = scmp.ne.s32.totalorder %s61, %s64
      %p73 = scmp.eq.s32.totalorder %s42, 3
      %p74 = por %p72, %p73
      %p75 = scmp.ne.s32.totalorder %s64, %s65
      %p76 = scmp.eq.s32.totalorder %s42, 0
      %p77 = por %p75, %p76
      %p78 = scmp.ne.s32.totalorder %s64, %s65
      %p79 = scmp.eq.s32.totalorder %s43, 3
      %p80 = por %p78, %p79
      %p82 = scmp.ne.s32.totalorder %s65, %s81
      %p83 = scmp.eq.s32.totalorder %s43, 0
      %p84 = por %p82, %p83
      %s85 = sadd.s32 %s45, 1
      %s86 = sadd.s32 %s52, 1
      %s87 = ssub.s32 %s44, %s56
      %s88 = ssub.s32 %s85, %s86
      %s89 = sor.u32 %s87, %s88
      %p90 = scmp.eq.s32.totalorder %s89, 0
      %s92 = sadd.s32 %s91, 1
      %s93 = scalar_select %p90, %s91, %s92
      %p96 = pneg %p90
      %p97 = scmp.eq.s32.totalorder %s37, 3
      %p98 = por %p96, %p97
      %p99 = scmp.ne.s32.totalorder %s91, %s94
      %p100 = scmp.eq.s32.totalorder %s37, 0
      %p101 = por %p99, %p100
      %p102 = scmp.ne.s32.totalorder %s91, %s94
      %p103 = scmp.eq.s32.totalorder %s42, 3
      %p104 = por %p102, %p103
      %p105 = scmp.ne.s32.totalorder %s94, %s95
      %p106 = scmp.eq.s32.totalorder %s42, 0
      %p107 = por %p105, %p106
      %p108 = scmp.ne.s32.totalorder %s94, %s95
      %p109 = scmp.eq.s32.totalorder %s43, 3
      %p110 = por %p108, %p109
      %p112 = scmp.ne.s32.totalorder %s95, %s111
      %p113 = scmp.eq.s32.totalorder %s43, 0
      %p114 = por %p112, %p113
      %s116 = sadd.s32 %s115, 1
      %p119 = scmp.eq.s32.totalorder %s37, 3
      %p120 = scmp.ne.s32.totalorder %s115, %s117
      %p121 = scmp.eq.s32.totalorder %s37, 0
      %p122 = por %p120, %p121
      %p123 = scmp.ne.s32.totalorder %s115, %s117
      %p124 = scmp.eq.s32.totalorder %s42, 3
      %p125 = por %p123, %p124
      %p126 = scmp.ne.s32.totalorder %s117, %s118
      %p127 = scmp.eq.s32.totalorder %s42, 0
      %p128 = por %p126, %p127
      %p129 = scmp.ne.s32.totalorder %s117, %s118
      %p130 = scmp.eq.s32.totalorder %s43, 3
      %p131 = por %p129, %p130
      %p133 = scmp.ne.s32.totalorder %s118, %s132
      %p134 = scmp.eq.s32.totalorder %s43, 0
      %p135 = por %p133, %p134
      %s137 = sadd.s32 %s136, 1
      %p140 = scmp.eq.s32.totalorder %s37, 3
      %p141 = scmp.ne.s32.totalorder %s136, %s138
      %p142 = scmp.eq.s32.totalorder %s37, 0
      %p143 = por %p141, %p142
      %p144 = scmp.ne.s32.totalorder %s136, %s138
      %p145 = scmp.eq.s32.totalorder %s42, 3
      %p146 = por %p144, %p145
      %p147 = scmp.ne.s32.totalorder %s138, %s139
      %p148 = scmp.eq.s32.totalorder %s42, 0
      %p149 = por %p147, %p148
      %p150 = scmp.ne.s32.totalorder %s138, %s139
      %p151 = scmp.eq.s32.totalorder %s43, 3
      %p152 = por %p150, %p151
      %p154 = scmp.ne.s32.totalorder %s139, %s153
      %p155 = scmp.eq.s32.totalorder %s43, 0
      %p156 = por %p154, %p155
      %s158 = sadd.s32 %s157, 1
      %p161 = scmp.eq.s32.totalorder %s37, 3
      %p162 = scmp.ne.s32.totalorder %s157, %s159
      %p163 = scmp.eq.s32.totalorder %s37, 0
      %p164 = por %p162, %p163
      %p165 = scmp.ne.s32.totalorder %s157, %s159
      %p166 = scmp.eq.s32.totalorder %s42, 3
      %p167 = por %p165, %p166
      %p168 = scmp.ne.s32.totalorder %s159, %s160
      %p169 = scmp.eq.s32.totalorder %s42, 0
      %p170 = por %p168, %p169
      %p171 = scmp.ne.s32.totalorder %s159, %s160
      %p172 = scmp.eq.s32.totalorder %s43, 3
      %p173 = por %p171, %p172
      %p175 = scmp.ne.s32.totalorder %s160, %s174
      %p176 = scmp.eq.s32.totalorder %s43, 0
      %p177 = por %p175, %p176
      %s179 = sadd.s32 %s178, 1
      %p182 = scmp.eq.s32.totalorder %s37, 3
      %p183 = scmp.ne.s32.totalorder %s178, %s180
      %p184 = scmp.eq.s32.totalorder %s37, 0
      %p185 = por %p183, %p184
      %p186 = scmp.ne.s32.totalorder %s178, %s180
      %p187 = scmp.eq.s32.totalorder %s42, 3
      %p188 = por %p186, %p187
      %p189 = scmp.ne.s32.totalorder %s180, %s181
      %p190 = scmp.eq.s32.totalorder %s42, 0
      %p191 = por %p189, %p190
      %p192 = scmp.ne.s32.totalorder %s180, %s181
      %p193 = scmp.eq.s32.totalorder %s43, 3
      %p194 = por %p192, %p193
      %p196 = scmp.ne.s32.totalorder %s181, %s195
      %p197 = scmp.eq.s32.totalorder %s43, 0
      %p198 = por %p196, %p197
      %s200 = sadd.s32 %s199, 1
      %p203 = scmp.eq.s32.totalorder %s37, 3
      %p204 = scmp.ne.s32.totalorder %s199, %s201
      %p205 = scmp.eq.s32.totalorder %s37, 0
      %p206 = por %p204, %p205
      %p207 = scmp.ne.s32.totalorder %s199, %s201
      %p208 = scmp.eq.s32.totalorder %s42, 3
      %p209 = por %p207, %p208
      %p210 = scmp.ne.s32.totalorder %s201, %s202
      %p211 = scmp.eq.s32.totalorder %s42, 0
      %p212 = por %p210, %p211
      %p213 = scmp.ne.s32.totalorder %s201, %s202
      %p214 = scmp.eq.s32.totalorder %s43, 3
      %p215 = por %p213, %p214
      %p217 = scmp.ne.s32.totalorder %s202, %s216
      %p218 = scmp.eq.s32.totalorder %s43, 0
      %p219 = por %p217, %p218
      %s221 = sadd.s32 %s220, 1
      %p224 = scmp.eq.s32.totalorder %s37, 3
      %p225 = scmp.ne.s32.totalorder %s220, %s222
      %p226 = scmp.eq.s32.totalorder %s37, 0
      %p227 = por %p225, %p226
      %p228 = scmp.ne.s32.totalorder %s220, %s222
      %p229 = scmp.eq.s32.totalorder %s42, 3
      %p230 = por %p228, %p229
      %p231 = scmp.ne.s32.totalorder %s222, %s223
      %p232 = scmp.eq.s32.totalorder %s42, 0
      %p233 = por %p231, %p232
      %p234 = scmp.ne.s32.totalorder %s222, %s223
      %p235 = scmp.eq.s32.totalorder %s43, 3
      %p236 = por %p234, %p235
      %p238 = scmp.ne.s32.totalorder %s223, %s237
      %p239 = scmp.eq.s32.totalorder %s43, 0
      %p240 = por %p238, %p239
      %s242 = sadd.s32 %s241, 1
      %p245 = scmp.eq.s32.totalorder %s37, 3
      %p246 = scmp.ne.s32.totalorder %s241, %s243
      %p247 = scmp.eq.s32.totalorder %s37, 0
      %p248 = por %p246, %p247
      %p249 = scmp.ne.s32.totalorder %s241, %s243
      %p250 = scmp.eq.s32.totalorder %s42, 3
      %p251 = por %p249, %p250
      %p252 = scmp.ne.s32.totalorder %s243, %s244
      %p253 = scmp.eq.s32.totalorder %s42, 0
      %p254 = por %p252, %p253
      %p255 = scmp.ne.s32.totalorder %s243, %s244
      %p256 = scmp.eq.s32.totalorder %s43, 3
      %p257 = por %p255, %p256
      %p259 = scmp.ne.s32.totalorder %s244, %s258
      %p260 = scmp.eq.s32.totalorder %s43, 0
      %p261 = por %p259, %p260
      %s263 = sadd.s32 %s262, 1
      %p266 = scmp.eq.s32.totalorder %s37, 3
      %p267 = scmp.ne.s32.totalorder %s262, %s264
      %p268 = scmp.eq.s32.totalorder %s37, 0
      %p269 = por %p267, %p268
      %p270 = scmp.ne.s32.totalorder %s262, %s264
      %p271 = scmp.eq.s32.totalorder %s42, 3
      %p272 = por %p270, %p271
      %p273 = scmp.ne.s32.totalorder %s264, %s265
      %p274 = scmp.eq.s32.totalorder %s42, 0
      %p275 = por %p273, %p274
      %p276 = scmp.ne.s32.totalorder %s264, %s265
      %p277 = scmp.eq.s32.totalorder %s43, 3
      %p278 = por %p276, %p277
      %p280 = scmp.ne.s32.totalorder %s265, %s279
      %p281 = scmp.eq.s32.totalorder %s43, 0
      %p282 = por %p280, %p281
      %s284 = sadd.s32 %s283, 1
      %p287 = scmp.eq.s32.totalorder %s37, 3
      %p288 = scmp.ne.s32.totalorder %s283, %s285
      %p289 = scmp.eq.s32.totalorder %s37, 0
      %p290 = por %p288, %p289
      %p291 = scmp.ne.s32.totalorder %s283, %s285
      %p292 = scmp.eq.s32.totalorder %s42, 3
      %p293 = por %p291, %p292
      %p294 = scmp.ne.s32.totalorder %s285, %s286
      %p295 = scmp.eq.s32.totalorder %s42, 0
      %p296 = por %p294, %p295
      %p297 = scmp.ne.s32.totalorder %s285, %s286
      %p298 = scmp.eq.s32.totalorder %s43, 3
      %p299 = por %p297, %p298
      %p301 = scmp.ne.s32.totalorder %s286, %s300
      %p302 = scmp.eq.s32.totalorder %s43, 0
      %p303 = por %p301, %p302
      %s305 = sadd.s32 %s304, 1
      %p308 = scmp.eq.s32.totalorder %s37, 3
      %p309 = scmp.ne.s32.totalorder %s304, %s306
      %p310 = scmp.eq.s32.totalorder %s37, 0
      %p311 = por %p309, %p310
      %p312 = scmp.ne.s32.totalorder %s304, %s306
      %p313 = scmp.eq.s32.totalorder %s42, 3
      %p314 = por %p312, %p313
      %p315 = scmp.ne.s32.totalorder %s306, %s307
      %p316 = scmp.eq.s32.totalorder %s42, 0
      %p317 = por %p315, %p316
      %p318 = scmp.ne.s32.totalorder %s306, %s307
      %p319 = scmp.eq.s32.totalorder %s43, 3
      %p320 = por %p318, %p319
      %p322 = scmp.ne.s32.totalorder %s307, %s321
      %p323 = scmp.eq.s32.totalorder %s43, 0
      %p324 = por %p322, %p323
      %s326 = sadd.s32 %s325, 1
      %p329 = scmp.eq.s32.totalorder %s37, 3
      %p330 = scmp.ne.s32.totalorder %s325, %s327
      %p331 = scmp.eq.s32.totalorder %s37, 0
      %p332 = por %p330, %p331
      %p333 = scmp.ne.s32.totalorder %s325, %s327
      %p334 = scmp.eq.s32.totalorder %s42, 3
      %p335 = por %p333, %p334
      %p336 = scmp.ne.s32.totalorder %s327, %s328
      %p337 = scmp.eq.s32.totalorder %s42, 0
      %p338 = por %p336, %p337
      %p339 = scmp.ne.s32.totalorder %s327, %s328
      %p340 = scmp.eq.s32.totalorder %s43, 3
      %p341 = por %p339, %p340
      %p343 = scmp.ne.s32.totalorder %s328, %s342
      %p344 = scmp.eq.s32.totalorder %s43, 0
      %p345 = por %p343, %p344
      %s347 = sadd.s32 %s346, 1
      %p350 = scmp.eq.s32.totalorder %s37, 3
      %p351 = scmp.ne.s32.totalorder %s346, %s348
      %p352 = scmp.eq.s32.totalorder %s37, 0
      %p353 = por %p351, %p352
      %p354 = scmp.ne.s32.totalorder %s346, %s348
      %p355 = scmp.eq.s32.totalorder %s42, 3
      %p356 = por %p354, %p355
      %p357 = scmp.ne.s32.totalorder %s348, %s349
      %p358 = scmp.eq.s32.totalorder %s42, 0
      %p359 = por %p357, %p358
      %p360 = scmp.ne.s32.totalorder %s348, %s349
      %p361 = scmp.eq.s32.totalorder %s43, 3
      %p362 = por %p360, %p361
      %p364 = scmp.ne.s32.totalorder %s349, %s363
      %p365 = scmp.eq.s32.totalorder %s43, 0
      %p366 = por %p364, %p365
      %s368 = sadd.s32 %s367, 1
      %p371 = scmp.eq.s32.totalorder %s37, 3
      %p372 = scmp.ne.s32.totalorder %s367, %s369
      %p373 = scmp.eq.s32.totalorder %s37, 0
      %p374 = por %p372, %p373
      %p375 = scmp.ne.s32.totalorder %s367, %s369
      %p376 = scmp.eq.s32.totalorder %s42, 3
      %p377 = por %p375, %p376
      %p378 = scmp.ne.s32.totalorder %s369, %s370
      %p379 = scmp.eq.s32.totalorder %s42, 0
      %p380 = por %p378, %p379
      %p381 = scmp.ne.s32.totalorder %s369, %s370
      %p382 = scmp.eq.s32.totalorder %s43, 3
      %p383 = por %p381, %p382
      %p385 = scmp.ne.s32.totalorder %s370, %s384
      %p386 = scmp.eq.s32.totalorder %s43, 0
      %p387 = por %p385, %p386
      %s389 = sadd.s32 %s388, 1
      %p392 = scmp.eq.s32.totalorder %s37, 3
      %p393 = scmp.ne.s32.totalorder %s388, %s390
      %p394 = scmp.eq.s32.totalorder %s37, 0
      %p395 = por %p393, %p394
      %p396 = scmp.ne.s32.totalorder %s388, %s390
      %p397 = scmp.eq.s32.totalorder %s42, 3
      %p398 = por %p396, %p397
      %p399 = scmp.ne.s32.totalorder %s390, %s391
      %p400 = scmp.eq.s32.totalorder %s42, 0
      %p401 = por %p399, %p400
      %p402 = scmp.ne.s32.totalorder %s390, %s391
      %p403 = scmp.eq.s32.totalorder %s43, 3
      %p404 = por %p402, %p403
      %p406 = scmp.ne.s32.totalorder %s391, %s405
      %p407 = scmp.eq.s32.totalorder %s43, 0
      %p408 = por %p406, %p407
      %s410 = sadd.s32 %s409, 1
      %p413 = scmp.eq.s32.totalorder %s37, 3
      %p414 = scmp.ne.s32.totalorder %s409, %s411
      %p415 = scmp.eq.s32.totalorder %s37, 0
      %p416 = por %p414, %p415
      %p417 = scmp.ne.s32.totalorder %s409, %s411
      %p418 = scmp.eq.s32.totalorder %s42, 3
      %p419 = por %p417, %p418
      %p420 = scmp.ne.s32.totalorder %s411, %s412
      %p421 = scmp.eq.s32.totalorder %s42, 0
      %p422 = por %p420, %p421
      %p423 = scmp.ne.s32.totalorder %s411, %s412
      %p424 = scmp.eq.s32.totalorder %s43, 3
      %p425 = por %p423, %p424
      %p427 = scmp.ne.s32.totalorder %s412, %s426
      %p428 = scmp.eq.s32.totalorder %s43, 0
      %p429 = por %p427, %p428
      %s431 = sadd.s32 %s430, 1
      %p434 = scmp.eq.s32.totalorder %s37, 3
      %p435 = scmp.ne.s32.totalorder %s430, %s432
      %p436 = scmp.eq.s32.totalorder %s37, 0
      %p437 = por %p435, %p436
      %p438 = scmp.ne.s32.totalorder %s430, %s432
      %p439 = scmp.eq.s32.totalorder %s42, 3
      %p440 = por %p438, %p439
      %p441 = scmp.ne.s32.totalorder %s432, %s433
      %p442 = scmp.eq.s32.totalorder %s42, 0
      %p443 = por %p441, %p442
      %p444 = scmp.ne.s32.totalorder %s432, %s433
      %p445 = scmp.eq.s32.totalorder %s43, 3
      %p446 = por %p444, %p445
      %p448 = scmp.ne.s32.totalorder %s433, %s447
      %p449 = scmp.eq.s32.totalorder %s43, 0
      %p450 = por %p448, %p449
      %s452 = sadd.s32 %s451, 1
      %p455 = scmp.eq.s32.totalorder %s37, 3
      %p456 = scmp.ne.s32.totalorder %s451, %s453
      %p457 = scmp.eq.s32.totalorder %s37, 0
      %p458 = por %p456, %p457
      %p459 = scmp.ne.s32.totalorder %s451, %s453
      %p460 = scmp.eq.s32.totalorder %s42, 3
      %p461 = por %p459, %p460
      %p462 = scmp.ne.s32.totalorder %s453, %s454
      %p463 = scmp.eq.s32.totalorder %s42, 0
      %p464 = por %p462, %p463
      %p465 = scmp.ne.s32.totalorder %s453, %s454
      %p466 = scmp.eq.s32.totalorder %s43, 3
      %p467 = por %p465, %p466
      %p469 = scmp.ne.s32.totalorder %s454, %s468
      %p470 = scmp.eq.s32.totalorder %s43, 0
      %p471 = por %p469, %p470
      %s473 = sadd.s32 %s472, 1
      %p476 = scmp.eq.s32.totalorder %s37, 3
      %p477 = scmp.ne.s32.totalorder %s472, %s474
      %p478 = scmp.eq.s32.totalorder %s37, 0
      %p479 = por %p477, %p478
      %p480 = scmp.ne.s32.totalorder %s472, %s474
      %p481 = scmp.eq.s32.totalorder %s42, 3
      %p482 = por %p480, %p481
      %p483 = scmp.ne.s32.totalorder %s474, %s475
      %p484 = scmp.eq.s32.totalorder %s42, 0
      %p485 = por %p483, %p484
      %p486 = scmp.ne.s32.totalorder %s474, %s475
      %p487 = scmp.eq.s32.totalorder %s43, 3
      %p488 = por %p486, %p487
      %p490 = scmp.ne.s32.totalorder %s475, %s489
      %p491 = scmp.eq.s32.totalorder %s43, 0
      %p492 = por %p490, %p491
      %s493 = ssub.s32 %s44, %s56
      %s494 = ssub.s32 %s45, %s52
      %s495 = sor.u32 %s493, %s494
      %p496 = scmp.eq.s32.totalorder %s495, 0
      %s498 = sadd.s32 %s497, 1
      %s499 = scalar_select %p496, %s497, %s498
      %p502 = pneg %p496
      %p503 = scmp.eq.s32.totalorder %s37, 3
      %p504 = por %p502, %p503
      %p505 = scmp.ne.s32.totalorder %s497, %s500
      %p506 = scmp.eq.s32.totalorder %s37, 0
      %p507 = por %p505, %p506
      %p508 = scmp.ne.s32.totalorder %s497, %s500
      %p509 = scmp.eq.s32.totalorder %s42, 3
      %p510 = por %p508, %p509
      %p511 = scmp.ne.s32.totalorder %s500, %s501
      %p512 = scmp.eq.s32.totalorder %s42, 0
      %p513 = por %p511, %p512
      %p514 = scmp.ne.s32.totalorder %s500, %s501
      %p515 = scmp.eq.s32.totalorder %s43, 3
      %p516 = por %p514, %p515
      %p518 = scmp.ne.s32.totalorder %s501, %s517
      %p519 = scmp.eq.s32.totalorder %s43, 0
      %p520 = por %p518, %p519
      %p521 = scmp.le.s32.totalorder 1, %s37
      %p522 = scmp.lt.s32.totalorder %s37, 5
      %p523 = pnand %p521, %p522
      %p524 = pneg %p523
      // Predicated region
      $region9: #{tpu_custom_call.1} parent=5 // pred_check
        _
      $region10: #{tpu_custom_call.1} parent=5 // pred_check_branch
        %526 = sbr.rel (%p523) target = $region12
      $region11: #{tpu_custom_call.1} parent=5 // pred_region
        %s527 = ssub.s32 %s37, 1
        // Predicated region
        $region13: #{tpu_custom_call.1} parent=11 // pred_check
          %p528 = pneg %p128
        $region14: #{tpu_custom_call.1} parent=11 // pred_check_branch
          %530 = sbr.rel (%p528) target = $region16
        $region15: #{tpu_custom_call.1} parent=11 // pred_region
          %s532 = ssub.s32 128, 128
          %533 = vsyncadd [#allocation11], %s532
          %s535 = sshll.u32 [#allocation12], 4
          %s536 = int_to_ptr.vmem [resolvable:$true] %s535
          %538 = dma.hbm_to_vmem [thread:$0]  %s2, 128, %s536, [#allocation11]
        $region16: #{tpu_custom_call.1} parent=11 // pred_fallthru
          _
        // Predicated region
        $region17: #{tpu_custom_call.1} parent=11 // pred_check
          %p539 = pneg %p149
        $region18: #{tpu_custom_call.1} parent=11 // pred_check_branch
          %541 = sbr.rel (%p539) target = $region20
        $region19: #{tpu_custom_call.1} parent=11 // pred_region
          _
        $region20: #{tpu_custom_call.1} parent=11 // pred_fallthru
          _
        // Predicated region
        $region21: #{tpu_custom_call.1} parent=11 // pred_check
          %p542 = pneg %p170
        $region22: #{tpu_custom_call.1} parent=11 // pred_check_branch
          %544 = sbr.rel (%p542) target = $region24
        $region23: #{tpu_custom_call.1} parent=11 // pred_region
          _
        $region24: #{tpu_custom_call.1} parent=11 // pred_fallthru
          _
        // Predicated region
        $region25: #{tpu_custom_call.1} parent=11 // pred_check
          %p545 = pneg %p191
        $region26: #{tpu_custom_call.1} parent=11 // pred_check_branch
          %547 = sbr.rel (%p545) target = $region28
        $region27: #{tpu_custom_call.1} parent=11 // pred_region
          %s549 = ssub.s32 384, 384
          %550 = vsyncadd [#allocation14], %s549
          %s551 = sshll.u32 [#allocation13], 4
          %s552 = int_to_ptr.vmem [resolvable:$true] %s551
          %557 = dma.hbm_to_vmem [thread:$0]  %s5, 384, %s552, [#allocation14], 128, 128, 8
        $region28: #{tpu_custom_call.1} parent=11 // pred_fallthru
          _
        // Predicated region
        $region29: #{tpu_custom_call.1} parent=11 // pred_check
          %p558 = pneg %p212
        $region30: #{tpu_custom_call.1} parent=11 // pred_check_branch
          %560 = sbr.rel (%p558) target = $region32
        $region31: #{tpu_custom_call.1} parent=11 // pred_region
          _
        $region32: #{tpu_custom_call.1} parent=11 // pred_fallthru
          _
        // Predicated region
        $region33: #{tpu_custom_call.1} parent=11 // pred_check
          %p561 = pneg %p233
        $region34: #{tpu_custom_call.1} parent=11 // pred_check_branch
          %563 = sbr.rel (%p561) target = $region36
        $region35: #{tpu_custom_call.1} parent=11 // pred_region
          _
        $region36: #{tpu_custom_call.1} parent=11 // pred_fallthru
          _
        // Predicated region
        $region37: #{tpu_custom_call.1} parent=11 // pred_check
          %p564 = pneg %p254
        $region38: #{tpu_custom_call.1} parent=11 // pred_check_branch
          %566 = sbr.rel (%p564) target = $region40
        $region39: #{tpu_custom_call.1} parent=11 // pred_region
          %s568 = ssub.s32 2304, 2304
          %569 = vsyncadd [#allocation14], %s568
          %s570 = sshll.u32 [#allocation15], 4
          %s571 = int_to_ptr.vmem [resolvable:$true] %s570
          %576 = dma.hbm_to_vmem [thread:$0]  %s8, 2304, %s571, [#allocation14], 128, 128, 8
        $region40: #{tpu_custom_call.1} parent=11 // pred_fallthru
          _
        // Predicated region
        $region41: #{tpu_custom_call.1} parent=11 // pred_check
          %p577 = pneg %p275
        $region42: #{tpu_custom_call.1} parent=11 // pred_check_branch
          %579 = sbr.rel (%p577) target = $region44
        $region43: #{tpu_custom_call.1} parent=11 // pred_region
          _
        $region44: #{tpu_custom_call.1} parent=11 // pred_fallthru
          _
        // Predicated region
        $region45: #{tpu_custom_call.1} parent=11 // pred_check
          %p580 = pneg %p296
        $region46: #{tpu_custom_call.1} parent=11 // pred_check_branch
          %582 = sbr.rel (%p580) target = $region48
        $region47: #{tpu_custom_call.1} parent=11 // pred_region
          _
        $region48: #{tpu_custom_call.1} parent=11 // pred_fallthru
          _
        // Predicated region
        $region49: #{tpu_custom_call.1} parent=11 // pred_check
          %p583 = pneg %p317
        $region50: #{tpu_custom_call.1} parent=11 // pred_check_branch
          %585 = sbr.rel (%p583) target = $region52
        $region51: #{tpu_custom_call.1} parent=11 // pred_region
          _
        $region52: #{tpu_custom_call.1} parent=11 // pred_fallthru
          _
        // Predicated region
        $region53: #{tpu_custom_call.1} parent=11 // pred_check
          %p586 = pneg %p338
        $region54: #{tpu_custom_call.1} parent=11 // pred_check_branch
          %588 = sbr.rel (%p586) target = $region56
        $region55: #{tpu_custom_call.1} parent=11 // pred_region
          _
        $region56: #{tpu_custom_call.1} parent=11 // pred_fallthru
          _
        // Predicated region
        $region57: #{tpu_custom_call.1} parent=11 // pred_check
          %p589 = pneg %p359
        $region58: #{tpu_custom_call.1} parent=11 // pred_check_branch
          %591 = sbr.rel (%p589) target = $region60
        $region59: #{tpu_custom_call.1} parent=11 // pred_region
          _
        $region60: #{tpu_custom_call.1} parent=11 // pred_fallthru
          _
        // Predicated region
        $region61: #{tpu_custom_call.1} parent=11 // pred_check
          %p592 = pneg %p380
        $region62: #{tpu_custom_call.1} parent=11 // pred_check_branch
          %594 = sbr.rel (%p592) target = $region64
        $region63: #{tpu_custom_call.1} parent=11 // pred_region
          %s596 = ssub.s32 2304, 2304
          %597 = vsyncadd [#allocation17], %s596
          %s598 = sshll.u32 [#allocation16], 4
          %s599 = int_to_ptr.vmem [resolvable:$true] %s598
          %604 = dma.hbm_to_vmem [thread:$0]  %s14, 2304, %s599, [#allocation17], 128, 128, 8
        $region64: #{tpu_custom_call.1} parent=11 // pred_fallthru
          _
        // Predicated region
        $region65: #{tpu_custom_call.1} parent=11 // pred_check
          %p605 = pneg %p401
        $region66: #{tpu_custom_call.1} parent=11 // pred_check_branch
          %607 = sbr.rel (%p605) target = $region68
        $region67: #{tpu_custom_call.1} parent=11 // pred_region
          _
        $region68: #{tpu_custom_call.1} parent=11 // pred_fallthru
          _
        // Predicated region
        $region69: #{tpu_custom_call.1} parent=11 // pred_check
          %p608 = pneg %p422
        $region70: #{tpu_custom_call.1} parent=11 // pred_check_branch
          %610 = sbr.rel (%p608) target = $region72
        $region71: #{tpu_custom_call.1} parent=11 // pred_region
          _
        $region72: #{tpu_custom_call.1} parent=11 // pred_fallthru
          _
        // Predicated region
        $region73: #{tpu_custom_call.1} parent=11 // pred_check
          %p611 = pneg %p443
        $region74: #{tpu_custom_call.1} parent=11 // pred_check_branch
          %613 = sbr.rel (%p611) target = $region76
        $region75: #{tpu_custom_call.1} parent=11 // pred_region
          _
        $region76: #{tpu_custom_call.1} parent=11 // pred_fallthru
          _
        // Predicated region
        $region77: #{tpu_custom_call.1} parent=11 // pred_check
          %p614 = pneg %p464
        $region78: #{tpu_custom_call.1} parent=11 // pred_check_branch
          %616 = sbr.rel (%p614) target = $region80
        $region79: #{tpu_custom_call.1} parent=11 // pred_region
          _
        $region80: #{tpu_custom_call.1} parent=11 // pred_fallthru
          _
        // Predicated region
        $region81: #{tpu_custom_call.1} parent=11 // pred_check
          %p617 = pneg %p485
        $region82: #{tpu_custom_call.1} parent=11 // pred_check_branch
          %619 = sbr.rel (%p617) target = $region84
        $region83: #{tpu_custom_call.1} parent=11 // pred_region
          _
        $region84: #{tpu_custom_call.1} parent=11 // pred_fallthru
          _
      $region12: #{tpu_custom_call.1} parent=5 // pred_fallthru
        _
      %p620 = scmp.lt.s32.totalorder %s37, 4
      // Predicated region
      $region85: #{tpu_custom_call.1} parent=5 // pred_check
        %p621 = pneg %p620
      $region86: #{tpu_custom_call.1} parent=5 // pred_check_branch
        %623 = sbr.rel (%p621) target = $region88
      $region87: #{tpu_custom_call.1} parent=5 // pred_region
        // Predicated region
        $region89: #{tpu_custom_call.1} parent=87 // pred_check
          %p624 = pneg %p71
        $region90: #{tpu_custom_call.1} parent=87 // pred_check_branch
          %626 = sbr.rel (%p624) target = $region92
        $region91: #{tpu_custom_call.1} parent=87 // pred_region
          %s627 = sand.u32 %s61, 1
          %s628 = scalar_lea.sflag [#allocation8], %s627
          %s629 = sand.u32 %s61, 1
          %s630 = smul.addr %s629, 128
          %s631 = scalar_lea.vmem [#allocation7], %s630
          %s632 = smul.u32 2, %s45
          %s634 = ssub.s32 2048, 2048
          %635 = vsyncadd %s628, %s634
          %s636 = smul.addr %s632, 8
          %s637 = smul.addr %s44, 48
          %s638 = sadd.s32 %s636, %s637
          %s639 = smul.addr %s638, 128
          %s640 = scalar_lea.hbm %s0, %s639
          %s641 = sshll.u32 %s631, 4
          %s642 = int_to_ptr.vmem [resolvable:$true] %s641
          %647 = dma.hbm_to_vmem [thread:$0]  %s640, 2048, %s642, %s628, 128, 128, 8
        $region92: #{tpu_custom_call.1} parent=87 // pred_fallthru
          _
        // Predicated region
        $region93: #{tpu_custom_call.1} parent=87 // pred_check
          %p648 = pneg %p101
        $region94: #{tpu_custom_call.1} parent=87 // pred_check_branch
          %650 = sbr.rel (%p648) target = $region96
        $region95: #{tpu_custom_call.1} parent=87 // pred_region
          %s651 = sand.u32 %s37, 1
          %s652 = scalar_lea.sflag [#allocation11], %s651
          %s653 = sand.u32 %s91, 1
          %s654 = smul.addr %s653, 128
          %s655 = scalar_lea.vmem [#allocation10], %s654
          %s656 = sadd.s32 %s45, 1
          %s657 = smul.u32 2, %s656
          %s659 = ssub.s32 2048, 2048
          %660 = vsyncadd %s652, %s659
          %s661 = smul.addr %s657, 8
          %s662 = smul.addr %s44, 48
          %s663 = sadd.s32 %s661, %s662
          %s664 = smul.addr %s663, 128
          %s665 = scalar_lea.hbm %s1, %s664
          %s666 = sshll.u32 %s655, 4
          %s667 = int_to_ptr.vmem [resolvable:$true] %s666
          %672 = dma.hbm_to_vmem [thread:$0]  %s665, 2048, %s667, %s652, 128, 128, 8
        $region96: #{tpu_custom_call.1} parent=87 // pred_fallthru
          _
      $region88: #{tpu_custom_call.1} parent=5 // pred_fallthru
        _
      %p673 = scmp.le.s32.totalorder 1, %s37
      %p674 = scmp.lt.s32.totalorder %s37, 5
      %p675 = pnand %p673, %p674
      %p676 = pneg %p675
      // Predicated region
      $region97: #{tpu_custom_call.1} parent=5 // pred_check
        _
      $region98: #{tpu_custom_call.1} parent=5 // pred_check_branch
        %678 = sbr.rel (%p675) target = $region100
      $region99: #{tpu_custom_call.1} parent=5 // pred_region
        %s679 = ssub.s32 %s37, 1
        %s680 = sand.u32 %s64, 1
        %s681 = scalar_lea.sflag [#allocation8], %s680
        %s682 = sand.u32 %s64, 1
        %s683 = smul.addr %s682, 128
        %s684 = scalar_lea.vmem [#allocation7], %s683
        // Predicated region
        $region101: #{tpu_custom_call.1} parent=99 // pred_check
          %p685 = pneg %p77
        $region102: #{tpu_custom_call.1} parent=99 // pred_check_branch
          %687 = sbr.rel (%p685) target = $region104
        $region103: #{tpu_custom_call.1} parent=99 // pred_region
          %688 = dma.done %s681, 2048
        $region104: #{tpu_custom_call.1} parent=99 // pred_fallthru
          _
        %s689 = sand.u32 %s42, 1
        %s690 = scalar_lea.sflag [#allocation11], %s689
        %s691 = sand.u32 %s94, 1
        %s692 = smul.addr %s691, 128
        %s693 = scalar_lea.vmem [#allocation10], %s692
        // Predicated region
        $region105: #{tpu_custom_call.1} parent=99 // pred_check
          %p694 = pneg %p107
        $region106: #{tpu_custom_call.1} parent=99 // pred_check_branch
          %696 = sbr.rel (%p694) target = $region108
        $region107: #{tpu_custom_call.1} parent=99 // pred_region
          %697 = dma.done %s690, 2048
        $region108: #{tpu_custom_call.1} parent=99 // pred_fallthru
          _
        // Predicated region
        $region109: #{tpu_custom_call.1} parent=99 // pred_check
          %p698 = pneg %p128
        $region110: #{tpu_custom_call.1} parent=99 // pred_check_branch
          %700 = sbr.rel (%p698) target = $region112
        $region111: #{tpu_custom_call.1} parent=99 // pred_region
          %701 = dma.done [#allocation11], 128
        $region112: #{tpu_custom_call.1} parent=99 // pred_fallthru
          _
        // Predicated region
        $region113: #{tpu_custom_call.1} parent=99 // pred_check
          %p702 = pneg %p191
        $region114: #{tpu_custom_call.1} parent=99 // pred_check_branch
          %704 = sbr.rel (%p702) target = $region116
        $region115: #{tpu_custom_call.1} parent=99 // pred_region
          %705 = dma.done [#allocation14], 384
        $region116: #{tpu_custom_call.1} parent=99 // pred_fallthru
          _
        // Predicated region
        $region117: #{tpu_custom_call.1} parent=99 // pred_check
          %p706 = pneg %p254
        $region118: #{tpu_custom_call.1} parent=99 // pred_check_branch
          %708 = sbr.rel (%p706) target = $region120
        $region119: #{tpu_custom_call.1} parent=99 // pred_region
          %709 = dma.done [#allocation14], 2304
        $region120: #{tpu_custom_call.1} parent=99 // pred_fallthru
          _
        // Predicated region
        $region121: #{tpu_custom_call.1} parent=99 // pred_check
          %p710 = pneg %p380
        $region122: #{tpu_custom_call.1} parent=99 // pred_check_branch
          %712 = sbr.rel (%p710) target = $region124
        $region123: #{tpu_custom_call.1} parent=99 // pred_region
          %713 = dma.done [#allocation17], 2304
        $region124: #{tpu_custom_call.1} parent=99 // pred_fallthru
          _
        %s714 = sand.u32 %s64, 1
        %s715 = scalar_lea.sflag [#allocation8], %s714
        %s716 = sand.u32 %s64, 1
        %s717 = smul.addr %s716, 128
        %s718 = scalar_lea.vmem [#allocation7], %s717
        %p719 = pneg %p77
        %p720 = pneg %p74
        %s721 = sand.u32 %s42, 1
        %s722 = scalar_lea.sflag [#allocation11], %s721
        %s723 = sand.u32 %s94, 1
        %s724 = smul.addr %s723, 128
        %s725 = scalar_lea.vmem [#allocation10], %s724
        %p726 = pneg %p107
        %p727 = pneg %p104
        %p728 = pneg %p128
        %p729 = pneg %p125
        %p730 = pneg %p149
        %p731 = pneg %p146
        %p732 = pneg %p170
        %p733 = pneg %p167
        %p734 = pneg %p191
        %p735 = pneg %p188
        %p736 = pneg %p212
        %p737 = pneg %p209
        %p738 = pneg %p233
        %p739 = pneg %p230
        %p740 = pneg %p254
        %p741 = pneg %p251
        %p742 = pneg %p275
        %p743 = pneg %p272
        %p744 = pneg %p296
        %p745 = pneg %p293
        %p746 = pneg %p317
        %p747 = pneg %p314
        %p748 = pneg %p338
        %p749 = pneg %p335
        %p750 = pneg %p359
        %p751 = pneg %p356
        %p752 = pneg %p380
        %p753 = pneg %p377
        %p754 = pneg %p401
        %p755 = pneg %p398
        %p756 = pneg %p422
        %p757 = pneg %p419
        %p758 = pneg %p443
        %p759 = pneg %p440
        %p760 = pneg %p464
        %p761 = pneg %p461
        %p762 = pneg %p485
        %p763 = pneg %p482
        %p764 = pneg %p513
        %p765 = pneg %p510
        %s766 = sand.u32 %s500, 1
        %s767 = scalar_lea.sflag [#allocation9], %s766
        %s768 = sand.u32 %s500, 1
        %s769 = smul.addr %s768, 128
        %s770 = scalar_lea.vmem [#allocation18], %s769
        %s771 = smul.u32 2, %s47
        %s772 = sadd.s32 %s47, 1
        %s773 = smul.u32 2, %s772
        %s774 = smul.u32 2, %s47
        %v775 = vld [vmem:[%s684] sm:$0xff]
        %v776 = vld [vmem:[%s684 + $0x8] sm:$0xff]
        %v777 = vld [vmem:[%s684 + $0x10] sm:$0xff]
        %v778 = vld [vmem:[%s684 + $0x18] sm:$0xff]
        %v779 = vld [vmem:[%s684 + $0x20] sm:$0xff]
        %v780 = vld [vmem:[%s684 + $0x28] sm:$0xff]
        %v781 = vld [vmem:[%s684 + $0x30] sm:$0xff]
        %v782 = vld [vmem:[%s684 + $0x38] sm:$0xff]
        %v783 = vld [vmem:[%s684 + $0x40] sm:$0xff]
        %v784 = vld [vmem:[%s684 + $0x48] sm:$0xff]
        %v785 = vld [vmem:[%s684 + $0x50] sm:$0xff]
        %v786 = vld [vmem:[%s684 + $0x58] sm:$0xff]
        %v787 = vld [vmem:[%s684 + $0x60] sm:$0xff]
        %v788 = vld [vmem:[%s684 + $0x68] sm:$0xff]
        %v789 = vld [vmem:[%s684 + $0x70] sm:$0xff]
        %v790 = vld [vmem:[%s684 + $0x78] sm:$0xff]
        %v791 = vld [vmem:[%s693] sm:$0xff]
        %v792 = vld [vmem:[%s693 + $0x8] sm:$0xff]
        %v793 = vld [vmem:[%s693 + $0x10] sm:$0xff]
        %v794 = vld [vmem:[%s693 + $0x18] sm:$0xff]
        %v795 = vld [vmem:[%s693 + $0x20] sm:$0xff]
        %v796 = vld [vmem:[%s693 + $0x28] sm:$0xff]
        %v797 = vld [vmem:[%s693 + $0x30] sm:$0xff]
        %v798 = vld [vmem:[%s693 + $0x38] sm:$0xff]
        %v799 = vld [vmem:[%s693 + $0x40] sm:$0xff]
        %v800 = vld [vmem:[%s693 + $0x48] sm:$0xff]
        %v801 = vld [vmem:[%s693 + $0x50] sm:$0xff]
        %v802 = vld [vmem:[%s693 + $0x58] sm:$0xff]
        %v803 = vld [vmem:[%s693 + $0x60] sm:$0xff]
        %v804 = vld [vmem:[%s693 + $0x68] sm:$0xff]
        %v805 = vld [vmem:[%s693 + $0x70] sm:$0xff]
        %v806 = vld [vmem:[%s693 + $0x78] sm:$0xff]
        %v807 = vld [vmem:[#allocation12] sm:$0xff]
        %vm808 = vcmask 64512
        %v810 = vsel %vm808, %v775, 0
        %v813 = vsel %vm808, %v776, 0
        %v816 = vsel %vm808, %v777, 0
        %v819 = vsel %vm808, %v778, 0
        %v822 = vsel %vm808, %v779, 0
        %v825 = vsel %vm808, %v780, 0
        %v828 = vsel %vm808, %v781, 0
        %v831 = vsel %vm808, %v782, 0
        %v834 = vsel %vm808, %v783, 0
        %v837 = vsel %vm808, %v784, 0
        %v840 = vsel %vm808, %v785, 0
        %v843 = vsel %vm808, %v786, 0
        %v846 = vsel %vm808, %v787, 0
        %v849 = vsel %vm808, %v788, 0
        %v852 = vsel %vm808, %v789, 0
        %v855 = vsel %vm808, %v790, 0
        %v858 = vsel %vm808, %v791, 0
        %v861 = vsel %vm808, %v792, 0
        %v864 = vsel %vm808, %v793, 0
        %v867 = vsel %vm808, %v794, 0
        %v870 = vsel %vm808, %v795, 0
        %v873 = vsel %vm808, %v796, 0
        %v876 = vsel %vm808, %v797, 0
        %v879 = vsel %vm808, %v798, 0
        %v882 = vsel %vm808, %v799, 0
        %v885 = vsel %vm808, %v800, 0
        %v888 = vsel %vm808, %v801, 0
        %v891 = vsel %vm808, %v802, 0
        %v894 = vsel %vm808, %v803, 0
        %v897 = vsel %vm808, %v804, 0
        %v900 = vsel %vm808, %v805, 0
        %v903 = vsel %vm808, %v806, 0
        %905 = vmatprep.subr.mxu0 0.0
        %906 = vmatpush1.msra.mxu0 %v807
        %907 = vmatprep.subr.mxu0 0.0
        %908 = vmatpush1.msra.mxu0 0.0
        %909 = vmatprep.subr.mxu0 0.0
        %910 = vmatpush1.msra.mxu0 0.0
        %911 = vmatprep.subr.mxu0 0.0
        %912 = vmatpush1.msra.mxu0 0.0
        %913 = vmatprep.subr.mxu0 0.0
        %914 = vmatpush1.msra.mxu0 0.0
        %915 = vmatprep.subr.mxu0 0.0
        %916 = vmatpush1.msra.mxu0 0.0
        %917 = vmatprep.subr.mxu0 0.0
        %918 = vmatpush1.msra.mxu0 0.0
        %919 = vmatprep.subr.mxu0 0.0
        %920 = vmatpush1.msra.mxu0 0.0
        %921 = vmatprep.subr.mxu0 0.0
        %922 = vmatpush1.msra.mxu0 0.0
        %923 = vmatprep.subr.mxu0 0.0
        %924 = vmatpush1.msra.mxu0 0.0
        %925 = vmatprep.subr.mxu0 0.0
        %926 = vmatpush1.msra.mxu0 0.0
        %927 = vmatprep.subr.mxu0 0.0
        %928 = vmatpush1.msra.mxu0 0.0
        %929 = vmatprep.subr.mxu0 0.0
        %930 = vmatpush1.msra.mxu0 0.0
        %931 = vmatprep.subr.mxu0 0.0
        %932 = vmatpush1.msra.mxu0 0.0
        %933 = vmatprep.subr.mxu0 0.0
        %934 = vmatpush1.msra.mxu0 0.0
        %935 = vmatprep.subr.mxu0 0.0
        %936 = vmatpush1.msra.mxu0 0.0
        %937 = vmatprep.subr.mxu0 0.0
        %938 = vmatpush1.msra.mxu0 0.0
        %939 = vmatprep.subr.mxu0 0.0
        %940 = vmatpush1.msra.mxu0 0.0
        %941 = vmatprep.subr.mxu0 0.0
        %942 = vmatpush1.msra.mxu0 0.0
        %943 = vmatprep.subr.mxu0 0.0
        %944 = vmatpush1.msra.mxu0 0.0
        %945 = vmatprep.subr.mxu0 0.0
        %946 = vmatpush1.msra.mxu0 0.0
        %947 = vmatprep.subr.mxu0 0.0
        %948 = vmatpush1.msra.mxu0 0.0
        %949 = vmatprep.subr.mxu0 0.0
        %950 = vmatpush1.msra.mxu0 0.0
        %951 = vmatprep.subr.mxu0 0.0
        %952 = vmatpush1.msra.mxu0 0.0
        %953 = vmatprep.subr.mxu0 0.0
        %954 = vmatpush1.msra.mxu0 0.0
        %955 = vmatprep.subr.mxu0 0.0
        %956 = vmatpush1.msra.mxu0 0.0
        %957 = vmatprep.subr.mxu0 0.0
        %958 = vmatpush1.msra.mxu0 0.0
        %959 = vmatprep.subr.mxu0 0.0
        %960 = vmatpush1.msra.mxu0 0.0
        %961 = vmatprep.subr.mxu0 0.0
        %962 = vmatpush1.msra.mxu0 0.0
        %963 = vmatprep.subr.mxu0 0.0
        %964 = vmatpush1.msra.mxu0 0.0
        %965 = vmatprep.subr.mxu0 0.0
        %966 = vmatpush1.msra.mxu0 0.0
        %967 = vmatprep.subr.mxu0 0.0
        %968 = vmatpush1.msra.mxu0 0.0
        %969 = vmatprep.mubr.f32.mxu0 0.0
        %970 = vmatmul.mubr.f32.gmra.mrb[0].mxu0 %v810
        %v971 = vpop.f32.mrb[0].mxu0
        %v972 = vadd.f32 0.0, %v971
        %v973 = vpop.f32.mrb[0].mxu0
        %974 = vmatprep.mubr.f32.mxu0 0.0
        %975 = vmatmul.mubr.f32.gmra.mrb[0].mxu0 %v813
        %v976 = vpop.f32.mrb[0].mxu0
        %v977 = vadd.f32 0.0, %v976
        %v978 = vpop.f32.mrb[0].mxu0
        %979 = vmatprep.mubr.f32.mxu0 0.0
        %980 = vmatmul.mubr.f32.gmra.mrb[0].mxu0 %v816
        %v981 = vpop.f32.mrb[0].mxu0
        %v982 = vadd.f32 0.0, %v981
        %v983 = vpop.f32.mrb[0].mxu0
        %984 = vmatprep.mubr.f32.mxu0 0.0
        %985 = vmatmul.mubr.f32.gmra.mrb[0].mxu0 %v819
        %v986 = vpop.f32.mrb[0].mxu0
        %v987 = vadd.f32 0.0, %v986
        %v988 = vpop.f32.mrb[0].mxu0
        %989 = vmatprep.mubr.f32.mxu0 0.0
        %990 = vmatmul.mubr.f32.gmra.mrb[0].mxu0 %v822
        %v991 = vpop.f32.mrb[0].mxu0
        %v992 = vadd.f32 0.0, %v991
        %v993 = vpop.f32.mrb[0].mxu0
        %994 = vmatprep.mubr.f32.mxu0 0.0
        %995 = vmatmul.mubr.f32.gmra.mrb[0].mxu0 %v825
        %v996 = vpop.f32.mrb[0].mxu0
        %v997 = vadd.f32 0.0, %v996
        %v998 = vpop.f32.mrb[0].mxu0
        %999 = vmatprep.mubr.f32.mxu0 0.0
        %1000 = vmatmul.mubr.f32.gmra.mrb[0].mxu0 %v828
        %v1001 = vpop.f32.mrb[0].mxu0
        %v1002 = vadd.f32 0.0, %v1001
        %v1003 = vpop.f32.mrb[0].mxu0
        %1004 = vmatprep.mubr.f32.mxu0 0.0
        %1005 = vmatmul.mubr.f32.gmra.mrb[0].mxu0 %v831
        %v1006 = vpop.f32.mrb[0].mxu0
        %v1007 = vadd.f32 0.0, %v1006
        %v1008 = vpop.f32.mrb[0].mxu0
        %1009 = vmatprep.mubr.f32.mxu0 0.0
        %1010 = vmatmul.mubr.f32.gmra.mrb[0].mxu0 %v834
        %v1011 = vpop.f32.mrb[0].mxu0
        %v1012 = vadd.f32 0.0, %v1011
        %v1013 = vpop.f32.mrb[0].mxu0
        %1014 = vmatprep.mubr.f32.mxu0 0.0
        %1015 = vmatmul.mubr.f32.gmra.mrb[0].mxu0 %v837
        %v1016 = vpop.f32.mrb[0].mxu0
        %v1017 = vadd.f32 0.0, %v1016
        %v1018 = vpop.f32.mrb[0].mxu0
        %1019 = vmatprep.mubr.f32.mxu0 0.0
        %1020 = vmatmul.mubr.f32.gmra.mrb[0].mxu0 %v840
        %v1021 = vpop.f32.mrb[0].mxu0
        %v1022 = vadd.f32 0.0, %v1021
        %v1023 = vpop.f32.mrb[0].mxu0
        %1024 = vmatprep.mubr.f32.mxu0 0.0
        %1025 = vmatmul.mubr.f32.gmra.mrb[0].mxu0 %v843
        %v1026 = vpop.f32.mrb[0].mxu0
        %v1027 = vadd.f32 0.0, %v1026
        %v1028 = vpop.f32.mrb[0].mxu0
        %1029 = vmatprep.mubr.f32.mxu0 0.0
        %1030 = vmatmul.mubr.f32.gmra.mrb[0].mxu0 %v846
        %v1031 = vpop.f32.mrb[0].mxu0
        %v1032 = vadd.f32 0.0, %v1031
        %v1033 = vpop.f32.mrb[0].mxu0
        %1034 = vmatprep.mubr.f32.mxu0 0.0
        %1035 = vmatmul.mubr.f32.gmra.mrb[0].mxu0 %v849
        %v1036 = vpop.f32.mrb[0].mxu0
        %v1037 = vadd.f32 0.0, %v1036
        %v1038 = vpop.f32.mrb[0].mxu0
        %1039 = vmatprep.mubr.f32.mxu0 0.0
        %1040 = vmatmul.mubr.f32.gmra.mrb[0].mxu0 %v852
        %v1041 = vpop.f32.mrb[0].mxu0
        %v1042 = vadd.f32 0.0, %v1041
        %v1043 = vpop.f32.mrb[0].mxu0
        %1044 = vmatprep.mubr.f32.mxu0 0.0
        %1045 = vmatmul.mubr.f32.gmra.mrb[0].mxu0 %v855
        %v1046 = vpop.f32.mrb[0].mxu0
        %v1047 = vadd.f32 0.0, %v1046
        %v1048 = vpop.f32.mrb[0].mxu0
        %1049 = vmatprep.mubr.f32.mxu0 0.0
        %1050 = vmatmul.mubr.f32.gmra.mrb[0].mxu0 %v858
        %v1051 = vpop.f32.mrb[0].mxu0
        %v1052 = vadd.f32 0.0, %v1051
        %v1053 = vpop.f32.mrb[0].mxu0
        %1054 = vmatprep.mubr.f32.mxu0 0.0
        %1055 = vmatmul.mubr.f32.gmra.mrb[0].mxu0 %v861
        %v1056 = vpop.f32.mrb[0].mxu0
        %v1057 = vadd.f32 0.0, %v1056
        %v1058 = vpop.f32.mrb[0].mxu0
        %1059 = vmatprep.mubr.f32.mxu0 0.0
        %1060 = vmatmul.mubr.f32.gmra.mrb[0].mxu0 %v864
        %v1061 = vpop.f32.mrb[0].mxu0
        %v1062 = vadd.f32 0.0, %v1061
        %v1063 = vpop.f32.mrb[0].mxu0
        %1064 = vmatprep.mubr.f32.mxu0 0.0
        %1065 = vmatmul.mubr.f32.gmra.mrb[0].mxu0 %v867
        %v1066 = vpop.f32.mrb[0].mxu0
        %v1067 = vadd.f32 0.0, %v1066
        %v1068 = vpop.f32.mrb[0].mxu0
        %1069 = vmatprep.mubr.f32.mxu0 0.0
        %1070 = vmatmul.mubr.f32.gmra.mrb[0].mxu0 %v870
        %v1071 = vpop.f32.mrb[0].mxu0
        %v1072 = vadd.f32 0.0, %v1071
        %v1073 = vpop.f32.mrb[0].mxu0
        %1074 = vmatprep.mubr.f32.mxu0 0.0
        %1075 = vmatmul.mubr.f32.gmra.mrb[0].mxu0 %v873
        %v1076 = vpop.f32.mrb[0].mxu0
        %v1077 = vadd.f32 0.0, %v1076
        %v1078 = vpop.f32.mrb[0].mxu0
        %1079 = vmatprep.mubr.f32.mxu0 0.0
        %1080 = vmatmul.mubr.f32.gmra.mrb[0].mxu0 %v876
        %v1081 = vpop.f32.mrb[0].mxu0
        %v1082 = vadd.f32 0.0, %v1081
        %v1083 = vpop.f32.mrb[0].mxu0
        %1084 = vmatprep.mubr.f32.mxu0 0.0
        %1085 = vmatmul.mubr.f32.gmra.mrb[0].mxu0 %v879
        %v1086 = vpop.f32.mrb[0].mxu0
        %v1087 = vadd.f32 0.0, %v1086
        %v1088 = vpop.f32.mrb[0].mxu0
        %1089 = vmatprep.mubr.f32.mxu0 0.0
        %1090 = vmatmul.mubr.f32.gmra.mrb[0].mxu0 %v882
        %v1091 = vpop.f32.mrb[0].mxu0
        %v1092 = vadd.f32 0.0, %v1091
        %v1093 = vpop.f32.mrb[0].mxu0
        %1094 = vmatprep.mubr.f32.mxu0 0.0
        %1095 = vmatmul.mubr.f32.gmra.mrb[0].mxu0 %v885
        %v1096 = vpop.f32.mrb[0].mxu0
        %v1097 = vadd.f32 0.0, %v1096
        %v1098 = vpop.f32.mrb[0].mxu0
        %1099 = vmatprep.mubr.f32.mxu0 0.0
        %1100 = vmatmul.mubr.f32.gmra.mrb[0].mxu0 %v888
        %v1101 = vpop.f32.mrb[0].mxu0
        %v1102 = vadd.f32 0.0, %v1101
        %v1103 = vpop.f32.mrb[0].mxu0
        %1104 = vmatprep.mubr.f32.mxu0 0.0
        %1105 = vmatmul.mubr.f32.gmra.mrb[0].mxu0 %v891
        %v1106 = vpop.f32.mrb[0].mxu0
        %v1107 = vadd.f32 0.0, %v1106
        %v1108 = vpop.f32.mrb[0].mxu0
        %1109 = vmatprep.mubr.f32.mxu0 0.0
        %1110 = vmatmul.mubr.f32.gmra.mrb[0].mxu0 %v894
        %v1111 = vpop.f32.mrb[0].mxu0
        %v1112 = vadd.f32 0.0, %v1111
        %v1113 = vpop.f32.mrb[0].mxu0
        %1114 = vmatprep.mubr.f32.mxu0 0.0
        %1115 = vmatmul.mubr.f32.gmra.mrb[0].mxu0 %v897
        %v1116 = vpop.f32.mrb[0].mxu0
        %v1117 = vadd.f32 0.0, %v1116
        %v1118 = vpop.f32.mrb[0].mxu0
        %1119 = vmatprep.mubr.f32.mxu0 0.0
        %1120 = vmatmul.mubr.f32.gmra.mrb[0].mxu0 %v900
        %v1121 = vpop.f32.mrb[0].mxu0
        %v1122 = vadd.f32 0.0, %v1121
        %v1123 = vpop.f32.mrb[0].mxu0
        %1124 = vmatprep.mubr.f32.mxu0 0.0
        %1125 = vmatmul.mubr.f32.gmra.mrb[0].mxu0 %v903
        %v1126 = vpop.f32.mrb[0].mxu0
        %v1127 = vadd.f32 0.0, %v1126
        %v1128 = vpop.f32.mrb[0].mxu0
        %1129 = vdwg.mxu0
        %v1130 = vld [vmem:[%s3] sm:$0x1]
        %v1132 = vlaneseq
        %v1133 = vshrl.u32 %v1132, 7
        %v1134 = vsub.s32 0, %v1133
        %v1135 = vrot.slane %v1130, %v1134
        %v1137 = vmul.f32 %v972, %v1135
        %v1138 = vmul.f32 %v977, %v1135
        %v1139 = vmul.f32 %v982, %v1135
        %v1140 = vmul.f32 %v987, %v1135
        %v1141 = vmul.f32 %v992, %v1135
        %v1142 = vmul.f32 %v997, %v1135
        %v1143 = vmul.f32 %v1002, %v1135
        %v1144 = vmul.f32 %v1007, %v1135
        %v1145 = vmul.f32 %v1012, %v1135
        %v1146 = vmul.f32 %v1017, %v1135
        %v1147 = vmul.f32 %v1022, %v1135
        %v1148 = vmul.f32 %v1027, %v1135
        %v1149 = vmul.f32 %v1032, %v1135
        %v1150 = vmul.f32 %v1037, %v1135
        %v1151 = vmul.f32 %v1042, %v1135
        %v1152 = vmul.f32 %v1047, %v1135
        %v1153 = vmul.f32 %v1052, %v1135
        %v1154 = vmul.f32 %v1057, %v1135
        %v1155 = vmul.f32 %v1062, %v1135
        %v1156 = vmul.f32 %v1067, %v1135
        %v1157 = vmul.f32 %v1072, %v1135
        %v1158 = vmul.f32 %v1077, %v1135
        %v1159 = vmul.f32 %v1082, %v1135
        %v1160 = vmul.f32 %v1087, %v1135
        %v1161 = vmul.f32 %v1092, %v1135
        %v1162 = vmul.f32 %v1097, %v1135
        %v1163 = vmul.f32 %v1102, %v1135
        %v1164 = vmul.f32 %v1107, %v1135
        %v1165 = vmul.f32 %v1112, %v1135
        %v1166 = vmul.f32 %v1117, %v1135
        %v1167 = vmul.f32 %v1122, %v1135
        %v1168 = vmul.f32 %v1127, %v1135
        %v1169 = vld [vmem:[%s4] sm:$0x1]
        %v1171 = vlaneseq
        %v1172 = vshrl.u32 %v1171, 7
        %v1173 = vsub.s32 0, %v1172
        %v1174 = vrot.slane %v1169, %v1173
        %v1176 = vadd.f32 %v1137, %v1174
        %v1177 = vadd.f32 %v1138, %v1174
        %v1178 = vadd.f32 %v1139, %v1174
        %v1179 = vadd.f32 %v1140, %v1174
        %v1180 = vadd.f32 %v1141, %v1174
        %v1181 = vadd.f32 %v1142, %v1174
        %v1182 = vadd.f32 %v1143, %v1174
        %v1183 = vadd.f32 %v1144, %v1174
        %v1184 = vadd.f32 %v1145, %v1174
        %v1185 = vadd.f32 %v1146, %v1174
        %v1186 = vadd.f32 %v1147, %v1174
        %v1187 = vadd.f32 %v1148, %v1174
        %v1188 = vadd.f32 %v1149, %v1174
        %v1189 = vadd.f32 %v1150, %v1174
        %v1190 = vadd.f32 %v1151, %v1174
        %v1191 = vadd.f32 %v1152, %v1174
        %v1192 = vadd.f32 %v1153, %v1174
        %v1193 = vadd.f32 %v1154, %v1174
        %v1194 = vadd.f32 %v1155, %v1174
        %v1195 = vadd.f32 %v1156, %v1174
        %v1196 = vadd.f32 %v1157, %v1174
        %v1197 = vadd.f32 %v1158, %v1174
        %v1198 = vadd.f32 %v1159, %v1174
        %v1199 = vadd.f32 %v1160, %v1174
        %v1200 = vadd.f32 %v1161, %v1174
        %v1201 = vadd.f32 %v1162, %v1174
        %v1202 = vadd.f32 %v1163, %v1174
        %v1203 = vadd.f32 %v1164, %v1174
        %v1204 = vadd.f32 %v1165, %v1174
        %v1205 = vadd.f32 %v1166, %v1174
        %v1206 = vadd.f32 %v1167, %v1174
        %v1207 = vadd.f32 %v1168, %v1174
        %v1208 = vmax.f32 %v1176, 0.0
        %v1209 = vmax.f32 %v1177, 0.0
        %v1210 = vmax.f32 %v1178, 0.0
        %v1211 = vmax.f32 %v1179, 0.0
        %v1212 = vmax.f32 %v1180, 0.0
        %v1213 = vmax.f32 %v1181, 0.0
        %v1214 = vmax.f32 %v1182, 0.0
        %v1215 = vmax.f32 %v1183, 0.0
        %v1216 = vmax.f32 %v1184, 0.0
        %v1217 = vmax.f32 %v1185, 0.0
        %v1218 = vmax.f32 %v1186, 0.0
        %v1219 = vmax.f32 %v1187, 0.0
        %v1220 = vmax.f32 %v1188, 0.0
        %v1221 = vmax.f32 %v1189, 0.0
        %v1222 = vmax.f32 %v1190, 0.0
        %v1223 = vmax.f32 %v1191, 0.0
        %v1224 = vmax.f32 %v1192, 0.0
        %v1225 = vmax.f32 %v1193, 0.0
        %v1226 = vmax.f32 %v1194, 0.0
        %v1227 = vmax.f32 %v1195, 0.0
        %v1228 = vmax.f32 %v1196, 0.0
        %v1229 = vmax.f32 %v1197, 0.0
        %v1230 = vmax.f32 %v1198, 0.0
        %v1231 = vmax.f32 %v1199, 0.0
        %v1232 = vmax.f32 %v1200, 0.0
        %v1233 = vmax.f32 %v1201, 0.0
        %v1234 = vmax.f32 %v1202, 0.0
        %v1235 = vmax.f32 %v1203, 0.0
        %v1236 = vmax.f32 %v1204, 0.0
        %v1237 = vmax.f32 %v1205, 0.0
        %v1238 = vmax.f32 %v1206, 0.0
        %v1239 = vmax.f32 %v1207, 0.0
        %1240 = vst.msk [vmem:[%s770] sm:$0xff] %vm808, %v1216
        %1241 = vst.msk [vmem:[%s770 + $0x8] sm:$0xff] %vm808, %v1217
        %1242 = vst.msk [vmem:[%s770 + $0x10] sm:$0xff] %vm808, %v1218
        %1243 = vst.msk [vmem:[%s770 + $0x18] sm:$0xff] %vm808, %v1219
        %1244 = vst.msk [vmem:[%s770 + $0x20] sm:$0xff] %vm808, %v1220
        %1245 = vst.msk [vmem:[%s770 + $0x28] sm:$0xff] %vm808, %v1221
        %1246 = vst.msk [vmem:[%s770 + $0x30] sm:$0xff] %vm808, %v1222
        %1247 = vst.msk [vmem:[%s770 + $0x38] sm:$0xff] %vm808, %v1223
        %1248 = vst.msk [vmem:[%s770 + $0x40] sm:$0xff] %vm808, %v1224
        %1249 = vst.msk [vmem:[%s770 + $0x48] sm:$0xff] %vm808, %v1225
        %1250 = vst.msk [vmem:[%s770 + $0x50] sm:$0xff] %vm808, %v1226
        %1251 = vst.msk [vmem:[%s770 + $0x58] sm:$0xff] %vm808, %v1227
        %1252 = vst.msk [vmem:[%s770 + $0x60] sm:$0xff] %vm808, %v1228
        %1253 = vst.msk [vmem:[%s770 + $0x68] sm:$0xff] %vm808, %v1229
        %1254 = vst.msk [vmem:[%s770 + $0x70] sm:$0xff] %vm808, %v1230
        %1255 = vst.msk [vmem:[%s770 + $0x78] sm:$0xff] %vm808, %v1231
        %1288 = vrot.lane.b32.xlu0 %v1208, 120
        %v1289 = vpop.permute.xlu0 %1288
        %1290 = vrot.lane.b32.xlu0 %v1209, 120
        %v1291 = vpop.permute.xlu0 %1290
        %1292 = vrot.lane.b32.xlu0 %v1210, 120
        %v1293 = vpop.permute.xlu0 %1292
        %1294 = vrot.lane.b32.xlu0 %v1211, 120
        %v1295 = vpop.permute.xlu0 %1294
        %1296 = vrot.lane.b32.xlu0 %v1212, 120
        %v1297 = vpop.permute.xlu0 %1296
        %1298 = vrot.lane.b32.xlu0 %v1213, 120
        %v1299 = vpop.permute.xlu0 %1298
        %1300 = vrot.lane.b32.xlu0 %v1214, 120
        %v1301 = vpop.permute.xlu0 %1300
        %1302 = vrot.lane.b32.xlu0 %v1215, 120
        %v1303 = vpop.permute.xlu0 %1302
        %1304 = vrot.lane.b32.xlu0 %v1216, 120
        %v1305 = vpop.permute.xlu0 %1304
        %1306 = vrot.lane.b32.xlu0 %v1217, 120
        %v1307 = vpop.permute.xlu0 %1306
        %1308 = vrot.lane.b32.xlu0 %v1218, 120
        %v1309 = vpop.permute.xlu0 %1308
        %1310 = vrot.lane.b32.xlu0 %v1219, 120
        %v1311 = vpop.permute.xlu0 %1310
        %1312 = vrot.lane.b32.xlu0 %v1220, 120
        %v1313 = vpop.permute.xlu0 %1312
        %1314 = vrot.lane.b32.xlu0 %v1221, 120
        %v1315 = vpop.permute.xlu0 %1314
        %1316 = vrot.lane.b32.xlu0 %v1222, 120
        %v1317 = vpop.permute.xlu0 %1316
        %1318 = vrot.lane.b32.xlu0 %v1223, 120
        %v1319 = vpop.permute.xlu0 %1318
        %1320 = vrot.lane.b32.xlu0 %v1224, 120
        %v1321 = vpop.permute.xlu0 %1320
        %1322 = vrot.lane.b32.xlu0 %v1225, 120
        %v1323 = vpop.permute.xlu0 %1322
        %1324 = vrot.lane.b32.xlu0 %v1226, 120
        %v1325 = vpop.permute.xlu0 %1324
        %1326 = vrot.lane.b32.xlu0 %v1227, 120
        %v1327 = vpop.permute.xlu0 %1326
        %1328 = vrot.lane.b32.xlu0 %v1228, 120
        %v1329 = vpop.permute.xlu0 %1328
        %1330 = vrot.lane.b32.xlu0 %v1229, 120
        %v1331 = vpop.permute.xlu0 %1330
        %1332 = vrot.lane.b32.xlu0 %v1230, 120
        %v1333 = vpop.permute.xlu0 %1332
        %1334 = vrot.lane.b32.xlu0 %v1231, 120
        %v1335 = vpop.permute.xlu0 %1334
        %1336 = vrot.lane.b32.xlu0 %v1232, 120
        %v1337 = vpop.permute.xlu0 %1336
        %1338 = vrot.lane.b32.xlu0 %v1233, 120
        %v1339 = vpop.permute.xlu0 %1338
        %1340 = vrot.lane.b32.xlu0 %v1234, 120
        %v1341 = vpop.permute.xlu0 %1340
        %1342 = vrot.lane.b32.xlu0 %v1235, 120
        %v1343 = vpop.permute.xlu0 %1342
        %1344 = vrot.lane.b32.xlu0 %v1236, 120
        %v1345 = vpop.permute.xlu0 %1344
        %1346 = vrot.lane.b32.xlu0 %v1237, 120
        %v1347 = vpop.permute.xlu0 %1346
        %1348 = vrot.lane.b32.xlu0 %v1238, 120
        %v1349 = vpop.permute.xlu0 %1348
        %1350 = vrot.lane.b32.xlu0 %v1239, 120
        %v1351 = vpop.permute.xlu0 %1350
        %1384 = vst.msk [vmem:[#allocation2] sm:$0xff] %vm808, %v1289
        %1385 = vst.msk [vmem:[#allocation2 + $0x8] sm:$0xff] %vm808, %v1291
        %1386 = vst.msk [vmem:[#allocation2 + $0x10] sm:$0xff] %vm808, %v1293
        %1387 = vst.msk [vmem:[#allocation2 + $0x18] sm:$0xff] %vm808, %v1295
        %1388 = vst.msk [vmem:[#allocation2 + $0x20] sm:$0xff] %vm808, %v1297
        %1389 = vst.msk [vmem:[#allocation2 + $0x28] sm:$0xff] %vm808, %v1299
        %1390 = vst.msk [vmem:[#allocation2 + $0x30] sm:$0xff] %vm808, %v1301
        %1391 = vst.msk [vmem:[#allocation2 + $0x38] sm:$0xff] %vm808, %v1303
        %1392 = vst.msk [vmem:[#allocation2 + $0x40] sm:$0xff] %vm808, %v1305
        %1393 = vst.msk [vmem:[#allocation2 + $0x48] sm:$0xff] %vm808, %v1307
        %1394 = vst.msk [vmem:[#allocation2 + $0x50] sm:$0xff] %vm808, %v1309
        %1395 = vst.msk [vmem:[#allocation2 + $0x58] sm:$0xff] %vm808, %v1311
        %1396 = vst.msk [vmem:[#allocation2 + $0x60] sm:$0xff] %vm808, %v1313
        %1397 = vst.msk [vmem:[#allocation2 + $0x68] sm:$0xff] %vm808, %v1315
        %1398 = vst.msk [vmem:[#allocation2 + $0x70] sm:$0xff] %vm808, %v1317
        %1399 = vst.msk [vmem:[#allocation2 + $0x78] sm:$0xff] %vm808, %v1319
        %1400 = vst.msk [vmem:[#allocation2 + $0x80] sm:$0xff] %vm808, %v1321
        %1401 = vst.msk [vmem:[#allocation2 + $0x88] sm:$0xff] %vm808, %v1323
        %1402 = vst.msk [vmem:[#allocation2 + $0x90] sm:$0xff] %vm808, %v1325
        %1403 = vst.msk [vmem:[#allocation2 + $0x98] sm:$0xff] %vm808, %v1327
        %1404 = vst.msk [vmem:[#allocation2 + $0xa0] sm:$0xff] %vm808, %v1329
        %1405 = vst.msk [vmem:[#allocation2 + $0xa8] sm:$0xff] %vm808, %v1331
        %1406 = vst.msk [vmem:[#allocation2 + $0xb0] sm:$0xff] %vm808, %v1333
        %1407 = vst.msk [vmem:[#allocation2 + $0xb8] sm:$0xff] %vm808, %v1335
        %1408 = vst.msk [vmem:[#allocation2 + $0xc0] sm:$0xff] %vm808, %v1337
        %1409 = vst.msk [vmem:[#allocation2 + $0xc8] sm:$0xff] %vm808, %v1339
        %1410 = vst.msk [vmem:[#allocation2 + $0xd0] sm:$0xff] %vm808, %v1341
        %1411 = vst.msk [vmem:[#allocation2 + $0xd8] sm:$0xff] %vm808, %v1343
        %1412 = vst.msk [vmem:[#allocation2 + $0xe0] sm:$0xff] %vm808, %v1345
        %1413 = vst.msk [vmem:[#allocation2 + $0xe8] sm:$0xff] %vm808, %v1347
        %1414 = vst.msk [vmem:[#allocation2 + $0xf0] sm:$0xff] %vm808, %v1349
        %1415 = vst.msk [vmem:[#allocation2 + $0xf8] sm:$0xff] %vm808, %v1351
        %1416 = vrot.lane.b32.xlu0 %v1208, 112
        %v1417 = vpop.permute.xlu0 %1416
        %1418 = vrot.lane.b32.xlu0 %v1209, 112
        %v1419 = vpop.permute.xlu0 %1418
        %1420 = vrot.lane.b32.xlu0 %v1210, 112
        %v1421 = vpop.permute.xlu0 %1420
        %1422 = vrot.lane.b32.xlu0 %v1211, 112
        %v1423 = vpop.permute.xlu0 %1422
        %1424 = vrot.lane.b32.xlu0 %v1212, 112
        %v1425 = vpop.permute.xlu0 %1424
        %1426 = vrot.lane.b32.xlu0 %v1213, 112
        %v1427 = vpop.permute.xlu0 %1426
        %1428 = vrot.lane.b32.xlu0 %v1214, 112
        %v1429 = vpop.permute.xlu0 %1428
        %1430 = vrot.lane.b32.xlu0 %v1215, 112
        %v1431 = vpop.permute.xlu0 %1430
        %1432 = vrot.lane.b32.xlu0 %v1216, 112
        %v1433 = vpop.permute.xlu0 %1432
        %1434 = vrot.lane.b32.xlu0 %v1217, 112
        %v1435 = vpop.permute.xlu0 %1434
        %1436 = vrot.lane.b32.xlu0 %v1218, 112
        %v1437 = vpop.permute.xlu0 %1436
        %1438 = vrot.lane.b32.xlu0 %v1219, 112
        %v1439 = vpop.permute.xlu0 %1438
        %1440 = vrot.lane.b32.xlu0 %v1220, 112
        %v1441 = vpop.permute.xlu0 %1440
        %1442 = vrot.lane.b32.xlu0 %v1221, 112
        %v1443 = vpop.permute.xlu0 %1442
        %1444 = vrot.lane.b32.xlu0 %v1222, 112
        %v1445 = vpop.permute.xlu0 %1444
        %1446 = vrot.lane.b32.xlu0 %v1223, 112
        %v1447 = vpop.permute.xlu0 %1446
        %1448 = vrot.lane.b32.xlu0 %v1224, 112
        %v1449 = vpop.permute.xlu0 %1448
        %1450 = vrot.lane.b32.xlu0 %v1225, 112
        %v1451 = vpop.permute.xlu0 %1450
        %1452 = vrot.lane.b32.xlu0 %v1226, 112
        %v1453 = vpop.permute.xlu0 %1452
        %1454 = vrot.lane.b32.xlu0 %v1227, 112
        %v1455 = vpop.permute.xlu0 %1454
        %1456 = vrot.lane.b32.xlu0 %v1228, 112
        %v1457 = vpop.permute.xlu0 %1456
        %1458 = vrot.lane.b32.xlu0 %v1229, 112
        %v1459 = vpop.permute.xlu0 %1458
        %1460 = vrot.lane.b32.xlu0 %v1230, 112
        %v1461 = vpop.permute.xlu0 %1460
        %1462 = vrot.lane.b32.xlu0 %v1231, 112
        %v1463 = vpop.permute.xlu0 %1462
        %1464 = vrot.lane.b32.xlu0 %v1232, 112
        %v1465 = vpop.permute.xlu0 %1464
        %1466 = vrot.lane.b32.xlu0 %v1233, 112
        %v1467 = vpop.permute.xlu0 %1466
        %1468 = vrot.lane.b32.xlu0 %v1234, 112
        %v1469 = vpop.permute.xlu0 %1468
        %1470 = vrot.lane.b32.xlu0 %v1235, 112
        %v1471 = vpop.permute.xlu0 %1470
        %1472 = vrot.lane.b32.xlu0 %v1236, 112
        %v1473 = vpop.permute.xlu0 %1472
        %1474 = vrot.lane.b32.xlu0 %v1237, 112
        %v1475 = vpop.permute.xlu0 %1474
        %1476 = vrot.lane.b32.xlu0 %v1238, 112
        %v1477 = vpop.permute.xlu0 %1476
        %1478 = vrot.lane.b32.xlu0 %v1239, 112
        %v1479 = vpop.permute.xlu0 %1478
        %1512 = vst.msk [vmem:[#allocation3] sm:$0xff] %vm808, %v1417
        %1513 = vst.msk [vmem:[#allocation3 + $0x8] sm:$0xff] %vm808, %v1419
        %1514 = vst.msk [vmem:[#allocation3 + $0x10] sm:$0xff] %vm808, %v1421
        %1515 = vst.msk [vmem:[#allocation3 + $0x18] sm:$0xff] %vm808, %v1423
        %1516 = vst.msk [vmem:[#allocation3 + $0x20] sm:$0xff] %vm808, %v1425
        %1517 = vst.msk [vmem:[#allocation3 + $0x28] sm:$0xff] %vm808, %v1427
        %1518 = vst.msk [vmem:[#allocation3 + $0x30] sm:$0xff] %vm808, %v1429
        %1519 = vst.msk [vmem:[#allocation3 + $0x38] sm:$0xff] %vm808, %v1431
        %1520 = vst.msk [vmem:[#allocation3 + $0x40] sm:$0xff] %vm808, %v1433
        %1521 = vst.msk [vmem:[#allocation3 + $0x48] sm:$0xff] %vm808, %v1435
        %1522 = vst.msk [vmem:[#allocation3 + $0x50] sm:$0xff] %vm808, %v1437
        %1523 = vst.msk [vmem:[#allocation3 + $0x58] sm:$0xff] %vm808, %v1439
        %1524 = vst.msk [vmem:[#allocation3 + $0x60] sm:$0xff] %vm808, %v1441
        %1525 = vst.msk [vmem:[#allocation3 + $0x68] sm:$0xff] %vm808, %v1443
        %1526 = vst.msk [vmem:[#allocation3 + $0x70] sm:$0xff] %vm808, %v1445
        %1527 = vst.msk [vmem:[#allocation3 + $0x78] sm:$0xff] %vm808, %v1447
        %1528 = vst.msk [vmem:[#allocation3 + $0x80] sm:$0xff] %vm808, %v1449
        %1529 = vst.msk [vmem:[#allocation3 + $0x88] sm:$0xff] %vm808, %v1451
        %1530 = vst.msk [vmem:[#allocation3 + $0x90] sm:$0xff] %vm808, %v1453
        %1531 = vst.msk [vmem:[#allocation3 + $0x98] sm:$0xff] %vm808, %v1455
        %1532 = vst.msk [vmem:[#allocation3 + $0xa0] sm:$0xff] %vm808, %v1457
        %1533 = vst.msk [vmem:[#allocation3 + $0xa8] sm:$0xff] %vm808, %v1459
        %1534 = vst.msk [vmem:[#allocation3 + $0xb0] sm:$0xff] %vm808, %v1461
        %1535 = vst.msk [vmem:[#allocation3 + $0xb8] sm:$0xff] %vm808, %v1463
        %1536 = vst.msk [vmem:[#allocation3 + $0xc0] sm:$0xff] %vm808, %v1465
        %1537 = vst.msk [vmem:[#allocation3 + $0xc8] sm:$0xff] %vm808, %v1467
        %1538 = vst.msk [vmem:[#allocation3 + $0xd0] sm:$0xff] %vm808, %v1469
        %1539 = vst.msk [vmem:[#allocation3 + $0xd8] sm:$0xff] %vm808, %v1471
        %1540 = vst.msk [vmem:[#allocation3 + $0xe0] sm:$0xff] %vm808, %v1473
        %1541 = vst.msk [vmem:[#allocation3 + $0xe8] sm:$0xff] %vm808, %v1475
        %1542 = vst.msk [vmem:[#allocation3 + $0xf0] sm:$0xff] %vm808, %v1477
        %1543 = vst.msk [vmem:[#allocation3 + $0xf8] sm:$0xff] %vm808, %v1479
        %1544 = vst.msk [vmem:[#allocation6] sm:$0xff] %vm808, -1e+30
        %vm1545 = vcmask 58368
        %1546 = vst.msk [vmem:[#allocation6 + $0x8] sm:$0x3] %vm1545, -1e+30
        %1547 = vst.msk [vmem:[#allocation6 + $0xa0] sm:$0xff] %vm808, -1e+30
        %1548 = vst.msk [vmem:[#allocation6 + $0xa8] sm:$0x3] %vm1545, -1e+30
        %1549 = vst.msk [vmem:[#allocation6 + $0x140] sm:$0xff] %vm808, -1e+30
        %1550 = vst.msk [vmem:[#allocation6 + $0x148] sm:$0x3] %vm1545, -1e+30
        %1551 = vst.msk [vmem:[#allocation6 + $0x1e0] sm:$0xff] %vm808, -1e+30
        %1552 = vst.msk [vmem:[#allocation6 + $0x1e8] sm:$0x3] %vm1545, -1e+30
        %s1553 = scalar_lea.vmem [#allocation6], 144
        %1554 = vst.msk [vmem:[%s1553] sm:$0xff] %vm808, -1e+30
        %1555 = vst.msk [vmem:[%s1553 + $0x8] sm:$0x3] %vm1545, -1e+30
        %1556 = vst.msk [vmem:[%s1553 + $0xa0] sm:$0xff] %vm808, -1e+30
        %1557 = vst.msk [vmem:[%s1553 + $0xa8] sm:$0x3] %vm1545, -1e+30
        %1558 = vst.msk [vmem:[%s1553 + $0x140] sm:$0xff] %vm808, -1e+30
        %1559 = vst.msk [vmem:[%s1553 + $0x148] sm:$0x3] %vm1545, -1e+30
        %1560 = vst.msk [vmem:[%s1553 + $0x1e0] sm:$0xff] %vm808, -1e+30
        %1561 = vst.msk [vmem:[%s1553 + $0x1e8] sm:$0x3] %vm1545, -1e+30
        %vm1562 = vcmask 57344
        %1563 = vst.msk [vmem:[#allocation6] sm:$0x1] %vm1562, -1e+30
        %1564 = vst.msk [vmem:[#allocation6 + $0x10] sm:$0x1] %vm1562, -1e+30
        %1565 = vst.msk [vmem:[#allocation6 + $0x20] sm:$0x1] %vm1562, -1e+30
        %1566 = vst.msk [vmem:[#allocation6 + $0x30] sm:$0x1] %vm1562, -1e+30
        %1567 = vst.msk [vmem:[#allocation6 + $0x40] sm:$0x1] %vm1562, -1e+30
        %1568 = vst.msk [vmem:[#allocation6 + $0x50] sm:$0x1] %vm1562, -1e+30
        %1569 = vst.msk [vmem:[#allocation6 + $0x60] sm:$0x1] %vm1562, -1e+30
        %1570 = vst.msk [vmem:[#allocation6 + $0x70] sm:$0x1] %vm1562, -1e+30
        %1571 = vst.msk [vmem:[#allocation6 + $0x80] sm:$0x1] %vm1562, -1e+30
        %1572 = vst.msk [vmem:[#allocation6 + $0x90] sm:$0x1] %vm1562, -1e+30
        %1573 = vst.msk [vmem:[#allocation6 + $0xa0] sm:$0x1] %vm1562, -1e+30
        %1574 = vst.msk [vmem:[#allocation6 + $0xb0] sm:$0x1] %vm1562, -1e+30
        %1575 = vst.msk [vmem:[#allocation6 + $0xc0] sm:$0x1] %vm1562, -1e+30
        %1576 = vst.msk [vmem:[#allocation6 + $0xd0] sm:$0x1] %vm1562, -1e+30
        %1577 = vst.msk [vmem:[#allocation6 + $0xe0] sm:$0x1] %vm1562, -1e+30
        %1578 = vst.msk [vmem:[#allocation6 + $0xf0] sm:$0x1] %vm1562, -1e+30
        %1579 = vst.msk [vmem:[#allocation6 + $0x100] sm:$0x1] %vm1562, -1e+30
        %1580 = vst.msk [vmem:[#allocation6 + $0x110] sm:$0x1] %vm1562, -1e+30
        %1581 = vst.msk [vmem:[#allocation6 + $0x120] sm:$0x1] %vm1562, -1e+30
        %1582 = vst.msk [vmem:[#allocation6 + $0x130] sm:$0x1] %vm1562, -1e+30
        %1583 = vst.msk [vmem:[#allocation6 + $0x140] sm:$0x1] %vm1562, -1e+30
        %1584 = vst.msk [vmem:[#allocation6 + $0x150] sm:$0x1] %vm1562, -1e+30
        %1585 = vst.msk [vmem:[#allocation6 + $0x160] sm:$0x1] %vm1562, -1e+30
        %1586 = vst.msk [vmem:[#allocation6 + $0x170] sm:$0x1] %vm1562, -1e+30
        %1587 = vst.msk [vmem:[#allocation6 + $0x180] sm:$0x1] %vm1562, -1e+30
        %1588 = vst.msk [vmem:[#allocation6 + $0x190] sm:$0x1] %vm1562, -1e+30
        %1589 = vst.msk [vmem:[#allocation6 + $0x1a0] sm:$0x1] %vm1562, -1e+30
        %1590 = vst.msk [vmem:[#allocation6 + $0x1b0] sm:$0x1] %vm1562, -1e+30
        %1591 = vst.msk [vmem:[#allocation6 + $0x1c0] sm:$0x1] %vm1562, -1e+30
        %1592 = vst.msk [vmem:[#allocation6 + $0x1d0] sm:$0x1] %vm1562, -1e+30
        %1593 = vst.msk [vmem:[#allocation6 + $0x1e0] sm:$0x1] %vm1562, -1e+30
        %1594 = vst.msk [vmem:[#allocation6 + $0x1f0] sm:$0x1] %vm1562, -1e+30
        %1595 = vst.msk [vmem:[#allocation6 + $0x200] sm:$0x1] %vm1562, -1e+30
        %1596 = vst.msk [vmem:[#allocation6 + $0x210] sm:$0x1] %vm1562, -1e+30
        %1597 = vst.msk [vmem:[#allocation6 + $0x220] sm:$0x1] %vm1562, -1e+30
        %1598 = vst.msk [vmem:[#allocation6 + $0x230] sm:$0x1] %vm1562, -1e+30
        %1599 = vst.msk [vmem:[#allocation6 + $0x240] sm:$0x1] %vm1562, -1e+30
        %1600 = vst.msk [vmem:[#allocation6 + $0x250] sm:$0x1] %vm1562, -1e+30
        %1601 = vst.msk [vmem:[#allocation6 + $0x260] sm:$0x1] %vm1562, -1e+30
        %1602 = vst.msk [vmem:[#allocation6 + $0x270] sm:$0x1] %vm1562, -1e+30
        %1603 = vst.msk [vmem:[#allocation6 + $0x9] sm:$0x1] %vm1562, -1e+30
        %1604 = vst.msk [vmem:[#allocation6 + $0x19] sm:$0x1] %vm1562, -1e+30
        %1605 = vst.msk [vmem:[#allocation6 + $0x29] sm:$0x1] %vm1562, -1e+30
        %1606 = vst.msk [vmem:[#allocation6 + $0x39] sm:$0x1] %vm1562, -1e+30
        %1607 = vst.msk [vmem:[#allocation6 + $0x49] sm:$0x1] %vm1562, -1e+30
        %1608 = vst.msk [vmem:[#allocation6 + $0x59] sm:$0x1] %vm1562, -1e+30
        %1609 = vst.msk [vmem:[#allocation6 + $0x69] sm:$0x1] %vm1562, -1e+30
        %1610 = vst.msk [vmem:[#allocation6 + $0x79] sm:$0x1] %vm1562, -1e+30
        %1611 = vst.msk [vmem:[#allocation6 + $0x89] sm:$0x1] %vm1562, -1e+30
        %1612 = vst.msk [vmem:[#allocation6 + $0x99] sm:$0x1] %vm1562, -1e+30
        %1613 = vst.msk [vmem:[#allocation6 + $0xa9] sm:$0x1] %vm1562, -1e+30
        %1614 = vst.msk [vmem:[#allocation6 + $0xb9] sm:$0x1] %vm1562, -1e+30
        %1615 = vst.msk [vmem:[#allocation6 + $0xc9] sm:$0x1] %vm1562, -1e+30
        %1616 = vst.msk [vmem:[#allocation6 + $0xd9] sm:$0x1] %vm1562, -1e+30
        %1617 = vst.msk [vmem:[#allocation6 + $0xe9] sm:$0x1] %vm1562, -1e+30
        %1618 = vst.msk [vmem:[#allocation6 + $0xf9] sm:$0x1] %vm1562, -1e+30
        %1619 = vst.msk [vmem:[#allocation6 + $0x109] sm:$0x1] %vm1562, -1e+30
        %1620 = vst.msk [vmem:[#allocation6 + $0x119] sm:$0x1] %vm1562, -1e+30
        %1621 = vst.msk [vmem:[#allocation6 + $0x129] sm:$0x1] %vm1562, -1e+30
        %1622 = vst.msk [vmem:[#allocation6 + $0x139] sm:$0x1] %vm1562, -1e+30
        %1623 = vst.msk [vmem:[#allocation6 + $0x149] sm:$0x1] %vm1562, -1e+30
        %1624 = vst.msk [vmem:[#allocation6 + $0x159] sm:$0x1] %vm1562, -1e+30
        %1625 = vst.msk [vmem:[#allocation6 + $0x169] sm:$0x1] %vm1562, -1e+30
        %1626 = vst.msk [vmem:[#allocation6 + $0x179] sm:$0x1] %vm1562, -1e+30
        %1627 = vst.msk [vmem:[#allocation6 + $0x189] sm:$0x1] %vm1562, -1e+30
        %1628 = vst.msk [vmem:[#allocation6 + $0x199] sm:$0x1] %vm1562, -1e+30
        %1629 = vst.msk [vmem:[#allocation6 + $0x1a9] sm:$0x1] %vm1562, -1e+30
        %1630 = vst.msk [vmem:[#allocation6 + $0x1b9] sm:$0x1] %vm1562, -1e+30
        %1631 = vst.msk [vmem:[#allocation6 + $0x1c9] sm:$0x1] %vm1562, -1e+30
        %1632 = vst.msk [vmem:[#allocation6 + $0x1d9] sm:$0x1] %vm1562, -1e+30
        %1633 = vst.msk [vmem:[#allocation6 + $0x1e9] sm:$0x1] %vm1562, -1e+30
        %1634 = vst.msk [vmem:[#allocation6 + $0x1f9] sm:$0x1] %vm1562, -1e+30
        %1635 = vst.msk [vmem:[#allocation6 + $0x209] sm:$0x1] %vm1562, -1e+30
        %1636 = vst.msk [vmem:[#allocation6 + $0x219] sm:$0x1] %vm1562, -1e+30
        %1637 = vst.msk [vmem:[#allocation6 + $0x229] sm:$0x1] %vm1562, -1e+30
        %1638 = vst.msk [vmem:[#allocation6 + $0x239] sm:$0x1] %vm1562, -1e+30
        %1639 = vst.msk [vmem:[#allocation6 + $0x249] sm:$0x1] %vm1562, -1e+30
        %1640 = vst.msk [vmem:[#allocation6 + $0x259] sm:$0x1] %vm1562, -1e+30
        %1641 = vst.msk [vmem:[#allocation6 + $0x269] sm:$0x1] %vm1562, -1e+30
        %1642 = vst.msk [vmem:[#allocation6 + $0x279] sm:$0x1] %vm1562, -1e+30
        %s1643 = scalar_lea.vmem [#allocation6], 16
        %1644 = vst.msk [vmem:[%s1643 + $0x1] sm:$0xff] %vm808, %v775
        %1645 = vst.msk [vmem:[%s1643 + $0x11] sm:$0xff] %vm808, %v776
        %1646 = vst.msk [vmem:[%s1643 + $0x21] sm:$0xff] %vm808, %v777
        %1647 = vst.msk [vmem:[%s1643 + $0x31] sm:$0xff] %vm808, %v778
        %1648 = vst.msk [vmem:[%s1643 + $0x41] sm:$0xff] %vm808, %v779
        %1649 = vst.msk [vmem:[%s1643 + $0x51] sm:$0xff] %vm808, %v780
        %1650 = vst.msk [vmem:[%s1643 + $0x61] sm:$0xff] %vm808, %v781
        %1651 = vst.msk [vmem:[%s1643 + $0x71] sm:$0xff] %vm808, %v782
        %1652 = vst.msk [vmem:[%s1643 + $0xa1] sm:$0xff] %vm808, %v783
        %1653 = vst.msk [vmem:[%s1643 + $0xb1] sm:$0xff] %vm808, %v784
        %1654 = vst.msk [vmem:[%s1643 + $0xc1] sm:$0xff] %vm808, %v785
        %1655 = vst.msk [vmem:[%s1643 + $0xd1] sm:$0xff] %vm808, %v786
        %1656 = vst.msk [vmem:[%s1643 + $0xe1] sm:$0xff] %vm808, %v787
        %1657 = vst.msk [vmem:[%s1643 + $0xf1] sm:$0xff] %vm808, %v788
        %1658 = vst.msk [vmem:[%s1643 + $0x101] sm:$0xff] %vm808, %v789
        %1659 = vst.msk [vmem:[%s1643 + $0x111] sm:$0xff] %vm808, %v790
        %1660 = vst.msk [vmem:[%s1643 + $0x141] sm:$0xff] %vm808, %v791
        %1661 = vst.msk [vmem:[%s1643 + $0x151] sm:$0xff] %vm808, %v792
        %1662 = vst.msk [vmem:[%s1643 + $0x161] sm:$0xff] %vm808, %v793
        %1663 = vst.msk [vmem:[%s1643 + $0x171] sm:$0xff] %vm808, %v794
        %1664 = vst.msk [vmem:[%s1643 + $0x181] sm:$0xff] %vm808, %v795
        %1665 = vst.msk [vmem:[%s1643 + $0x191] sm:$0xff] %vm808, %v796
        %1666 = vst.msk [vmem:[%s1643 + $0x1a1] sm:$0xff] %vm808, %v797
        %1667 = vst.msk [vmem:[%s1643 + $0x1b1] sm:$0xff] %vm808, %v798
        %1668 = vst.msk [vmem:[%s1643 + $0x1e1] sm:$0xff] %vm808, %v799
        %1669 = vst.msk [vmem:[%s1643 + $0x1f1] sm:$0xff] %vm808, %v800
        %1670 = vst.msk [vmem:[%s1643 + $0x201] sm:$0xff] %vm808, %v801
        %1671 = vst.msk [vmem:[%s1643 + $0x211] sm:$0xff] %vm808, %v802
        %1672 = vst.msk [vmem:[%s1643 + $0x221] sm:$0xff] %vm808, %v803
        %1673 = vst.msk [vmem:[%s1643 + $0x231] sm:$0xff] %vm808, %v804
        %1674 = vst.msk [vmem:[%s1643 + $0x241] sm:$0xff] %vm808, %v805
        %1675 = vst.msk [vmem:[%s1643 + $0x251] sm:$0xff] %vm808, %v806
        %p1676 = scmp.eq.s32.totalorder %s47, 0
        // Predicated region
        $region125: #{tpu_custom_call.1} parent=99 // pred_check
          %p1677 = pneg %p1676
        $region126: #{tpu_custom_call.1} parent=99 // pred_check_branch
          %1679 = sbr.rel (%p1677) target = $region128
        $region127: #{tpu_custom_call.1} parent=99 // pred_region
          %1680 = vst.msk [vmem:[#allocation2] sm:$0xff] %vm808, 0.0
          %1681 = vst.msk [vmem:[#allocation2 + $0x8] sm:$0xff] %vm808, 0.0
          %1682 = vst.msk [vmem:[#allocation2 + $0x10] sm:$0xff] %vm808, 0.0
          %1683 = vst.msk [vmem:[#allocation2 + $0x18] sm:$0xff] %vm808, 0.0
          %1684 = vst.msk [vmem:[#allocation2 + $0x20] sm:$0xff] %vm808, 0.0
          %1685 = vst.msk [vmem:[#allocation2 + $0x28] sm:$0xff] %vm808, 0.0
          %1686 = vst.msk [vmem:[#allocation2 + $0x30] sm:$0xff] %vm808, 0.0
          %1687 = vst.msk [vmem:[#allocation2 + $0x38] sm:$0xff] %vm808, 0.0
          %1688 = vst.msk [vmem:[#allocation3] sm:$0xff] %vm808, 0.0
          %1689 = vst.msk [vmem:[#allocation3 + $0x8] sm:$0xff] %vm808, 0.0
          %1690 = vst.msk [vmem:[#allocation3 + $0x10] sm:$0xff] %vm808, 0.0
          %1691 = vst.msk [vmem:[#allocation3 + $0x18] sm:$0xff] %vm808, 0.0
          %1692 = vst.msk [vmem:[#allocation3 + $0x20] sm:$0xff] %vm808, 0.0
          %1693 = vst.msk [vmem:[#allocation3 + $0x28] sm:$0xff] %vm808, 0.0
          %1694 = vst.msk [vmem:[#allocation3 + $0x30] sm:$0xff] %vm808, 0.0
          %1695 = vst.msk [vmem:[#allocation3 + $0x38] sm:$0xff] %vm808, 0.0
          %1696 = vst.msk [vmem:[#allocation6] sm:$0xff] %vm808, -1e+30
          %1697 = vst.msk [vmem:[#allocation6 + $0x8] sm:$0x3] %vm1545, -1e+30
          %1698 = vst.msk [vmem:[#allocation6 + $0x10] sm:$0xff] %vm808, -1e+30
          %1699 = vst.msk [vmem:[#allocation6 + $0x18] sm:$0x3] %vm1545, -1e+30
          %1700 = vst.msk [vmem:[#allocation6 + $0x20] sm:$0xff] %vm808, -1e+30
          %1701 = vst.msk [vmem:[#allocation6 + $0x28] sm:$0x3] %vm1545, -1e+30
          %1702 = vst.msk [vmem:[#allocation6 + $0x30] sm:$0xff] %vm808, -1e+30
          %1703 = vst.msk [vmem:[#allocation6 + $0x38] sm:$0x3] %vm1545, -1e+30
          %1704 = vst.msk [vmem:[#allocation6 + $0x40] sm:$0xff] %vm808, -1e+30
          %1705 = vst.msk [vmem:[#allocation6 + $0x48] sm:$0x3] %vm1545, -1e+30
          %1706 = vst.msk [vmem:[#allocation6 + $0x50] sm:$0xff] %vm808, -1e+30
          %1707 = vst.msk [vmem:[#allocation6 + $0x58] sm:$0x3] %vm1545, -1e+30
          %1708 = vst.msk [vmem:[#allocation6 + $0x60] sm:$0xff] %vm808, -1e+30
          %1709 = vst.msk [vmem:[#allocation6 + $0x68] sm:$0x3] %vm1545, -1e+30
          %1710 = vst.msk [vmem:[#allocation6 + $0x70] sm:$0xff] %vm808, -1e+30
          %1711 = vst.msk [vmem:[#allocation6 + $0x78] sm:$0x3] %vm1545, -1e+30
          %1712 = vst.msk [vmem:[#allocation6 + $0x80] sm:$0xff] %vm808, -1e+30
          %1713 = vst.msk [vmem:[#allocation6 + $0x88] sm:$0x3] %vm1545, -1e+30
          %1714 = vst.msk [vmem:[#allocation6 + $0x90] sm:$0xff] %vm808, -1e+30
          %1715 = vst.msk [vmem:[#allocation6 + $0x98] sm:$0x3] %vm1545, -1e+30
        $region128: #{tpu_custom_call.1} parent=99 // pred_fallthru
          _
        %p1716 = scmp.eq.s32.totalorder %s47, 1
        // Predicated region
        $region129: #{tpu_custom_call.1} parent=99 // pred_check
          %p1717 = pneg %p1716
        $region130: #{tpu_custom_call.1} parent=99 // pred_check_branch
          %1719 = sbr.rel (%p1717) target = $region132
        $region131: #{tpu_custom_call.1} parent=99 // pred_region
          %s1720 = scalar_lea.vmem [#allocation2], 192
          %1721 = vst.msk [vmem:[%s1720] sm:$0xff] %vm808, 0.0
          %1722 = vst.msk [vmem:[%s1720 + $0x8] sm:$0xff] %vm808, 0.0
          %1723 = vst.msk [vmem:[%s1720 + $0x10] sm:$0xff] %vm808, 0.0
          %1724 = vst.msk [vmem:[%s1720 + $0x18] sm:$0xff] %vm808, 0.0
          %1725 = vst.msk [vmem:[%s1720 + $0x20] sm:$0xff] %vm808, 0.0
          %1726 = vst.msk [vmem:[%s1720 + $0x28] sm:$0xff] %vm808, 0.0
          %1727 = vst.msk [vmem:[%s1720 + $0x30] sm:$0xff] %vm808, 0.0
          %1728 = vst.msk [vmem:[%s1720 + $0x38] sm:$0xff] %vm808, 0.0
          %s1729 = scalar_lea.vmem [#allocation3], 192
          %1730 = vst.msk [vmem:[%s1729] sm:$0xff] %vm808, 0.0
          %1731 = vst.msk [vmem:[%s1729 + $0x8] sm:$0xff] %vm808, 0.0
          %1732 = vst.msk [vmem:[%s1729 + $0x10] sm:$0xff] %vm808, 0.0
          %1733 = vst.msk [vmem:[%s1729 + $0x18] sm:$0xff] %vm808, 0.0
          %1734 = vst.msk [vmem:[%s1729 + $0x20] sm:$0xff] %vm808, 0.0
          %1735 = vst.msk [vmem:[%s1729 + $0x28] sm:$0xff] %vm808, 0.0
          %1736 = vst.msk [vmem:[%s1729 + $0x30] sm:$0xff] %vm808, 0.0
          %1737 = vst.msk [vmem:[%s1729 + $0x38] sm:$0xff] %vm808, 0.0
          %s1738 = scalar_lea.vmem [#allocation6], 480
          %1739 = vst.msk [vmem:[%s1738] sm:$0xff] %vm808, -1e+30
          %1740 = vst.msk [vmem:[%s1738 + $0x8] sm:$0x3] %vm1545, -1e+30
          %1741 = vst.msk [vmem:[%s1738 + $0x10] sm:$0xff] %vm808, -1e+30
          %1742 = vst.msk [vmem:[%s1738 + $0x18] sm:$0x3] %vm1545, -1e+30
          %1743 = vst.msk [vmem:[%s1738 + $0x20] sm:$0xff] %vm808, -1e+30
          %1744 = vst.msk [vmem:[%s1738 + $0x28] sm:$0x3] %vm1545, -1e+30
          %1745 = vst.msk [vmem:[%s1738 + $0x30] sm:$0xff] %vm808, -1e+30
          %1746 = vst.msk [vmem:[%s1738 + $0x38] sm:$0x3] %vm1545, -1e+30
          %1747 = vst.msk [vmem:[%s1738 + $0x40] sm:$0xff] %vm808, -1e+30
          %1748 = vst.msk [vmem:[%s1738 + $0x48] sm:$0x3] %vm1545, -1e+30
          %1749 = vst.msk [vmem:[%s1738 + $0x50] sm:$0xff] %vm808, -1e+30
          %1750 = vst.msk [vmem:[%s1738 + $0x58] sm:$0x3] %vm1545, -1e+30
          %1751 = vst.msk [vmem:[%s1738 + $0x60] sm:$0xff] %vm808, -1e+30
          %1752 = vst.msk [vmem:[%s1738 + $0x68] sm:$0x3] %vm1545, -1e+30
          %1753 = vst.msk [vmem:[%s1738 + $0x70] sm:$0xff] %vm808, -1e+30
          %1754 = vst.msk [vmem:[%s1738 + $0x78] sm:$0x3] %vm1545, -1e+30
          %1755 = vst.msk [vmem:[%s1738 + $0x80] sm:$0xff] %vm808, -1e+30
          %1756 = vst.msk [vmem:[%s1738 + $0x88] sm:$0x3] %vm1545, -1e+30
          %1757 = vst.msk [vmem:[%s1738 + $0x90] sm:$0xff] %vm808, -1e+30
          %1758 = vst.msk [vmem:[%s1738 + $0x98] sm:$0x3] %vm1545, -1e+30
        $region132: #{tpu_custom_call.1} parent=99 // pred_fallthru
          _
        %v1759 = vld [vmem:[#allocation2] sm:$0xff]
        %v1760 = vld [vmem:[#allocation2 + $0x8] sm:$0xff]
        %v1761 = vld [vmem:[#allocation2 + $0x10] sm:$0xff]
        %v1762 = vld [vmem:[#allocation2 + $0x18] sm:$0xff]
        %v1763 = vld [vmem:[#allocation2 + $0x20] sm:$0xff]
        %v1764 = vld [vmem:[#allocation2 + $0x28] sm:$0xff]
        %v1765 = vld [vmem:[#allocation2 + $0x30] sm:$0xff]
        %v1766 = vld [vmem:[#allocation2 + $0x38] sm:$0xff]
        %v1767 = vld [vmem:[#allocation2 + $0x40] sm:$0xff]
        %v1768 = vld [vmem:[#allocation2 + $0x48] sm:$0xff]
        %v1769 = vld [vmem:[#allocation2 + $0x50] sm:$0xff]
        %v1770 = vld [vmem:[#allocation2 + $0x58] sm:$0xff]
        %v1771 = vld [vmem:[#allocation2 + $0x60] sm:$0xff]
        %v1772 = vld [vmem:[#allocation2 + $0x68] sm:$0xff]
        %v1773 = vld [vmem:[#allocation2 + $0x70] sm:$0xff]
        %v1774 = vld [vmem:[#allocation2 + $0x78] sm:$0xff]
        %v1775 = vld [vmem:[#allocation13] sm:$0xff]
        %s1776 = scalar_lea.vmem [#allocation2], 64
        %v1777 = vld [vmem:[%s1776] sm:$0xff]
        %v1778 = vld [vmem:[%s1776 + $0x8] sm:$0xff]
        %v1779 = vld [vmem:[%s1776 + $0x10] sm:$0xff]
        %v1780 = vld [vmem:[%s1776 + $0x18] sm:$0xff]
        %v1781 = vld [vmem:[%s1776 + $0x20] sm:$0xff]
        %v1782 = vld [vmem:[%s1776 + $0x28] sm:$0xff]
        %v1783 = vld [vmem:[%s1776 + $0x30] sm:$0xff]
        %v1784 = vld [vmem:[%s1776 + $0x38] sm:$0xff]
        %v1785 = vld [vmem:[%s1776 + $0x40] sm:$0xff]
        %v1786 = vld [vmem:[%s1776 + $0x48] sm:$0xff]
        %v1787 = vld [vmem:[%s1776 + $0x50] sm:$0xff]
        %v1788 = vld [vmem:[%s1776 + $0x58] sm:$0xff]
        %v1789 = vld [vmem:[%s1776 + $0x60] sm:$0xff]
        %v1790 = vld [vmem:[%s1776 + $0x68] sm:$0xff]
        %v1791 = vld [vmem:[%s1776 + $0x70] sm:$0xff]
        %v1792 = vld [vmem:[%s1776 + $0x78] sm:$0xff]
        %s1793 = scalar_lea.vmem [#allocation13], 8
        %v1794 = vld [vmem:[%s1793] sm:$0xff]
        %v1796 = vsel %vm808, %v1777, 0
        %v1799 = vsel %vm808, %v1778, 0
        %v1802 = vsel %vm808, %v1779, 0
        %v1805 = vsel %vm808, %v1780, 0
        %v1808 = vsel %vm808, %v1781, 0
        %v1811 = vsel %vm808, %v1782, 0
        %v1814 = vsel %vm808, %v1783, 0
        %v1817 = vsel %vm808, %v1784, 0
        %v1820 = vsel %vm808, %v1785, 0
        %v1823 = vsel %vm808, %v1786, 0
        %v1826 = vsel %vm808, %v1787, 0
        %v1829 = vsel %vm808, %v1788, 0
        %v1832 = vsel %vm808, %v1789, 0
        %v1835 = vsel %vm808, %v1790, 0
        %v1838 = vsel %vm808, %v1791, 0
        %v1841 = vsel %vm808, %v1792, 0
        %1843 = vmatprep.subr.mxu0 0.0
        %1844 = vmatpush1.msra.mxu0 %v1794
        %1845 = vmatprep.subr.mxu0 0.0
        %1846 = vmatpush1.msra.mxu0 0.0
        %1847 = vmatprep.subr.mxu0 0.0
        %1848 = vmatpush1.msra.mxu0 0.0
        %1849 = vmatprep.subr.mxu0 0.0
        %1850 = vmatpush1.msra.mxu0 0.0
        %1851 = vmatprep.subr.mxu0 0.0
        %1852 = vmatpush1.msra.mxu0 0.0
        %1853 = vmatprep.subr.mxu0 0.0
        %1854 = vmatpush1.msra.mxu0 0.0
        %1855 = vmatprep.subr.mxu0 0.0
        %1856 = vmatpush1.msra.mxu0 0.0
        %1857 = vmatprep.subr.mxu0 0.0
        %1858 = vmatpush1.msra.mxu0 0.0
        %1859 = vmatprep.subr.mxu0 0.0
        %1860 = vmatpush1.msra.mxu0 0.0
        %1861 = vmatprep.subr.mxu0 0.0
        %1862 = vmatpush1.msra.mxu0 0.0
        %1863 = vmatprep.subr.mxu0 0.0
        %1864 = vmatpush1.msra.mxu0 0.0
        %1865 = vmatprep.subr.mxu0 0.0
        %1866 = vmatpush1.msra.mxu0 0.0
        %1867 = vmatprep.subr.mxu0 0.0
        %1868 = vmatpush1.msra.mxu0 0.0
        %1869 = vmatprep.subr.mxu0 0.0
        %1870 = vmatpush1.msra.mxu0 0.0
        %1871 = vmatprep.subr.mxu0 0.0
        %1872 = vmatpush1.msra.mxu0 0.0
        %1873 = vmatprep.subr.mxu0 0.0
        %1874 = vmatpush1.msra.mxu0 0.0
        %1875 = vmatprep.subr.mxu0 0.0
        %1876 = vmatpush1.msra.mxu0 0.0
        %1877 = vmatprep.subr.mxu0 0.0
        %1878 = vmatpush1.msra.mxu0 0.0
        %1879 = vmatprep.subr.mxu0 0.0
        %1880 = vmatpush1.msra.mxu0 0.0
        %1881 = vmatprep.subr.mxu0 0.0
        %1882 = vmatpush1.msra.mxu0 0.0
        %1883 = vmatprep.subr.mxu0 0.0
        %1884 = vmatpush1.msra.mxu0 0.0
        %1885 = vmatprep.subr.mxu0 0.0
        %1886 = vmatpush1.msra.mxu0 0.0
        %1887 = vmatprep.subr.mxu0 0.0
        %1888 = vmatpush1.msra.mxu0 0.0
        %1889 = vmatprep.subr.mxu0 0.0
        %1890 = vmatpush1.msra.mxu0 0.0
        %1891 = vmatprep.subr.mxu0 0.0
        %1892 = vmatpush1.msra.mxu0 0.0
        %1893 = vmatprep.subr.mxu0 0.0
        %1894 = vmatpush1.msra.mxu0 0.0
        %1895 = vmatprep.subr.mxu0 0.0
        %1896 = vmatpush1.msra.mxu0 0.0
        %1897 = vmatprep.subr.mxu0 0.0
        %1898 = vmatpush1.msra.mxu0 0.0
        %1899 = vmatprep.subr.mxu0 0.0
        %1900 = vmatpush1.msra.mxu0 0.0
        %1901 = vmatprep.subr.mxu0 0.0
        %1902 = vmatpush1.msra.mxu0 0.0
        %1903 = vmatprep.subr.mxu0 0.0
        %1904 = vmatpush1.msra.mxu0 0.0
        %1905 = vmatprep.subr.mxu0 0.0
        %1906 = vmatpush1.msra.mxu0 0.0
        %1907 = vmatprep.mubr.f32.mxu0 0.0
        %1908 = vmatmul.mubr.f32.gmra.mrb[0].mxu0 %v1796
        %v1909 = vpop.f32.mrb[0].mxu0
        %v1910 = vadd.f32 0.0, %v1909
        %v1911 = vpop.f32.mrb[0].mxu0
        %1912 = vmatprep.mubr.f32.mxu0 0.0
        %1913 = vmatmul.mubr.f32.gmra.mrb[0].mxu0 %v1799
        %v1914 = vpop.f32.mrb[0].mxu0
        %v1915 = vadd.f32 0.0, %v1914
        %v1916 = vpop.f32.mrb[0].mxu0
        %1917 = vmatprep.mubr.f32.mxu0 0.0
        %1918 = vmatmul.mubr.f32.gmra.mrb[0].mxu0 %v1802
        %v1919 = vpop.f32.mrb[0].mxu0
        %v1920 = vadd.f32 0.0, %v1919
        %v1921 = vpop.f32.mrb[0].mxu0
        %1922 = vmatprep.mubr.f32.mxu0 0.0
        %1923 = vmatmul.mubr.f32.gmra.mrb[0].mxu0 %v1805
        %v1924 = vpop.f32.mrb[0].mxu0
        %v1925 = vadd.f32 0.0, %v1924
        %v1926 = vpop.f32.mrb[0].mxu0
        %1927 = vmatprep.mubr.f32.mxu0 0.0
        %1928 = vmatmul.mubr.f32.gmra.mrb[0].mxu0 %v1808
        %v1929 = vpop.f32.mrb[0].mxu0
        %v1930 = vadd.f32 0.0, %v1929
        %v1931 = vpop.f32.mrb[0].mxu0
        %1932 = vmatprep.mubr.f32.mxu0 0.0
        %1933 = vmatmul.mubr.f32.gmra.mrb[0].mxu0 %v1811
        %v1934 = vpop.f32.mrb[0].mxu0
        %v1935 = vadd.f32 0.0, %v1934
        %v1936 = vpop.f32.mrb[0].mxu0
        %1937 = vmatprep.mubr.f32.mxu0 0.0
        %1938 = vmatmul.mubr.f32.gmra.mrb[0].mxu0 %v1814
        %v1939 = vpop.f32.mrb[0].mxu0
        %v1940 = vadd.f32 0.0, %v1939
        %v1941 = vpop.f32.mrb[0].mxu0
        %1942 = vmatprep.mubr.f32.mxu0 0.0
        %1943 = vmatmul.mubr.f32.gmra.mrb[0].mxu0 %v1817
        %v1944 = vpop.f32.mrb[0].mxu0
        %v1945 = vadd.f32 0.0, %v1944
        %v1946 = vpop.f32.mrb[0].mxu0
        %1947 = vmatprep.mubr.f32.mxu0 0.0
        %1948 = vmatmul.mubr.f32.gmra.mrb[0].mxu0 %v1820
        %v1949 = vpop.f32.mrb[0].mxu0
        %v1950 = vadd.f32 0.0, %v1949
        %v1951 = vpop.f32.mrb[0].mxu0
        %1952 = vmatprep.mubr.f32.mxu0 0.0
        %1953 = vmatmul.mubr.f32.gmra.mrb[0].mxu0 %v1823
        %v1954 = vpop.f32.mrb[0].mxu0
        %v1955 = vadd.f32 0.0, %v1954
        %v1956 = vpop.f32.mrb[0].mxu0
        %1957 = vmatprep.mubr.f32.mxu0 0.0
        %1958 = vmatmul.mubr.f32.gmra.mrb[0].mxu0 %v1826
        %v1959 = vpop.f32.mrb[0].mxu0
        %v1960 = vadd.f32 0.0, %v1959
        %v1961 = vpop.f32.mrb[0].mxu0
        %1962 = vmatprep.mubr.f32.mxu0 0.0
        %1963 = vmatmul.mubr.f32.gmra.mrb[0].mxu0 %v1829
        %v1964 = vpop.f32.mrb[0].mxu0
        %v1965 = vadd.f32 0.0, %v1964
        %v1966 = vpop.f32.mrb[0].mxu0
        %1967 = vmatprep.mubr.f32.mxu0 0.0
        %1968 = vmatmul.mubr.f32.gmra.mrb[0].mxu0 %v1832
        %v1969 = vpop.f32.mrb[0].mxu0
        %v1970 = vadd.f32 0.0, %v1969
        %v1971 = vpop.f32.mrb[0].mxu0
        %1972 = vmatprep.mubr.f32.mxu0 0.0
        %1973 = vmatmul.mubr.f32.gmra.mrb[0].mxu0 %v1835
        %v1974 = vpop.f32.mrb[0].mxu0
        %v1975 = vadd.f32 0.0, %v1974
        %v1976 = vpop.f32.mrb[0].mxu0
        %1977 = vmatprep.mubr.f32.mxu0 0.0
        %1978 = vmatmul.mubr.f32.gmra.mrb[0].mxu0 %v1838
        %v1979 = vpop.f32.mrb[0].mxu0
        %v1980 = vadd.f32 0.0, %v1979
        %v1981 = vpop.f32.mrb[0].mxu0
        %1982 = vmatprep.mubr.f32.mxu0 0.0
        %1983 = vmatmul.mubr.f32.gmra.mrb[0].mxu0 %v1841
        %v1984 = vpop.f32.mrb[0].mxu0
        %v1985 = vadd.f32 0.0, %v1984
        %v1986 = vpop.f32.mrb[0].mxu0
        %1987 = vdwg.mxu0
        %v1989 = vsel %vm808, %v1759, 0
        %v1992 = vsel %vm808, %v1760, 0
        %v1995 = vsel %vm808, %v1761, 0
        %v1998 = vsel %vm808, %v1762, 0
        %v2001 = vsel %vm808, %v1763, 0
        %v2004 = vsel %vm808, %v1764, 0
        %v2007 = vsel %vm808, %v1765, 0
        %v2010 = vsel %vm808, %v1766, 0
        %v2013 = vsel %vm808, %v1767, 0
        %v2016 = vsel %vm808, %v1768, 0
        %v2019 = vsel %vm808, %v1769, 0
        %v2022 = vsel %vm808, %v1770, 0
        %v2025 = vsel %vm808, %v1771, 0
        %v2028 = vsel %vm808, %v1772, 0
        %v2031 = vsel %vm808, %v1773, 0
        %v2034 = vsel %vm808, %v1774, 0
        %2036 = vmatprep.subr.mxu0 0.0
        %2037 = vmatpush1.msra.mxu0 %v1775
        %2038 = vmatprep.subr.mxu0 0.0
        %2039 = vmatpush1.msra.mxu0 0.0
        %2040 = vmatprep.subr.mxu0 0.0
        %2041 = vmatpush1.msra.mxu0 0.0
        %2042 = vmatprep.subr.mxu0 0.0
        %2043 = vmatpush1.msra.mxu0 0.0
        %2044 = vmatprep.subr.mxu0 0.0
        %2045 = vmatpush1.msra.mxu0 0.0
        %2046 = vmatprep.subr.mxu0 0.0
        %2047 = vmatpush1.msra.mxu0 0.0
        %2048 = vmatprep.subr.mxu0 0.0
        %2049 = vmatpush1.msra.mxu0 0.0
        %2050 = vmatprep.subr.mxu0 0.0
        %2051 = vmatpush1.msra.mxu0 0.0
        %2052 = vmatprep.subr.mxu0 0.0
        %2053 = vmatpush1.msra.mxu0 0.0
        %2054 = vmatprep.subr.mxu0 0.0
        %2055 = vmatpush1.msra.mxu0 0.0
        %2056 = vmatprep.subr.mxu0 0.0
        %2057 = vmatpush1.msra.mxu0 0.0
        %2058 = vmatprep.subr.mxu0 0.0
        %2059 = vmatpush1.msra.mxu0 0.0
        %2060 = vmatprep.subr.mxu0 0.0
        %2061 = vmatpush1.msra.mxu0 0.0
        %2062 = vmatprep.subr.mxu0 0.0
        %2063 = vmatpush1.msra.mxu0 0.0
        %2064 = vmatprep.subr.mxu0 0.0
        %2065 = vmatpush1.msra.mxu0 0.0
        %2066 = vmatprep.subr.mxu0 0.0
        %2067 = vmatpush1.msra.mxu0 0.0
        %2068 = vmatprep.subr.mxu0 0.0
        %2069 = vmatpush1.msra.mxu0 0.0
        %2070 = vmatprep.subr.mxu0 0.0
        %2071 = vmatpush1.msra.mxu0 0.0
        %2072 = vmatprep.subr.mxu0 0.0
        %2073 = vmatpush1.msra.mxu0 0.0
        %2074 = vmatprep.subr.mxu0 0.0
        %2075 = vmatpush1.msra.mxu0 0.0
        %2076 = vmatprep.subr.mxu0 0.0
        %2077 = vmatpush1.msra.mxu0 0.0
        %2078 = vmatprep.subr.mxu0 0.0
        %2079 = vmatpush1.msra.mxu0 0.0
        %2080 = vmatprep.subr.mxu0 0.0
        %2081 = vmatpush1.msra.mxu0 0.0
        %2082 = vmatprep.subr.mxu0 0.0
        %2083 = vmatpush1.msra.mxu0 0.0
        %2084 = vmatprep.subr.mxu0 0.0
        %2085 = vmatpush1.msra.mxu0 0.0
        %2086 = vmatprep.subr.mxu0 0.0
        %2087 = vmatpush1.msra.mxu0 0.0
        %2088 = vmatprep.subr.mxu0 0.0
        %2089 = vmatpush1.msra.mxu0 0.0
        %2090 = vmatprep.subr.mxu0 0.0
        %2091 = vmatpush1.msra.mxu0 0.0
        %2092 = vmatprep.subr.mxu0 0.0
        %2093 = vmatpush1.msra.mxu0 0.0
        %2094 = vmatprep.subr.mxu0 0.0
        %2095 = vmatpush1.msra.mxu0 0.0
        %2096 = vmatprep.subr.mxu0 0.0
        %2097 = vmatpush1.msra.mxu0 0.0
        %2098 = vmatprep.subr.mxu0 0.0
        %2099 = vmatpush1.msra.mxu0 0.0
        %2100 = vmatprep.mubr.f32.mxu0 0.0
        %2101 = vmatmul.mubr.f32.gmra.mrb[0].mxu0 %v1989
        %v2102 = vpop.f32.mrb[0].mxu0
        %v2103 = vadd.f32 %v1910, %v2102
        %v2104 = vpop.f32.mrb[0].mxu0
        %2105 = vmatprep.mubr.f32.mxu0 0.0
        %2106 = vmatmul.mubr.f32.gmra.mrb[0].mxu0 %v1992
        %v2107 = vpop.f32.mrb[0].mxu0
        %v2108 = vadd.f32 %v1915, %v2107
        %v2109 = vpop.f32.mrb[0].mxu0
        %2110 = vmatprep.mubr.f32.mxu0 0.0
        %2111 = vmatmul.mubr.f32.gmra.mrb[0].mxu0 %v1995
        %v2112 = vpop.f32.mrb[0].mxu0
        %v2113 = vadd.f32 %v1920, %v2112
        %v2114 = vpop.f32.mrb[0].mxu0
        %2115 = vmatprep.mubr.f32.mxu0 0.0
        %2116 = vmatmul.mubr.f32.gmra.mrb[0].mxu0 %v1998
        %v2117 = vpop.f32.mrb[0].mxu0
        %v2118 = vadd.f32 %v1925, %v2117
        %v2119 = vpop.f32.mrb[0].mxu0
        %2120 = vmatprep.mubr.f32.mxu0 0.0
        %2121 = vmatmul.mubr.f32.gmra.mrb[0].mxu0 %v2001
        %v2122 = vpop.f32.mrb[0].mxu0
        %v2123 = vadd.f32 %v1930, %v2122
        %v2124 = vpop.f32.mrb[0].mxu0
        %2125 = vmatprep.mubr.f32.mxu0 0.0
        %2126 = vmatmul.mubr.f32.gmra.mrb[0].mxu0 %v2004
        %v2127 = vpop.f32.mrb[0].mxu0
        %v2128 = vadd.f32 %v1935, %v2127
        %v2129 = vpop.f32.mrb[0].mxu0
        %2130 = vmatprep.mubr.f32.mxu0 0.0
        %2131 = vmatmul.mubr.f32.gmra.mrb[0].mxu0 %v2007
        %v2132 = vpop.f32.mrb[0].mxu0
        %v2133 = vadd.f32 %v1940, %v2132
        %v2134 = vpop.f32.mrb[0].mxu0
        %2135 = vmatprep.mubr.f32.mxu0 0.0
        %2136 = vmatmul.mubr.f32.gmra.mrb[0].mxu0 %v2010
        %v2137 = vpop.f32.mrb[0].mxu0
        %v2138 = vadd.f32 %v1945, %v2137
        %v2139 = vpop.f32.mrb[0].mxu0
        %2140 = vmatprep.mubr.f32.mxu0 0.0
        %2141 = vmatmul.mubr.f32.gmra.mrb[0].mxu0 %v2013
        %v2142 = vpop.f32.mrb[0].mxu0
        %v2143 = vadd.f32 %v1950, %v2142
        %v2144 = vpop.f32.mrb[0].mxu0
        %2145 = vmatprep.mubr.f32.mxu0 0.0
        %2146 = vmatmul.mubr.f32.gmra.mrb[0].mxu0 %v2016
        %v2147 = vpop.f32.mrb[0].mxu0
        %v2148 = vadd.f32 %v1955, %v2147
        %v2149 = vpop.f32.mrb[0].mxu0
        %2150 = vmatprep.mubr.f32.mxu0 0.0
        %2151 = vmatmul.mubr.f32.gmra.mrb[0].mxu0 %v2019
        %v2152 = vpop.f32.mrb[0].mxu0
        %v2153 = vadd.f32 %v1960, %v2152
        %v2154 = vpop.f32.mrb[0].mxu0
        %2155 = vmatprep.mubr.f32.mxu0 0.0
        %2156 = vmatmul.mubr.f32.gmra.mrb[0].mxu0 %v2022
        %v2157 = vpop.f32.mrb[0].mxu0
        %v2158 = vadd.f32 %v1965, %v2157
        %v2159 = vpop.f32.mrb[0].mxu0
        %2160 = vmatprep.mubr.f32.mxu0 0.0
        %2161 = vmatmul.mubr.f32.gmra.mrb[0].mxu0 %v2025
        %v2162 = vpop.f32.mrb[0].mxu0
        %v2163 = vadd.f32 %v1970, %v2162
        %v2164 = vpop.f32.mrb[0].mxu0
        %2165 = vmatprep.mubr.f32.mxu0 0.0
        %2166 = vmatmul.mubr.f32.gmra.mrb[0].mxu0 %v2028
        %v2167 = vpop.f32.mrb[0].mxu0
        %v2168 = vadd.f32 %v1975, %v2167
        %v2169 = vpop.f32.mrb[0].mxu0
        %2170 = vmatprep.mubr.f32.mxu0 0.0
        %2171 = vmatmul.mubr.f32.gmra.mrb[0].mxu0 %v2031
        %v2172 = vpop.f32.mrb[0].mxu0
        %v2173 = vadd.f32 %v1980, %v2172
        %v2174 = vpop.f32.mrb[0].mxu0
        %2175 = vmatprep.mubr.f32.mxu0 0.0
        %2176 = vmatmul.mubr.f32.gmra.mrb[0].mxu0 %v2034
        %v2177 = vpop.f32.mrb[0].mxu0
        %v2178 = vadd.f32 %v1985, %v2177
        %v2179 = vpop.f32.mrb[0].mxu0
        %2180 = vdwg.mxu0
        %s2181 = scalar_lea.vmem [#allocation2], 128
        %v2182 = vld [vmem:[%s2181] sm:$0xff]
        %v2183 = vld [vmem:[%s2181 + $0x8] sm:$0xff]
        %v2184 = vld [vmem:[%s2181 + $0x10] sm:$0xff]
        %v2185 = vld [vmem:[%s2181 + $0x18] sm:$0xff]
        %v2186 = vld [vmem:[%s2181 + $0x20] sm:$0xff]
        %v2187 = vld [vmem:[%s2181 + $0x28] sm:$0xff]
        %v2188 = vld [vmem:[%s2181 + $0x30] sm:$0xff]
        %v2189 = vld [vmem:[%s2181 + $0x38] sm:$0xff]
        %v2190 = vld [vmem:[%s2181 + $0x40] sm:$0xff]
        %v2191 = vld [vmem:[%s2181 + $0x48] sm:$0xff]
        %v2192 = vld [vmem:[%s2181 + $0x50] sm:$0xff]
        %v2193 = vld [vmem:[%s2181 + $0x58] sm:$0xff]
        %v2194 = vld [vmem:[%s2181 + $0x60] sm:$0xff]
        %v2195 = vld [vmem:[%s2181 + $0x68] sm:$0xff]
        %v2196 = vld [vmem:[%s2181 + $0x70] sm:$0xff]
        %v2197 = vld [vmem:[%s2181 + $0x78] sm:$0xff]
        %s2198 = scalar_lea.vmem [#allocation13], 16
        %v2199 = vld [vmem:[%s2198] sm:$0xff]
        %v2201 = vsel %vm808, %v2182, 0
        %v2204 = vsel %vm808, %v2183, 0
        %v2207 = vsel %vm808, %v2184, 0
        %v2210 = vsel %vm808, %v2185, 0
        %v2213 = vsel %vm808, %v2186, 0
        %v2216 = vsel %vm808, %v2187, 0
        %v2219 = vsel %vm808, %v2188, 0
        %v2222 = vsel %vm808, %v2189, 0
        %v2225 = vsel %vm808, %v2190, 0
        %v2228 = vsel %vm808, %v2191, 0
        %v2231 = vsel %vm808, %v2192, 0
        %v2234 = vsel %vm808, %v2193, 0
        %v2237 = vsel %vm808, %v2194, 0
        %v2240 = vsel %vm808, %v2195, 0
        %v2243 = vsel %vm808, %v2196, 0
        %v2246 = vsel %vm808, %v2197, 0
        %2248 = vmatprep.subr.mxu0 0.0
        %2249 = vmatpush1.msra.mxu0 %v2199
        %2250 = vmatprep.subr.mxu0 0.0
        %2251 = vmatpush1.msra.mxu0 0.0
        %2252 = vmatprep.subr.mxu0 0.0
        %2253 = vmatpush1.msra.mxu0 0.0
        %2254 = vmatprep.subr.mxu0 0.0
        %2255 = vmatpush1.msra.mxu0 0.0
        %2256 = vmatprep.subr.mxu0 0.0
        %2257 = vmatpush1.msra.mxu0 0.0
        %2258 = vmatprep.subr.mxu0 0.0
        %2259 = vmatpush1.msra.mxu0 0.0
        %2260 = vmatprep.subr.mxu0 0.0
        %2261 = vmatpush1.msra.mxu0 0.0
        %2262 = vmatprep.subr.mxu0 0.0
        %2263 = vmatpush1.msra.mxu0 0.0
        %2264 = vmatprep.subr.mxu0 0.0
        %2265 = vmatpush1.msra.mxu0 0.0
        %2266 = vmatprep.subr.mxu0 0.0
        %2267 = vmatpush1.msra.mxu0 0.0
        %2268 = vmatprep.subr.mxu0 0.0
        %2269 = vmatpush1.msra.mxu0 0.0
        %2270 = vmatprep.subr.mxu0 0.0
        %2271 = vmatpush1.msra.mxu0 0.0
        %2272 = vmatprep.subr.mxu0 0.0
        %2273 = vmatpush1.msra.mxu0 0.0
        %2274 = vmatprep.subr.mxu0 0.0
        %2275 = vmatpush1.msra.mxu0 0.0
        %2276 = vmatprep.subr.mxu0 0.0
        %2277 = vmatpush1.msra.mxu0 0.0
        %2278 = vmatprep.subr.mxu0 0.0
        %2279 = vmatpush1.msra.mxu0 0.0
        %2280 = vmatprep.subr.mxu0 0.0
        %2281 = vmatpush1.msra.mxu0 0.0
        %2282 = vmatprep.subr.mxu0 0.0
        %2283 = vmatpush1.msra.mxu0 0.0
        %2284 = vmatprep.subr.mxu0 0.0
        %2285 = vmatpush1.msra.mxu0 0.0
        %2286 = vmatprep.subr.mxu0 0.0
        %2287 = vmatpush1.msra.mxu0 0.0
        %2288 = vmatprep.subr.mxu0 0.0
        %2289 = vmatpush1.msra.mxu0 0.0
        %2290 = vmatprep.subr.mxu0 0.0
        %2291 = vmatpush1.msra.mxu0 0.0
        %2292 = vmatprep.subr.mxu0 0.0
        %2293 = vmatpush1.msra.mxu0 0.0
        %2294 = vmatprep.subr.mxu0 0.0
        %2295 = vmatpush1.msra.mxu0 0.0
        %2296 = vmatprep.subr.mxu0 0.0
        %2297 = vmatpush1.msra.mxu0 0.0
        %2298 = vmatprep.subr.mxu0 0.0
        %2299 = vmatpush1.msra.mxu0 0.0
        %2300 = vmatprep.subr.mxu0 0.0
        %2301 = vmatpush1.msra.mxu0 0.0
        %2302 = vmatprep.subr.mxu0 0.0
        %2303 = vmatpush1.msra.mxu0 0.0
        %2304 = vmatprep.subr.mxu0 0.0
        %2305 = vmatpush1.msra.mxu0 0.0
        %2306 = vmatprep.subr.mxu0 0.0
        %2307 = vmatpush1.msra.mxu0 0.0
        %2308 = vmatprep.subr.mxu0 0.0
        %2309 = vmatpush1.msra.mxu0 0.0
        %2310 = vmatprep.subr.mxu0 0.0
        %2311 = vmatpush1.msra.mxu0 0.0
        %2312 = vmatprep.mubr.f32.mxu0 0.0
        %2313 = vmatmul.mubr.f32.gmra.mrb[0].mxu0 %v2201
        %v2314 = vpop.f32.mrb[0].mxu0
        %v2315 = vadd.f32 0.0, %v2314
        %v2316 = vpop.f32.mrb[0].mxu0
        %2317 = vmatprep.mubr.f32.mxu0 0.0
        %2318 = vmatmul.mubr.f32.gmra.mrb[0].mxu0 %v2204
        %v2319 = vpop.f32.mrb[0].mxu0
        %v2320 = vadd.f32 0.0, %v2319
        %v2321 = vpop.f32.mrb[0].mxu0
        %2322 = vmatprep.mubr.f32.mxu0 0.0
        %2323 = vmatmul.mubr.f32.gmra.mrb[0].mxu0 %v2207
        %v2324 = vpop.f32.mrb[0].mxu0
        %v2325 = vadd.f32 0.0, %v2324
        %v2326 = vpop.f32.mrb[0].mxu0
        %2327 = vmatprep.mubr.f32.mxu0 0.0
        %2328 = vmatmul.mubr.f32.gmra.mrb[0].mxu0 %v2210
        %v2329 = vpop.f32.mrb[0].mxu0
        %v2330 = vadd.f32 0.0, %v2329
        %v2331 = vpop.f32.mrb[0].mxu0
        %2332 = vmatprep.mubr.f32.mxu0 0.0
        %2333 = vmatmul.mubr.f32.gmra.mrb[0].mxu0 %v2213
        %v2334 = vpop.f32.mrb[0].mxu0
        %v2335 = vadd.f32 0.0, %v2334
        %v2336 = vpop.f32.mrb[0].mxu0
        %2337 = vmatprep.mubr.f32.mxu0 0.0
        %2338 = vmatmul.mubr.f32.gmra.mrb[0].mxu0 %v2216
        %v2339 = vpop.f32.mrb[0].mxu0
        %v2340 = vadd.f32 0.0, %v2339
        %v2341 = vpop.f32.mrb[0].mxu0
        %2342 = vmatprep.mubr.f32.mxu0 0.0
        %2343 = vmatmul.mubr.f32.gmra.mrb[0].mxu0 %v2219
        %v2344 = vpop.f32.mrb[0].mxu0
        %v2345 = vadd.f32 0.0, %v2344
        %v2346 = vpop.f32.mrb[0].mxu0
        %2347 = vmatprep.mubr.f32.mxu0 0.0
        %2348 = vmatmul.mubr.f32.gmra.mrb[0].mxu0 %v2222
        %v2349 = vpop.f32.mrb[0].mxu0
        %v2350 = vadd.f32 0.0, %v2349
        %v2351 = vpop.f32.mrb[0].mxu0
        %2352 = vmatprep.mubr.f32.mxu0 0.0
        %2353 = vmatmul.mubr.f32.gmra.mrb[0].mxu0 %v2225
        %v2354 = vpop.f32.mrb[0].mxu0
        %v2355 = vadd.f32 0.0, %v2354
        %v2356 = vpop.f32.mrb[0].mxu0
        %2357 = vmatprep.mubr.f32.mxu0 0.0
        %2358 = vmatmul.mubr.f32.gmra.mrb[0].mxu0 %v2228
        %v2359 = vpop.f32.mrb[0].mxu0
        %v2360 = vadd.f32 0.0, %v2359
        %v2361 = vpop.f32.mrb[0].mxu0
        %2362 = vmatprep.mubr.f32.mxu0 0.0
        %2363 = vmatmul.mubr.f32.gmra.mrb[0].mxu0 %v2231
        %v2364 = vpop.f32.mrb[0].mxu0
        %v2365 = vadd.f32 0.0, %v2364
        %v2366 = vpop.f32.mrb[0].mxu0
        %2367 = vmatprep.mubr.f32.mxu0 0.0
        %2368 = vmatmul.mubr.f32.gmra.mrb[0].mxu0 %v2234
        %v2369 = vpop.f32.mrb[0].mxu0
        %v2370 = vadd.f32 0.0, %v2369
        %v2371 = vpop.f32.mrb[0].mxu0
        %2372 = vmatprep.mubr.f32.mxu0 0.0
        %2373 = vmatmul.mubr.f32.gmra.mrb[0].mxu0 %v2237
        %v2374 = vpop.f32.mrb[0].mxu0
        %v2375 = vadd.f32 0.0, %v2374
        %v2376 = vpop.f32.mrb[0].mxu0
        %2377 = vmatprep.mubr.f32.mxu0 0.0
        %2378 = vmatmul.mubr.f32.gmra.mrb[0].mxu0 %v2240
        %v2379 = vpop.f32.mrb[0].mxu0
        %v2380 = vadd.f32 0.0, %v2379
        %v2381 = vpop.f32.mrb[0].mxu0
        %2382 = vmatprep.mubr.f32.mxu0 0.0
        %2383 = vmatmul.mubr.f32.gmra.mrb[0].mxu0 %v2243
        %v2384 = vpop.f32.mrb[0].mxu0
        %v2385 = vadd.f32 0.0, %v2384
        %v2386 = vpop.f32.mrb[0].mxu0
        %2387 = vmatprep.mubr.f32.mxu0 0.0
        %2388 = vmatmul.mubr.f32.gmra.mrb[0].mxu0 %v2246
        %v2389 = vpop.f32.mrb[0].mxu0
        %v2390 = vadd.f32 0.0, %v2389
        %v2391 = vpop.f32.mrb[0].mxu0
        %2392 = vdwg.mxu0
        %v2393 = vadd.f32 %v2103, %v2315
        %v2394 = vadd.f32 %v2108, %v2320
        %v2395 = vadd.f32 %v2113, %v2325
        %v2396 = vadd.f32 %v2118, %v2330
        %v2397 = vadd.f32 %v2123, %v2335
        %v2398 = vadd.f32 %v2128, %v2340
        %v2399 = vadd.f32 %v2133, %v2345
        %v2400 = vadd.f32 %v2138, %v2350
        %v2401 = vadd.f32 %v2143, %v2355
        %v2402 = vadd.f32 %v2148, %v2360
        %v2403 = vadd.f32 %v2153, %v2365
        %v2404 = vadd.f32 %v2158, %v2370
        %v2405 = vadd.f32 %v2163, %v2375
        %v2406 = vadd.f32 %v2168, %v2380
        %v2407 = vadd.f32 %v2173, %v2385
        %v2408 = vadd.f32 %v2178, %v2390
        %v2409 = vld [vmem:[%s6] sm:$0x1]
        %v2411 = vlaneseq
        %v2412 = vshrl.u32 %v2411, 7
        %v2413 = vsub.s32 0, %v2412
        %v2414 = vrot.slane %v2409, %v2413
        %v2416 = vmul.f32 %v2393, %v2414
        %v2417 = vmul.f32 %v2394, %v2414
        %v2418 = vmul.f32 %v2395, %v2414
        %v2419 = vmul.f32 %v2396, %v2414
        %v2420 = vmul.f32 %v2397, %v2414
        %v2421 = vmul.f32 %v2398, %v2414
        %v2422 = vmul.f32 %v2399, %v2414
        %v2423 = vmul.f32 %v2400, %v2414
        %v2424 = vmul.f32 %v2401, %v2414
        %v2425 = vmul.f32 %v2402, %v2414
        %v2426 = vmul.f32 %v2403, %v2414
        %v2427 = vmul.f32 %v2404, %v2414
        %v2428 = vmul.f32 %v2405, %v2414
        %v2429 = vmul.f32 %v2406, %v2414
        %v2430 = vmul.f32 %v2407, %v2414
        %v2431 = vmul.f32 %v2408, %v2414
        %v2432 = vld [vmem:[%s7] sm:$0x1]
        %v2434 = vlaneseq
        %v2435 = vshrl.u32 %v2434, 7
        %v2436 = vsub.s32 0, %v2435
        %v2437 = vrot.slane %v2432, %v2436
        %v2439 = vadd.f32 %v2416, %v2437
        %v2440 = vadd.f32 %v2417, %v2437
        %v2441 = vadd.f32 %v2418, %v2437
        %v2442 = vadd.f32 %v2419, %v2437
        %v2443 = vadd.f32 %v2420, %v2437
        %v2444 = vadd.f32 %v2421, %v2437
        %v2445 = vadd.f32 %v2422, %v2437
        %v2446 = vadd.f32 %v2423, %v2437
        %v2447 = vadd.f32 %v2424, %v2437
        %v2448 = vadd.f32 %v2425, %v2437
        %v2449 = vadd.f32 %v2426, %v2437
        %v2450 = vadd.f32 %v2427, %v2437
        %v2451 = vadd.f32 %v2428, %v2437
        %v2452 = vadd.f32 %v2429, %v2437
        %v2453 = vadd.f32 %v2430, %v2437
        %v2454 = vadd.f32 %v2431, %v2437
        %v2455 = vmax.f32 %v2439, 0.0
        %v2456 = vmax.f32 %v2440, 0.0
        %v2457 = vmax.f32 %v2441, 0.0
        %v2458 = vmax.f32 %v2442, 0.0
        %v2459 = vmax.f32 %v2443, 0.0
        %v2460 = vmax.f32 %v2444, 0.0
        %v2461 = vmax.f32 %v2445, 0.0
        %v2462 = vmax.f32 %v2446, 0.0
        %v2463 = vmax.f32 %v2447, 0.0
        %v2464 = vmax.f32 %v2448, 0.0
        %v2465 = vmax.f32 %v2449, 0.0
        %v2466 = vmax.f32 %v2450, 0.0
        %v2467 = vmax.f32 %v2451, 0.0
        %v2468 = vmax.f32 %v2452, 0.0
        %v2469 = vmax.f32 %v2453, 0.0
        %v2470 = vmax.f32 %v2454, 0.0
        %vm2471 = vcmask 130048
        %2472 = vst.msk [vmem:[#allocation4] sm:$0xff] %vm2471, 0.0
        %vm2473 = vcmask 123904
        %2474 = vst.msk [vmem:[#allocation4 + $0x8] sm:$0x3] %vm2473, 0.0
        %2475 = vst.msk [vmem:[#allocation4 + $0xa0] sm:$0xff] %vm2471, 0.0
        %2476 = vst.msk [vmem:[#allocation4 + $0xa8] sm:$0x3] %vm2473, 0.0
        %s2477 = scalar_lea.vmem [#allocation4], 144
        %2478 = vst.msk [vmem:[%s2477] sm:$0xff] %vm2471, 0.0
        %2479 = vst.msk [vmem:[%s2477 + $0x8] sm:$0x3] %vm2473, 0.0
        %2480 = vst.msk [vmem:[%s2477 + $0xa0] sm:$0xff] %vm2471, 0.0
        %2481 = vst.msk [vmem:[%s2477 + $0xa8] sm:$0x3] %vm2473, 0.0
        %vm2482 = vcmask 122880
        %2483 = vst.msk [vmem:[#allocation4] sm:$0x1] %vm2482, 0.0
        %2484 = vst.msk [vmem:[#allocation4 + $0x10] sm:$0x1] %vm2482, 0.0
        %2485 = vst.msk [vmem:[#allocation4 + $0x20] sm:$0x1] %vm2482, 0.0
        %2486 = vst.msk [vmem:[#allocation4 + $0x30] sm:$0x1] %vm2482, 0.0
        %2487 = vst.msk [vmem:[#allocation4 + $0x40] sm:$0x1] %vm2482, 0.0
        %2488 = vst.msk [vmem:[#allocation4 + $0x50] sm:$0x1] %vm2482, 0.0
        %2489 = vst.msk [vmem:[#allocation4 + $0x60] sm:$0x1] %vm2482, 0.0
        %2490 = vst.msk [vmem:[#allocation4 + $0x70] sm:$0x1] %vm2482, 0.0
        %2491 = vst.msk [vmem:[#allocation4 + $0x80] sm:$0x1] %vm2482, 0.0
        %2492 = vst.msk [vmem:[#allocation4 + $0x90] sm:$0x1] %vm2482, 0.0
        %2493 = vst.msk [vmem:[#allocation4 + $0xa0] sm:$0x1] %vm2482, 0.0
        %2494 = vst.msk [vmem:[#allocation4 + $0xb0] sm:$0x1] %vm2482, 0.0
        %2495 = vst.msk [vmem:[#allocation4 + $0xc0] sm:$0x1] %vm2482, 0.0
        %2496 = vst.msk [vmem:[#allocation4 + $0xd0] sm:$0x1] %vm2482, 0.0
        %2497 = vst.msk [vmem:[#allocation4 + $0xe0] sm:$0x1] %vm2482, 0.0
        %2498 = vst.msk [vmem:[#allocation4 + $0xf0] sm:$0x1] %vm2482, 0.0
        %2499 = vst.msk [vmem:[#allocation4 + $0x100] sm:$0x1] %vm2482, 0.0
        %2500 = vst.msk [vmem:[#allocation4 + $0x110] sm:$0x1] %vm2482, 0.0
        %2501 = vst.msk [vmem:[#allocation4 + $0x120] sm:$0x1] %vm2482, 0.0
        %2502 = vst.msk [vmem:[#allocation4 + $0x130] sm:$0x1] %vm2482, 0.0
        %2503 = vst.msk [vmem:[#allocation4 + $0x9] sm:$0x1] %vm2482, 0.0
        %2504 = vst.msk [vmem:[#allocation4 + $0x19] sm:$0x1] %vm2482, 0.0
        %2505 = vst.msk [vmem:[#allocation4 + $0x29] sm:$0x1] %vm2482, 0.0
        %2506 = vst.msk [vmem:[#allocation4 + $0x39] sm:$0x1] %vm2482, 0.0
        %2507 = vst.msk [vmem:[#allocation4 + $0x49] sm:$0x1] %vm2482, 0.0
        %2508 = vst.msk [vmem:[#allocation4 + $0x59] sm:$0x1] %vm2482, 0.0
        %2509 = vst.msk [vmem:[#allocation4 + $0x69] sm:$0x1] %vm2482, 0.0
        %2510 = vst.msk [vmem:[#allocation4 + $0x79] sm:$0x1] %vm2482, 0.0
        %2511 = vst.msk [vmem:[#allocation4 + $0x89] sm:$0x1] %vm2482, 0.0
        %2512 = vst.msk [vmem:[#allocation4 + $0x99] sm:$0x1] %vm2482, 0.0
        %2513 = vst.msk [vmem:[#allocation4 + $0xa9] sm:$0x1] %vm2482, 0.0
        %2514 = vst.msk [vmem:[#allocation4 + $0xb9] sm:$0x1] %vm2482, 0.0
        %2515 = vst.msk [vmem:[#allocation4 + $0xc9] sm:$0x1] %vm2482, 0.0
        %2516 = vst.msk [vmem:[#allocation4 + $0xd9] sm:$0x1] %vm2482, 0.0
        %2517 = vst.msk [vmem:[#allocation4 + $0xe9] sm:$0x1] %vm2482, 0.0
        %2518 = vst.msk [vmem:[#allocation4 + $0xf9] sm:$0x1] %vm2482, 0.0
        %2519 = vst.msk [vmem:[#allocation4 + $0x109] sm:$0x1] %vm2482, 0.0
        %2520 = vst.msk [vmem:[#allocation4 + $0x119] sm:$0x1] %vm2482, 0.0
        %2521 = vst.msk [vmem:[#allocation4 + $0x129] sm:$0x1] %vm2482, 0.0
        %2522 = vst.msk [vmem:[#allocation4 + $0x139] sm:$0x1] %vm2482, 0.0
        %s2523 = scalar_lea.vmem [#allocation4], 16
        %2524 = vst.msk [vmem:[%s2523 + $0x1] sm:$0xff] %vm2471, %v2455
        %2525 = vst.msk [vmem:[%s2523 + $0x11] sm:$0xff] %vm2471, %v2456
        %2526 = vst.msk [vmem:[%s2523 + $0x21] sm:$0xff] %vm2471, %v2457
        %2527 = vst.msk [vmem:[%s2523 + $0x31] sm:$0xff] %vm2471, %v2458
        %2528 = vst.msk [vmem:[%s2523 + $0x41] sm:$0xff] %vm2471, %v2459
        %2529 = vst.msk [vmem:[%s2523 + $0x51] sm:$0xff] %vm2471, %v2460
        %2530 = vst.msk [vmem:[%s2523 + $0x61] sm:$0xff] %vm2471, %v2461
        %2531 = vst.msk [vmem:[%s2523 + $0x71] sm:$0xff] %vm2471, %v2462
        %2532 = vst.msk [vmem:[%s2523 + $0xa1] sm:$0xff] %vm2471, %v2463
        %2533 = vst.msk [vmem:[%s2523 + $0xb1] sm:$0xff] %vm2471, %v2464
        %2534 = vst.msk [vmem:[%s2523 + $0xc1] sm:$0xff] %vm2471, %v2465
        %2535 = vst.msk [vmem:[%s2523 + $0xd1] sm:$0xff] %vm2471, %v2466
        %2536 = vst.msk [vmem:[%s2523 + $0xe1] sm:$0xff] %vm2471, %v2467
        %2537 = vst.msk [vmem:[%s2523 + $0xf1] sm:$0xff] %vm2471, %v2468
        %2538 = vst.msk [vmem:[%s2523 + $0x101] sm:$0xff] %vm2471, %v2469
        %2539 = vst.msk [vmem:[%s2523 + $0x111] sm:$0xff] %vm2471, %v2470
        %v2540 = vld [vmem:[#allocation4] sm:$0xff]
        %v2541 = vld [vmem:[#allocation4 + $0x10] sm:$0xff]
        %v2542 = vld [vmem:[#allocation4 + $0x20] sm:$0xff]
        %v2543 = vld [vmem:[#allocation4 + $0x30] sm:$0xff]
        %v2544 = vld [vmem:[#allocation4 + $0x40] sm:$0xff]
        %v2545 = vld [vmem:[#allocation4 + $0x50] sm:$0xff]
        %v2546 = vld [vmem:[#allocation4 + $0x60] sm:$0xff]
        %v2547 = vld [vmem:[#allocation4 + $0x70] sm:$0xff]
        %v2548 = vld [vmem:[#allocation4 + $0xa0] sm:$0xff]
        %v2549 = vld [vmem:[#allocation4 + $0xb0] sm:$0xff]
        %v2550 = vld [vmem:[#allocation4 + $0xc0] sm:$0xff]
        %v2551 = vld [vmem:[#allocation4 + $0xd0] sm:$0xff]
        %v2552 = vld [vmem:[#allocation4 + $0xe0] sm:$0xff]
        %v2553 = vld [vmem:[#allocation4 + $0xf0] sm:$0xff]
        %v2554 = vld [vmem:[#allocation4 + $0x100] sm:$0xff]
        %v2555 = vld [vmem:[#allocation4 + $0x110] sm:$0xff]
        %v2556 = vld [vmem:[#allocation15] sm:$0xff]
        %v2557 = vld [vmem:[#allocation15 + $0x8] sm:$0xff]
        %v2558 = vld [vmem:[#allocation4 + $0x1] sm:$0xff]
        %v2559 = vld [vmem:[#allocation4 + $0x11] sm:$0xff]
        %v2560 = vld [vmem:[#allocation4 + $0x21] sm:$0xff]
        %v2561 = vld [vmem:[#allocation4 + $0x31] sm:$0xff]
        %v2562 = vld [vmem:[#allocation4 + $0x41] sm:$0xff]
        %v2563 = vld [vmem:[#allocation4 + $0x51] sm:$0xff]
        %v2564 = vld [vmem:[#allocation4 + $0x61] sm:$0xff]
        %v2565 = vld [vmem:[#allocation4 + $0x71] sm:$0xff]
        %v2566 = vld [vmem:[#allocation4 + $0xa1] sm:$0xff]
        %v2567 = vld [vmem:[#allocation4 + $0xb1] sm:$0xff]
        %v2568 = vld [vmem:[#allocation4 + $0xc1] sm:$0xff]
        %v2569 = vld [vmem:[#allocation4 + $0xd1] sm:$0xff]
        %v2570 = vld [vmem:[#allocation4 + $0xe1] sm:$0xff]
        %v2571 = vld [vmem:[#allocation4 + $0xf1] sm:$0xff]
        %v2572 = vld [vmem:[#allocation4 + $0x101] sm:$0xff]
        %v2573 = vld [vmem:[#allocation4 + $0x111] sm:$0xff]
        %s2574 = scalar_lea.vmem [#allocation15], 16
        %v2575 = vld [vmem:[%s2574] sm:$0xff]
        %v2576 = vld [vmem:[%s2574 + $0x8] sm:$0xff]
        %v2578 = vsel %vm2471, %v2558, 0
        %v2581 = vsel %vm2471, %v2559, 0
        %v2584 = vsel %vm2471, %v2560, 0
        %v2587 = vsel %vm2471, %v2561, 0
        %v2590 = vsel %vm2471, %v2562, 0
        %v2593 = vsel %vm2471, %v2563, 0
        %v2596 = vsel %vm2471, %v2564, 0
        %v2599 = vsel %vm2471, %v2565, 0
        %v2602 = vsel %vm2471, %v2566, 0
        %v2605 = vsel %vm2471, %v2567, 0
        %v2608 = vsel %vm2471, %v2568, 0
        %v2611 = vsel %vm2471, %v2569, 0
        %v2614 = vsel %vm2471, %v2570, 0
        %v2617 = vsel %vm2471, %v2571, 0
        %v2620 = vsel %vm2471, %v2572, 0
        %v2623 = vsel %vm2471, %v2573, 0
        %2625 = vmatprep.subr.mxu0 0.0
        %2626 = vmatpush1.msra.mxu0 %v2575
        %2627 = vmatprep.subr.mxu0 0.0
        %2628 = vmatpush1.msra.mxu0 %v2576
        %2629 = vmatprep.subr.mxu0 0.0
        %2630 = vmatpush1.msra.mxu0 0.0
        %2631 = vmatprep.subr.mxu0 0.0
        %2632 = vmatpush1.msra.mxu0 0.0
        %2633 = vmatprep.subr.mxu0 0.0
        %2634 = vmatpush1.msra.mxu0 0.0
        %2635 = vmatprep.subr.mxu0 0.0
        %2636 = vmatpush1.msra.mxu0 0.0
        %2637 = vmatprep.subr.mxu0 0.0
        %2638 = vmatpush1.msra.mxu0 0.0
        %2639 = vmatprep.subr.mxu0 0.0
        %2640 = vmatpush1.msra.mxu0 0.0
        %2641 = vmatprep.subr.mxu0 0.0
        %2642 = vmatpush1.msra.mxu0 0.0
        %2643 = vmatprep.subr.mxu0 0.0
        %2644 = vmatpush1.msra.mxu0 0.0
        %2645 = vmatprep.subr.mxu0 0.0
        %2646 = vmatpush1.msra.mxu0 0.0
        %2647 = vmatprep.subr.mxu0 0.0
        %2648 = vmatpush1.msra.mxu0 0.0
        %2649 = vmatprep.subr.mxu0 0.0
        %2650 = vmatpush1.msra.mxu0 0.0
        %2651 = vmatprep.subr.mxu0 0.0
        %2652 = vmatpush1.msra.mxu0 0.0
        %2653 = vmatprep.subr.mxu0 0.0
        %2654 = vmatpush1.msra.mxu0 0.0
        %2655 = vmatprep.subr.mxu0 0.0
        %2656 = vmatpush1.msra.mxu0 0.0
        %2657 = vmatprep.subr.mxu0 0.0
        %2658 = vmatpush1.msra.mxu0 0.0
        %2659 = vmatprep.subr.mxu0 0.0
        %2660 = vmatpush1.msra.mxu0 0.0
        %2661 = vmatprep.subr.mxu0 0.0
        %2662 = vmatpush1.msra.mxu0 0.0
        %2663 = vmatprep.subr.mxu0 0.0
        %2664 = vmatpush1.msra.mxu0 0.0
        %2665 = vmatprep.subr.mxu0 0.0
        %2666 = vmatpush1.msra.mxu0 0.0
        %2667 = vmatprep.subr.mxu0 0.0
        %2668 = vmatpush1.msra.mxu0 0.0
        %2669 = vmatprep.subr.mxu0 0.0
        %2670 = vmatpush1.msra.mxu0 0.0
        %2671 = vmatprep.subr.mxu0 0.0
        %2672 = vmatpush1.msra.mxu0 0.0
        %2673 = vmatprep.subr.mxu0 0.0
        %2674 = vmatpush1.msra.mxu0 0.0
        %2675 = vmatprep.subr.mxu0 0.0
        %2676 = vmatpush1.msra.mxu0 0.0
        %2677 = vmatprep.subr.mxu0 0.0
        %2678 = vmatpush1.msra.mxu0 0.0
        %2679 = vmatprep.subr.mxu0 0.0
        %2680 = vmatpush1.msra.mxu0 0.0
        %2681 = vmatprep.subr.mxu0 0.0
        %2682 = vmatpush1.msra.mxu0 0.0
        %2683 = vmatprep.subr.mxu0 0.0
        %2684 = vmatpush1.msra.mxu0 0.0
        %2685 = vmatprep.subr.mxu0 0.0
        %2686 = vmatpush1.msra.mxu0 0.0
        %2687 = vmatprep.subr.mxu0 0.0
        %2688 = vmatpush1.msra.mxu0 0.0
        %2689 = vmatprep.mubr.f32.mxu0 0.0
        %2690 = vmatmul.mubr.f32.gmra.mrb[0].mxu0 %v2578
        %v2691 = vpop.f32.mrb[0].mxu0
        %v2692 = vadd.f32 0.0, %v2691
        %v2693 = vpop.f32.mrb[0].mxu0
        %2694 = vmatprep.mubr.f32.mxu0 0.0
        %2695 = vmatmul.mubr.f32.gmra.mrb[0].mxu0 %v2581
        %v2696 = vpop.f32.mrb[0].mxu0
        %v2697 = vadd.f32 0.0, %v2696
        %v2698 = vpop.f32.mrb[0].mxu0
        %2699 = vmatprep.mubr.f32.mxu0 0.0
        %2700 = vmatmul.mubr.f32.gmra.mrb[0].mxu0 %v2584
        %v2701 = vpop.f32.mrb[0].mxu0
        %v2702 = vadd.f32 0.0, %v2701
        %v2703 = vpop.f32.mrb[0].mxu0
        %2704 = vmatprep.mubr.f32.mxu0 0.0
        %2705 = vmatmul.mubr.f32.gmra.mrb[0].mxu0 %v2587
        %v2706 = vpop.f32.mrb[0].mxu0
        %v2707 = vadd.f32 0.0, %v2706
        %v2708 = vpop.f32.mrb[0].mxu0
        %2709 = vmatprep.mubr.f32.mxu0 0.0
        %2710 = vmatmul.mubr.f32.gmra.mrb[0].mxu0 %v2590
        %v2711 = vpop.f32.mrb[0].mxu0
        %v2712 = vadd.f32 0.0, %v2711
        %v2713 = vpop.f32.mrb[0].mxu0
        %2714 = vmatprep.mubr.f32.mxu0 0.0
        %2715 = vmatmul.mubr.f32.gmra.mrb[0].mxu0 %v2593
        %v2716 = vpop.f32.mrb[0].mxu0
        %v2717 = vadd.f32 0.0, %v2716
        %v2718 = vpop.f32.mrb[0].mxu0
        %2719 = vmatprep.mubr.f32.mxu0 0.0
        %2720 = vmatmul.mubr.f32.gmra.mrb[0].mxu0 %v2596
        %v2721 = vpop.f32.mrb[0].mxu0
        %v2722 = vadd.f32 0.0, %v2721
        %v2723 = vpop.f32.mrb[0].mxu0
        %2724 = vmatprep.mubr.f32.mxu0 0.0
        %2725 = vmatmul.mubr.f32.gmra.mrb[0].mxu0 %v2599
        %v2726 = vpop.f32.mrb[0].mxu0
        %v2727 = vadd.f32 0.0, %v2726
        %v2728 = vpop.f32.mrb[0].mxu0
        %2729 = vmatprep.mubr.f32.mxu0 0.0
        %2730 = vmatmul.mubr.f32.gmra.mrb[0].mxu0 %v2602
        %v2731 = vpop.f32.mrb[0].mxu0
        %v2732 = vadd.f32 0.0, %v2731
        %v2733 = vpop.f32.mrb[0].mxu0
        %2734 = vmatprep.mubr.f32.mxu0 0.0
        %2735 = vmatmul.mubr.f32.gmra.mrb[0].mxu0 %v2605
        %v2736 = vpop.f32.mrb[0].mxu0
        %v2737 = vadd.f32 0.0, %v2736
        %v2738 = vpop.f32.mrb[0].mxu0
        %2739 = vmatprep.mubr.f32.mxu0 0.0
        %2740 = vmatmul.mubr.f32.gmra.mrb[0].mxu0 %v2608
        %v2741 = vpop.f32.mrb[0].mxu0
        %v2742 = vadd.f32 0.0, %v2741
        %v2743 = vpop.f32.mrb[0].mxu0
        %2744 = vmatprep.mubr.f32.mxu0 0.0
        %2745 = vmatmul.mubr.f32.gmra.mrb[0].mxu0 %v2611
        %v2746 = vpop.f32.mrb[0].mxu0
        %v2747 = vadd.f32 0.0, %v2746
        %v2748 = vpop.f32.mrb[0].mxu0
        %2749 = vmatprep.mubr.f32.mxu0 0.0
        %2750 = vmatmul.mubr.f32.gmra.mrb[0].mxu0 %v2614
        %v2751 = vpop.f32.mrb[0].mxu0
        %v2752 = vadd.f32 0.0, %v2751
        %v2753 = vpop.f32.mrb[0].mxu0
        %2754 = vmatprep.mubr.f32.mxu0 0.0
        %2755 = vmatmul.mubr.f32.gmra.mrb[0].mxu0 %v2617
        %v2756 = vpop.f32.mrb[0].mxu0
        %v2757 = vadd.f32 0.0, %v2756
        %v2758 = vpop.f32.mrb[0].mxu0
        %2759 = vmatprep.mubr.f32.mxu0 0.0
        %2760 = vmatmul.mubr.f32.gmra.mrb[0].mxu0 %v2620
        %v2761 = vpop.f32.mrb[0].mxu0
        %v2762 = vadd.f32 0.0, %v2761
        %v2763 = vpop.f32.mrb[0].mxu0
        %2764 = vmatprep.mubr.f32.mxu0 0.0
        %2765 = vmatmul.mubr.f32.gmra.mrb[0].mxu0 %v2623
        %v2766 = vpop.f32.mrb[0].mxu0
        %v2767 = vadd.f32 0.0, %v2766
        %v2768 = vpop.f32.mrb[0].mxu0
        %2769 = vdwg.mxu0
        %v2771 = vsel %vm2471, %v2540, 0
        %v2774 = vsel %vm2471, %v2541, 0
        %v2777 = vsel %vm2471, %v2542, 0
        %v2780 = vsel %vm2471, %v2543, 0
        %v2783 = vsel %vm2471, %v2544, 0
        %v2786 = vsel %vm2471, %v2545, 0
        %v2789 = vsel %vm2471, %v2546, 0
        %v2792 = vsel %vm2471, %v2547, 0
        %v2795 = vsel %vm2471, %v2548, 0
        %v2798 = vsel %vm2471, %v2549, 0
        %v2801 = vsel %vm2471, %v2550, 0
        %v2804 = vsel %vm2471, %v2551, 0
        %v2807 = vsel %vm2471, %v2552, 0
        %v2810 = vsel %vm2471, %v2553, 0
        %v2813 = vsel %vm2471, %v2554, 0
        %v2816 = vsel %vm2471, %v2555, 0
        %2818 = vmatprep.subr.mxu0 0.0
        %2819 = vmatpush1.msra.mxu0 %v2556
        %2820 = vmatprep.subr.mxu0 0.0
        %2821 = vmatpush1.msra.mxu0 %v2557
        %2822 = vmatprep.subr.mxu0 0.0
        %2823 = vmatpush1.msra.mxu0 0.0
        %2824 = vmatprep.subr.mxu0 0.0
        %2825 = vmatpush1.msra.mxu0 0.0
        %2826 = vmatprep.subr.mxu0 0.0
        %2827 = vmatpush1.msra.mxu0 0.0
        %2828 = vmatprep.subr.mxu0 0.0
        %2829 = vmatpush1.msra.mxu0 0.0
        %2830 = vmatprep.subr.mxu0 0.0
        %2831 = vmatpush1.msra.mxu0 0.0
        %2832 = vmatprep.subr.mxu0 0.0
        %2833 = vmatpush1.msra.mxu0 0.0
        %2834 = vmatprep.subr.mxu0 0.0
        %2835 = vmatpush1.msra.mxu0 0.0
        %2836 = vmatprep.subr.mxu0 0.0
        %2837 = vmatpush1.msra.mxu0 0.0
        %2838 = vmatprep.subr.mxu0 0.0
        %2839 = vmatpush1.msra.mxu0 0.0
        %2840 = vmatprep.subr.mxu0 0.0
        %2841 = vmatpush1.msra.mxu0 0.0
        %2842 = vmatprep.subr.mxu0 0.0
        %2843 = vmatpush1.msra.mxu0 0.0
        %2844 = vmatprep.subr.mxu0 0.0
        %2845 = vmatpush1.msra.mxu0 0.0
        %2846 = vmatprep.subr.mxu0 0.0
        %2847 = vmatpush1.msra.mxu0 0.0
        %2848 = vmatprep.subr.mxu0 0.0
        %2849 = vmatpush1.msra.mxu0 0.0
        %2850 = vmatprep.subr.mxu0 0.0
        %2851 = vmatpush1.msra.mxu0 0.0
        %2852 = vmatprep.subr.mxu0 0.0
        %2853 = vmatpush1.msra.mxu0 0.0
        %2854 = vmatprep.subr.mxu0 0.0
        %2855 = vmatpush1.msra.mxu0 0.0
        %2856 = vmatprep.subr.mxu0 0.0
        %2857 = vmatpush1.msra.mxu0 0.0
        %2858 = vmatprep.subr.mxu0 0.0
        %2859 = vmatpush1.msra.mxu0 0.0
        %2860 = vmatprep.subr.mxu0 0.0
        %2861 = vmatpush1.msra.mxu0 0.0
        %2862 = vmatprep.subr.mxu0 0.0
        %2863 = vmatpush1.msra.mxu0 0.0
        %2864 = vmatprep.subr.mxu0 0.0
        %2865 = vmatpush1.msra.mxu0 0.0
        %2866 = vmatprep.subr.mxu0 0.0
        %2867 = vmatpush1.msra.mxu0 0.0
        %2868 = vmatprep.subr.mxu0 0.0
        %2869 = vmatpush1.msra.mxu0 0.0
        %2870 = vmatprep.subr.mxu0 0.0
        %2871 = vmatpush1.msra.mxu0 0.0
        %2872 = vmatprep.subr.mxu0 0.0
        %2873 = vmatpush1.msra.mxu0 0.0
        %2874 = vmatprep.subr.mxu0 0.0
        %2875 = vmatpush1.msra.mxu0 0.0
        %2876 = vmatprep.subr.mxu0 0.0
        %2877 = vmatpush1.msra.mxu0 0.0
        %2878 = vmatprep.subr.mxu0 0.0
        %2879 = vmatpush1.msra.mxu0 0.0
        %2880 = vmatprep.subr.mxu0 0.0
        %2881 = vmatpush1.msra.mxu0 0.0
        %2882 = vmatprep.mubr.f32.mxu0 0.0
        %2883 = vmatmul.mubr.f32.gmra.mrb[0].mxu0 %v2771
        %v2884 = vpop.f32.mrb[0].mxu0
        %v2885 = vadd.f32 %v2692, %v2884
        %v2886 = vpop.f32.mrb[0].mxu0
        %2887 = vmatprep.mubr.f32.mxu0 0.0
        %2888 = vmatmul.mubr.f32.gmra.mrb[0].mxu0 %v2774
        %v2889 = vpop.f32.mrb[0].mxu0
        %v2890 = vadd.f32 %v2697, %v2889
        %v2891 = vpop.f32.mrb[0].mxu0
        %2892 = vmatprep.mubr.f32.mxu0 0.0
        %2893 = vmatmul.mubr.f32.gmra.mrb[0].mxu0 %v2777
        %v2894 = vpop.f32.mrb[0].mxu0
        %v2895 = vadd.f32 %v2702, %v2894
        %v2896 = vpop.f32.mrb[0].mxu0
        %2897 = vmatprep.mubr.f32.mxu0 0.0
        %2898 = vmatmul.mubr.f32.gmra.mrb[0].mxu0 %v2780
        %v2899 = vpop.f32.mrb[0].mxu0
        %v2900 = vadd.f32 %v2707, %v2899
        %v2901 = vpop.f32.mrb[0].mxu0
        %2902 = vmatprep.mubr.f32.mxu0 0.0
        %2903 = vmatmul.mubr.f32.gmra.mrb[0].mxu0 %v2783
        %v2904 = vpop.f32.mrb[0].mxu0
        %v2905 = vadd.f32 %v2712, %v2904
        %v2906 = vpop.f32.mrb[0].mxu0
        %2907 = vmatprep.mubr.f32.mxu0 0.0
        %2908 = vmatmul.mubr.f32.gmra.mrb[0].mxu0 %v2786
        %v2909 = vpop.f32.mrb[0].mxu0
        %v2910 = vadd.f32 %v2717, %v2909
        %v2911 = vpop.f32.mrb[0].mxu0
        %2912 = vmatprep.mubr.f32.mxu0 0.0
        %2913 = vmatmul.mubr.f32.gmra.mrb[0].mxu0 %v2789
        %v2914 = vpop.f32.mrb[0].mxu0
        %v2915 = vadd.f32 %v2722, %v2914
        %v2916 = vpop.f32.mrb[0].mxu0
        %2917 = vmatprep.mubr.f32.mxu0 0.0
        %2918 = vmatmul.mubr.f32.gmra.mrb[0].mxu0 %v2792
        %v2919 = vpop.f32.mrb[0].mxu0
        %v2920 = vadd.f32 %v2727, %v2919
        %v2921 = vpop.f32.mrb[0].mxu0
        %2922 = vmatprep.mubr.f32.mxu0 0.0
        %2923 = vmatmul.mubr.f32.gmra.mrb[0].mxu0 %v2795
        %v2924 = vpop.f32.mrb[0].mxu0
        %v2925 = vadd.f32 %v2732, %v2924
        %v2926 = vpop.f32.mrb[0].mxu0
        %2927 = vmatprep.mubr.f32.mxu0 0.0
        %2928 = vmatmul.mubr.f32.gmra.mrb[0].mxu0 %v2798
        %v2929 = vpop.f32.mrb[0].mxu0
        %v2930 = vadd.f32 %v2737, %v2929
        %v2931 = vpop.f32.mrb[0].mxu0
        %2932 = vmatprep.mubr.f32.mxu0 0.0
        %2933 = vmatmul.mubr.f32.gmra.mrb[0].mxu0 %v2801
        %v2934 = vpop.f32.mrb[0].mxu0
        %v2935 = vadd.f32 %v2742, %v2934
        %v2936 = vpop.f32.mrb[0].mxu0
        %2937 = vmatprep.mubr.f32.mxu0 0.0
        %2938 = vmatmul.mubr.f32.gmra.mrb[0].mxu0 %v2804
        %v2939 = vpop.f32.mrb[0].mxu0
        %v2940 = vadd.f32 %v2747, %v2939
        %v2941 = vpop.f32.mrb[0].mxu0
        %2942 = vmatprep.mubr.f32.mxu0 0.0
        %2943 = vmatmul.mubr.f32.gmra.mrb[0].mxu0 %v2807
        %v2944 = vpop.f32.mrb[0].mxu0
        %v2945 = vadd.f32 %v2752, %v2944
        %v2946 = vpop.f32.mrb[0].mxu0
        %2947 = vmatprep.mubr.f32.mxu0 0.0
        %2948 = vmatmul.mubr.f32.gmra.mrb[0].mxu0 %v2810
        %v2949 = vpop.f32.mrb[0].mxu0
        %v2950 = vadd.f32 %v2757, %v2949
        %v2951 = vpop.f32.mrb[0].mxu0
        %2952 = vmatprep.mubr.f32.mxu0 0.0
        %2953 = vmatmul.mubr.f32.gmra.mrb[0].mxu0 %v2813
        %v2954 = vpop.f32.mrb[0].mxu0
        %v2955 = vadd.f32 %v2762, %v2954
        %v2956 = vpop.f32.mrb[0].mxu0
        %2957 = vmatprep.mubr.f32.mxu0 0.0
        %2958 = vmatmul.mubr.f32.gmra.mrb[0].mxu0 %v2816
        %v2959 = vpop.f32.mrb[0].mxu0
        %v2960 = vadd.f32 %v2767, %v2959
        %v2961 = vpop.f32.mrb[0].mxu0
        %2962 = vdwg.mxu0
        %v2963 = vld [vmem:[#allocation4 + $0x2] sm:$0xff]
        %v2964 = vld [vmem:[#allocation4 + $0x12] sm:$0xff]
        %v2965 = vld [vmem:[#allocation4 + $0x22] sm:$0xff]
        %v2966 = vld [vmem:[#allocation4 + $0x32] sm:$0xff]
        %v2967 = vld [vmem:[#allocation4 + $0x42] sm:$0xff]
        %v2968 = vld [vmem:[#allocation4 + $0x52] sm:$0xff]
        %v2969 = vld [vmem:[#allocation4 + $0x62] sm:$0xff]
        %v2970 = vld [vmem:[#allocation4 + $0x72] sm:$0xff]
        %v2971 = vld [vmem:[#allocation4 + $0xa2] sm:$0xff]
        %v2972 = vld [vmem:[#allocation4 + $0xb2] sm:$0xff]
        %v2973 = vld [vmem:[#allocation4 + $0xc2] sm:$0xff]
        %v2974 = vld [vmem:[#allocation4 + $0xd2] sm:$0xff]
        %v2975 = vld [vmem:[#allocation4 + $0xe2] sm:$0xff]
        %v2976 = vld [vmem:[#allocation4 + $0xf2] sm:$0xff]
        %v2977 = vld [vmem:[#allocation4 + $0x102] sm:$0xff]
        %v2978 = vld [vmem:[#allocation4 + $0x112] sm:$0xff]
        %s2979 = scalar_lea.vmem [#allocation15], 32
        %v2980 = vld [vmem:[%s2979] sm:$0xff]
        %v2981 = vld [vmem:[%s2979 + $0x8] sm:$0xff]
        %v2983 = vsel %vm2471, %v2963, 0
        %v2986 = vsel %vm2471, %v2964, 0
        %v2989 = vsel %vm2471, %v2965, 0
        %v2992 = vsel %vm2471, %v2966, 0
        %v2995 = vsel %vm2471, %v2967, 0
        %v2998 = vsel %vm2471, %v2968, 0
        %v3001 = vsel %vm2471, %v2969, 0
        %v3004 = vsel %vm2471, %v2970, 0
        %v3007 = vsel %vm2471, %v2971, 0
        %v3010 = vsel %vm2471, %v2972, 0
        %v3013 = vsel %vm2471, %v2973, 0
        %v3016 = vsel %vm2471, %v2974, 0
        %v3019 = vsel %vm2471, %v2975, 0
        %v3022 = vsel %vm2471, %v2976, 0
        %v3025 = vsel %vm2471, %v2977, 0
        %v3028 = vsel %vm2471, %v2978, 0
        %3030 = vmatprep.subr.mxu0 0.0
        %3031 = vmatpush1.msra.mxu0 %v2980
        %3032 = vmatprep.subr.mxu0 0.0
        %3033 = vmatpush1.msra.mxu0 %v2981
        %3034 = vmatprep.subr.mxu0 0.0
        %3035 = vmatpush1.msra.mxu0 0.0
        %3036 = vmatprep.subr.mxu0 0.0
        %3037 = vmatpush1.msra.mxu0 0.0
        %3038 = vmatprep.subr.mxu0 0.0
        %3039 = vmatpush1.msra.mxu0 0.0
        %3040 = vmatprep.subr.mxu0 0.0
        %3041 = vmatpush1.msra.mxu0 0.0
        %3042 = vmatprep.subr.mxu0 0.0
        %3043 = vmatpush1.msra.mxu0 0.0
        %3044 = vmatprep.subr.mxu0 0.0
        %3045 = vmatpush1.msra.mxu0 0.0
        %3046 = vmatprep.subr.mxu0 0.0
        %3047 = vmatpush1.msra.mxu0 0.0
        %3048 = vmatprep.subr.mxu0 0.0
        %3049 = vmatpush1.msra.mxu0 0.0
        %3050 = vmatprep.subr.mxu0 0.0
        %3051 = vmatpush1.msra.mxu0 0.0
        %3052 = vmatprep.subr.mxu0 0.0
        %3053 = vmatpush1.msra.mxu0 0.0
        %3054 = vmatprep.subr.mxu0 0.0
        %3055 = vmatpush1.msra.mxu0 0.0
        %3056 = vmatprep.subr.mxu0 0.0
        %3057 = vmatpush1.msra.mxu0 0.0
        %3058 = vmatprep.subr.mxu0 0.0
        %3059 = vmatpush1.msra.mxu0 0.0
        %3060 = vmatprep.subr.mxu0 0.0
        %3061 = vmatpush1.msra.mxu0 0.0
        %3062 = vmatprep.subr.mxu0 0.0
        %3063 = vmatpush1.msra.mxu0 0.0
        %3064 = vmatprep.subr.mxu0 0.0
        %3065 = vmatpush1.msra.mxu0 0.0
        %3066 = vmatprep.subr.mxu0 0.0
        %3067 = vmatpush1.msra.mxu0 0.0
        %3068 = vmatprep.subr.mxu0 0.0
        %3069 = vmatpush1.msra.mxu0 0.0
        %3070 = vmatprep.subr.mxu0 0.0
        %3071 = vmatpush1.msra.mxu0 0.0
        %3072 = vmatprep.subr.mxu0 0.0
        %3073 = vmatpush1.msra.mxu0 0.0
        %3074 = vmatprep.subr.mxu0 0.0
        %3075 = vmatpush1.msra.mxu0 0.0
        %3076 = vmatprep.subr.mxu0 0.0
        %3077 = vmatpush1.msra.mxu0 0.0
        %3078 = vmatprep.subr.mxu0 0.0
        %3079 = vmatpush1.msra.mxu0 0.0
        %3080 = vmatprep.subr.mxu0 0.0
        %3081 = vmatpush1.msra.mxu0 0.0
        %3082 = vmatprep.subr.mxu0 0.0
        %3083 = vmatpush1.msra.mxu0 0.0
        %3084 = vmatprep.subr.mxu0 0.0
        %3085 = vmatpush1.msra.mxu0 0.0
        %3086 = vmatprep.subr.mxu0 0.0
        %3087 = vmatpush1.msra.mxu0 0.0
        %3088 = vmatprep.subr.mxu0 0.0
        %3089 = vmatpush1.msra.mxu0 0.0
        %3090 = vmatprep.subr.mxu0 0.0
        %3091 = vmatpush1.msra.mxu0 0.0
        %3092 = vmatprep.subr.mxu0 0.0
        %3093 = vmatpush1.msra.mxu0 0.0
        %3094 = vmatprep.mubr.f32.mxu0 0.0
        %3095 = vmatmul.mubr.f32.gmra.mrb[0].mxu0 %v2983
        %v3096 = vpop.f32.mrb[0].mxu0
        %v3097 = vadd.f32 0.0, %v3096
        %v3098 = vpop.f32.mrb[0].mxu0
        %3099 = vmatprep.mubr.f32.mxu0 0.0
        %3100 = vmatmul.mubr.f32.gmra.mrb[0].mxu0 %v2986
        %v3101 = vpop.f32.mrb[0].mxu0
        %v3102 = vadd.f32 0.0, %v3101
        %v3103 = vpop.f32.mrb[0].mxu0
        %3104 = vmatprep.mubr.f32.mxu0 0.0
        %3105 = vmatmul.mubr.f32.gmra.mrb[0].mxu0 %v2989
        %v3106 = vpop.f32.mrb[0].mxu0
        %v3107 = vadd.f32 0.0, %v3106
        %v3108 = vpop.f32.mrb[0].mxu0
        %3109 = vmatprep.mubr.f32.mxu0 0.0
        %3110 = vmatmul.mubr.f32.gmra.mrb[0].mxu0 %v2992
        %v3111 = vpop.f32.mrb[0].mxu0
        %v3112 = vadd.f32 0.0, %v3111
        %v3113 = vpop.f32.mrb[0].mxu0
        %3114 = vmatprep.mubr.f32.mxu0 0.0
        %3115 = vmatmul.mubr.f32.gmra.mrb[0].mxu0 %v2995
        %v3116 = vpop.f32.mrb[0].mxu0
        %v3117 = vadd.f32 0.0, %v3116
        %v3118 = vpop.f32.mrb[0].mxu0
        %3119 = vmatprep.mubr.f32.mxu0 0.0
        %3120 = vmatmul.mubr.f32.gmra.mrb[0].mxu0 %v2998
        %v3121 = vpop.f32.mrb[0].mxu0
        %v3122 = vadd.f32 0.0, %v3121
        %v3123 = vpop.f32.mrb[0].mxu0
        %3124 = vmatprep.mubr.f32.mxu0 0.0
        %3125 = vmatmul.mubr.f32.gmra.mrb[0].mxu0 %v3001
        %v3126 = vpop.f32.mrb[0].mxu0
        %v3127 = vadd.f32 0.0, %v3126
        %v3128 = vpop.f32.mrb[0].mxu0
        %3129 = vmatprep.mubr.f32.mxu0 0.0
        %3130 = vmatmul.mubr.f32.gmra.mrb[0].mxu0 %v3004
        %v3131 = vpop.f32.mrb[0].mxu0
        %v3132 = vadd.f32 0.0, %v3131
        %v3133 = vpop.f32.mrb[0].mxu0
        %3134 = vmatprep.mubr.f32.mxu0 0.0
        %3135 = vmatmul.mubr.f32.gmra.mrb[0].mxu0 %v3007
        %v3136 = vpop.f32.mrb[0].mxu0
        %v3137 = vadd.f32 0.0, %v3136
        %v3138 = vpop.f32.mrb[0].mxu0
        %3139 = vmatprep.mubr.f32.mxu0 0.0
        %3140 = vmatmul.mubr.f32.gmra.mrb[0].mxu0 %v3010
        %v3141 = vpop.f32.mrb[0].mxu0
        %v3142 = vadd.f32 0.0, %v3141
        %v3143 = vpop.f32.mrb[0].mxu0
        %3144 = vmatprep.mubr.f32.mxu0 0.0
        %3145 = vmatmul.mubr.f32.gmra.mrb[0].mxu0 %v3013
        %v3146 = vpop.f32.mrb[0].mxu0
        %v3147 = vadd.f32 0.0, %v3146
        %v3148 = vpop.f32.mrb[0].mxu0
        %3149 = vmatprep.mubr.f32.mxu0 0.0
        %3150 = vmatmul.mubr.f32.gmra.mrb[0].mxu0 %v3016
        %v3151 = vpop.f32.mrb[0].mxu0
        %v3152 = vadd.f32 0.0, %v3151
        %v3153 = vpop.f32.mrb[0].mxu0
        %3154 = vmatprep.mubr.f32.mxu0 0.0
        %3155 = vmatmul.mubr.f32.gmra.mrb[0].mxu0 %v3019
        %v3156 = vpop.f32.mrb[0].mxu0
        %v3157 = vadd.f32 0.0, %v3156
        %v3158 = vpop.f32.mrb[0].mxu0
        %3159 = vmatprep.mubr.f32.mxu0 0.0
        %3160 = vmatmul.mubr.f32.gmra.mrb[0].mxu0 %v3022
        %v3161 = vpop.f32.mrb[0].mxu0
        %v3162 = vadd.f32 0.0, %v3161
        %v3163 = vpop.f32.mrb[0].mxu0
        %3164 = vmatprep.mubr.f32.mxu0 0.0
        %3165 = vmatmul.mubr.f32.gmra.mrb[0].mxu0 %v3025
        %v3166 = vpop.f32.mrb[0].mxu0
        %v3167 = vadd.f32 0.0, %v3166
        %v3168 = vpop.f32.mrb[0].mxu0
        %3169 = vmatprep.mubr.f32.mxu0 0.0
        %3170 = vmatmul.mubr.f32.gmra.mrb[0].mxu0 %v3028
        %v3171 = vpop.f32.mrb[0].mxu0
        %v3172 = vadd.f32 0.0, %v3171
        %v3173 = vpop.f32.mrb[0].mxu0
        %3174 = vdwg.mxu0
        %v3175 = vadd.f32 %v2885, %v3097
        %v3176 = vadd.f32 %v2890, %v3102
        %v3177 = vadd.f32 %v2895, %v3107
        %v3178 = vadd.f32 %v2900, %v3112
        %v3179 = vadd.f32 %v2905, %v3117
        %v3180 = vadd.f32 %v2910, %v3122
        %v3181 = vadd.f32 %v2915, %v3127
        %v3182 = vadd.f32 %v2920, %v3132
        %v3183 = vadd.f32 %v2925, %v3137
        %v3184 = vadd.f32 %v2930, %v3142
        %v3185 = vadd.f32 %v2935, %v3147
        %v3186 = vadd.f32 %v2940, %v3152
        %v3187 = vadd.f32 %v2945, %v3157
        %v3188 = vadd.f32 %v2950, %v3162
        %v3189 = vadd.f32 %v2955, %v3167
        %v3190 = vadd.f32 %v2960, %v3172
        %v3191 = vld [vmem:[%s2523] sm:$0xff]
        %v3192 = vld [vmem:[%s2523 + $0x10] sm:$0xff]
        %v3193 = vld [vmem:[%s2523 + $0x20] sm:$0xff]
        %v3194 = vld [vmem:[%s2523 + $0x30] sm:$0xff]
        %v3195 = vld [vmem:[%s2523 + $0x40] sm:$0xff]
        %v3196 = vld [vmem:[%s2523 + $0x50] sm:$0xff]
        %v3197 = vld [vmem:[%s2523 + $0x60] sm:$0xff]
        %v3198 = vld [vmem:[%s2523 + $0x70] sm:$0xff]
        %v3199 = vld [vmem:[%s2523 + $0xa0] sm:$0xff]
        %v3200 = vld [vmem:[%s2523 + $0xb0] sm:$0xff]
        %v3201 = vld [vmem:[%s2523 + $0xc0] sm:$0xff]
        %v3202 = vld [vmem:[%s2523 + $0xd0] sm:$0xff]
        %v3203 = vld [vmem:[%s2523 + $0xe0] sm:$0xff]
        %v3204 = vld [vmem:[%s2523 + $0xf0] sm:$0xff]
        %v3205 = vld [vmem:[%s2523 + $0x100] sm:$0xff]
        %v3206 = vld [vmem:[%s2523 + $0x110] sm:$0xff]
        %s3207 = scalar_lea.vmem [#allocation15], 48
        %v3208 = vld [vmem:[%s3207] sm:$0xff]
        %v3209 = vld [vmem:[%s3207 + $0x8] sm:$0xff]
        %v3211 = vsel %vm2471, %v3191, 0
        %v3214 = vsel %vm2471, %v3192, 0
        %v3217 = vsel %vm2471, %v3193, 0
        %v3220 = vsel %vm2471, %v3194, 0
        %v3223 = vsel %vm2471, %v3195, 0
        %v3226 = vsel %vm2471, %v3196, 0
        %v3229 = vsel %vm2471, %v3197, 0
        %v3232 = vsel %vm2471, %v3198, 0
        %v3235 = vsel %vm2471, %v3199, 0
        %v3238 = vsel %vm2471, %v3200, 0
        %v3241 = vsel %vm2471, %v3201, 0
        %v3244 = vsel %vm2471, %v3202, 0
        %v3247 = vsel %vm2471, %v3203, 0
        %v3250 = vsel %vm2471, %v3204, 0
        %v3253 = vsel %vm2471, %v3205, 0
        %v3256 = vsel %vm2471, %v3206, 0
        %3258 = vmatprep.subr.mxu0 0.0
        %3259 = vmatpush1.msra.mxu0 %v3208
        %3260 = vmatprep.subr.mxu0 0.0
        %3261 = vmatpush1.msra.mxu0 %v3209
        %3262 = vmatprep.subr.mxu0 0.0
        %3263 = vmatpush1.msra.mxu0 0.0
        %3264 = vmatprep.subr.mxu0 0.0
        %3265 = vmatpush1.msra.mxu0 0.0
        %3266 = vmatprep.subr.mxu0 0.0
        %3267 = vmatpush1.msra.mxu0 0.0
        %3268 = vmatprep.subr.mxu0 0.0
        %3269 = vmatpush1.msra.mxu0 0.0
        %3270 = vmatprep.subr.mxu0 0.0
        %3271 = vmatpush1.msra.mxu0 0.0
        %3272 = vmatprep.subr.mxu0 0.0
        %3273 = vmatpush1.msra.mxu0 0.0
        %3274 = vmatprep.subr.mxu0 0.0
        %3275 = vmatpush1.msra.mxu0 0.0
        %3276 = vmatprep.subr.mxu0 0.0
        %3277 = vmatpush1.msra.mxu0 0.0
        %3278 = vmatprep.subr.mxu0 0.0
        %3279 = vmatpush1.msra.mxu0 0.0
        %3280 = vmatprep.subr.mxu0 0.0
        %3281 = vmatpush1.msra.mxu0 0.0
        %3282 = vmatprep.subr.mxu0 0.0
        %3283 = vmatpush1.msra.mxu0 0.0
        %3284 = vmatprep.subr.mxu0 0.0
        %3285 = vmatpush1.msra.mxu0 0.0
        %3286 = vmatprep.subr.mxu0 0.0
        %3287 = vmatpush1.msra.mxu0 0.0
        %3288 = vmatprep.subr.mxu0 0.0
        %3289 = vmatpush1.msra.mxu0 0.0
        %3290 = vmatprep.subr.mxu0 0.0
        %3291 = vmatpush1.msra.mxu0 0.0
        %3292 = vmatprep.subr.mxu0 0.0
        %3293 = vmatpush1.msra.mxu0 0.0
        %3294 = vmatprep.subr.mxu0 0.0
        %3295 = vmatpush1.msra.mxu0 0.0
        %3296 = vmatprep.subr.mxu0 0.0
        %3297 = vmatpush1.msra.mxu0 0.0
        %3298 = vmatprep.subr.mxu0 0.0
        %3299 = vmatpush1.msra.mxu0 0.0
        %3300 = vmatprep.subr.mxu0 0.0
        %3301 = vmatpush1.msra.mxu0 0.0
        %3302 = vmatprep.subr.mxu0 0.0
        %3303 = vmatpush1.msra.mxu0 0.0
        %3304 = vmatprep.subr.mxu0 0.0
        %3305 = vmatpush1.msra.mxu0 0.0
        %3306 = vmatprep.subr.mxu0 0.0
        %3307 = vmatpush1.msra.mxu0 0.0
        %3308 = vmatprep.subr.mxu0 0.0
        %3309 = vmatpush1.msra.mxu0 0.0
        %3310 = vmatprep.subr.mxu0 0.0
        %3311 = vmatpush1.msra.mxu0 0.0
        %3312 = vmatprep.subr.mxu0 0.0
        %3313 = vmatpush1.msra.mxu0 0.0
        %3314 = vmatprep.subr.mxu0 0.0
        %3315 = vmatpush1.msra.mxu0 0.0
        %3316 = vmatprep.subr.mxu0 0.0
        %3317 = vmatpush1.msra.mxu0 0.0
        %3318 = vmatprep.subr.mxu0 0.0
        %3319 = vmatpush1.msra.mxu0 0.0
        %3320 = vmatprep.subr.mxu0 0.0
        %3321 = vmatpush1.msra.mxu0 0.0
        %3322 = vmatprep.mubr.f32.mxu0 0.0
        %3323 = vmatmul.mubr.f32.gmra.mrb[0].mxu0 %v3211
        %v3324 = vpop.f32.mrb[0].mxu0
        %v3325 = vadd.f32 0.0, %v3324
        %v3326 = vpop.f32.mrb[0].mxu0
        %3327 = vmatprep.mubr.f32.mxu0 0.0
        %3328 = vmatmul.mubr.f32.gmra.mrb[0].mxu0 %v3214
        %v3329 = vpop.f32.mrb[0].mxu0
        %v3330 = vadd.f32 0.0, %v3329
        %v3331 = vpop.f32.mrb[0].mxu0
        %3332 = vmatprep.mubr.f32.mxu0 0.0
        %3333 = vmatmul.mubr.f32.gmra.mrb[0].mxu0 %v3217
        %v3334 = vpop.f32.mrb[0].mxu0
        %v3335 = vadd.f32 0.0, %v3334
        %v3336 = vpop.f32.mrb[0].mxu0
        %3337 = vmatprep.mubr.f32.mxu0 0.0
        %3338 = vmatmul.mubr.f32.gmra.mrb[0].mxu0 %v3220
        %v3339 = vpop.f32.mrb[0].mxu0
        %v3340 = vadd.f32 0.0, %v3339
        %v3341 = vpop.f32.mrb[0].mxu0
        %3342 = vmatprep.mubr.f32.mxu0 0.0
        %3343 = vmatmul.mubr.f32.gmra.mrb[0].mxu0 %v3223
        %v3344 = vpop.f32.mrb[0].mxu0
        %v3345 = vadd.f32 0.0, %v3344
        %v3346 = vpop.f32.mrb[0].mxu0
        %3347 = vmatprep.mubr.f32.mxu0 0.0
        %3348 = vmatmul.mubr.f32.gmra.mrb[0].mxu0 %v3226
        %v3349 = vpop.f32.mrb[0].mxu0
        %v3350 = vadd.f32 0.0, %v3349
        %v3351 = vpop.f32.mrb[0].mxu0
        %3352 = vmatprep.mubr.f32.mxu0 0.0
        %3353 = vmatmul.mubr.f32.gmra.mrb[0].mxu0 %v3229
        %v3354 = vpop.f32.mrb[0].mxu0
        %v3355 = vadd.f32 0.0, %v3354
        %v3356 = vpop.f32.mrb[0].mxu0
        %3357 = vmatprep.mubr.f32.mxu0 0.0
        %3358 = vmatmul.mubr.f32.gmra.mrb[0].mxu0 %v3232
        %v3359 = vpop.f32.mrb[0].mxu0
        %v3360 = vadd.f32 0.0, %v3359
        %v3361 = vpop.f32.mrb[0].mxu0
        %3362 = vmatprep.mubr.f32.mxu0 0.0
        %3363 = vmatmul.mubr.f32.gmra.mrb[0].mxu0 %v3235
        %v3364 = vpop.f32.mrb[0].mxu0
        %v3365 = vadd.f32 0.0, %v3364
        %v3366 = vpop.f32.mrb[0].mxu0
        %3367 = vmatprep.mubr.f32.mxu0 0.0
        %3368 = vmatmul.mubr.f32.gmra.mrb[0].mxu0 %v3238
        %v3369 = vpop.f32.mrb[0].mxu0
        %v3370 = vadd.f32 0.0, %v3369
        %v3371 = vpop.f32.mrb[0].mxu0
        %3372 = vmatprep.mubr.f32.mxu0 0.0
        %3373 = vmatmul.mubr.f32.gmra.mrb[0].mxu0 %v3241
        %v3374 = vpop.f32.mrb[0].mxu0
        %v3375 = vadd.f32 0.0, %v3374
        %v3376 = vpop.f32.mrb[0].mxu0
        %3377 = vmatprep.mubr.f32.mxu0 0.0
        %3378 = vmatmul.mubr.f32.gmra.mrb[0].mxu0 %v3244
        %v3379 = vpop.f32.mrb[0].mxu0
        %v3380 = vadd.f32 0.0, %v3379
        %v3381 = vpop.f32.mrb[0].mxu0
        %3382 = vmatprep.mubr.f32.mxu0 0.0
        %3383 = vmatmul.mubr.f32.gmra.mrb[0].mxu0 %v3247
        %v3384 = vpop.f32.mrb[0].mxu0
        %v3385 = vadd.f32 0.0, %v3384
        %v3386 = vpop.f32.mrb[0].mxu0
        %3387 = vmatprep.mubr.f32.mxu0 0.0
        %3388 = vmatmul.mubr.f32.gmra.mrb[0].mxu0 %v3250
        %v3389 = vpop.f32.mrb[0].mxu0
        %v3390 = vadd.f32 0.0, %v3389
        %v3391 = vpop.f32.mrb[0].mxu0
        %3392 = vmatprep.mubr.f32.mxu0 0.0
        %3393 = vmatmul.mubr.f32.gmra.mrb[0].mxu0 %v3253
        %v3394 = vpop.f32.mrb[0].mxu0
        %v3395 = vadd.f32 0.0, %v3394
        %v3396 = vpop.f32.mrb[0].mxu0
        %3397 = vmatprep.mubr.f32.mxu0 0.0
        %3398 = vmatmul.mubr.f32.gmra.mrb[0].mxu0 %v3256
        %v3399 = vpop.f32.mrb[0].mxu0
        %v3400 = vadd.f32 0.0, %v3399
        %v3401 = vpop.f32.mrb[0].mxu0
        %3402 = vdwg.mxu0
        %v3403 = vadd.f32 %v3175, %v3325
        %v3404 = vadd.f32 %v3176, %v3330
        %v3405 = vadd.f32 %v3177, %v3335
        %v3406 = vadd.f32 %v3178, %v3340
        %v3407 = vadd.f32 %v3179, %v3345
        %v3408 = vadd.f32 %v3180, %v3350
        %v3409 = vadd.f32 %v3181, %v3355
        %v3410 = vadd.f32 %v3182, %v3360
        %v3411 = vadd.f32 %v3183, %v3365
        %v3412 = vadd.f32 %v3184, %v3370
        %v3413 = vadd.f32 %v3185, %v3375
        %v3414 = vadd.f32 %v3186, %v3380
        %v3415 = vadd.f32 %v3187, %v3385
        %v3416 = vadd.f32 %v3188, %v3390
        %v3417 = vadd.f32 %v3189, %v3395
        %v3418 = vadd.f32 %v3190, %v3400
        %v3419 = vld [vmem:[%s2523 + $0x1] sm:$0xff]
        %v3420 = vld [vmem:[%s2523 + $0x11] sm:$0xff]
        %v3421 = vld [vmem:[%s2523 + $0x21] sm:$0xff]
        %v3422 = vld [vmem:[%s2523 + $0x31] sm:$0xff]
        %v3423 = vld [vmem:[%s2523 + $0x41] sm:$0xff]
        %v3424 = vld [vmem:[%s2523 + $0x51] sm:$0xff]
        %v3425 = vld [vmem:[%s2523 + $0x61] sm:$0xff]
        %v3426 = vld [vmem:[%s2523 + $0x71] sm:$0xff]
        %v3427 = vld [vmem:[%s2523 + $0xa1] sm:$0xff]
        %v3428 = vld [vmem:[%s2523 + $0xb1] sm:$0xff]
        %v3429 = vld [vmem:[%s2523 + $0xc1] sm:$0xff]
        %v3430 = vld [vmem:[%s2523 + $0xd1] sm:$0xff]
        %v3431 = vld [vmem:[%s2523 + $0xe1] sm:$0xff]
        %v3432 = vld [vmem:[%s2523 + $0xf1] sm:$0xff]
        %v3433 = vld [vmem:[%s2523 + $0x101] sm:$0xff]
        %v3434 = vld [vmem:[%s2523 + $0x111] sm:$0xff]
        %s3435 = scalar_lea.vmem [#allocation15], 64
        %v3436 = vld [vmem:[%s3435] sm:$0xff]
        %v3437 = vld [vmem:[%s3435 + $0x8] sm:$0xff]
        %v3439 = vsel %vm2471, %v3419, 0
        %v3442 = vsel %vm2471, %v3420, 0
        %v3445 = vsel %vm2471, %v3421, 0
        %v3448 = vsel %vm2471, %v3422, 0
        %v3451 = vsel %vm2471, %v3423, 0
        %v3454 = vsel %vm2471, %v3424, 0
        %v3457 = vsel %vm2471, %v3425, 0
        %v3460 = vsel %vm2471, %v3426, 0
        %v3463 = vsel %vm2471, %v3427, 0
        %v3466 = vsel %vm2471, %v3428, 0
        %v3469 = vsel %vm2471, %v3429, 0
        %v3472 = vsel %vm2471, %v3430, 0
        %v3475 = vsel %vm2471, %v3431, 0
        %v3478 = vsel %vm2471, %v3432, 0
        %v3481 = vsel %vm2471, %v3433, 0
        %v3484 = vsel %vm2471, %v3434, 0
        %3486 = vmatprep.subr.mxu0 0.0
        %3487 = vmatpush1.msra.mxu0 %v3436
        %3488 = vmatprep.subr.mxu0 0.0
        %3489 = vmatpush1.msra.mxu0 %v3437
        %3490 = vmatprep.subr.mxu0 0.0
        %3491 = vmatpush1.msra.mxu0 0.0
        %3492 = vmatprep.subr.mxu0 0.0
        %3493 = vmatpush1.msra.mxu0 0.0
        %3494 = vmatprep.subr.mxu0 0.0
        %3495 = vmatpush1.msra.mxu0 0.0
        %3496 = vmatprep.subr.mxu0 0.0
        %3497 = vmatpush1.msra.mxu0 0.0
        %3498 = vmatprep.subr.mxu0 0.0
        %3499 = vmatpush1.msra.mxu0 0.0
        %3500 = vmatprep.subr.mxu0 0.0
        %3501 = vmatpush1.msra.mxu0 0.0
        %3502 = vmatprep.subr.mxu0 0.0
        %3503 = vmatpush1.msra.mxu0 0.0
        %3504 = vmatprep.subr.mxu0 0.0
        %3505 = vmatpush1.msra.mxu0 0.0
        %3506 = vmatprep.subr.mxu0 0.0
        %3507 = vmatpush1.msra.mxu0 0.0
        %3508 = vmatprep.subr.mxu0 0.0
        %3509 = vmatpush1.msra.mxu0 0.0
        %3510 = vmatprep.subr.mxu0 0.0
        %3511 = vmatpush1.msra.mxu0 0.0
        %3512 = vmatprep.subr.mxu0 0.0
        %3513 = vmatpush1.msra.mxu0 0.0
        %3514 = vmatprep.subr.mxu0 0.0
        %3515 = vmatpush1.msra.mxu0 0.0
        %3516 = vmatprep.subr.mxu0 0.0
        %3517 = vmatpush1.msra.mxu0 0.0
        %3518 = vmatprep.subr.mxu0 0.0
        %3519 = vmatpush1.msra.mxu0 0.0
        %3520 = vmatprep.subr.mxu0 0.0
        %3521 = vmatpush1.msra.mxu0 0.0
        %3522 = vmatprep.subr.mxu0 0.0
        %3523 = vmatpush1.msra.mxu0 0.0
        %3524 = vmatprep.subr.mxu0 0.0
        %3525 = vmatpush1.msra.mxu0 0.0
        %3526 = vmatprep.subr.mxu0 0.0
        %3527 = vmatpush1.msra.mxu0 0.0
        %3528 = vmatprep.subr.mxu0 0.0
        %3529 = vmatpush1.msra.mxu0 0.0
        %3530 = vmatprep.subr.mxu0 0.0
        %3531 = vmatpush1.msra.mxu0 0.0
        %3532 = vmatprep.subr.mxu0 0.0
        %3533 = vmatpush1.msra.mxu0 0.0
        %3534 = vmatprep.subr.mxu0 0.0
        %3535 = vmatpush1.msra.mxu0 0.0
        %3536 = vmatprep.subr.mxu0 0.0
        %3537 = vmatpush1.msra.mxu0 0.0
        %3538 = vmatprep.subr.mxu0 0.0
        %3539 = vmatpush1.msra.mxu0 0.0
        %3540 = vmatprep.subr.mxu0 0.0
        %3541 = vmatpush1.msra.mxu0 0.0
        %3542 = vmatprep.subr.mxu0 0.0
        %3543 = vmatpush1.msra.mxu0 0.0
        %3544 = vmatprep.subr.mxu0 0.0
        %3545 = vmatpush1.msra.mxu0 0.0
        %3546 = vmatprep.subr.mxu0 0.0
        %3547 = vmatpush1.msra.mxu0 0.0
        %3548 = vmatprep.subr.mxu0 0.0
        %3549 = vmatpush1.msra.mxu0 0.0
        %3550 = vmatprep.mubr.f32.mxu0 0.0
        %3551 = vmatmul.mubr.f32.gmra.mrb[0].mxu0 %v3439
        %v3552 = vpop.f32.mrb[0].mxu0
        %v3553 = vadd.f32 0.0, %v3552
        %v3554 = vpop.f32.mrb[0].mxu0
        %3555 = vmatprep.mubr.f32.mxu0 0.0
        %3556 = vmatmul.mubr.f32.gmra.mrb[0].mxu0 %v3442
        %v3557 = vpop.f32.mrb[0].mxu0
        %v3558 = vadd.f32 0.0, %v3557
        %v3559 = vpop.f32.mrb[0].mxu0
        %3560 = vmatprep.mubr.f32.mxu0 0.0
        %3561 = vmatmul.mubr.f32.gmra.mrb[0].mxu0 %v3445
        %v3562 = vpop.f32.mrb[0].mxu0
        %v3563 = vadd.f32 0.0, %v3562
        %v3564 = vpop.f32.mrb[0].mxu0
        %3565 = vmatprep.mubr.f32.mxu0 0.0
        %3566 = vmatmul.mubr.f32.gmra.mrb[0].mxu0 %v3448
        %v3567 = vpop.f32.mrb[0].mxu0
        %v3568 = vadd.f32 0.0, %v3567
        %v3569 = vpop.f32.mrb[0].mxu0
        %3570 = vmatprep.mubr.f32.mxu0 0.0
        %3571 = vmatmul.mubr.f32.gmra.mrb[0].mxu0 %v3451
        %v3572 = vpop.f32.mrb[0].mxu0
        %v3573 = vadd.f32 0.0, %v3572
        %v3574 = vpop.f32.mrb[0].mxu0
        %3575 = vmatprep.mubr.f32.mxu0 0.0
        %3576 = vmatmul.mubr.f32.gmra.mrb[0].mxu0 %v3454
        %v3577 = vpop.f32.mrb[0].mxu0
        %v3578 = vadd.f32 0.0, %v3577
        %v3579 = vpop.f32.mrb[0].mxu0
        %3580 = vmatprep.mubr.f32.mxu0 0.0
        %3581 = vmatmul.mubr.f32.gmra.mrb[0].mxu0 %v3457
        %v3582 = vpop.f32.mrb[0].mxu0
        %v3583 = vadd.f32 0.0, %v3582
        %v3584 = vpop.f32.mrb[0].mxu0
        %3585 = vmatprep.mubr.f32.mxu0 0.0
        %3586 = vmatmul.mubr.f32.gmra.mrb[0].mxu0 %v3460
        %v3587 = vpop.f32.mrb[0].mxu0
        %v3588 = vadd.f32 0.0, %v3587
        %v3589 = vpop.f32.mrb[0].mxu0
        %3590 = vmatprep.mubr.f32.mxu0 0.0
        %3591 = vmatmul.mubr.f32.gmra.mrb[0].mxu0 %v3463
        %v3592 = vpop.f32.mrb[0].mxu0
        %v3593 = vadd.f32 0.0, %v3592
        %v3594 = vpop.f32.mrb[0].mxu0
        %3595 = vmatprep.mubr.f32.mxu0 0.0
        %3596 = vmatmul.mubr.f32.gmra.mrb[0].mxu0 %v3466
        %v3597 = vpop.f32.mrb[0].mxu0
        %v3598 = vadd.f32 0.0, %v3597
        %v3599 = vpop.f32.mrb[0].mxu0
        %3600 = vmatprep.mubr.f32.mxu0 0.0
        %3601 = vmatmul.mubr.f32.gmra.mrb[0].mxu0 %v3469
        %v3602 = vpop.f32.mrb[0].mxu0
        %v3603 = vadd.f32 0.0, %v3602
        %v3604 = vpop.f32.mrb[0].mxu0
        %3605 = vmatprep.mubr.f32.mxu0 0.0
        %3606 = vmatmul.mubr.f32.gmra.mrb[0].mxu0 %v3472
        %v3607 = vpop.f32.mrb[0].mxu0
        %v3608 = vadd.f32 0.0, %v3607
        %v3609 = vpop.f32.mrb[0].mxu0
        %3610 = vmatprep.mubr.f32.mxu0 0.0
        %3611 = vmatmul.mubr.f32.gmra.mrb[0].mxu0 %v3475
        %v3612 = vpop.f32.mrb[0].mxu0
        %v3613 = vadd.f32 0.0, %v3612
        %v3614 = vpop.f32.mrb[0].mxu0
        %3615 = vmatprep.mubr.f32.mxu0 0.0
        %3616 = vmatmul.mubr.f32.gmra.mrb[0].mxu0 %v3478
        %v3617 = vpop.f32.mrb[0].mxu0
        %v3618 = vadd.f32 0.0, %v3617
        %v3619 = vpop.f32.mrb[0].mxu0
        %3620 = vmatprep.mubr.f32.mxu0 0.0
        %3621 = vmatmul.mubr.f32.gmra.mrb[0].mxu0 %v3481
        %v3622 = vpop.f32.mrb[0].mxu0
        %v3623 = vadd.f32 0.0, %v3622
        %v3624 = vpop.f32.mrb[0].mxu0
        %3625 = vmatprep.mubr.f32.mxu0 0.0
        %3626 = vmatmul.mubr.f32.gmra.mrb[0].mxu0 %v3484
        %v3627 = vpop.f32.mrb[0].mxu0
        %v3628 = vadd.f32 0.0, %v3627
        %v3629 = vpop.f32.mrb[0].mxu0
        %3630 = vdwg.mxu0
        %v3631 = vadd.f32 %v3403, %v3553
        %v3632 = vadd.f32 %v3404, %v3558
        %v3633 = vadd.f32 %v3405, %v3563
        %v3634 = vadd.f32 %v3406, %v3568
        %v3635 = vadd.f32 %v3407, %v3573
        %v3636 = vadd.f32 %v3408, %v3578
        %v3637 = vadd.f32 %v3409, %v3583
        %v3638 = vadd.f32 %v3410, %v3588
        %v3639 = vadd.f32 %v3411, %v3593
        %v3640 = vadd.f32 %v3412, %v3598
        %v3641 = vadd.f32 %v3413, %v3603
        %v3642 = vadd.f32 %v3414, %v3608
        %v3643 = vadd.f32 %v3415, %v3613
        %v3644 = vadd.f32 %v3416, %v3618
        %v3645 = vadd.f32 %v3417, %v3623
        %v3646 = vadd.f32 %v3418, %v3628
        %v3647 = vld [vmem:[%s2523 + $0x2] sm:$0xff]
        %v3648 = vld [vmem:[%s2523 + $0x12] sm:$0xff]
        %v3649 = vld [vmem:[%s2523 + $0x22] sm:$0xff]
        %v3650 = vld [vmem:[%s2523 + $0x32] sm:$0xff]
        %v3651 = vld [vmem:[%s2523 + $0x42] sm:$0xff]
        %v3652 = vld [vmem:[%s2523 + $0x52] sm:$0xff]
        %v3653 = vld [vmem:[%s2523 + $0x62] sm:$0xff]
        %v3654 = vld [vmem:[%s2523 + $0x72] sm:$0xff]
        %v3655 = vld [vmem:[%s2523 + $0xa2] sm:$0xff]
        %v3656 = vld [vmem:[%s2523 + $0xb2] sm:$0xff]
        %v3657 = vld [vmem:[%s2523 + $0xc2] sm:$0xff]
        %v3658 = vld [vmem:[%s2523 + $0xd2] sm:$0xff]
        %v3659 = vld [vmem:[%s2523 + $0xe2] sm:$0xff]
        %v3660 = vld [vmem:[%s2523 + $0xf2] sm:$0xff]
        %v3661 = vld [vmem:[%s2523 + $0x102] sm:$0xff]
        %v3662 = vld [vmem:[%s2523 + $0x112] sm:$0xff]
        %s3663 = scalar_lea.vmem [#allocation15], 80
        %v3664 = vld [vmem:[%s3663] sm:$0xff]
        %v3665 = vld [vmem:[%s3663 + $0x8] sm:$0xff]
        %v3667 = vsel %vm2471, %v3647, 0
        %v3670 = vsel %vm2471, %v3648, 0
        %v3673 = vsel %vm2471, %v3649, 0
        %v3676 = vsel %vm2471, %v3650, 0
        %v3679 = vsel %vm2471, %v3651, 0
        %v3682 = vsel %vm2471, %v3652, 0
        %v3685 = vsel %vm2471, %v3653, 0
        %v3688 = vsel %vm2471, %v3654, 0
        %v3691 = vsel %vm2471, %v3655, 0
        %v3694 = vsel %vm2471, %v3656, 0
        %v3697 = vsel %vm2471, %v3657, 0
        %v3700 = vsel %vm2471, %v3658, 0
        %v3703 = vsel %vm2471, %v3659, 0
        %v3706 = vsel %vm2471, %v3660, 0
        %v3709 = vsel %vm2471, %v3661, 0
        %v3712 = vsel %vm2471, %v3662, 0
        %3714 = vmatprep.subr.mxu0 0.0
        %3715 = vmatpush1.msra.mxu0 %v3664
        %3716 = vmatprep.subr.mxu0 0.0
        %3717 = vmatpush1.msra.mxu0 %v3665
        %3718 = vmatprep.subr.mxu0 0.0
        %3719 = vmatpush1.msra.mxu0 0.0
        %3720 = vmatprep.subr.mxu0 0.0
        %3721 = vmatpush1.msra.mxu0 0.0
        %3722 = vmatprep.subr.mxu0 0.0
        %3723 = vmatpush1.msra.mxu0 0.0
        %3724 = vmatprep.subr.mxu0 0.0
        %3725 = vmatpush1.msra.mxu0 0.0
        %3726 = vmatprep.subr.mxu0 0.0
        %3727 = vmatpush1.msra.mxu0 0.0
        %3728 = vmatprep.subr.mxu0 0.0
        %3729 = vmatpush1.msra.mxu0 0.0
        %3730 = vmatprep.subr.mxu0 0.0
        %3731 = vmatpush1.msra.mxu0 0.0
        %3732 = vmatprep.subr.mxu0 0.0
        %3733 = vmatpush1.msra.mxu0 0.0
        %3734 = vmatprep.subr.mxu0 0.0
        %3735 = vmatpush1.msra.mxu0 0.0
        %3736 = vmatprep.subr.mxu0 0.0
        %3737 = vmatpush1.msra.mxu0 0.0
        %3738 = vmatprep.subr.mxu0 0.0
        %3739 = vmatpush1.msra.mxu0 0.0
        %3740 = vmatprep.subr.mxu0 0.0
        %3741 = vmatpush1.msra.mxu0 0.0
        %3742 = vmatprep.subr.mxu0 0.0
        %3743 = vmatpush1.msra.mxu0 0.0
        %3744 = vmatprep.subr.mxu0 0.0
        %3745 = vmatpush1.msra.mxu0 0.0
        %3746 = vmatprep.subr.mxu0 0.0
        %3747 = vmatpush1.msra.mxu0 0.0
        %3748 = vmatprep.subr.mxu0 0.0
        %3749 = vmatpush1.msra.mxu0 0.0
        %3750 = vmatprep.subr.mxu0 0.0
        %3751 = vmatpush1.msra.mxu0 0.0
        %3752 = vmatprep.subr.mxu0 0.0
        %3753 = vmatpush1.msra.mxu0 0.0
        %3754 = vmatprep.subr.mxu0 0.0
        %3755 = vmatpush1.msra.mxu0 0.0
        %3756 = vmatprep.subr.mxu0 0.0
        %3757 = vmatpush1.msra.mxu0 0.0
        %3758 = vmatprep.subr.mxu0 0.0
        %3759 = vmatpush1.msra.mxu0 0.0
        %3760 = vmatprep.subr.mxu0 0.0
        %3761 = vmatpush1.msra.mxu0 0.0
        %3762 = vmatprep.subr.mxu0 0.0
        %3763 = vmatpush1.msra.mxu0 0.0
        %3764 = vmatprep.subr.mxu0 0.0
        %3765 = vmatpush1.msra.mxu0 0.0
        %3766 = vmatprep.subr.mxu0 0.0
        %3767 = vmatpush1.msra.mxu0 0.0
        %3768 = vmatprep.subr.mxu0 0.0
        %3769 = vmatpush1.msra.mxu0 0.0
        %3770 = vmatprep.subr.mxu0 0.0
        %3771 = vmatpush1.msra.mxu0 0.0
        %3772 = vmatprep.subr.mxu0 0.0
        %3773 = vmatpush1.msra.mxu0 0.0
        %3774 = vmatprep.subr.mxu0 0.0
        %3775 = vmatpush1.msra.mxu0 0.0
        %3776 = vmatprep.subr.mxu0 0.0
        %3777 = vmatpush1.msra.mxu0 0.0
        %3778 = vmatprep.mubr.f32.mxu0 0.0
        %3779 = vmatmul.mubr.f32.gmra.mrb[0].mxu0 %v3667
        %v3780 = vpop.f32.mrb[0].mxu0
        %v3781 = vadd.f32 0.0, %v3780
        %v3782 = vpop.f32.mrb[0].mxu0
        %3783 = vmatprep.mubr.f32.mxu0 0.0
        %3784 = vmatmul.mubr.f32.gmra.mrb[0].mxu0 %v3670
        %v3785 = vpop.f32.mrb[0].mxu0
        %v3786 = vadd.f32 0.0, %v3785
        %v3787 = vpop.f32.mrb[0].mxu0
        %3788 = vmatprep.mubr.f32.mxu0 0.0
        %3789 = vmatmul.mubr.f32.gmra.mrb[0].mxu0 %v3673
        %v3790 = vpop.f32.mrb[0].mxu0
        %v3791 = vadd.f32 0.0, %v3790
        %v3792 = vpop.f32.mrb[0].mxu0
        %3793 = vmatprep.mubr.f32.mxu0 0.0
        %3794 = vmatmul.mubr.f32.gmra.mrb[0].mxu0 %v3676
        %v3795 = vpop.f32.mrb[0].mxu0
        %v3796 = vadd.f32 0.0, %v3795
        %v3797 = vpop.f32.mrb[0].mxu0
        %3798 = vmatprep.mubr.f32.mxu0 0.0
        %3799 = vmatmul.mubr.f32.gmra.mrb[0].mxu0 %v3679
        %v3800 = vpop.f32.mrb[0].mxu0
        %v3801 = vadd.f32 0.0, %v3800
        %v3802 = vpop.f32.mrb[0].mxu0
        %3803 = vmatprep.mubr.f32.mxu0 0.0
        %3804 = vmatmul.mubr.f32.gmra.mrb[0].mxu0 %v3682
        %v3805 = vpop.f32.mrb[0].mxu0
        %v3806 = vadd.f32 0.0, %v3805
        %v3807 = vpop.f32.mrb[0].mxu0
        %3808 = vmatprep.mubr.f32.mxu0 0.0
        %3809 = vmatmul.mubr.f32.gmra.mrb[0].mxu0 %v3685
        %v3810 = vpop.f32.mrb[0].mxu0
        %v3811 = vadd.f32 0.0, %v3810
        %v3812 = vpop.f32.mrb[0].mxu0
        %3813 = vmatprep.mubr.f32.mxu0 0.0
        %3814 = vmatmul.mubr.f32.gmra.mrb[0].mxu0 %v3688
        %v3815 = vpop.f32.mrb[0].mxu0
        %v3816 = vadd.f32 0.0, %v3815
        %v3817 = vpop.f32.mrb[0].mxu0
        %3818 = vmatprep.mubr.f32.mxu0 0.0
        %3819 = vmatmul.mubr.f32.gmra.mrb[0].mxu0 %v3691
        %v3820 = vpop.f32.mrb[0].mxu0
        %v3821 = vadd.f32 0.0, %v3820
        %v3822 = vpop.f32.mrb[0].mxu0
        %3823 = vmatprep.mubr.f32.mxu0 0.0
        %3824 = vmatmul.mubr.f32.gmra.mrb[0].mxu0 %v3694
        %v3825 = vpop.f32.mrb[0].mxu0
        %v3826 = vadd.f32 0.0, %v3825
        %v3827 = vpop.f32.mrb[0].mxu0
        %3828 = vmatprep.mubr.f32.mxu0 0.0
        %3829 = vmatmul.mubr.f32.gmra.mrb[0].mxu0 %v3697
        %v3830 = vpop.f32.mrb[0].mxu0
        %v3831 = vadd.f32 0.0, %v3830
        %v3832 = vpop.f32.mrb[0].mxu0
        %3833 = vmatprep.mubr.f32.mxu0 0.0
        %3834 = vmatmul.mubr.f32.gmra.mrb[0].mxu0 %v3700
        %v3835 = vpop.f32.mrb[0].mxu0
        %v3836 = vadd.f32 0.0, %v3835
        %v3837 = vpop.f32.mrb[0].mxu0
        %3838 = vmatprep.mubr.f32.mxu0 0.0
        %3839 = vmatmul.mubr.f32.gmra.mrb[0].mxu0 %v3703
        %v3840 = vpop.f32.mrb[0].mxu0
        %v3841 = vadd.f32 0.0, %v3840
        %v3842 = vpop.f32.mrb[0].mxu0
        %3843 = vmatprep.mubr.f32.mxu0 0.0
        %3844 = vmatmul.mubr.f32.gmra.mrb[0].mxu0 %v3706
        %v3845 = vpop.f32.mrb[0].mxu0
        %v3846 = vadd.f32 0.0, %v3845
        %v3847 = vpop.f32.mrb[0].mxu0
        %3848 = vmatprep.mubr.f32.mxu0 0.0
        %3849 = vmatmul.mubr.f32.gmra.mrb[0].mxu0 %v3709
        %v3850 = vpop.f32.mrb[0].mxu0
        %v3851 = vadd.f32 0.0, %v3850
        %v3852 = vpop.f32.mrb[0].mxu0
        %3853 = vmatprep.mubr.f32.mxu0 0.0
        %3854 = vmatmul.mubr.f32.gmra.mrb[0].mxu0 %v3712
        %v3855 = vpop.f32.mrb[0].mxu0
        %v3856 = vadd.f32 0.0, %v3855
        %v3857 = vpop.f32.mrb[0].mxu0
        %3858 = vdwg.mxu0
        %v3859 = vadd.f32 %v3631, %v3781
        %v3860 = vadd.f32 %v3632, %v3786
        %v3861 = vadd.f32 %v3633, %v3791
        %v3862 = vadd.f32 %v3634, %v3796
        %v3863 = vadd.f32 %v3635, %v3801
        %v3864 = vadd.f32 %v3636, %v3806
        %v3865 = vadd.f32 %v3637, %v3811
        %v3866 = vadd.f32 %v3638, %v3816
        %v3867 = vadd.f32 %v3639, %v3821
        %v3868 = vadd.f32 %v3640, %v3826
        %v3869 = vadd.f32 %v3641, %v3831
        %v3870 = vadd.f32 %v3642, %v3836
        %v3871 = vadd.f32 %v3643, %v3841
        %v3872 = vadd.f32 %v3644, %v3846
        %v3873 = vadd.f32 %v3645, %v3851
        %v3874 = vadd.f32 %v3646, %v3856
        %s3875 = scalar_lea.vmem [#allocation4], 32
        %v3876 = vld [vmem:[%s3875] sm:$0xff]
        %v3877 = vld [vmem:[%s3875 + $0x10] sm:$0xff]
        %v3878 = vld [vmem:[%s3875 + $0x20] sm:$0xff]
        %v3879 = vld [vmem:[%s3875 + $0x30] sm:$0xff]
        %v3880 = vld [vmem:[%s3875 + $0x40] sm:$0xff]
        %v3881 = vld [vmem:[%s3875 + $0x50] sm:$0xff]
        %v3882 = vld [vmem:[%s3875 + $0x60] sm:$0xff]
        %v3883 = vld [vmem:[%s3875 + $0x70] sm:$0xff]
        %v3884 = vld [vmem:[%s3875 + $0xa0] sm:$0xff]
        %v3885 = vld [vmem:[%s3875 + $0xb0] sm:$0xff]
        %v3886 = vld [vmem:[%s3875 + $0xc0] sm:$0xff]
        %v3887 = vld [vmem:[%s3875 + $0xd0] sm:$0xff]
        %v3888 = vld [vmem:[%s3875 + $0xe0] sm:$0xff]
        %v3889 = vld [vmem:[%s3875 + $0xf0] sm:$0xff]
        %v3890 = vld [vmem:[%s3875 + $0x100] sm:$0xff]
        %v3891 = vld [vmem:[%s3875 + $0x110] sm:$0xff]
        %s3892 = scalar_lea.vmem [#allocation15], 96
        %v3893 = vld [vmem:[%s3892] sm:$0xff]
        %v3894 = vld [vmem:[%s3892 + $0x8] sm:$0xff]
        %v3896 = vsel %vm2471, %v3876, 0
        %v3899 = vsel %vm2471, %v3877, 0
        %v3902 = vsel %vm2471, %v3878, 0
        %v3905 = vsel %vm2471, %v3879, 0
        %v3908 = vsel %vm2471, %v3880, 0
        %v3911 = vsel %vm2471, %v3881, 0
        %v3914 = vsel %vm2471, %v3882, 0
        %v3917 = vsel %vm2471, %v3883, 0
        %v3920 = vsel %vm2471, %v3884, 0
        %v3923 = vsel %vm2471, %v3885, 0
        %v3926 = vsel %vm2471, %v3886, 0
        %v3929 = vsel %vm2471, %v3887, 0
        %v3932 = vsel %vm2471, %v3888, 0
        %v3935 = vsel %vm2471, %v3889, 0
        %v3938 = vsel %vm2471, %v3890, 0
        %v3941 = vsel %vm2471, %v3891, 0
        %3943 = vmatprep.subr.mxu0 0.0
        %3944 = vmatpush1.msra.mxu0 %v3893
        %3945 = vmatprep.subr.mxu0 0.0
        %3946 = vmatpush1.msra.mxu0 %v3894
        %3947 = vmatprep.subr.mxu0 0.0
        %3948 = vmatpush1.msra.mxu0 0.0
        %3949 = vmatprep.subr.mxu0 0.0
        %3950 = vmatpush1.msra.mxu0 0.0
        %3951 = vmatprep.subr.mxu0 0.0
        %3952 = vmatpush1.msra.mxu0 0.0
        %3953 = vmatprep.subr.mxu0 0.0
        %3954 = vmatpush1.msra.mxu0 0.0
        %3955 = vmatprep.subr.mxu0 0.0
        %3956 = vmatpush1.msra.mxu0 0.0
        %3957 = vmatprep.subr.mxu0 0.0
        %3958 = vmatpush1.msra.mxu0 0.0
        %3959 = vmatprep.subr.mxu0 0.0
        %3960 = vmatpush1.msra.mxu0 0.0
        %3961 = vmatprep.subr.mxu0 0.0
        %3962 = vmatpush1.msra.mxu0 0.0
        %3963 = vmatprep.subr.mxu0 0.0
        %3964 = vmatpush1.msra.mxu0 0.0
        %3965 = vmatprep.subr.mxu0 0.0
        %3966 = vmatpush1.msra.mxu0 0.0
        %3967 = vmatprep.subr.mxu0 0.0
        %3968 = vmatpush1.msra.mxu0 0.0
        %3969 = vmatprep.subr.mxu0 0.0
        %3970 = vmatpush1.msra.mxu0 0.0
        %3971 = vmatprep.subr.mxu0 0.0
        %3972 = vmatpush1.msra.mxu0 0.0
        %3973 = vmatprep.subr.mxu0 0.0
        %3974 = vmatpush1.msra.mxu0 0.0
        %3975 = vmatprep.subr.mxu0 0.0
        %3976 = vmatpush1.msra.mxu0 0.0
        %3977 = vmatprep.subr.mxu0 0.0
        %3978 = vmatpush1.msra.mxu0 0.0
        %3979 = vmatprep.subr.mxu0 0.0
        %3980 = vmatpush1.msra.mxu0 0.0
        %3981 = vmatprep.subr.mxu0 0.0
        %3982 = vmatpush1.msra.mxu0 0.0
        %3983 = vmatprep.subr.mxu0 0.0
        %3984 = vmatpush1.msra.mxu0 0.0
        %3985 = vmatprep.subr.mxu0 0.0
        %3986 = vmatpush1.msra.mxu0 0.0
        %3987 = vmatprep.subr.mxu0 0.0
        %3988 = vmatpush1.msra.mxu0 0.0
        %3989 = vmatprep.subr.mxu0 0.0
        %3990 = vmatpush1.msra.mxu0 0.0
        %3991 = vmatprep.subr.mxu0 0.0
        %3992 = vmatpush1.msra.mxu0 0.0
        %3993 = vmatprep.subr.mxu0 0.0
        %3994 = vmatpush1.msra.mxu0 0.0
        %3995 = vmatprep.subr.mxu0 0.0
        %3996 = vmatpush1.msra.mxu0 0.0
        %3997 = vmatprep.subr.mxu0 0.0
        %3998 = vmatpush1.msra.mxu0 0.0
        %3999 = vmatprep.subr.mxu0 0.0
        %4000 = vmatpush1.msra.mxu0 0.0
        %4001 = vmatprep.subr.mxu0 0.0
        %4002 = vmatpush1.msra.mxu0 0.0
        %4003 = vmatprep.subr.mxu0 0.0
        %4004 = vmatpush1.msra.mxu0 0.0
        %4005 = vmatprep.subr.mxu0 0.0
        %4006 = vmatpush1.msra.mxu0 0.0
        %4007 = vmatprep.mubr.f32.mxu0 0.0
        %4008 = vmatmul.mubr.f32.gmra.mrb[0].mxu0 %v3896
        %v4009 = vpop.f32.mrb[0].mxu0
        %v4010 = vadd.f32 0.0, %v4009
        %v4011 = vpop.f32.mrb[0].mxu0
        %4012 = vmatprep.mubr.f32.mxu0 0.0
        %4013 = vmatmul.mubr.f32.gmra.mrb[0].mxu0 %v3899
        %v4014 = vpop.f32.mrb[0].mxu0
        %v4015 = vadd.f32 0.0, %v4014
        %v4016 = vpop.f32.mrb[0].mxu0
        %4017 = vmatprep.mubr.f32.mxu0 0.0
        %4018 = vmatmul.mubr.f32.gmra.mrb[0].mxu0 %v3902
        %v4019 = vpop.f32.mrb[0].mxu0
        %v4020 = vadd.f32 0.0, %v4019
        %v4021 = vpop.f32.mrb[0].mxu0
        %4022 = vmatprep.mubr.f32.mxu0 0.0
        %4023 = vmatmul.mubr.f32.gmra.mrb[0].mxu0 %v3905
        %v4024 = vpop.f32.mrb[0].mxu0
        %v4025 = vadd.f32 0.0, %v4024
        %v4026 = vpop.f32.mrb[0].mxu0
        %4027 = vmatprep.mubr.f32.mxu0 0.0
        %4028 = vmatmul.mubr.f32.gmra.mrb[0].mxu0 %v3908
        %v4029 = vpop.f32.mrb[0].mxu0
        %v4030 = vadd.f32 0.0, %v4029
        %v4031 = vpop.f32.mrb[0].mxu0
        %4032 = vmatprep.mubr.f32.mxu0 0.0
        %4033 = vmatmul.mubr.f32.gmra.mrb[0].mxu0 %v3911
        %v4034 = vpop.f32.mrb[0].mxu0
        %v4035 = vadd.f32 0.0, %v4034
        %v4036 = vpop.f32.mrb[0].mxu0
        %4037 = vmatprep.mubr.f32.mxu0 0.0
        %4038 = vmatmul.mubr.f32.gmra.mrb[0].mxu0 %v3914
        %v4039 = vpop.f32.mrb[0].mxu0
        %v4040 = vadd.f32 0.0, %v4039
        %v4041 = vpop.f32.mrb[0].mxu0
        %4042 = vmatprep.mubr.f32.mxu0 0.0
        %4043 = vmatmul.mubr.f32.gmra.mrb[0].mxu0 %v3917
        %v4044 = vpop.f32.mrb[0].mxu0
        %v4045 = vadd.f32 0.0, %v4044
        %v4046 = vpop.f32.mrb[0].mxu0
        %4047 = vmatprep.mubr.f32.mxu0 0.0
        %4048 = vmatmul.mubr.f32.gmra.mrb[0].mxu0 %v3920
        %v4049 = vpop.f32.mrb[0].mxu0
        %v4050 = vadd.f32 0.0, %v4049
        %v4051 = vpop.f32.mrb[0].mxu0
        %4052 = vmatprep.mubr.f32.mxu0 0.0
        %4053 = vmatmul.mubr.f32.gmra.mrb[0].mxu0 %v3923
        %v4054 = vpop.f32.mrb[0].mxu0
        %v4055 = vadd.f32 0.0, %v4054
        %v4056 = vpop.f32.mrb[0].mxu0
        %4057 = vmatprep.mubr.f32.mxu0 0.0
        %4058 = vmatmul.mubr.f32.gmra.mrb[0].mxu0 %v3926
        %v4059 = vpop.f32.mrb[0].mxu0
        %v4060 = vadd.f32 0.0, %v4059
        %v4061 = vpop.f32.mrb[0].mxu0
        %4062 = vmatprep.mubr.f32.mxu0 0.0
        %4063 = vmatmul.mubr.f32.gmra.mrb[0].mxu0 %v3929
        %v4064 = vpop.f32.mrb[0].mxu0
        %v4065 = vadd.f32 0.0, %v4064
        %v4066 = vpop.f32.mrb[0].mxu0
        %4067 = vmatprep.mubr.f32.mxu0 0.0
        %4068 = vmatmul.mubr.f32.gmra.mrb[0].mxu0 %v3932
        %v4069 = vpop.f32.mrb[0].mxu0
        %v4070 = vadd.f32 0.0, %v4069
        %v4071 = vpop.f32.mrb[0].mxu0
        %4072 = vmatprep.mubr.f32.mxu0 0.0
        %4073 = vmatmul.mubr.f32.gmra.mrb[0].mxu0 %v3935
        %v4074 = vpop.f32.mrb[0].mxu0
        %v4075 = vadd.f32 0.0, %v4074
        %v4076 = vpop.f32.mrb[0].mxu0
        %4077 = vmatprep.mubr.f32.mxu0 0.0
        %4078 = vmatmul.mubr.f32.gmra.mrb[0].mxu0 %v3938
        %v4079 = vpop.f32.mrb[0].mxu0
        %v4080 = vadd.f32 0.0, %v4079
        %v4081 = vpop.f32.mrb[0].mxu0
        %4082 = vmatprep.mubr.f32.mxu0 0.0
        %4083 = vmatmul.mubr.f32.gmra.mrb[0].mxu0 %v3941
        %v4084 = vpop.f32.mrb[0].mxu0
        %v4085 = vadd.f32 0.0, %v4084
        %v4086 = vpop.f32.mrb[0].mxu0
        %4087 = vdwg.mxu0
        %v4088 = vadd.f32 %v3859, %v4010
        %v4089 = vadd.f32 %v3860, %v4015
        %v4090 = vadd.f32 %v3861, %v4020
        %v4091 = vadd.f32 %v3862, %v4025
        %v4092 = vadd.f32 %v3863, %v4030
        %v4093 = vadd.f32 %v3864, %v4035
        %v4094 = vadd.f32 %v3865, %v4040
        %v4095 = vadd.f32 %v3866, %v4045
        %v4096 = vadd.f32 %v3867, %v4050
        %v4097 = vadd.f32 %v3868, %v4055
        %v4098 = vadd.f32 %v3869, %v4060
        %v4099 = vadd.f32 %v3870, %v4065
        %v4100 = vadd.f32 %v3871, %v4070
        %v4101 = vadd.f32 %v3872, %v4075
        %v4102 = vadd.f32 %v3873, %v4080
        %v4103 = vadd.f32 %v3874, %v4085
        %v4104 = vld [vmem:[%s3875 + $0x1] sm:$0xff]
        %v4105 = vld [vmem:[%s3875 + $0x11] sm:$0xff]
        %v4106 = vld [vmem:[%s3875 + $0x21] sm:$0xff]
        %v4107 = vld [vmem:[%s3875 + $0x31] sm:$0xff]
        %v4108 = vld [vmem:[%s3875 + $0x41] sm:$0xff]
        %v4109 = vld [vmem:[%s3875 + $0x51] sm:$0xff]
        %v4110 = vld [vmem:[%s3875 + $0x61] sm:$0xff]
        %v4111 = vld [vmem:[%s3875 + $0x71] sm:$0xff]
        %v4112 = vld [vmem:[%s3875 + $0xa1] sm:$0xff]
        %v4113 = vld [vmem:[%s3875 + $0xb1] sm:$0xff]
        %v4114 = vld [vmem:[%s3875 + $0xc1] sm:$0xff]
        %v4115 = vld [vmem:[%s3875 + $0xd1] sm:$0xff]
        %v4116 = vld [vmem:[%s3875 + $0xe1] sm:$0xff]
        %v4117 = vld [vmem:[%s3875 + $0xf1] sm:$0xff]
        %v4118 = vld [vmem:[%s3875 + $0x101] sm:$0xff]
        %v4119 = vld [vmem:[%s3875 + $0x111] sm:$0xff]
        %s4120 = scalar_lea.vmem [#allocation15], 112
        %v4121 = vld [vmem:[%s4120] sm:$0xff]
        %v4122 = vld [vmem:[%s4120 + $0x8] sm:$0xff]
        %v4124 = vsel %vm2471, %v4104, 0
        %v4127 = vsel %vm2471, %v4105, 0
        %v4130 = vsel %vm2471, %v4106, 0
        %v4133 = vsel %vm2471, %v4107, 0
        %v4136 = vsel %vm2471, %v4108, 0
        %v4139 = vsel %vm2471, %v4109, 0
        %v4142 = vsel %vm2471, %v4110, 0
        %v4145 = vsel %vm2471, %v4111, 0
        %v4148 = vsel %vm2471, %v4112, 0
        %v4151 = vsel %vm2471, %v4113, 0
        %v4154 = vsel %vm2471, %v4114, 0
        %v4157 = vsel %vm2471, %v4115, 0
        %v4160 = vsel %vm2471, %v4116, 0
        %v4163 = vsel %vm2471, %v4117, 0
        %v4166 = vsel %vm2471, %v4118, 0
        %v4169 = vsel %vm2471, %v4119, 0
        %4171 = vmatprep.subr.mxu0 0.0
        %4172 = vmatpush1.msra.mxu0 %v4121
        %4173 = vmatprep.subr.mxu0 0.0
        %4174 = vmatpush1.msra.mxu0 %v4122
        %4175 = vmatprep.subr.mxu0 0.0
        %4176 = vmatpush1.msra.mxu0 0.0
        %4177 = vmatprep.subr.mxu0 0.0
        %4178 = vmatpush1.msra.mxu0 0.0
        %4179 = vmatprep.subr.mxu0 0.0
        %4180 = vmatpush1.msra.mxu0 0.0
        %4181 = vmatprep.subr.mxu0 0.0
        %4182 = vmatpush1.msra.mxu0 0.0
        %4183 = vmatprep.subr.mxu0 0.0
        %4184 = vmatpush1.msra.mxu0 0.0
        %4185 = vmatprep.subr.mxu0 0.0
        %4186 = vmatpush1.msra.mxu0 0.0
        %4187 = vmatprep.subr.mxu0 0.0
        %4188 = vmatpush1.msra.mxu0 0.0
        %4189 = vmatprep.subr.mxu0 0.0
        %4190 = vmatpush1.msra.mxu0 0.0
        %4191 = vmatprep.subr.mxu0 0.0
        %4192 = vmatpush1.msra.mxu0 0.0
        %4193 = vmatprep.subr.mxu0 0.0
        %4194 = vmatpush1.msra.mxu0 0.0
        %4195 = vmatprep.subr.mxu0 0.0
        %4196 = vmatpush1.msra.mxu0 0.0
        %4197 = vmatprep.subr.mxu0 0.0
        %4198 = vmatpush1.msra.mxu0 0.0
        %4199 = vmatprep.subr.mxu0 0.0
        %4200 = vmatpush1.msra.mxu0 0.0
        %4201 = vmatprep.subr.mxu0 0.0
        %4202 = vmatpush1.msra.mxu0 0.0
        %4203 = vmatprep.subr.mxu0 0.0
        %4204 = vmatpush1.msra.mxu0 0.0
        %4205 = vmatprep.subr.mxu0 0.0
        %4206 = vmatpush1.msra.mxu0 0.0
        %4207 = vmatprep.subr.mxu0 0.0
        %4208 = vmatpush1.msra.mxu0 0.0
        %4209 = vmatprep.subr.mxu0 0.0
        %4210 = vmatpush1.msra.mxu0 0.0
        %4211 = vmatprep.subr.mxu0 0.0
        %4212 = vmatpush1.msra.mxu0 0.0
        %4213 = vmatprep.subr.mxu0 0.0
        %4214 = vmatpush1.msra.mxu0 0.0
        %4215 = vmatprep.subr.mxu0 0.0
        %4216 = vmatpush1.msra.mxu0 0.0
        %4217 = vmatprep.subr.mxu0 0.0
        %4218 = vmatpush1.msra.mxu0 0.0
        %4219 = vmatprep.subr.mxu0 0.0
        %4220 = vmatpush1.msra.mxu0 0.0
        %4221 = vmatprep.subr.mxu0 0.0
        %4222 = vmatpush1.msra.mxu0 0.0
        %4223 = vmatprep.subr.mxu0 0.0
        %4224 = vmatpush1.msra.mxu0 0.0
        %4225 = vmatprep.subr.mxu0 0.0
        %4226 = vmatpush1.msra.mxu0 0.0
        %4227 = vmatprep.subr.mxu0 0.0
        %4228 = vmatpush1.msra.mxu0 0.0
        %4229 = vmatprep.subr.mxu0 0.0
        %4230 = vmatpush1.msra.mxu0 0.0
        %4231 = vmatprep.subr.mxu0 0.0
        %4232 = vmatpush1.msra.mxu0 0.0
        %4233 = vmatprep.subr.mxu0 0.0
        %4234 = vmatpush1.msra.mxu0 0.0
        %4235 = vmatprep.mubr.f32.mxu0 0.0
        %4236 = vmatmul.mubr.f32.gmra.mrb[0].mxu0 %v4124
        %v4237 = vpop.f32.mrb[0].mxu0
        %v4238 = vadd.f32 0.0, %v4237
        %v4239 = vpop.f32.mrb[0].mxu0
        %4240 = vmatprep.mubr.f32.mxu0 0.0
        %4241 = vmatmul.mubr.f32.gmra.mrb[0].mxu0 %v4127
        %v4242 = vpop.f32.mrb[0].mxu0
        %v4243 = vadd.f32 0.0, %v4242
        %v4244 = vpop.f32.mrb[0].mxu0
        %4245 = vmatprep.mubr.f32.mxu0 0.0
        %4246 = vmatmul.mubr.f32.gmra.mrb[0].mxu0 %v4130
        %v4247 = vpop.f32.mrb[0].mxu0
        %v4248 = vadd.f32 0.0, %v4247
        %v4249 = vpop.f32.mrb[0].mxu0
        %4250 = vmatprep.mubr.f32.mxu0 0.0
        %4251 = vmatmul.mubr.f32.gmra.mrb[0].mxu0 %v4133
        %v4252 = vpop.f32.mrb[0].mxu0
        %v4253 = vadd.f32 0.0, %v4252
        %v4254 = vpop.f32.mrb[0].mxu0
        %4255 = vmatprep.mubr.f32.mxu0 0.0
        %4256 = vmatmul.mubr.f32.gmra.mrb[0].mxu0 %v4136
        %v4257 = vpop.f32.mrb[0].mxu0
        %v4258 = vadd.f32 0.0, %v4257
        %v4259 = vpop.f32.mrb[0].mxu0
        %4260 = vmatprep.mubr.f32.mxu0 0.0
        %4261 = vmatmul.mubr.f32.gmra.mrb[0].mxu0 %v4139
        %v4262 = vpop.f32.mrb[0].mxu0
        %v4263 = vadd.f32 0.0, %v4262
        %v4264 = vpop.f32.mrb[0].mxu0
        %4265 = vmatprep.mubr.f32.mxu0 0.0
        %4266 = vmatmul.mubr.f32.gmra.mrb[0].mxu0 %v4142
        %v4267 = vpop.f32.mrb[0].mxu0
        %v4268 = vadd.f32 0.0, %v4267
        %v4269 = vpop.f32.mrb[0].mxu0
        %4270 = vmatprep.mubr.f32.mxu0 0.0
        %4271 = vmatmul.mubr.f32.gmra.mrb[0].mxu0 %v4145
        %v4272 = vpop.f32.mrb[0].mxu0
        %v4273 = vadd.f32 0.0, %v4272
        %v4274 = vpop.f32.mrb[0].mxu0
        %4275 = vmatprep.mubr.f32.mxu0 0.0
        %4276 = vmatmul.mubr.f32.gmra.mrb[0].mxu0 %v4148
        %v4277 = vpop.f32.mrb[0].mxu0
        %v4278 = vadd.f32 0.0, %v4277
        %v4279 = vpop.f32.mrb[0].mxu0
        %4280 = vmatprep.mubr.f32.mxu0 0.0
        %4281 = vmatmul.mubr.f32.gmra.mrb[0].mxu0 %v4151
        %v4282 = vpop.f32.mrb[0].mxu0
        %v4283 = vadd.f32 0.0, %v4282
        %v4284 = vpop.f32.mrb[0].mxu0
        %4285 = vmatprep.mubr.f32.mxu0 0.0
        %4286 = vmatmul.mubr.f32.gmra.mrb[0].mxu0 %v4154
        %v4287 = vpop.f32.mrb[0].mxu0
        %v4288 = vadd.f32 0.0, %v4287
        %v4289 = vpop.f32.mrb[0].mxu0
        %4290 = vmatprep.mubr.f32.mxu0 0.0
        %4291 = vmatmul.mubr.f32.gmra.mrb[0].mxu0 %v4157
        %v4292 = vpop.f32.mrb[0].mxu0
        %v4293 = vadd.f32 0.0, %v4292
        %v4294 = vpop.f32.mrb[0].mxu0
        %4295 = vmatprep.mubr.f32.mxu0 0.0
        %4296 = vmatmul.mubr.f32.gmra.mrb[0].mxu0 %v4160
        %v4297 = vpop.f32.mrb[0].mxu0
        %v4298 = vadd.f32 0.0, %v4297
        %v4299 = vpop.f32.mrb[0].mxu0
        %4300 = vmatprep.mubr.f32.mxu0 0.0
        %4301 = vmatmul.mubr.f32.gmra.mrb[0].mxu0 %v4163
        %v4302 = vpop.f32.mrb[0].mxu0
        %v4303 = vadd.f32 0.0, %v4302
        %v4304 = vpop.f32.mrb[0].mxu0
        %4305 = vmatprep.mubr.f32.mxu0 0.0
        %4306 = vmatmul.mubr.f32.gmra.mrb[0].mxu0 %v4166
        %v4307 = vpop.f32.mrb[0].mxu0
        %v4308 = vadd.f32 0.0, %v4307
        %v4309 = vpop.f32.mrb[0].mxu0
        %4310 = vmatprep.mubr.f32.mxu0 0.0
        %4311 = vmatmul.mubr.f32.gmra.mrb[0].mxu0 %v4169
        %v4312 = vpop.f32.mrb[0].mxu0
        %v4313 = vadd.f32 0.0, %v4312
        %v4314 = vpop.f32.mrb[0].mxu0
        %4315 = vdwg.mxu0
        %v4316 = vadd.f32 %v4088, %v4238
        %v4317 = vadd.f32 %v4089, %v4243
        %v4318 = vadd.f32 %v4090, %v4248
        %v4319 = vadd.f32 %v4091, %v4253
        %v4320 = vadd.f32 %v4092, %v4258
        %v4321 = vadd.f32 %v4093, %v4263
        %v4322 = vadd.f32 %v4094, %v4268
        %v4323 = vadd.f32 %v4095, %v4273
        %v4324 = vadd.f32 %v4096, %v4278
        %v4325 = vadd.f32 %v4097, %v4283
        %v4326 = vadd.f32 %v4098, %v4288
        %v4327 = vadd.f32 %v4099, %v4293
        %v4328 = vadd.f32 %v4100, %v4298
        %v4329 = vadd.f32 %v4101, %v4303
        %v4330 = vadd.f32 %v4102, %v4308
        %v4331 = vadd.f32 %v4103, %v4313
        %v4332 = vld [vmem:[%s3875 + $0x2] sm:$0xff]
        %v4333 = vld [vmem:[%s3875 + $0x12] sm:$0xff]
        %v4334 = vld [vmem:[%s3875 + $0x22] sm:$0xff]
        %v4335 = vld [vmem:[%s3875 + $0x32] sm:$0xff]
        %v4336 = vld [vmem:[%s3875 + $0x42] sm:$0xff]
        %v4337 = vld [vmem:[%s3875 + $0x52] sm:$0xff]
        %v4338 = vld [vmem:[%s3875 + $0x62] sm:$0xff]
        %v4339 = vld [vmem:[%s3875 + $0x72] sm:$0xff]
        %v4340 = vld [vmem:[%s3875 + $0xa2] sm:$0xff]
        %v4341 = vld [vmem:[%s3875 + $0xb2] sm:$0xff]
        %v4342 = vld [vmem:[%s3875 + $0xc2] sm:$0xff]
        %v4343 = vld [vmem:[%s3875 + $0xd2] sm:$0xff]
        %v4344 = vld [vmem:[%s3875 + $0xe2] sm:$0xff]
        %v4345 = vld [vmem:[%s3875 + $0xf2] sm:$0xff]
        %v4346 = vld [vmem:[%s3875 + $0x102] sm:$0xff]
        %v4347 = vld [vmem:[%s3875 + $0x112] sm:$0xff]
        %s4348 = scalar_lea.vmem [#allocation15], 128
        %v4349 = vld [vmem:[%s4348] sm:$0xff]
        %v4350 = vld [vmem:[%s4348 + $0x8] sm:$0xff]
        %v4352 = vsel %vm2471, %v4332, 0
        %v4355 = vsel %vm2471, %v4333, 0
        %v4358 = vsel %vm2471, %v4334, 0
        %v4361 = vsel %vm2471, %v4335, 0
        %v4364 = vsel %vm2471, %v4336, 0
        %v4367 = vsel %vm2471, %v4337, 0
        %v4370 = vsel %vm2471, %v4338, 0
        %v4373 = vsel %vm2471, %v4339, 0
        %v4376 = vsel %vm2471, %v4340, 0
        %v4379 = vsel %vm2471, %v4341, 0
        %v4382 = vsel %vm2471, %v4342, 0
        %v4385 = vsel %vm2471, %v4343, 0
        %v4388 = vsel %vm2471, %v4344, 0
        %v4391 = vsel %vm2471, %v4345, 0
        %v4394 = vsel %vm2471, %v4346, 0
        %v4397 = vsel %vm2471, %v4347, 0
        %4399 = vmatprep.subr.mxu0 0.0
        %4400 = vmatpush1.msra.mxu0 %v4349
        %4401 = vmatprep.subr.mxu0 0.0
        %4402 = vmatpush1.msra.mxu0 %v4350
        %4403 = vmatprep.subr.mxu0 0.0
        %4404 = vmatpush1.msra.mxu0 0.0
        %4405 = vmatprep.subr.mxu0 0.0
        %4406 = vmatpush1.msra.mxu0 0.0
        %4407 = vmatprep.subr.mxu0 0.0
        %4408 = vmatpush1.msra.mxu0 0.0
        %4409 = vmatprep.subr.mxu0 0.0
        %4410 = vmatpush1.msra.mxu0 0.0
        %4411 = vmatprep.subr.mxu0 0.0
        %4412 = vmatpush1.msra.mxu0 0.0
        %4413 = vmatprep.subr.mxu0 0.0
        %4414 = vmatpush1.msra.mxu0 0.0
        %4415 = vmatprep.subr.mxu0 0.0
        %4416 = vmatpush1.msra.mxu0 0.0
        %4417 = vmatprep.subr.mxu0 0.0
        %4418 = vmatpush1.msra.mxu0 0.0
        %4419 = vmatprep.subr.mxu0 0.0
        %4420 = vmatpush1.msra.mxu0 0.0
        %4421 = vmatprep.subr.mxu0 0.0
        %4422 = vmatpush1.msra.mxu0 0.0
        %4423 = vmatprep.subr.mxu0 0.0
        %4424 = vmatpush1.msra.mxu0 0.0
        %4425 = vmatprep.subr.mxu0 0.0
        %4426 = vmatpush1.msra.mxu0 0.0
        %4427 = vmatprep.subr.mxu0 0.0
        %4428 = vmatpush1.msra.mxu0 0.0
        %4429 = vmatprep.subr.mxu0 0.0
        %4430 = vmatpush1.msra.mxu0 0.0
        %4431 = vmatprep.subr.mxu0 0.0
        %4432 = vmatpush1.msra.mxu0 0.0
        %4433 = vmatprep.subr.mxu0 0.0
        %4434 = vmatpush1.msra.mxu0 0.0
        %4435 = vmatprep.subr.mxu0 0.0
        %4436 = vmatpush1.msra.mxu0 0.0
        %4437 = vmatprep.subr.mxu0 0.0
        %4438 = vmatpush1.msra.mxu0 0.0
        %4439 = vmatprep.subr.mxu0 0.0
        %4440 = vmatpush1.msra.mxu0 0.0
        %4441 = vmatprep.subr.mxu0 0.0
        %4442 = vmatpush1.msra.mxu0 0.0
        %4443 = vmatprep.subr.mxu0 0.0
        %4444 = vmatpush1.msra.mxu0 0.0
        %4445 = vmatprep.subr.mxu0 0.0
        %4446 = vmatpush1.msra.mxu0 0.0
        %4447 = vmatprep.subr.mxu0 0.0
        %4448 = vmatpush1.msra.mxu0 0.0
        %4449 = vmatprep.subr.mxu0 0.0
        %4450 = vmatpush1.msra.mxu0 0.0
        %4451 = vmatprep.subr.mxu0 0.0
        %4452 = vmatpush1.msra.mxu0 0.0
        %4453 = vmatprep.subr.mxu0 0.0
        %4454 = vmatpush1.msra.mxu0 0.0
        %4455 = vmatprep.subr.mxu0 0.0
        %4456 = vmatpush1.msra.mxu0 0.0
        %4457 = vmatprep.subr.mxu0 0.0
        %4458 = vmatpush1.msra.mxu0 0.0
        %4459 = vmatprep.subr.mxu0 0.0
        %4460 = vmatpush1.msra.mxu0 0.0
        %4461 = vmatprep.subr.mxu0 0.0
        %4462 = vmatpush1.msra.mxu0 0.0
        %4463 = vmatprep.mubr.f32.mxu0 0.0
        %4464 = vmatmul.mubr.f32.gmra.mrb[0].mxu0 %v4352
        %v4465 = vpop.f32.mrb[0].mxu0
        %v4466 = vadd.f32 0.0, %v4465
        %v4467 = vpop.f32.mrb[0].mxu0
        %4468 = vmatprep.mubr.f32.mxu0 0.0
        %4469 = vmatmul.mubr.f32.gmra.mrb[0].mxu0 %v4355
        %v4470 = vpop.f32.mrb[0].mxu0
        %v4471 = vadd.f32 0.0, %v4470
        %v4472 = vpop.f32.mrb[0].mxu0
        %4473 = vmatprep.mubr.f32.mxu0 0.0
        %4474 = vmatmul.mubr.f32.gmra.mrb[0].mxu0 %v4358
        %v4475 = vpop.f32.mrb[0].mxu0
        %v4476 = vadd.f32 0.0, %v4475
        %v4477 = vpop.f32.mrb[0].mxu0
        %4478 = vmatprep.mubr.f32.mxu0 0.0
        %4479 = vmatmul.mubr.f32.gmra.mrb[0].mxu0 %v4361
        %v4480 = vpop.f32.mrb[0].mxu0
        %v4481 = vadd.f32 0.0, %v4480
        %v4482 = vpop.f32.mrb[0].mxu0
        %4483 = vmatprep.mubr.f32.mxu0 0.0
        %4484 = vmatmul.mubr.f32.gmra.mrb[0].mxu0 %v4364
        %v4485 = vpop.f32.mrb[0].mxu0
        %v4486 = vadd.f32 0.0, %v4485
        %v4487 = vpop.f32.mrb[0].mxu0
        %4488 = vmatprep.mubr.f32.mxu0 0.0
        %4489 = vmatmul.mubr.f32.gmra.mrb[0].mxu0 %v4367
        %v4490 = vpop.f32.mrb[0].mxu0
        %v4491 = vadd.f32 0.0, %v4490
        %v4492 = vpop.f32.mrb[0].mxu0
        %4493 = vmatprep.mubr.f32.mxu0 0.0
        %4494 = vmatmul.mubr.f32.gmra.mrb[0].mxu0 %v4370
        %v4495 = vpop.f32.mrb[0].mxu0
        %v4496 = vadd.f32 0.0, %v4495
        %v4497 = vpop.f32.mrb[0].mxu0
        %4498 = vmatprep.mubr.f32.mxu0 0.0
        %4499 = vmatmul.mubr.f32.gmra.mrb[0].mxu0 %v4373
        %v4500 = vpop.f32.mrb[0].mxu0
        %v4501 = vadd.f32 0.0, %v4500
        %v4502 = vpop.f32.mrb[0].mxu0
        %4503 = vmatprep.mubr.f32.mxu0 0.0
        %4504 = vmatmul.mubr.f32.gmra.mrb[0].mxu0 %v4376
        %v4505 = vpop.f32.mrb[0].mxu0
        %v4506 = vadd.f32 0.0, %v4505
        %v4507 = vpop.f32.mrb[0].mxu0
        %4508 = vmatprep.mubr.f32.mxu0 0.0
        %4509 = vmatmul.mubr.f32.gmra.mrb[0].mxu0 %v4379
        %v4510 = vpop.f32.mrb[0].mxu0
        %v4511 = vadd.f32 0.0, %v4510
        %v4512 = vpop.f32.mrb[0].mxu0
        %4513 = vmatprep.mubr.f32.mxu0 0.0
        %4514 = vmatmul.mubr.f32.gmra.mrb[0].mxu0 %v4382
        %v4515 = vpop.f32.mrb[0].mxu0
        %v4516 = vadd.f32 0.0, %v4515
        %v4517 = vpop.f32.mrb[0].mxu0
        %4518 = vmatprep.mubr.f32.mxu0 0.0
        %4519 = vmatmul.mubr.f32.gmra.mrb[0].mxu0 %v4385
        %v4520 = vpop.f32.mrb[0].mxu0
        %v4521 = vadd.f32 0.0, %v4520
        %v4522 = vpop.f32.mrb[0].mxu0
        %4523 = vmatprep.mubr.f32.mxu0 0.0
        %4524 = vmatmul.mubr.f32.gmra.mrb[0].mxu0 %v4388
        %v4525 = vpop.f32.mrb[0].mxu0
        %v4526 = vadd.f32 0.0, %v4525
        %v4527 = vpop.f32.mrb[0].mxu0
        %4528 = vmatprep.mubr.f32.mxu0 0.0
        %4529 = vmatmul.mubr.f32.gmra.mrb[0].mxu0 %v4391
        %v4530 = vpop.f32.mrb[0].mxu0
        %v4531 = vadd.f32 0.0, %v4530
        %v4532 = vpop.f32.mrb[0].mxu0
        %4533 = vmatprep.mubr.f32.mxu0 0.0
        %4534 = vmatmul.mubr.f32.gmra.mrb[0].mxu0 %v4394
        %v4535 = vpop.f32.mrb[0].mxu0
        %v4536 = vadd.f32 0.0, %v4535
        %v4537 = vpop.f32.mrb[0].mxu0
        %4538 = vmatprep.mubr.f32.mxu0 0.0
        %4539 = vmatmul.mubr.f32.gmra.mrb[0].mxu0 %v4397
        %v4540 = vpop.f32.mrb[0].mxu0
        %v4541 = vadd.f32 0.0, %v4540
        %v4542 = vpop.f32.mrb[0].mxu0
        %4543 = vdwg.mxu0
        %v4544 = vadd.f32 %v4316, %v4466
        %v4545 = vadd.f32 %v4317, %v4471
        %v4546 = vadd.f32 %v4318, %v4476
        %v4547 = vadd.f32 %v4319, %v4481
        %v4548 = vadd.f32 %v4320, %v4486
        %v4549 = vadd.f32 %v4321, %v4491
        %v4550 = vadd.f32 %v4322, %v4496
        %v4551 = vadd.f32 %v4323, %v4501
        %v4552 = vadd.f32 %v4324, %v4506
        %v4553 = vadd.f32 %v4325, %v4511
        %v4554 = vadd.f32 %v4326, %v4516
        %v4555 = vadd.f32 %v4327, %v4521
        %v4556 = vadd.f32 %v4328, %v4526
        %v4557 = vadd.f32 %v4329, %v4531
        %v4558 = vadd.f32 %v4330, %v4536
        %v4559 = vadd.f32 %v4331, %v4541
        %v4560 = vld [vmem:[%s9] sm:$0x1]
        %v4562 = vlaneseq
        %v4563 = vshrl.u32 %v4562, 7
        %v4564 = vsub.s32 0, %v4563
        %v4565 = vrot.slane %v4560, %v4564
        %v4567 = vmul.f32 %v4544, %v4565
        %v4568 = vmul.f32 %v4545, %v4565
        %v4569 = vmul.f32 %v4546, %v4565
        %v4570 = vmul.f32 %v4547, %v4565
        %v4571 = vmul.f32 %v4548, %v4565
        %v4572 = vmul.f32 %v4549, %v4565
        %v4573 = vmul.f32 %v4550, %v4565
        %v4574 = vmul.f32 %v4551, %v4565
        %v4575 = vmul.f32 %v4552, %v4565
        %v4576 = vmul.f32 %v4553, %v4565
        %v4577 = vmul.f32 %v4554, %v4565
        %v4578 = vmul.f32 %v4555, %v4565
        %v4579 = vmul.f32 %v4556, %v4565
        %v4580 = vmul.f32 %v4557, %v4565
        %v4581 = vmul.f32 %v4558, %v4565
        %v4582 = vmul.f32 %v4559, %v4565
        %v4583 = vld [vmem:[%s10] sm:$0x1]
        %v4585 = vlaneseq
        %v4586 = vshrl.u32 %v4585, 7
        %v4587 = vsub.s32 0, %v4586
        %v4588 = vrot.slane %v4583, %v4587
        %v4590 = vadd.f32 %v4567, %v4588
        %v4591 = vadd.f32 %v4568, %v4588
        %v4592 = vadd.f32 %v4569, %v4588
        %v4593 = vadd.f32 %v4570, %v4588
        %v4594 = vadd.f32 %v4571, %v4588
        %v4595 = vadd.f32 %v4572, %v4588
        %v4596 = vadd.f32 %v4573, %v4588
        %v4597 = vadd.f32 %v4574, %v4588
        %v4598 = vadd.f32 %v4575, %v4588
        %v4599 = vadd.f32 %v4576, %v4588
        %v4600 = vadd.f32 %v4577, %v4588
        %v4601 = vadd.f32 %v4578, %v4588
        %v4602 = vadd.f32 %v4579, %v4588
        %v4603 = vadd.f32 %v4580, %v4588
        %v4604 = vadd.f32 %v4581, %v4588
        %v4605 = vadd.f32 %v4582, %v4588
        %v4606 = vmax.f32 %v4590, 0.0
        %v4607 = vmax.f32 %v4591, 0.0
        %v4608 = vmax.f32 %v4592, 0.0
        %v4609 = vmax.f32 %v4593, 0.0
        %v4610 = vmax.f32 %v4594, 0.0
        %v4611 = vmax.f32 %v4595, 0.0
        %v4612 = vmax.f32 %v4596, 0.0
        %v4613 = vmax.f32 %v4597, 0.0
        %v4614 = vmax.f32 %v4598, 0.0
        %v4615 = vmax.f32 %v4599, 0.0
        %v4616 = vmax.f32 %v4600, 0.0
        %v4617 = vmax.f32 %v4601, 0.0
        %v4618 = vmax.f32 %v4602, 0.0
        %v4619 = vmax.f32 %v4603, 0.0
        %v4620 = vmax.f32 %v4604, 0.0
        %v4621 = vmax.f32 %v4605, 0.0
        %4638 = vrot.lane.b32.xlu0 %v4606, 8
        %v4639 = vpop.permute.xlu0 %4638
        %4640 = vrot.lane.b32.xlu0 %v4607, 8
        %v4641 = vpop.permute.xlu0 %4640
        %4642 = vrot.lane.b32.xlu0 %v4608, 8
        %v4643 = vpop.permute.xlu0 %4642
        %4644 = vrot.lane.b32.xlu0 %v4609, 8
        %v4645 = vpop.permute.xlu0 %4644
        %4646 = vrot.lane.b32.xlu0 %v4610, 8
        %v4647 = vpop.permute.xlu0 %4646
        %4648 = vrot.lane.b32.xlu0 %v4611, 8
        %v4649 = vpop.permute.xlu0 %4648
        %4650 = vrot.lane.b32.xlu0 %v4612, 8
        %v4651 = vpop.permute.xlu0 %4650
        %4652 = vrot.lane.b32.xlu0 %v4613, 8
        %v4653 = vpop.permute.xlu0 %4652
        %4654 = vrot.lane.b32.xlu0 %v4614, 8
        %v4655 = vpop.permute.xlu0 %4654
        %4656 = vrot.lane.b32.xlu0 %v4615, 8
        %v4657 = vpop.permute.xlu0 %4656
        %4658 = vrot.lane.b32.xlu0 %v4616, 8
        %v4659 = vpop.permute.xlu0 %4658
        %4660 = vrot.lane.b32.xlu0 %v4617, 8
        %v4661 = vpop.permute.xlu0 %4660
        %4662 = vrot.lane.b32.xlu0 %v4618, 8
        %v4663 = vpop.permute.xlu0 %4662
        %4664 = vrot.lane.b32.xlu0 %v4619, 8
        %v4665 = vpop.permute.xlu0 %4664
        %4666 = vrot.lane.b32.xlu0 %v4620, 8
        %v4667 = vpop.permute.xlu0 %4666
        %4668 = vrot.lane.b32.xlu0 %v4621, 8
        %v4669 = vpop.permute.xlu0 %4668
        %vm4686 = vcmask 195648
        %4687 = vst.msk [vmem:[%s770] sm:$0xff] %vm4686, %v4639
        %4688 = vst.msk [vmem:[%s770 + $0x8] sm:$0xff] %vm4686, %v4641
        %4689 = vst.msk [vmem:[%s770 + $0x10] sm:$0xff] %vm4686, %v4643
        %4690 = vst.msk [vmem:[%s770 + $0x18] sm:$0xff] %vm4686, %v4645
        %4691 = vst.msk [vmem:[%s770 + $0x20] sm:$0xff] %vm4686, %v4647
        %4692 = vst.msk [vmem:[%s770 + $0x28] sm:$0xff] %vm4686, %v4649
        %4693 = vst.msk [vmem:[%s770 + $0x30] sm:$0xff] %vm4686, %v4651
        %4694 = vst.msk [vmem:[%s770 + $0x38] sm:$0xff] %vm4686, %v4653
        %4695 = vst.msk [vmem:[%s770 + $0x40] sm:$0xff] %vm4686, %v4655
        %4696 = vst.msk [vmem:[%s770 + $0x48] sm:$0xff] %vm4686, %v4657
        %4697 = vst.msk [vmem:[%s770 + $0x50] sm:$0xff] %vm4686, %v4659
        %4698 = vst.msk [vmem:[%s770 + $0x58] sm:$0xff] %vm4686, %v4661
        %4699 = vst.msk [vmem:[%s770 + $0x60] sm:$0xff] %vm4686, %v4663
        %4700 = vst.msk [vmem:[%s770 + $0x68] sm:$0xff] %vm4686, %v4665
        %4701 = vst.msk [vmem:[%s770 + $0x70] sm:$0xff] %vm4686, %v4667
        %4702 = vst.msk [vmem:[%s770 + $0x78] sm:$0xff] %vm4686, %v4669
        %v4703 = vld [vmem:[#allocation3] sm:$0xff]
        %v4704 = vld [vmem:[#allocation3 + $0x8] sm:$0xff]
        %v4705 = vld [vmem:[#allocation3 + $0x10] sm:$0xff]
        %v4706 = vld [vmem:[#allocation3 + $0x18] sm:$0xff]
        %v4707 = vld [vmem:[#allocation3 + $0x20] sm:$0xff]
        %v4708 = vld [vmem:[#allocation3 + $0x28] sm:$0xff]
        %v4709 = vld [vmem:[#allocation3 + $0x30] sm:$0xff]
        %v4710 = vld [vmem:[#allocation3 + $0x38] sm:$0xff]
        %v4711 = vld [vmem:[#allocation3 + $0x40] sm:$0xff]
        %v4712 = vld [vmem:[#allocation3 + $0x48] sm:$0xff]
        %v4713 = vld [vmem:[#allocation3 + $0x50] sm:$0xff]
        %v4714 = vld [vmem:[#allocation3 + $0x58] sm:$0xff]
        %v4715 = vld [vmem:[#allocation3 + $0x60] sm:$0xff]
        %v4716 = vld [vmem:[#allocation3 + $0x68] sm:$0xff]
        %v4717 = vld [vmem:[#allocation3 + $0x70] sm:$0xff]
        %v4718 = vld [vmem:[#allocation3 + $0x78] sm:$0xff]
        %v4719 = vld [vmem:[%s11] sm:$0xff]
        %s4720 = scalar_lea.vmem [#allocation3], 64
        %v4721 = vld [vmem:[%s4720] sm:$0xff]
        %v4722 = vld [vmem:[%s4720 + $0x8] sm:$0xff]
        %v4723 = vld [vmem:[%s4720 + $0x10] sm:$0xff]
        %v4724 = vld [vmem:[%s4720 + $0x18] sm:$0xff]
        %v4725 = vld [vmem:[%s4720 + $0x20] sm:$0xff]
        %v4726 = vld [vmem:[%s4720 + $0x28] sm:$0xff]
        %v4727 = vld [vmem:[%s4720 + $0x30] sm:$0xff]
        %v4728 = vld [vmem:[%s4720 + $0x38] sm:$0xff]
        %v4729 = vld [vmem:[%s4720 + $0x40] sm:$0xff]
        %v4730 = vld [vmem:[%s4720 + $0x48] sm:$0xff]
        %v4731 = vld [vmem:[%s4720 + $0x50] sm:$0xff]
        %v4732 = vld [vmem:[%s4720 + $0x58] sm:$0xff]
        %v4733 = vld [vmem:[%s4720 + $0x60] sm:$0xff]
        %v4734 = vld [vmem:[%s4720 + $0x68] sm:$0xff]
        %v4735 = vld [vmem:[%s4720 + $0x70] sm:$0xff]
        %v4736 = vld [vmem:[%s4720 + $0x78] sm:$0xff]
        %s4737 = scalar_lea.vmem %s11, 8
        %v4738 = vld [vmem:[%s4737] sm:$0xff]
        %v4740 = vsel %vm808, %v4721, 0
        %v4743 = vsel %vm808, %v4722, 0
        %v4746 = vsel %vm808, %v4723, 0
        %v4749 = vsel %vm808, %v4724, 0
        %v4752 = vsel %vm808, %v4725, 0
        %v4755 = vsel %vm808, %v4726, 0
        %v4758 = vsel %vm808, %v4727, 0
        %v4761 = vsel %vm808, %v4728, 0
        %v4764 = vsel %vm808, %v4729, 0
        %v4767 = vsel %vm808, %v4730, 0
        %v4770 = vsel %vm808, %v4731, 0
        %v4773 = vsel %vm808, %v4732, 0
        %v4776 = vsel %vm808, %v4733, 0
        %v4779 = vsel %vm808, %v4734, 0
        %v4782 = vsel %vm808, %v4735, 0
        %v4785 = vsel %vm808, %v4736, 0
        %4787 = vmatprep.subr.mxu0 0.0
        %4788 = vmatpush1.msra.mxu0 %v4738
        %4789 = vmatprep.subr.mxu0 0.0
        %4790 = vmatpush1.msra.mxu0 0.0
        %4791 = vmatprep.subr.mxu0 0.0
        %4792 = vmatpush1.msra.mxu0 0.0
        %4793 = vmatprep.subr.mxu0 0.0
        %4794 = vmatpush1.msra.mxu0 0.0
        %4795 = vmatprep.subr.mxu0 0.0
        %4796 = vmatpush1.msra.mxu0 0.0
        %4797 = vmatprep.subr.mxu0 0.0
        %4798 = vmatpush1.msra.mxu0 0.0
        %4799 = vmatprep.subr.mxu0 0.0
        %4800 = vmatpush1.msra.mxu0 0.0
        %4801 = vmatprep.subr.mxu0 0.0
        %4802 = vmatpush1.msra.mxu0 0.0
        %4803 = vmatprep.subr.mxu0 0.0
        %4804 = vmatpush1.msra.mxu0 0.0
        %4805 = vmatprep.subr.mxu0 0.0
        %4806 = vmatpush1.msra.mxu0 0.0
        %4807 = vmatprep.subr.mxu0 0.0
        %4808 = vmatpush1.msra.mxu0 0.0
        %4809 = vmatprep.subr.mxu0 0.0
        %4810 = vmatpush1.msra.mxu0 0.0
        %4811 = vmatprep.subr.mxu0 0.0
        %4812 = vmatpush1.msra.mxu0 0.0
        %4813 = vmatprep.subr.mxu0 0.0
        %4814 = vmatpush1.msra.mxu0 0.0
        %4815 = vmatprep.subr.mxu0 0.0
        %4816 = vmatpush1.msra.mxu0 0.0
        %4817 = vmatprep.subr.mxu0 0.0
        %4818 = vmatpush1.msra.mxu0 0.0
        %4819 = vmatprep.subr.mxu0 0.0
        %4820 = vmatpush1.msra.mxu0 0.0
        %4821 = vmatprep.subr.mxu0 0.0
        %4822 = vmatpush1.msra.mxu0 0.0
        %4823 = vmatprep.subr.mxu0 0.0
        %4824 = vmatpush1.msra.mxu0 0.0
        %4825 = vmatprep.subr.mxu0 0.0
        %4826 = vmatpush1.msra.mxu0 0.0
        %4827 = vmatprep.subr.mxu0 0.0
        %4828 = vmatpush1.msra.mxu0 0.0
        %4829 = vmatprep.subr.mxu0 0.0
        %4830 = vmatpush1.msra.mxu0 0.0
        %4831 = vmatprep.subr.mxu0 0.0
        %4832 = vmatpush1.msra.mxu0 0.0
        %4833 = vmatprep.subr.mxu0 0.0
        %4834 = vmatpush1.msra.mxu0 0.0
        %4835 = vmatprep.subr.mxu0 0.0
        %4836 = vmatpush1.msra.mxu0 0.0
        %4837 = vmatprep.subr.mxu0 0.0
        %4838 = vmatpush1.msra.mxu0 0.0
        %4839 = vmatprep.subr.mxu0 0.0
        %4840 = vmatpush1.msra.mxu0 0.0
        %4841 = vmatprep.subr.mxu0 0.0
        %4842 = vmatpush1.msra.mxu0 0.0
        %4843 = vmatprep.subr.mxu0 0.0
        %4844 = vmatpush1.msra.mxu0 0.0
        %4845 = vmatprep.subr.mxu0 0.0
        %4846 = vmatpush1.msra.mxu0 0.0
        %4847 = vmatprep.subr.mxu0 0.0
        %4848 = vmatpush1.msra.mxu0 0.0
        %4849 = vmatprep.subr.mxu0 0.0
        %4850 = vmatpush1.msra.mxu0 0.0
        %4851 = vmatprep.mubr.f32.mxu0 0.0
        %4852 = vmatmul.mubr.f32.gmra.mrb[0].mxu0 %v4740
        %v4853 = vpop.f32.mrb[0].mxu0
        %v4854 = vadd.f32 0.0, %v4853
        %v4855 = vpop.f32.mrb[0].mxu0
        %4856 = vmatprep.mubr.f32.mxu0 0.0
        %4857 = vmatmul.mubr.f32.gmra.mrb[0].mxu0 %v4743
        %v4858 = vpop.f32.mrb[0].mxu0
        %v4859 = vadd.f32 0.0, %v4858
        %v4860 = vpop.f32.mrb[0].mxu0
        %4861 = vmatprep.mubr.f32.mxu0 0.0
        %4862 = vmatmul.mubr.f32.gmra.mrb[0].mxu0 %v4746
        %v4863 = vpop.f32.mrb[0].mxu0
        %v4864 = vadd.f32 0.0, %v4863
        %v4865 = vpop.f32.mrb[0].mxu0
        %4866 = vmatprep.mubr.f32.mxu0 0.0
        %4867 = vmatmul.mubr.f32.gmra.mrb[0].mxu0 %v4749
        %v4868 = vpop.f32.mrb[0].mxu0
        %v4869 = vadd.f32 0.0, %v4868
        %v4870 = vpop.f32.mrb[0].mxu0
        %4871 = vmatprep.mubr.f32.mxu0 0.0
        %4872 = vmatmul.mubr.f32.gmra.mrb[0].mxu0 %v4752
        %v4873 = vpop.f32.mrb[0].mxu0
        %v4874 = vadd.f32 0.0, %v4873
        %v4875 = vpop.f32.mrb[0].mxu0
        %4876 = vmatprep.mubr.f32.mxu0 0.0
        %4877 = vmatmul.mubr.f32.gmra.mrb[0].mxu0 %v4755
        %v4878 = vpop.f32.mrb[0].mxu0
        %v4879 = vadd.f32 0.0, %v4878
        %v4880 = vpop.f32.mrb[0].mxu0
        %4881 = vmatprep.mubr.f32.mxu0 0.0
        %4882 = vmatmul.mubr.f32.gmra.mrb[0].mxu0 %v4758
        %v4883 = vpop.f32.mrb[0].mxu0
        %v4884 = vadd.f32 0.0, %v4883
        %v4885 = vpop.f32.mrb[0].mxu0
        %4886 = vmatprep.mubr.f32.mxu0 0.0
        %4887 = vmatmul.mubr.f32.gmra.mrb[0].mxu0 %v4761
        %v4888 = vpop.f32.mrb[0].mxu0
        %v4889 = vadd.f32 0.0, %v4888
        %v4890 = vpop.f32.mrb[0].mxu0
        %4891 = vmatprep.mubr.f32.mxu0 0.0
        %4892 = vmatmul.mubr.f32.gmra.mrb[0].mxu0 %v4764
        %v4893 = vpop.f32.mrb[0].mxu0
        %v4894 = vadd.f32 0.0, %v4893
        %v4895 = vpop.f32.mrb[0].mxu0
        %4896 = vmatprep.mubr.f32.mxu0 0.0
        %4897 = vmatmul.mubr.f32.gmra.mrb[0].mxu0 %v4767
        %v4898 = vpop.f32.mrb[0].mxu0
        %v4899 = vadd.f32 0.0, %v4898
        %v4900 = vpop.f32.mrb[0].mxu0
        %4901 = vmatprep.mubr.f32.mxu0 0.0
        %4902 = vmatmul.mubr.f32.gmra.mrb[0].mxu0 %v4770
        %v4903 = vpop.f32.mrb[0].mxu0
        %v4904 = vadd.f32 0.0, %v4903
        %v4905 = vpop.f32.mrb[0].mxu0
        %4906 = vmatprep.mubr.f32.mxu0 0.0
        %4907 = vmatmul.mubr.f32.gmra.mrb[0].mxu0 %v4773
        %v4908 = vpop.f32.mrb[0].mxu0
        %v4909 = vadd.f32 0.0, %v4908
        %v4910 = vpop.f32.mrb[0].mxu0
        %4911 = vmatprep.mubr.f32.mxu0 0.0
        %4912 = vmatmul.mubr.f32.gmra.mrb[0].mxu0 %v4776
        %v4913 = vpop.f32.mrb[0].mxu0
        %v4914 = vadd.f32 0.0, %v4913
        %v4915 = vpop.f32.mrb[0].mxu0
        %4916 = vmatprep.mubr.f32.mxu0 0.0
        %4917 = vmatmul.mubr.f32.gmra.mrb[0].mxu0 %v4779
        %v4918 = vpop.f32.mrb[0].mxu0
        %v4919 = vadd.f32 0.0, %v4918
        %v4920 = vpop.f32.mrb[0].mxu0
        %4921 = vmatprep.mubr.f32.mxu0 0.0
        %4922 = vmatmul.mubr.f32.gmra.mrb[0].mxu0 %v4782
        %v4923 = vpop.f32.mrb[0].mxu0
        %v4924 = vadd.f32 0.0, %v4923
        %v4925 = vpop.f32.mrb[0].mxu0
        %4926 = vmatprep.mubr.f32.mxu0 0.0
        %4927 = vmatmul.mubr.f32.gmra.mrb[0].mxu0 %v4785
        %v4928 = vpop.f32.mrb[0].mxu0
        %v4929 = vadd.f32 0.0, %v4928
        %v4930 = vpop.f32.mrb[0].mxu0
        %4931 = vdwg.mxu0
        %v4933 = vsel %vm808, %v4703, 0
        %v4936 = vsel %vm808, %v4704, 0
        %v4939 = vsel %vm808, %v4705, 0
        %v4942 = vsel %vm808, %v4706, 0
        %v4945 = vsel %vm808, %v4707, 0
        %v4948 = vsel %vm808, %v4708, 0
        %v4951 = vsel %vm808, %v4709, 0
        %v4954 = vsel %vm808, %v4710, 0
        %v4957 = vsel %vm808, %v4711, 0
        %v4960 = vsel %vm808, %v4712, 0
        %v4963 = vsel %vm808, %v4713, 0
        %v4966 = vsel %vm808, %v4714, 0
        %v4969 = vsel %vm808, %v4715, 0
        %v4972 = vsel %vm808, %v4716, 0
        %v4975 = vsel %vm808, %v4717, 0
        %v4978 = vsel %vm808, %v4718, 0
        %4980 = vmatprep.subr.mxu0 0.0
        %4981 = vmatpush1.msra.mxu0 %v4719
        %4982 = vmatprep.subr.mxu0 0.0
        %4983 = vmatpush1.msra.mxu0 0.0
        %4984 = vmatprep.subr.mxu0 0.0
        %4985 = vmatpush1.msra.mxu0 0.0
        %4986 = vmatprep.subr.mxu0 0.0
        %4987 = vmatpush1.msra.mxu0 0.0
        %4988 = vmatprep.subr.mxu0 0.0
        %4989 = vmatpush1.msra.mxu0 0.0
        %4990 = vmatprep.subr.mxu0 0.0
        %4991 = vmatpush1.msra.mxu0 0.0
        %4992 = vmatprep.subr.mxu0 0.0
        %4993 = vmatpush1.msra.mxu0 0.0
        %4994 = vmatprep.subr.mxu0 0.0
        %4995 = vmatpush1.msra.mxu0 0.0
        %4996 = vmatprep.subr.mxu0 0.0
        %4997 = vmatpush1.msra.mxu0 0.0
        %4998 = vmatprep.subr.mxu0 0.0
        %4999 = vmatpush1.msra.mxu0 0.0
        %5000 = vmatprep.subr.mxu0 0.0
        %5001 = vmatpush1.msra.mxu0 0.0
        %5002 = vmatprep.subr.mxu0 0.0
        %5003 = vmatpush1.msra.mxu0 0.0
        %5004 = vmatprep.subr.mxu0 0.0
        %5005 = vmatpush1.msra.mxu0 0.0
        %5006 = vmatprep.subr.mxu0 0.0
        %5007 = vmatpush1.msra.mxu0 0.0
        %5008 = vmatprep.subr.mxu0 0.0
        %5009 = vmatpush1.msra.mxu0 0.0
        %5010 = vmatprep.subr.mxu0 0.0
        %5011 = vmatpush1.msra.mxu0 0.0
        %5012 = vmatprep.subr.mxu0 0.0
        %5013 = vmatpush1.msra.mxu0 0.0
        %5014 = vmatprep.subr.mxu0 0.0
        %5015 = vmatpush1.msra.mxu0 0.0
        %5016 = vmatprep.subr.mxu0 0.0
        %5017 = vmatpush1.msra.mxu0 0.0
        %5018 = vmatprep.subr.mxu0 0.0
        %5019 = vmatpush1.msra.mxu0 0.0
        %5020 = vmatprep.subr.mxu0 0.0
        %5021 = vmatpush1.msra.mxu0 0.0
        %5022 = vmatprep.subr.mxu0 0.0
        %5023 = vmatpush1.msra.mxu0 0.0
        %5024 = vmatprep.subr.mxu0 0.0
        %5025 = vmatpush1.msra.mxu0 0.0
        %5026 = vmatprep.subr.mxu0 0.0
        %5027 = vmatpush1.msra.mxu0 0.0
        %5028 = vmatprep.subr.mxu0 0.0
        %5029 = vmatpush1.msra.mxu0 0.0
        %5030 = vmatprep.subr.mxu0 0.0
        %5031 = vmatpush1.msra.mxu0 0.0
        %5032 = vmatprep.subr.mxu0 0.0
        %5033 = vmatpush1.msra.mxu0 0.0
        %5034 = vmatprep.subr.mxu0 0.0
        %5035 = vmatpush1.msra.mxu0 0.0
        %5036 = vmatprep.subr.mxu0 0.0
        %5037 = vmatpush1.msra.mxu0 0.0
        %5038 = vmatprep.subr.mxu0 0.0
        %5039 = vmatpush1.msra.mxu0 0.0
        %5040 = vmatprep.subr.mxu0 0.0
        %5041 = vmatpush1.msra.mxu0 0.0
        %5042 = vmatprep.subr.mxu0 0.0
        %5043 = vmatpush1.msra.mxu0 0.0
        %5044 = vmatprep.mubr.f32.mxu0 0.0
        %5045 = vmatmul.mubr.f32.gmra.mrb[0].mxu0 %v4933
        %v5046 = vpop.f32.mrb[0].mxu0
        %v5047 = vadd.f32 %v4854, %v5046
        %v5048 = vpop.f32.mrb[0].mxu0
        %5049 = vmatprep.mubr.f32.mxu0 0.0
        %5050 = vmatmul.mubr.f32.gmra.mrb[0].mxu0 %v4936
        %v5051 = vpop.f32.mrb[0].mxu0
        %v5052 = vadd.f32 %v4859, %v5051
        %v5053 = vpop.f32.mrb[0].mxu0
        %5054 = vmatprep.mubr.f32.mxu0 0.0
        %5055 = vmatmul.mubr.f32.gmra.mrb[0].mxu0 %v4939
        %v5056 = vpop.f32.mrb[0].mxu0
        %v5057 = vadd.f32 %v4864, %v5056
        %v5058 = vpop.f32.mrb[0].mxu0
        %5059 = vmatprep.mubr.f32.mxu0 0.0
        %5060 = vmatmul.mubr.f32.gmra.mrb[0].mxu0 %v4942
        %v5061 = vpop.f32.mrb[0].mxu0
        %v5062 = vadd.f32 %v4869, %v5061
        %v5063 = vpop.f32.mrb[0].mxu0
        %5064 = vmatprep.mubr.f32.mxu0 0.0
        %5065 = vmatmul.mubr.f32.gmra.mrb[0].mxu0 %v4945
        %v5066 = vpop.f32.mrb[0].mxu0
        %v5067 = vadd.f32 %v4874, %v5066
        %v5068 = vpop.f32.mrb[0].mxu0
        %5069 = vmatprep.mubr.f32.mxu0 0.0
        %5070 = vmatmul.mubr.f32.gmra.mrb[0].mxu0 %v4948
        %v5071 = vpop.f32.mrb[0].mxu0
        %v5072 = vadd.f32 %v4879, %v5071
        %v5073 = vpop.f32.mrb[0].mxu0
        %5074 = vmatprep.mubr.f32.mxu0 0.0
        %5075 = vmatmul.mubr.f32.gmra.mrb[0].mxu0 %v4951
        %v5076 = vpop.f32.mrb[0].mxu0
        %v5077 = vadd.f32 %v4884, %v5076
        %v5078 = vpop.f32.mrb[0].mxu0
        %5079 = vmatprep.mubr.f32.mxu0 0.0
        %5080 = vmatmul.mubr.f32.gmra.mrb[0].mxu0 %v4954
        %v5081 = vpop.f32.mrb[0].mxu0
        %v5082 = vadd.f32 %v4889, %v5081
        %v5083 = vpop.f32.mrb[0].mxu0
        %5084 = vmatprep.mubr.f32.mxu0 0.0
        %5085 = vmatmul.mubr.f32.gmra.mrb[0].mxu0 %v4957
        %v5086 = vpop.f32.mrb[0].mxu0
        %v5087 = vadd.f32 %v4894, %v5086
        %v5088 = vpop.f32.mrb[0].mxu0
        %5089 = vmatprep.mubr.f32.mxu0 0.0
        %5090 = vmatmul.mubr.f32.gmra.mrb[0].mxu0 %v4960
        %v5091 = vpop.f32.mrb[0].mxu0
        %v5092 = vadd.f32 %v4899, %v5091
        %v5093 = vpop.f32.mrb[0].mxu0
        %5094 = vmatprep.mubr.f32.mxu0 0.0
        %5095 = vmatmul.mubr.f32.gmra.mrb[0].mxu0 %v4963
        %v5096 = vpop.f32.mrb[0].mxu0
        %v5097 = vadd.f32 %v4904, %v5096
        %v5098 = vpop.f32.mrb[0].mxu0
        %5099 = vmatprep.mubr.f32.mxu0 0.0
        %5100 = vmatmul.mubr.f32.gmra.mrb[0].mxu0 %v4966
        %v5101 = vpop.f32.mrb[0].mxu0
        %v5102 = vadd.f32 %v4909, %v5101
        %v5103 = vpop.f32.mrb[0].mxu0
        %5104 = vmatprep.mubr.f32.mxu0 0.0
        %5105 = vmatmul.mubr.f32.gmra.mrb[0].mxu0 %v4969
        %v5106 = vpop.f32.mrb[0].mxu0
        %v5107 = vadd.f32 %v4914, %v5106
        %v5108 = vpop.f32.mrb[0].mxu0
        %5109 = vmatprep.mubr.f32.mxu0 0.0
        %5110 = vmatmul.mubr.f32.gmra.mrb[0].mxu0 %v4972
        %v5111 = vpop.f32.mrb[0].mxu0
        %v5112 = vadd.f32 %v4919, %v5111
        %v5113 = vpop.f32.mrb[0].mxu0
        %5114 = vmatprep.mubr.f32.mxu0 0.0
        %5115 = vmatmul.mubr.f32.gmra.mrb[0].mxu0 %v4975
        %v5116 = vpop.f32.mrb[0].mxu0
        %v5117 = vadd.f32 %v4924, %v5116
        %v5118 = vpop.f32.mrb[0].mxu0
        %5119 = vmatprep.mubr.f32.mxu0 0.0
        %5120 = vmatmul.mubr.f32.gmra.mrb[0].mxu0 %v4978
        %v5121 = vpop.f32.mrb[0].mxu0
        %v5122 = vadd.f32 %v4929, %v5121
        %v5123 = vpop.f32.mrb[0].mxu0
        %5124 = vdwg.mxu0
        %s5125 = scalar_lea.vmem [#allocation3], 128
        %v5126 = vld [vmem:[%s5125] sm:$0xff]
        %v5127 = vld [vmem:[%s5125 + $0x8] sm:$0xff]
        %v5128 = vld [vmem:[%s5125 + $0x10] sm:$0xff]
        %v5129 = vld [vmem:[%s5125 + $0x18] sm:$0xff]
        %v5130 = vld [vmem:[%s5125 + $0x20] sm:$0xff]
        %v5131 = vld [vmem:[%s5125 + $0x28] sm:$0xff]
        %v5132 = vld [vmem:[%s5125 + $0x30] sm:$0xff]
        %v5133 = vld [vmem:[%s5125 + $0x38] sm:$0xff]
        %v5134 = vld [vmem:[%s5125 + $0x40] sm:$0xff]
        %v5135 = vld [vmem:[%s5125 + $0x48] sm:$0xff]
        %v5136 = vld [vmem:[%s5125 + $0x50] sm:$0xff]
        %v5137 = vld [vmem:[%s5125 + $0x58] sm:$0xff]
        %v5138 = vld [vmem:[%s5125 + $0x60] sm:$0xff]
        %v5139 = vld [vmem:[%s5125 + $0x68] sm:$0xff]
        %v5140 = vld [vmem:[%s5125 + $0x70] sm:$0xff]
        %v5141 = vld [vmem:[%s5125 + $0x78] sm:$0xff]
        %s5142 = scalar_lea.vmem %s11, 16
        %v5143 = vld [vmem:[%s5142] sm:$0xff]
        %v5145 = vsel %vm808, %v5126, 0
        %v5148 = vsel %vm808, %v5127, 0
        %v5151 = vsel %vm808, %v5128, 0
        %v5154 = vsel %vm808, %v5129, 0
        %v5157 = vsel %vm808, %v5130, 0
        %v5160 = vsel %vm808, %v5131, 0
        %v5163 = vsel %vm808, %v5132, 0
        %v5166 = vsel %vm808, %v5133, 0
        %v5169 = vsel %vm808, %v5134, 0
        %v5172 = vsel %vm808, %v5135, 0
        %v5175 = vsel %vm808, %v5136, 0
        %v5178 = vsel %vm808, %v5137, 0
        %v5181 = vsel %vm808, %v5138, 0
        %v5184 = vsel %vm808, %v5139, 0
        %v5187 = vsel %vm808, %v5140, 0
        %v5190 = vsel %vm808, %v5141, 0
        %5192 = vmatprep.subr.mxu0 0.0
        %5193 = vmatpush1.msra.mxu0 %v5143
        %5194 = vmatprep.subr.mxu0 0.0
        %5195 = vmatpush1.msra.mxu0 0.0
        %5196 = vmatprep.subr.mxu0 0.0
        %5197 = vmatpush1.msra.mxu0 0.0
        %5198 = vmatprep.subr.mxu0 0.0
        %5199 = vmatpush1.msra.mxu0 0.0
        %5200 = vmatprep.subr.mxu0 0.0
        %5201 = vmatpush1.msra.mxu0 0.0
        %5202 = vmatprep.subr.mxu0 0.0
        %5203 = vmatpush1.msra.mxu0 0.0
        %5204 = vmatprep.subr.mxu0 0.0
        %5205 = vmatpush1.msra.mxu0 0.0
        %5206 = vmatprep.subr.mxu0 0.0
        %5207 = vmatpush1.msra.mxu0 0.0
        %5208 = vmatprep.subr.mxu0 0.0
        %5209 = vmatpush1.msra.mxu0 0.0
        %5210 = vmatprep.subr.mxu0 0.0
        %5211 = vmatpush1.msra.mxu0 0.0
        %5212 = vmatprep.subr.mxu0 0.0
        %5213 = vmatpush1.msra.mxu0 0.0
        %5214 = vmatprep.subr.mxu0 0.0
        %5215 = vmatpush1.msra.mxu0 0.0
        %5216 = vmatprep.subr.mxu0 0.0
        %5217 = vmatpush1.msra.mxu0 0.0
        %5218 = vmatprep.subr.mxu0 0.0
        %5219 = vmatpush1.msra.mxu0 0.0
        %5220 = vmatprep.subr.mxu0 0.0
        %5221 = vmatpush1.msra.mxu0 0.0
        %5222 = vmatprep.subr.mxu0 0.0
        %5223 = vmatpush1.msra.mxu0 0.0
        %5224 = vmatprep.subr.mxu0 0.0
        %5225 = vmatpush1.msra.mxu0 0.0
        %5226 = vmatprep.subr.mxu0 0.0
        %5227 = vmatpush1.msra.mxu0 0.0
        %5228 = vmatprep.subr.mxu0 0.0
        %5229 = vmatpush1.msra.mxu0 0.0
        %5230 = vmatprep.subr.mxu0 0.0
        %5231 = vmatpush1.msra.mxu0 0.0
        %5232 = vmatprep.subr.mxu0 0.0
        %5233 = vmatpush1.msra.mxu0 0.0
        %5234 = vmatprep.subr.mxu0 0.0
        %5235 = vmatpush1.msra.mxu0 0.0
        %5236 = vmatprep.subr.mxu0 0.0
        %5237 = vmatpush1.msra.mxu0 0.0
        %5238 = vmatprep.subr.mxu0 0.0
        %5239 = vmatpush1.msra.mxu0 0.0
        %5240 = vmatprep.subr.mxu0 0.0
        %5241 = vmatpush1.msra.mxu0 0.0
        %5242 = vmatprep.subr.mxu0 0.0
        %5243 = vmatpush1.msra.mxu0 0.0
        %5244 = vmatprep.subr.mxu0 0.0
        %5245 = vmatpush1.msra.mxu0 0.0
        %5246 = vmatprep.subr.mxu0 0.0
        %5247 = vmatpush1.msra.mxu0 0.0
        %5248 = vmatprep.subr.mxu0 0.0
        %5249 = vmatpush1.msra.mxu0 0.0
        %5250 = vmatprep.subr.mxu0 0.0
        %5251 = vmatpush1.msra.mxu0 0.0
        %5252 = vmatprep.subr.mxu0 0.0
        %5253 = vmatpush1.msra.mxu0 0.0
        %5254 = vmatprep.subr.mxu0 0.0
        %5255 = vmatpush1.msra.mxu0 0.0
        %5256 = vmatprep.mubr.f32.mxu0 0.0
        %5257 = vmatmul.mubr.f32.gmra.mrb[0].mxu0 %v5145
        %v5258 = vpop.f32.mrb[0].mxu0
        %v5259 = vadd.f32 0.0, %v5258
        %v5260 = vpop.f32.mrb[0].mxu0
        %5261 = vmatprep.mubr.f32.mxu0 0.0
        %5262 = vmatmul.mubr.f32.gmra.mrb[0].mxu0 %v5148
        %v5263 = vpop.f32.mrb[0].mxu0
        %v5264 = vadd.f32 0.0, %v5263
        %v5265 = vpop.f32.mrb[0].mxu0
        %5266 = vmatprep.mubr.f32.mxu0 0.0
        %5267 = vmatmul.mubr.f32.gmra.mrb[0].mxu0 %v5151
        %v5268 = vpop.f32.mrb[0].mxu0
        %v5269 = vadd.f32 0.0, %v5268
        %v5270 = vpop.f32.mrb[0].mxu0
        %5271 = vmatprep.mubr.f32.mxu0 0.0
        %5272 = vmatmul.mubr.f32.gmra.mrb[0].mxu0 %v5154
        %v5273 = vpop.f32.mrb[0].mxu0
        %v5274 = vadd.f32 0.0, %v5273
        %v5275 = vpop.f32.mrb[0].mxu0
        %5276 = vmatprep.mubr.f32.mxu0 0.0
        %5277 = vmatmul.mubr.f32.gmra.mrb[0].mxu0 %v5157
        %v5278 = vpop.f32.mrb[0].mxu0
        %v5279 = vadd.f32 0.0, %v5278
        %v5280 = vpop.f32.mrb[0].mxu0
        %5281 = vmatprep.mubr.f32.mxu0 0.0
        %5282 = vmatmul.mubr.f32.gmra.mrb[0].mxu0 %v5160
        %v5283 = vpop.f32.mrb[0].mxu0
        %v5284 = vadd.f32 0.0, %v5283
        %v5285 = vpop.f32.mrb[0].mxu0
        %5286 = vmatprep.mubr.f32.mxu0 0.0
        %5287 = vmatmul.mubr.f32.gmra.mrb[0].mxu0 %v5163
        %v5288 = vpop.f32.mrb[0].mxu0
        %v5289 = vadd.f32 0.0, %v5288
        %v5290 = vpop.f32.mrb[0].mxu0
        %5291 = vmatprep.mubr.f32.mxu0 0.0
        %5292 = vmatmul.mubr.f32.gmra.mrb[0].mxu0 %v5166
        %v5293 = vpop.f32.mrb[0].mxu0
        %v5294 = vadd.f32 0.0, %v5293
        %v5295 = vpop.f32.mrb[0].mxu0
        %5296 = vmatprep.mubr.f32.mxu0 0.0
        %5297 = vmatmul.mubr.f32.gmra.mrb[0].mxu0 %v5169
        %v5298 = vpop.f32.mrb[0].mxu0
        %v5299 = vadd.f32 0.0, %v5298
        %v5300 = vpop.f32.mrb[0].mxu0
        %5301 = vmatprep.mubr.f32.mxu0 0.0
        %5302 = vmatmul.mubr.f32.gmra.mrb[0].mxu0 %v5172
        %v5303 = vpop.f32.mrb[0].mxu0
        %v5304 = vadd.f32 0.0, %v5303
        %v5305 = vpop.f32.mrb[0].mxu0
        %5306 = vmatprep.mubr.f32.mxu0 0.0
        %5307 = vmatmul.mubr.f32.gmra.mrb[0].mxu0 %v5175
        %v5308 = vpop.f32.mrb[0].mxu0
        %v5309 = vadd.f32 0.0, %v5308
        %v5310 = vpop.f32.mrb[0].mxu0
        %5311 = vmatprep.mubr.f32.mxu0 0.0
        %5312 = vmatmul.mubr.f32.gmra.mrb[0].mxu0 %v5178
        %v5313 = vpop.f32.mrb[0].mxu0
        %v5314 = vadd.f32 0.0, %v5313
        %v5315 = vpop.f32.mrb[0].mxu0
        %5316 = vmatprep.mubr.f32.mxu0 0.0
        %5317 = vmatmul.mubr.f32.gmra.mrb[0].mxu0 %v5181
        %v5318 = vpop.f32.mrb[0].mxu0
        %v5319 = vadd.f32 0.0, %v5318
        %v5320 = vpop.f32.mrb[0].mxu0
        %5321 = vmatprep.mubr.f32.mxu0 0.0
        %5322 = vmatmul.mubr.f32.gmra.mrb[0].mxu0 %v5184
        %v5323 = vpop.f32.mrb[0].mxu0
        %v5324 = vadd.f32 0.0, %v5323
        %v5325 = vpop.f32.mrb[0].mxu0
        %5326 = vmatprep.mubr.f32.mxu0 0.0
        %5327 = vmatmul.mubr.f32.gmra.mrb[0].mxu0 %v5187
        %v5328 = vpop.f32.mrb[0].mxu0
        %v5329 = vadd.f32 0.0, %v5328
        %v5330 = vpop.f32.mrb[0].mxu0
        %5331 = vmatprep.mubr.f32.mxu0 0.0
        %5332 = vmatmul.mubr.f32.gmra.mrb[0].mxu0 %v5190
        %v5333 = vpop.f32.mrb[0].mxu0
        %v5334 = vadd.f32 0.0, %v5333
        %v5335 = vpop.f32.mrb[0].mxu0
        %5336 = vdwg.mxu0
        %v5337 = vadd.f32 %v5047, %v5259
        %v5338 = vadd.f32 %v5052, %v5264
        %v5339 = vadd.f32 %v5057, %v5269
        %v5340 = vadd.f32 %v5062, %v5274
        %v5341 = vadd.f32 %v5067, %v5279
        %v5342 = vadd.f32 %v5072, %v5284
        %v5343 = vadd.f32 %v5077, %v5289
        %v5344 = vadd.f32 %v5082, %v5294
        %v5345 = vadd.f32 %v5087, %v5299
        %v5346 = vadd.f32 %v5092, %v5304
        %v5347 = vadd.f32 %v5097, %v5309
        %v5348 = vadd.f32 %v5102, %v5314
        %v5349 = vadd.f32 %v5107, %v5319
        %v5350 = vadd.f32 %v5112, %v5324
        %v5351 = vadd.f32 %v5117, %v5329
        %v5352 = vadd.f32 %v5122, %v5334
        %v5353 = vld [vmem:[%s12] sm:$0x1]
        %v5355 = vlaneseq
        %v5356 = vshrl.u32 %v5355, 7
        %v5357 = vsub.s32 0, %v5356
        %v5358 = vrot.slane %v5353, %v5357
        %v5360 = vmul.f32 %v5337, %v5358
        %v5361 = vmul.f32 %v5338, %v5358
        %v5362 = vmul.f32 %v5339, %v5358
        %v5363 = vmul.f32 %v5340, %v5358
        %v5364 = vmul.f32 %v5341, %v5358
        %v5365 = vmul.f32 %v5342, %v5358
        %v5366 = vmul.f32 %v5343, %v5358
        %v5367 = vmul.f32 %v5344, %v5358
        %v5368 = vmul.f32 %v5345, %v5358
        %v5369 = vmul.f32 %v5346, %v5358
        %v5370 = vmul.f32 %v5347, %v5358
        %v5371 = vmul.f32 %v5348, %v5358
        %v5372 = vmul.f32 %v5349, %v5358
        %v5373 = vmul.f32 %v5350, %v5358
        %v5374 = vmul.f32 %v5351, %v5358
        %v5375 = vmul.f32 %v5352, %v5358
        %v5376 = vld [vmem:[%s13] sm:$0x1]
        %v5378 = vlaneseq
        %v5379 = vshrl.u32 %v5378, 7
        %v5380 = vsub.s32 0, %v5379
        %v5381 = vrot.slane %v5376, %v5380
        %v5383 = vadd.f32 %v5360, %v5381
        %v5384 = vadd.f32 %v5361, %v5381
        %v5385 = vadd.f32 %v5362, %v5381
        %v5386 = vadd.f32 %v5363, %v5381
        %v5387 = vadd.f32 %v5364, %v5381
        %v5388 = vadd.f32 %v5365, %v5381
        %v5389 = vadd.f32 %v5366, %v5381
        %v5390 = vadd.f32 %v5367, %v5381
        %v5391 = vadd.f32 %v5368, %v5381
        %v5392 = vadd.f32 %v5369, %v5381
        %v5393 = vadd.f32 %v5370, %v5381
        %v5394 = vadd.f32 %v5371, %v5381
        %v5395 = vadd.f32 %v5372, %v5381
        %v5396 = vadd.f32 %v5373, %v5381
        %v5397 = vadd.f32 %v5374, %v5381
        %v5398 = vadd.f32 %v5375, %v5381
        %v5399 = vmax.f32 %v5383, 0.0
        %v5400 = vmax.f32 %v5384, 0.0
        %v5401 = vmax.f32 %v5385, 0.0
        %v5402 = vmax.f32 %v5386, 0.0
        %v5403 = vmax.f32 %v5387, 0.0
        %v5404 = vmax.f32 %v5388, 0.0
        %v5405 = vmax.f32 %v5389, 0.0
        %v5406 = vmax.f32 %v5390, 0.0
        %v5407 = vmax.f32 %v5391, 0.0
        %v5408 = vmax.f32 %v5392, 0.0
        %v5409 = vmax.f32 %v5393, 0.0
        %v5410 = vmax.f32 %v5394, 0.0
        %v5411 = vmax.f32 %v5395, 0.0
        %v5412 = vmax.f32 %v5396, 0.0
        %v5413 = vmax.f32 %v5397, 0.0
        %v5414 = vmax.f32 %v5398, 0.0
        %5415 = vst.msk [vmem:[#allocation5] sm:$0xff] %vm2471, 0.0
        %5416 = vst.msk [vmem:[#allocation5 + $0x8] sm:$0x3] %vm2473, 0.0
        %5417 = vst.msk [vmem:[#allocation5 + $0xa0] sm:$0xff] %vm2471, 0.0
        %5418 = vst.msk [vmem:[#allocation5 + $0xa8] sm:$0x3] %vm2473, 0.0
        %s5419 = scalar_lea.vmem [#allocation5], 144
        %5420 = vst.msk [vmem:[%s5419] sm:$0xff] %vm2471, 0.0
        %5421 = vst.msk [vmem:[%s5419 + $0x8] sm:$0x3] %vm2473, 0.0
        %5422 = vst.msk [vmem:[%s5419 + $0xa0] sm:$0xff] %vm2471, 0.0
        %5423 = vst.msk [vmem:[%s5419 + $0xa8] sm:$0x3] %vm2473, 0.0
        %5424 = vst.msk [vmem:[#allocation5] sm:$0x1] %vm2482, 0.0
        %5425 = vst.msk [vmem:[#allocation5 + $0x10] sm:$0x1] %vm2482, 0.0
        %5426 = vst.msk [vmem:[#allocation5 + $0x20] sm:$0x1] %vm2482, 0.0
        %5427 = vst.msk [vmem:[#allocation5 + $0x30] sm:$0x1] %vm2482, 0.0
        %5428 = vst.msk [vmem:[#allocation5 + $0x40] sm:$0x1] %vm2482, 0.0
        %5429 = vst.msk [vmem:[#allocation5 + $0x50] sm:$0x1] %vm2482, 0.0
        %5430 = vst.msk [vmem:[#allocation5 + $0x60] sm:$0x1] %vm2482, 0.0
        %5431 = vst.msk [vmem:[#allocation5 + $0x70] sm:$0x1] %vm2482, 0.0
        %5432 = vst.msk [vmem:[#allocation5 + $0x80] sm:$0x1] %vm2482, 0.0
        %5433 = vst.msk [vmem:[#allocation5 + $0x90] sm:$0x1] %vm2482, 0.0
        %5434 = vst.msk [vmem:[#allocation5 + $0xa0] sm:$0x1] %vm2482, 0.0
        %5435 = vst.msk [vmem:[#allocation5 + $0xb0] sm:$0x1] %vm2482, 0.0
        %5436 = vst.msk [vmem:[#allocation5 + $0xc0] sm:$0x1] %vm2482, 0.0
        %5437 = vst.msk [vmem:[#allocation5 + $0xd0] sm:$0x1] %vm2482, 0.0
        %5438 = vst.msk [vmem:[#allocation5 + $0xe0] sm:$0x1] %vm2482, 0.0
        %5439 = vst.msk [vmem:[#allocation5 + $0xf0] sm:$0x1] %vm2482, 0.0
        %5440 = vst.msk [vmem:[#allocation5 + $0x100] sm:$0x1] %vm2482, 0.0
        %5441 = vst.msk [vmem:[#allocation5 + $0x110] sm:$0x1] %vm2482, 0.0
        %5442 = vst.msk [vmem:[#allocation5 + $0x120] sm:$0x1] %vm2482, 0.0
        %5443 = vst.msk [vmem:[#allocation5 + $0x130] sm:$0x1] %vm2482, 0.0
        %5444 = vst.msk [vmem:[#allocation5 + $0x9] sm:$0x1] %vm2482, 0.0
        %5445 = vst.msk [vmem:[#allocation5 + $0x19] sm:$0x1] %vm2482, 0.0
        %5446 = vst.msk [vmem:[#allocation5 + $0x29] sm:$0x1] %vm2482, 0.0
        %5447 = vst.msk [vmem:[#allocation5 + $0x39] sm:$0x1] %vm2482, 0.0
        %5448 = vst.msk [vmem:[#allocation5 + $0x49] sm:$0x1] %vm2482, 0.0
        %5449 = vst.msk [vmem:[#allocation5 + $0x59] sm:$0x1] %vm2482, 0.0
        %5450 = vst.msk [vmem:[#allocation5 + $0x69] sm:$0x1] %vm2482, 0.0
        %5451 = vst.msk [vmem:[#allocation5 + $0x79] sm:$0x1] %vm2482, 0.0
        %5452 = vst.msk [vmem:[#allocation5 + $0x89] sm:$0x1] %vm2482, 0.0
        %5453 = vst.msk [vmem:[#allocation5 + $0x99] sm:$0x1] %vm2482, 0.0
        %5454 = vst.msk [vmem:[#allocation5 + $0xa9] sm:$0x1] %vm2482, 0.0
        %5455 = vst.msk [vmem:[#allocation5 + $0xb9] sm:$0x1] %vm2482, 0.0
        %5456 = vst.msk [vmem:[#allocation5 + $0xc9] sm:$0x1] %vm2482, 0.0
        %5457 = vst.msk [vmem:[#allocation5 + $0xd9] sm:$0x1] %vm2482, 0.0
        %5458 = vst.msk [vmem:[#allocation5 + $0xe9] sm:$0x1] %vm2482, 0.0
        %5459 = vst.msk [vmem:[#allocation5 + $0xf9] sm:$0x1] %vm2482, 0.0
        %5460 = vst.msk [vmem:[#allocation5 + $0x109] sm:$0x1] %vm2482, 0.0
        %5461 = vst.msk [vmem:[#allocation5 + $0x119] sm:$0x1] %vm2482, 0.0
        %5462 = vst.msk [vmem:[#allocation5 + $0x129] sm:$0x1] %vm2482, 0.0
        %5463 = vst.msk [vmem:[#allocation5 + $0x139] sm:$0x1] %vm2482, 0.0
        %s5464 = scalar_lea.vmem [#allocation5], 16
        %5465 = vst.msk [vmem:[%s5464 + $0x1] sm:$0xff] %vm2471, %v5399
        %5466 = vst.msk [vmem:[%s5464 + $0x11] sm:$0xff] %vm2471, %v5400
        %5467 = vst.msk [vmem:[%s5464 + $0x21] sm:$0xff] %vm2471, %v5401
        %5468 = vst.msk [vmem:[%s5464 + $0x31] sm:$0xff] %vm2471, %v5402
        %5469 = vst.msk [vmem:[%s5464 + $0x41] sm:$0xff] %vm2471, %v5403
        %5470 = vst.msk [vmem:[%s5464 + $0x51] sm:$0xff] %vm2471, %v5404
        %5471 = vst.msk [vmem:[%s5464 + $0x61] sm:$0xff] %vm2471, %v5405
        %5472 = vst.msk [vmem:[%s5464 + $0x71] sm:$0xff] %vm2471, %v5406
        %5473 = vst.msk [vmem:[%s5464 + $0xa1] sm:$0xff] %vm2471, %v5407
        %5474 = vst.msk [vmem:[%s5464 + $0xb1] sm:$0xff] %vm2471, %v5408
        %5475 = vst.msk [vmem:[%s5464 + $0xc1] sm:$0xff] %vm2471, %v5409
        %5476 = vst.msk [vmem:[%s5464 + $0xd1] sm:$0xff] %vm2471, %v5410
        %5477 = vst.msk [vmem:[%s5464 + $0xe1] sm:$0xff] %vm2471, %v5411
        %5478 = vst.msk [vmem:[%s5464 + $0xf1] sm:$0xff] %vm2471, %v5412
        %5479 = vst.msk [vmem:[%s5464 + $0x101] sm:$0xff] %vm2471, %v5413
        %5480 = vst.msk [vmem:[%s5464 + $0x111] sm:$0xff] %vm2471, %v5414
        %v5481 = vld [vmem:[#allocation5] sm:$0xff]
        %v5482 = vld [vmem:[#allocation5 + $0x10] sm:$0xff]
        %v5483 = vld [vmem:[#allocation5 + $0x20] sm:$0xff]
        %v5484 = vld [vmem:[#allocation5 + $0x30] sm:$0xff]
        %v5485 = vld [vmem:[#allocation5 + $0x40] sm:$0xff]
        %v5486 = vld [vmem:[#allocation5 + $0x50] sm:$0xff]
        %v5487 = vld [vmem:[#allocation5 + $0x60] sm:$0xff]
        %v5488 = vld [vmem:[#allocation5 + $0x70] sm:$0xff]
        %v5489 = vld [vmem:[#allocation5 + $0xa0] sm:$0xff]
        %v5490 = vld [vmem:[#allocation5 + $0xb0] sm:$0xff]
        %v5491 = vld [vmem:[#allocation5 + $0xc0] sm:$0xff]
        %v5492 = vld [vmem:[#allocation5 + $0xd0] sm:$0xff]
        %v5493 = vld [vmem:[#allocation5 + $0xe0] sm:$0xff]
        %v5494 = vld [vmem:[#allocation5 + $0xf0] sm:$0xff]
        %v5495 = vld [vmem:[#allocation5 + $0x100] sm:$0xff]
        %v5496 = vld [vmem:[#allocation5 + $0x110] sm:$0xff]
        %v5497 = vld [vmem:[#allocation16] sm:$0xff]
        %v5498 = vld [vmem:[#allocation16 + $0x8] sm:$0xff]
        %v5499 = vld [vmem:[#allocation5 + $0x1] sm:$0xff]
        %v5500 = vld [vmem:[#allocation5 + $0x11] sm:$0xff]
        %v5501 = vld [vmem:[#allocation5 + $0x21] sm:$0xff]
        %v5502 = vld [vmem:[#allocation5 + $0x31] sm:$0xff]
        %v5503 = vld [vmem:[#allocation5 + $0x41] sm:$0xff]
        %v5504 = vld [vmem:[#allocation5 + $0x51] sm:$0xff]
        %v5505 = vld [vmem:[#allocation5 + $0x61] sm:$0xff]
        %v5506 = vld [vmem:[#allocation5 + $0x71] sm:$0xff]
        %v5507 = vld [vmem:[#allocation5 + $0xa1] sm:$0xff]
        %v5508 = vld [vmem:[#allocation5 + $0xb1] sm:$0xff]
        %v5509 = vld [vmem:[#allocation5 + $0xc1] sm:$0xff]
        %v5510 = vld [vmem:[#allocation5 + $0xd1] sm:$0xff]
        %v5511 = vld [vmem:[#allocation5 + $0xe1] sm:$0xff]
        %v5512 = vld [vmem:[#allocation5 + $0xf1] sm:$0xff]
        %v5513 = vld [vmem:[#allocation5 + $0x101] sm:$0xff]
        %v5514 = vld [vmem:[#allocation5 + $0x111] sm:$0xff]
        %s5515 = scalar_lea.vmem [#allocation16], 16
        %v5516 = vld [vmem:[%s5515] sm:$0xff]
        %v5517 = vld [vmem:[%s5515 + $0x8] sm:$0xff]
        %v5519 = vsel %vm2471, %v5499, 0
        %v5522 = vsel %vm2471, %v5500, 0
        %v5525 = vsel %vm2471, %v5501, 0
        %v5528 = vsel %vm2471, %v5502, 0
        %v5531 = vsel %vm2471, %v5503, 0
        %v5534 = vsel %vm2471, %v5504, 0
        %v5537 = vsel %vm2471, %v5505, 0
        %v5540 = vsel %vm2471, %v5506, 0
        %v5543 = vsel %vm2471, %v5507, 0
        %v5546 = vsel %vm2471, %v5508, 0
        %v5549 = vsel %vm2471, %v5509, 0
        %v5552 = vsel %vm2471, %v5510, 0
        %v5555 = vsel %vm2471, %v5511, 0
        %v5558 = vsel %vm2471, %v5512, 0
        %v5561 = vsel %vm2471, %v5513, 0
        %v5564 = vsel %vm2471, %v5514, 0
        %5566 = vmatprep.subr.mxu0 0.0
        %5567 = vmatpush1.msra.mxu0 %v5516
        %5568 = vmatprep.subr.mxu0 0.0
        %5569 = vmatpush1.msra.mxu0 %v5517
        %5570 = vmatprep.subr.mxu0 0.0
        %5571 = vmatpush1.msra.mxu0 0.0
        %5572 = vmatprep.subr.mxu0 0.0
        %5573 = vmatpush1.msra.mxu0 0.0
        %5574 = vmatprep.subr.mxu0 0.0
        %5575 = vmatpush1.msra.mxu0 0.0
        %5576 = vmatprep.subr.mxu0 0.0
        %5577 = vmatpush1.msra.mxu0 0.0
        %5578 = vmatprep.subr.mxu0 0.0
        %5579 = vmatpush1.msra.mxu0 0.0
        %5580 = vmatprep.subr.mxu0 0.0
        %5581 = vmatpush1.msra.mxu0 0.0
        %5582 = vmatprep.subr.mxu0 0.0
        %5583 = vmatpush1.msra.mxu0 0.0
        %5584 = vmatprep.subr.mxu0 0.0
        %5585 = vmatpush1.msra.mxu0 0.0
        %5586 = vmatprep.subr.mxu0 0.0
        %5587 = vmatpush1.msra.mxu0 0.0
        %5588 = vmatprep.subr.mxu0 0.0
        %5589 = vmatpush1.msra.mxu0 0.0
        %5590 = vmatprep.subr.mxu0 0.0
        %5591 = vmatpush1.msra.mxu0 0.0
        %5592 = vmatprep.subr.mxu0 0.0
        %5593 = vmatpush1.msra.mxu0 0.0
        %5594 = vmatprep.subr.mxu0 0.0
        %5595 = vmatpush1.msra.mxu0 0.0
        %5596 = vmatprep.subr.mxu0 0.0
        %5597 = vmatpush1.msra.mxu0 0.0
        %5598 = vmatprep.subr.mxu0 0.0
        %5599 = vmatpush1.msra.mxu0 0.0
        %5600 = vmatprep.subr.mxu0 0.0
        %5601 = vmatpush1.msra.mxu0 0.0
        %5602 = vmatprep.subr.mxu0 0.0
        %5603 = vmatpush1.msra.mxu0 0.0
        %5604 = vmatprep.subr.mxu0 0.0
        %5605 = vmatpush1.msra.mxu0 0.0
        %5606 = vmatprep.subr.mxu0 0.0
        %5607 = vmatpush1.msra.mxu0 0.0
        %5608 = vmatprep.subr.mxu0 0.0
        %5609 = vmatpush1.msra.mxu0 0.0
        %5610 = vmatprep.subr.mxu0 0.0
        %5611 = vmatpush1.msra.mxu0 0.0
        %5612 = vmatprep.subr.mxu0 0.0
        %5613 = vmatpush1.msra.mxu0 0.0
        %5614 = vmatprep.subr.mxu0 0.0
        %5615 = vmatpush1.msra.mxu0 0.0
        %5616 = vmatprep.subr.mxu0 0.0
        %5617 = vmatpush1.msra.mxu0 0.0
        %5618 = vmatprep.subr.mxu0 0.0
        %5619 = vmatpush1.msra.mxu0 0.0
        %5620 = vmatprep.subr.mxu0 0.0
        %5621 = vmatpush1.msra.mxu0 0.0
        %5622 = vmatprep.subr.mxu0 0.0
        %5623 = vmatpush1.msra.mxu0 0.0
        %5624 = vmatprep.subr.mxu0 0.0
        %5625 = vmatpush1.msra.mxu0 0.0
        %5626 = vmatprep.subr.mxu0 0.0
        %5627 = vmatpush1.msra.mxu0 0.0
        %5628 = vmatprep.subr.mxu0 0.0
        %5629 = vmatpush1.msra.mxu0 0.0
        %5630 = vmatprep.mubr.f32.mxu0 0.0
        %5631 = vmatmul.mubr.f32.gmra.mrb[0].mxu0 %v5519
        %v5632 = vpop.f32.mrb[0].mxu0
        %v5633 = vadd.f32 0.0, %v5632
        %v5634 = vpop.f32.mrb[0].mxu0
        %5635 = vmatprep.mubr.f32.mxu0 0.0
        %5636 = vmatmul.mubr.f32.gmra.mrb[0].mxu0 %v5522
        %v5637 = vpop.f32.mrb[0].mxu0
        %v5638 = vadd.f32 0.0, %v5637
        %v5639 = vpop.f32.mrb[0].mxu0
        %5640 = vmatprep.mubr.f32.mxu0 0.0
        %5641 = vmatmul.mubr.f32.gmra.mrb[0].mxu0 %v5525
        %v5642 = vpop.f32.mrb[0].mxu0
        %v5643 = vadd.f32 0.0, %v5642
        %v5644 = vpop.f32.mrb[0].mxu0
        %5645 = vmatprep.mubr.f32.mxu0 0.0
        %5646 = vmatmul.mubr.f32.gmra.mrb[0].mxu0 %v5528
        %v5647 = vpop.f32.mrb[0].mxu0
        %v5648 = vadd.f32 0.0, %v5647
        %v5649 = vpop.f32.mrb[0].mxu0
        %5650 = vmatprep.mubr.f32.mxu0 0.0
        %5651 = vmatmul.mubr.f32.gmra.mrb[0].mxu0 %v5531
        %v5652 = vpop.f32.mrb[0].mxu0
        %v5653 = vadd.f32 0.0, %v5652
        %v5654 = vpop.f32.mrb[0].mxu0
        %5655 = vmatprep.mubr.f32.mxu0 0.0
        %5656 = vmatmul.mubr.f32.gmra.mrb[0].mxu0 %v5534
        %v5657 = vpop.f32.mrb[0].mxu0
        %v5658 = vadd.f32 0.0, %v5657
        %v5659 = vpop.f32.mrb[0].mxu0
        %5660 = vmatprep.mubr.f32.mxu0 0.0
        %5661 = vmatmul.mubr.f32.gmra.mrb[0].mxu0 %v5537
        %v5662 = vpop.f32.mrb[0].mxu0
        %v5663 = vadd.f32 0.0, %v5662
        %v5664 = vpop.f32.mrb[0].mxu0
        %5665 = vmatprep.mubr.f32.mxu0 0.0
        %5666 = vmatmul.mubr.f32.gmra.mrb[0].mxu0 %v5540
        %v5667 = vpop.f32.mrb[0].mxu0
        %v5668 = vadd.f32 0.0, %v5667
        %v5669 = vpop.f32.mrb[0].mxu0
        %5670 = vmatprep.mubr.f32.mxu0 0.0
        %5671 = vmatmul.mubr.f32.gmra.mrb[0].mxu0 %v5543
        %v5672 = vpop.f32.mrb[0].mxu0
        %v5673 = vadd.f32 0.0, %v5672
        %v5674 = vpop.f32.mrb[0].mxu0
        %5675 = vmatprep.mubr.f32.mxu0 0.0
        %5676 = vmatmul.mubr.f32.gmra.mrb[0].mxu0 %v5546
        %v5677 = vpop.f32.mrb[0].mxu0
        %v5678 = vadd.f32 0.0, %v5677
        %v5679 = vpop.f32.mrb[0].mxu0
        %5680 = vmatprep.mubr.f32.mxu0 0.0
        %5681 = vmatmul.mubr.f32.gmra.mrb[0].mxu0 %v5549
        %v5682 = vpop.f32.mrb[0].mxu0
        %v5683 = vadd.f32 0.0, %v5682
        %v5684 = vpop.f32.mrb[0].mxu0
        %5685 = vmatprep.mubr.f32.mxu0 0.0
        %5686 = vmatmul.mubr.f32.gmra.mrb[0].mxu0 %v5552
        %v5687 = vpop.f32.mrb[0].mxu0
        %v5688 = vadd.f32 0.0, %v5687
        %v5689 = vpop.f32.mrb[0].mxu0
        %5690 = vmatprep.mubr.f32.mxu0 0.0
        %5691 = vmatmul.mubr.f32.gmra.mrb[0].mxu0 %v5555
        %v5692 = vpop.f32.mrb[0].mxu0
        %v5693 = vadd.f32 0.0, %v5692
        %v5694 = vpop.f32.mrb[0].mxu0
        %5695 = vmatprep.mubr.f32.mxu0 0.0
        %5696 = vmatmul.mubr.f32.gmra.mrb[0].mxu0 %v5558
        %v5697 = vpop.f32.mrb[0].mxu0
        %v5698 = vadd.f32 0.0, %v5697
        %v5699 = vpop.f32.mrb[0].mxu0
        %5700 = vmatprep.mubr.f32.mxu0 0.0
        %5701 = vmatmul.mubr.f32.gmra.mrb[0].mxu0 %v5561
        %v5702 = vpop.f32.mrb[0].mxu0
        %v5703 = vadd.f32 0.0, %v5702
        %v5704 = vpop.f32.mrb[0].mxu0
        %5705 = vmatprep.mubr.f32.mxu0 0.0
        %5706 = vmatmul.mubr.f32.gmra.mrb[0].mxu0 %v5564
        %v5707 = vpop.f32.mrb[0].mxu0
        %v5708 = vadd.f32 0.0, %v5707
        %v5709 = vpop.f32.mrb[0].mxu0
        %5710 = vdwg.mxu0
        %v5712 = vsel %vm2471, %v5481, 0
        %v5715 = vsel %vm2471, %v5482, 0
        %v5718 = vsel %vm2471, %v5483, 0
        %v5721 = vsel %vm2471, %v5484, 0
        %v5724 = vsel %vm2471, %v5485, 0
        %v5727 = vsel %vm2471, %v5486, 0
        %v5730 = vsel %vm2471, %v5487, 0
        %v5733 = vsel %vm2471, %v5488, 0
        %v5736 = vsel %vm2471, %v5489, 0
        %v5739 = vsel %vm2471, %v5490, 0
        %v5742 = vsel %vm2471, %v5491, 0
        %v5745 = vsel %vm2471, %v5492, 0
        %v5748 = vsel %vm2471, %v5493, 0
        %v5751 = vsel %vm2471, %v5494, 0
        %v5754 = vsel %vm2471, %v5495, 0
        %v5757 = vsel %vm2471, %v5496, 0
        %5759 = vmatprep.subr.mxu0 0.0
        %5760 = vmatpush1.msra.mxu0 %v5497
        %5761 = vmatprep.subr.mxu0 0.0
        %5762 = vmatpush1.msra.mxu0 %v5498
        %5763 = vmatprep.subr.mxu0 0.0
        %5764 = vmatpush1.msra.mxu0 0.0
        %5765 = vmatprep.subr.mxu0 0.0
        %5766 = vmatpush1.msra.mxu0 0.0
        %5767 = vmatprep.subr.mxu0 0.0
        %5768 = vmatpush1.msra.mxu0 0.0
        %5769 = vmatprep.subr.mxu0 0.0
        %5770 = vmatpush1.msra.mxu0 0.0
        %5771 = vmatprep.subr.mxu0 0.0
        %5772 = vmatpush1.msra.mxu0 0.0
        %5773 = vmatprep.subr.mxu0 0.0
        %5774 = vmatpush1.msra.mxu0 0.0
        %5775 = vmatprep.subr.mxu0 0.0
        %5776 = vmatpush1.msra.mxu0 0.0
        %5777 = vmatprep.subr.mxu0 0.0
        %5778 = vmatpush1.msra.mxu0 0.0
        %5779 = vmatprep.subr.mxu0 0.0
        %5780 = vmatpush1.msra.mxu0 0.0
        %5781 = vmatprep.subr.mxu0 0.0
        %5782 = vmatpush1.msra.mxu0 0.0
        %5783 = vmatprep.subr.mxu0 0.0
        %5784 = vmatpush1.msra.mxu0 0.0
        %5785 = vmatprep.subr.mxu0 0.0
        %5786 = vmatpush1.msra.mxu0 0.0
        %5787 = vmatprep.subr.mxu0 0.0
        %5788 = vmatpush1.msra.mxu0 0.0
        %5789 = vmatprep.subr.mxu0 0.0
        %5790 = vmatpush1.msra.mxu0 0.0
        %5791 = vmatprep.subr.mxu0 0.0
        %5792 = vmatpush1.msra.mxu0 0.0
        %5793 = vmatprep.subr.mxu0 0.0
        %5794 = vmatpush1.msra.mxu0 0.0
        %5795 = vmatprep.subr.mxu0 0.0
        %5796 = vmatpush1.msra.mxu0 0.0
        %5797 = vmatprep.subr.mxu0 0.0
        %5798 = vmatpush1.msra.mxu0 0.0
        %5799 = vmatprep.subr.mxu0 0.0
        %5800 = vmatpush1.msra.mxu0 0.0
        %5801 = vmatprep.subr.mxu0 0.0
        %5802 = vmatpush1.msra.mxu0 0.0
        %5803 = vmatprep.subr.mxu0 0.0
        %5804 = vmatpush1.msra.mxu0 0.0
        %5805 = vmatprep.subr.mxu0 0.0
        %5806 = vmatpush1.msra.mxu0 0.0
        %5807 = vmatprep.subr.mxu0 0.0
        %5808 = vmatpush1.msra.mxu0 0.0
        %5809 = vmatprep.subr.mxu0 0.0
        %5810 = vmatpush1.msra.mxu0 0.0
        %5811 = vmatprep.subr.mxu0 0.0
        %5812 = vmatpush1.msra.mxu0 0.0
        %5813 = vmatprep.subr.mxu0 0.0
        %5814 = vmatpush1.msra.mxu0 0.0
        %5815 = vmatprep.subr.mxu0 0.0
        %5816 = vmatpush1.msra.mxu0 0.0
        %5817 = vmatprep.subr.mxu0 0.0
        %5818 = vmatpush1.msra.mxu0 0.0
        %5819 = vmatprep.subr.mxu0 0.0
        %5820 = vmatpush1.msra.mxu0 0.0
        %5821 = vmatprep.subr.mxu0 0.0
        %5822 = vmatpush1.msra.mxu0 0.0
        %5823 = vmatprep.mubr.f32.mxu0 0.0
        %5824 = vmatmul.mubr.f32.gmra.mrb[0].mxu0 %v5712
        %v5825 = vpop.f32.mrb[0].mxu0
        %v5826 = vadd.f32 %v5633, %v5825
        %v5827 = vpop.f32.mrb[0].mxu0
        %5828 = vmatprep.mubr.f32.mxu0 0.0
        %5829 = vmatmul.mubr.f32.gmra.mrb[0].mxu0 %v5715
        %v5830 = vpop.f32.mrb[0].mxu0
        %v5831 = vadd.f32 %v5638, %v5830
        %v5832 = vpop.f32.mrb[0].mxu0
        %5833 = vmatprep.mubr.f32.mxu0 0.0
        %5834 = vmatmul.mubr.f32.gmra.mrb[0].mxu0 %v5718
        %v5835 = vpop.f32.mrb[0].mxu0
        %v5836 = vadd.f32 %v5643, %v5835
        %v5837 = vpop.f32.mrb[0].mxu0
        %5838 = vmatprep.mubr.f32.mxu0 0.0
        %5839 = vmatmul.mubr.f32.gmra.mrb[0].mxu0 %v5721
        %v5840 = vpop.f32.mrb[0].mxu0
        %v5841 = vadd.f32 %v5648, %v5840
        %v5842 = vpop.f32.mrb[0].mxu0
        %5843 = vmatprep.mubr.f32.mxu0 0.0
        %5844 = vmatmul.mubr.f32.gmra.mrb[0].mxu0 %v5724
        %v5845 = vpop.f32.mrb[0].mxu0
        %v5846 = vadd.f32 %v5653, %v5845
        %v5847 = vpop.f32.mrb[0].mxu0
        %5848 = vmatprep.mubr.f32.mxu0 0.0
        %5849 = vmatmul.mubr.f32.gmra.mrb[0].mxu0 %v5727
        %v5850 = vpop.f32.mrb[0].mxu0
        %v5851 = vadd.f32 %v5658, %v5850
        %v5852 = vpop.f32.mrb[0].mxu0
        %5853 = vmatprep.mubr.f32.mxu0 0.0
        %5854 = vmatmul.mubr.f32.gmra.mrb[0].mxu0 %v5730
        %v5855 = vpop.f32.mrb[0].mxu0
        %v5856 = vadd.f32 %v5663, %v5855
        %v5857 = vpop.f32.mrb[0].mxu0
        %5858 = vmatprep.mubr.f32.mxu0 0.0
        %5859 = vmatmul.mubr.f32.gmra.mrb[0].mxu0 %v5733
        %v5860 = vpop.f32.mrb[0].mxu0
        %v5861 = vadd.f32 %v5668, %v5860
        %v5862 = vpop.f32.mrb[0].mxu0
        %5863 = vmatprep.mubr.f32.mxu0 0.0
        %5864 = vmatmul.mubr.f32.gmra.mrb[0].mxu0 %v5736
        %v5865 = vpop.f32.mrb[0].mxu0
        %v5866 = vadd.f32 %v5673, %v5865
        %v5867 = vpop.f32.mrb[0].mxu0
        %5868 = vmatprep.mubr.f32.mxu0 0.0
        %5869 = vmatmul.mubr.f32.gmra.mrb[0].mxu0 %v5739
        %v5870 = vpop.f32.mrb[0].mxu0
        %v5871 = vadd.f32 %v5678, %v5870
        %v5872 = vpop.f32.mrb[0].mxu0
        %5873 = vmatprep.mubr.f32.mxu0 0.0
        %5874 = vmatmul.mubr.f32.gmra.mrb[0].mxu0 %v5742
        %v5875 = vpop.f32.mrb[0].mxu0
        %v5876 = vadd.f32 %v5683, %v5875
        %v5877 = vpop.f32.mrb[0].mxu0
        %5878 = vmatprep.mubr.f32.mxu0 0.0
        %5879 = vmatmul.mubr.f32.gmra.mrb[0].mxu0 %v5745
        %v5880 = vpop.f32.mrb[0].mxu0
        %v5881 = vadd.f32 %v5688, %v5880
        %v5882 = vpop.f32.mrb[0].mxu0
        %5883 = vmatprep.mubr.f32.mxu0 0.0
        %5884 = vmatmul.mubr.f32.gmra.mrb[0].mxu0 %v5748
        %v5885 = vpop.f32.mrb[0].mxu0
        %v5886 = vadd.f32 %v5693, %v5885
        %v5887 = vpop.f32.mrb[0].mxu0
        %5888 = vmatprep.mubr.f32.mxu0 0.0
        %5889 = vmatmul.mubr.f32.gmra.mrb[0].mxu0 %v5751
        %v5890 = vpop.f32.mrb[0].mxu0
        %v5891 = vadd.f32 %v5698, %v5890
        %v5892 = vpop.f32.mrb[0].mxu0
        %5893 = vmatprep.mubr.f32.mxu0 0.0
        %5894 = vmatmul.mubr.f32.gmra.mrb[0].mxu0 %v5754
        %v5895 = vpop.f32.mrb[0].mxu0
        %v5896 = vadd.f32 %v5703, %v5895
        %v5897 = vpop.f32.mrb[0].mxu0
        %5898 = vmatprep.mubr.f32.mxu0 0.0
        %5899 = vmatmul.mubr.f32.gmra.mrb[0].mxu0 %v5757
        %v5900 = vpop.f32.mrb[0].mxu0
        %v5901 = vadd.f32 %v5708, %v5900
        %v5902 = vpop.f32.mrb[0].mxu0
        %5903 = vdwg.mxu0
        %v5904 = vld [vmem:[#allocation5 + $0x2] sm:$0xff]
        %v5905 = vld [vmem:[#allocation5 + $0x12] sm:$0xff]
        %v5906 = vld [vmem:[#allocation5 + $0x22] sm:$0xff]
        %v5907 = vld [vmem:[#allocation5 + $0x32] sm:$0xff]
        %v5908 = vld [vmem:[#allocation5 + $0x42] sm:$0xff]
        %v5909 = vld [vmem:[#allocation5 + $0x52] sm:$0xff]
        %v5910 = vld [vmem:[#allocation5 + $0x62] sm:$0xff]
        %v5911 = vld [vmem:[#allocation5 + $0x72] sm:$0xff]
        %v5912 = vld [vmem:[#allocation5 + $0xa2] sm:$0xff]
        %v5913 = vld [vmem:[#allocation5 + $0xb2] sm:$0xff]
        %v5914 = vld [vmem:[#allocation5 + $0xc2] sm:$0xff]
        %v5915 = vld [vmem:[#allocation5 + $0xd2] sm:$0xff]
        %v5916 = vld [vmem:[#allocation5 + $0xe2] sm:$0xff]
        %v5917 = vld [vmem:[#allocation5 + $0xf2] sm:$0xff]
        %v5918 = vld [vmem:[#allocation5 + $0x102] sm:$0xff]
        %v5919 = vld [vmem:[#allocation5 + $0x112] sm:$0xff]
        %s5920 = scalar_lea.vmem [#allocation16], 32
        %v5921 = vld [vmem:[%s5920] sm:$0xff]
        %v5922 = vld [vmem:[%s5920 + $0x8] sm:$0xff]
        %v5924 = vsel %vm2471, %v5904, 0
        %v5927 = vsel %vm2471, %v5905, 0
        %v5930 = vsel %vm2471, %v5906, 0
        %v5933 = vsel %vm2471, %v5907, 0
        %v5936 = vsel %vm2471, %v5908, 0
        %v5939 = vsel %vm2471, %v5909, 0
        %v5942 = vsel %vm2471, %v5910, 0
        %v5945 = vsel %vm2471, %v5911, 0
        %v5948 = vsel %vm2471, %v5912, 0
        %v5951 = vsel %vm2471, %v5913, 0
        %v5954 = vsel %vm2471, %v5914, 0
        %v5957 = vsel %vm2471, %v5915, 0
        %v5960 = vsel %vm2471, %v5916, 0
        %v5963 = vsel %vm2471, %v5917, 0
        %v5966 = vsel %vm2471, %v5918, 0
        %v5969 = vsel %vm2471, %v5919, 0
        %5971 = vmatprep.subr.mxu0 0.0
        %5972 = vmatpush1.msra.mxu0 %v5921
        %5973 = vmatprep.subr.mxu0 0.0
        %5974 = vmatpush1.msra.mxu0 %v5922
        %5975 = vmatprep.subr.mxu0 0.0
        %5976 = vmatpush1.msra.mxu0 0.0
        %5977 = vmatprep.subr.mxu0 0.0
        %5978 = vmatpush1.msra.mxu0 0.0
        %5979 = vmatprep.subr.mxu0 0.0
        %5980 = vmatpush1.msra.mxu0 0.0
        %5981 = vmatprep.subr.mxu0 0.0
        %5982 = vmatpush1.msra.mxu0 0.0
        %5983 = vmatprep.subr.mxu0 0.0
        %5984 = vmatpush1.msra.mxu0 0.0
        %5985 = vmatprep.subr.mxu0 0.0
        %5986 = vmatpush1.msra.mxu0 0.0
        %5987 = vmatprep.subr.mxu0 0.0
        %5988 = vmatpush1.msra.mxu0 0.0
        %5989 = vmatprep.subr.mxu0 0.0
        %5990 = vmatpush1.msra.mxu0 0.0
        %5991 = vmatprep.subr.mxu0 0.0
        %5992 = vmatpush1.msra.mxu0 0.0
        %5993 = vmatprep.subr.mxu0 0.0
        %5994 = vmatpush1.msra.mxu0 0.0
        %5995 = vmatprep.subr.mxu0 0.0
        %5996 = vmatpush1.msra.mxu0 0.0
        %5997 = vmatprep.subr.mxu0 0.0
        %5998 = vmatpush1.msra.mxu0 0.0
        %5999 = vmatprep.subr.mxu0 0.0
        %6000 = vmatpush1.msra.mxu0 0.0
        %6001 = vmatprep.subr.mxu0 0.0
        %6002 = vmatpush1.msra.mxu0 0.0
        %6003 = vmatprep.subr.mxu0 0.0
        %6004 = vmatpush1.msra.mxu0 0.0
        %6005 = vmatprep.subr.mxu0 0.0
        %6006 = vmatpush1.msra.mxu0 0.0
        %6007 = vmatprep.subr.mxu0 0.0
        %6008 = vmatpush1.msra.mxu0 0.0
        %6009 = vmatprep.subr.mxu0 0.0
        %6010 = vmatpush1.msra.mxu0 0.0
        %6011 = vmatprep.subr.mxu0 0.0
        %6012 = vmatpush1.msra.mxu0 0.0
        %6013 = vmatprep.subr.mxu0 0.0
        %6014 = vmatpush1.msra.mxu0 0.0
        %6015 = vmatprep.subr.mxu0 0.0
        %6016 = vmatpush1.msra.mxu0 0.0
        %6017 = vmatprep.subr.mxu0 0.0
        %6018 = vmatpush1.msra.mxu0 0.0
        %6019 = vmatprep.subr.mxu0 0.0
        %6020 = vmatpush1.msra.mxu0 0.0
        %6021 = vmatprep.subr.mxu0 0.0
        %6022 = vmatpush1.msra.mxu0 0.0
        %6023 = vmatprep.subr.mxu0 0.0
        %6024 = vmatpush1.msra.mxu0 0.0
        %6025 = vmatprep.subr.mxu0 0.0
        %6026 = vmatpush1.msra.mxu0 0.0
        %6027 = vmatprep.subr.mxu0 0.0
        %6028 = vmatpush1.msra.mxu0 0.0
        %6029 = vmatprep.subr.mxu0 0.0
        %6030 = vmatpush1.msra.mxu0 0.0
        %6031 = vmatprep.subr.mxu0 0.0
        %6032 = vmatpush1.msra.mxu0 0.0
        %6033 = vmatprep.subr.mxu0 0.0
        %6034 = vmatpush1.msra.mxu0 0.0
        %6035 = vmatprep.mubr.f32.mxu0 0.0
        %6036 = vmatmul.mubr.f32.gmra.mrb[0].mxu0 %v5924
        %v6037 = vpop.f32.mrb[0].mxu0
        %v6038 = vadd.f32 0.0, %v6037
        %v6039 = vpop.f32.mrb[0].mxu0
        %6040 = vmatprep.mubr.f32.mxu0 0.0
        %6041 = vmatmul.mubr.f32.gmra.mrb[0].mxu0 %v5927
        %v6042 = vpop.f32.mrb[0].mxu0
        %v6043 = vadd.f32 0.0, %v6042
        %v6044 = vpop.f32.mrb[0].mxu0
        %6045 = vmatprep.mubr.f32.mxu0 0.0
        %6046 = vmatmul.mubr.f32.gmra.mrb[0].mxu0 %v5930
        %v6047 = vpop.f32.mrb[0].mxu0
        %v6048 = vadd.f32 0.0, %v6047
        %v6049 = vpop.f32.mrb[0].mxu0
        %6050 = vmatprep.mubr.f32.mxu0 0.0
        %6051 = vmatmul.mubr.f32.gmra.mrb[0].mxu0 %v5933
        %v6052 = vpop.f32.mrb[0].mxu0
        %v6053 = vadd.f32 0.0, %v6052
        %v6054 = vpop.f32.mrb[0].mxu0
        %6055 = vmatprep.mubr.f32.mxu0 0.0
        %6056 = vmatmul.mubr.f32.gmra.mrb[0].mxu0 %v5936
        %v6057 = vpop.f32.mrb[0].mxu0
        %v6058 = vadd.f32 0.0, %v6057
        %v6059 = vpop.f32.mrb[0].mxu0
        %6060 = vmatprep.mubr.f32.mxu0 0.0
        %6061 = vmatmul.mubr.f32.gmra.mrb[0].mxu0 %v5939
        %v6062 = vpop.f32.mrb[0].mxu0
        %v6063 = vadd.f32 0.0, %v6062
        %v6064 = vpop.f32.mrb[0].mxu0
        %6065 = vmatprep.mubr.f32.mxu0 0.0
        %6066 = vmatmul.mubr.f32.gmra.mrb[0].mxu0 %v5942
        %v6067 = vpop.f32.mrb[0].mxu0
        %v6068 = vadd.f32 0.0, %v6067
        %v6069 = vpop.f32.mrb[0].mxu0
        %6070 = vmatprep.mubr.f32.mxu0 0.0
        %6071 = vmatmul.mubr.f32.gmra.mrb[0].mxu0 %v5945
        %v6072 = vpop.f32.mrb[0].mxu0
        %v6073 = vadd.f32 0.0, %v6072
        %v6074 = vpop.f32.mrb[0].mxu0
        %6075 = vmatprep.mubr.f32.mxu0 0.0
        %6076 = vmatmul.mubr.f32.gmra.mrb[0].mxu0 %v5948
        %v6077 = vpop.f32.mrb[0].mxu0
        %v6078 = vadd.f32 0.0, %v6077
        %v6079 = vpop.f32.mrb[0].mxu0
        %6080 = vmatprep.mubr.f32.mxu0 0.0
        %6081 = vmatmul.mubr.f32.gmra.mrb[0].mxu0 %v5951
        %v6082 = vpop.f32.mrb[0].mxu0
        %v6083 = vadd.f32 0.0, %v6082
        %v6084 = vpop.f32.mrb[0].mxu0
        %6085 = vmatprep.mubr.f32.mxu0 0.0
        %6086 = vmatmul.mubr.f32.gmra.mrb[0].mxu0 %v5954
        %v6087 = vpop.f32.mrb[0].mxu0
        %v6088 = vadd.f32 0.0, %v6087
        %v6089 = vpop.f32.mrb[0].mxu0
        %6090 = vmatprep.mubr.f32.mxu0 0.0
        %6091 = vmatmul.mubr.f32.gmra.mrb[0].mxu0 %v5957
        %v6092 = vpop.f32.mrb[0].mxu0
        %v6093 = vadd.f32 0.0, %v6092
        %v6094 = vpop.f32.mrb[0].mxu0
        %6095 = vmatprep.mubr.f32.mxu0 0.0
        %6096 = vmatmul.mubr.f32.gmra.mrb[0].mxu0 %v5960
        %v6097 = vpop.f32.mrb[0].mxu0
        %v6098 = vadd.f32 0.0, %v6097
        %v6099 = vpop.f32.mrb[0].mxu0
        %6100 = vmatprep.mubr.f32.mxu0 0.0
        %6101 = vmatmul.mubr.f32.gmra.mrb[0].mxu0 %v5963
        %v6102 = vpop.f32.mrb[0].mxu0
        %v6103 = vadd.f32 0.0, %v6102
        %v6104 = vpop.f32.mrb[0].mxu0
        %6105 = vmatprep.mubr.f32.mxu0 0.0
        %6106 = vmatmul.mubr.f32.gmra.mrb[0].mxu0 %v5966
        %v6107 = vpop.f32.mrb[0].mxu0
        %v6108 = vadd.f32 0.0, %v6107
        %v6109 = vpop.f32.mrb[0].mxu0
        %6110 = vmatprep.mubr.f32.mxu0 0.0
        %6111 = vmatmul.mubr.f32.gmra.mrb[0].mxu0 %v5969
        %v6112 = vpop.f32.mrb[0].mxu0
        %v6113 = vadd.f32 0.0, %v6112
        %v6114 = vpop.f32.mrb[0].mxu0
        %6115 = vdwg.mxu0
        %v6116 = vadd.f32 %v5826, %v6038
        %v6117 = vadd.f32 %v5831, %v6043
        %v6118 = vadd.f32 %v5836, %v6048
        %v6119 = vadd.f32 %v5841, %v6053
        %v6120 = vadd.f32 %v5846, %v6058
        %v6121 = vadd.f32 %v5851, %v6063
        %v6122 = vadd.f32 %v5856, %v6068
        %v6123 = vadd.f32 %v5861, %v6073
        %v6124 = vadd.f32 %v5866, %v6078
        %v6125 = vadd.f32 %v5871, %v6083
        %v6126 = vadd.f32 %v5876, %v6088
        %v6127 = vadd.f32 %v5881, %v6093
        %v6128 = vadd.f32 %v5886, %v6098
        %v6129 = vadd.f32 %v5891, %v6103
        %v6130 = vadd.f32 %v5896, %v6108
        %v6131 = vadd.f32 %v5901, %v6113
        %v6132 = vld [vmem:[%s5464] sm:$0xff]
        %v6133 = vld [vmem:[%s5464 + $0x10] sm:$0xff]
        %v6134 = vld [vmem:[%s5464 + $0x20] sm:$0xff]
        %v6135 = vld [vmem:[%s5464 + $0x30] sm:$0xff]
        %v6136 = vld [vmem:[%s5464 + $0x40] sm:$0xff]
        %v6137 = vld [vmem:[%s5464 + $0x50] sm:$0xff]
        %v6138 = vld [vmem:[%s5464 + $0x60] sm:$0xff]
        %v6139 = vld [vmem:[%s5464 + $0x70] sm:$0xff]
        %v6140 = vld [vmem:[%s5464 + $0xa0] sm:$0xff]
        %v6141 = vld [vmem:[%s5464 + $0xb0] sm:$0xff]
        %v6142 = vld [vmem:[%s5464 + $0xc0] sm:$0xff]
        %v6143 = vld [vmem:[%s5464 + $0xd0] sm:$0xff]
        %v6144 = vld [vmem:[%s5464 + $0xe0] sm:$0xff]
        %v6145 = vld [vmem:[%s5464 + $0xf0] sm:$0xff]
        %v6146 = vld [vmem:[%s5464 + $0x100] sm:$0xff]
        %v6147 = vld [vmem:[%s5464 + $0x110] sm:$0xff]
        %s6148 = scalar_lea.vmem [#allocation16], 48
        %v6149 = vld [vmem:[%s6148] sm:$0xff]
        %v6150 = vld [vmem:[%s6148 + $0x8] sm:$0xff]
        %v6152 = vsel %vm2471, %v6132, 0
        %v6155 = vsel %vm2471, %v6133, 0
        %v6158 = vsel %vm2471, %v6134, 0
        %v6161 = vsel %vm2471, %v6135, 0
        %v6164 = vsel %vm2471, %v6136, 0
        %v6167 = vsel %vm2471, %v6137, 0
        %v6170 = vsel %vm2471, %v6138, 0
        %v6173 = vsel %vm2471, %v6139, 0
        %v6176 = vsel %vm2471, %v6140, 0
        %v6179 = vsel %vm2471, %v6141, 0
        %v6182 = vsel %vm2471, %v6142, 0
        %v6185 = vsel %vm2471, %v6143, 0
        %v6188 = vsel %vm2471, %v6144, 0
        %v6191 = vsel %vm2471, %v6145, 0
        %v6194 = vsel %vm2471, %v6146, 0
        %v6197 = vsel %vm2471, %v6147, 0
        %6199 = vmatprep.subr.mxu0 0.0
        %6200 = vmatpush1.msra.mxu0 %v6149
        %6201 = vmatprep.subr.mxu0 0.0
        %6202 = vmatpush1.msra.mxu0 %v6150
        %6203 = vmatprep.subr.mxu0 0.0
        %6204 = vmatpush1.msra.mxu0 0.0
        %6205 = vmatprep.subr.mxu0 0.0
        %6206 = vmatpush1.msra.mxu0 0.0
        %6207 = vmatprep.subr.mxu0 0.0
        %6208 = vmatpush1.msra.mxu0 0.0
        %6209 = vmatprep.subr.mxu0 0.0
        %6210 = vmatpush1.msra.mxu0 0.0
        %6211 = vmatprep.subr.mxu0 0.0
        %6212 = vmatpush1.msra.mxu0 0.0
        %6213 = vmatprep.subr.mxu0 0.0
        %6214 = vmatpush1.msra.mxu0 0.0
        %6215 = vmatprep.subr.mxu0 0.0
        %6216 = vmatpush1.msra.mxu0 0.0
        %6217 = vmatprep.subr.mxu0 0.0
        %6218 = vmatpush1.msra.mxu0 0.0
        %6219 = vmatprep.subr.mxu0 0.0
        %6220 = vmatpush1.msra.mxu0 0.0
        %6221 = vmatprep.subr.mxu0 0.0
        %6222 = vmatpush1.msra.mxu0 0.0
        %6223 = vmatprep.subr.mxu0 0.0
        %6224 = vmatpush1.msra.mxu0 0.0
        %6225 = vmatprep.subr.mxu0 0.0
        %6226 = vmatpush1.msra.mxu0 0.0
        %6227 = vmatprep.subr.mxu0 0.0
        %6228 = vmatpush1.msra.mxu0 0.0
        %6229 = vmatprep.subr.mxu0 0.0
        %6230 = vmatpush1.msra.mxu0 0.0
        %6231 = vmatprep.subr.mxu0 0.0
        %6232 = vmatpush1.msra.mxu0 0.0
        %6233 = vmatprep.subr.mxu0 0.0
        %6234 = vmatpush1.msra.mxu0 0.0
        %6235 = vmatprep.subr.mxu0 0.0
        %6236 = vmatpush1.msra.mxu0 0.0
        %6237 = vmatprep.subr.mxu0 0.0
        %6238 = vmatpush1.msra.mxu0 0.0
        %6239 = vmatprep.subr.mxu0 0.0
        %6240 = vmatpush1.msra.mxu0 0.0
        %6241 = vmatprep.subr.mxu0 0.0
        %6242 = vmatpush1.msra.mxu0 0.0
        %6243 = vmatprep.subr.mxu0 0.0
        %6244 = vmatpush1.msra.mxu0 0.0
        %6245 = vmatprep.subr.mxu0 0.0
        %6246 = vmatpush1.msra.mxu0 0.0
        %6247 = vmatprep.subr.mxu0 0.0
        %6248 = vmatpush1.msra.mxu0 0.0
        %6249 = vmatprep.subr.mxu0 0.0
        %6250 = vmatpush1.msra.mxu0 0.0
        %6251 = vmatprep.subr.mxu0 0.0
        %6252 = vmatpush1.msra.mxu0 0.0
        %6253 = vmatprep.subr.mxu0 0.0
        %6254 = vmatpush1.msra.mxu0 0.0
        %6255 = vmatprep.subr.mxu0 0.0
        %6256 = vmatpush1.msra.mxu0 0.0
        %6257 = vmatprep.subr.mxu0 0.0
        %6258 = vmatpush1.msra.mxu0 0.0
        %6259 = vmatprep.subr.mxu0 0.0
        %6260 = vmatpush1.msra.mxu0 0.0
        %6261 = vmatprep.subr.mxu0 0.0
        %6262 = vmatpush1.msra.mxu0 0.0
        %6263 = vmatprep.mubr.f32.mxu0 0.0
        %6264 = vmatmul.mubr.f32.gmra.mrb[0].mxu0 %v6152
        %v6265 = vpop.f32.mrb[0].mxu0
        %v6266 = vadd.f32 0.0, %v6265
        %v6267 = vpop.f32.mrb[0].mxu0
        %6268 = vmatprep.mubr.f32.mxu0 0.0
        %6269 = vmatmul.mubr.f32.gmra.mrb[0].mxu0 %v6155
        %v6270 = vpop.f32.mrb[0].mxu0
        %v6271 = vadd.f32 0.0, %v6270
        %v6272 = vpop.f32.mrb[0].mxu0
        %6273 = vmatprep.mubr.f32.mxu0 0.0
        %6274 = vmatmul.mubr.f32.gmra.mrb[0].mxu0 %v6158
        %v6275 = vpop.f32.mrb[0].mxu0
        %v6276 = vadd.f32 0.0, %v6275
        %v6277 = vpop.f32.mrb[0].mxu0
        %6278 = vmatprep.mubr.f32.mxu0 0.0
        %6279 = vmatmul.mubr.f32.gmra.mrb[0].mxu0 %v6161
        %v6280 = vpop.f32.mrb[0].mxu0
        %v6281 = vadd.f32 0.0, %v6280
        %v6282 = vpop.f32.mrb[0].mxu0
        %6283 = vmatprep.mubr.f32.mxu0 0.0
        %6284 = vmatmul.mubr.f32.gmra.mrb[0].mxu0 %v6164
        %v6285 = vpop.f32.mrb[0].mxu0
        %v6286 = vadd.f32 0.0, %v6285
        %v6287 = vpop.f32.mrb[0].mxu0
        %6288 = vmatprep.mubr.f32.mxu0 0.0
        %6289 = vmatmul.mubr.f32.gmra.mrb[0].mxu0 %v6167
        %v6290 = vpop.f32.mrb[0].mxu0
        %v6291 = vadd.f32 0.0, %v6290
        %v6292 = vpop.f32.mrb[0].mxu0
        %6293 = vmatprep.mubr.f32.mxu0 0.0
        %6294 = vmatmul.mubr.f32.gmra.mrb[0].mxu0 %v6170
        %v6295 = vpop.f32.mrb[0].mxu0
        %v6296 = vadd.f32 0.0, %v6295
        %v6297 = vpop.f32.mrb[0].mxu0
        %6298 = vmatprep.mubr.f32.mxu0 0.0
        %6299 = vmatmul.mubr.f32.gmra.mrb[0].mxu0 %v6173
        %v6300 = vpop.f32.mrb[0].mxu0
        %v6301 = vadd.f32 0.0, %v6300
        %v6302 = vpop.f32.mrb[0].mxu0
        %6303 = vmatprep.mubr.f32.mxu0 0.0
        %6304 = vmatmul.mubr.f32.gmra.mrb[0].mxu0 %v6176
        %v6305 = vpop.f32.mrb[0].mxu0
        %v6306 = vadd.f32 0.0, %v6305
        %v6307 = vpop.f32.mrb[0].mxu0
        %6308 = vmatprep.mubr.f32.mxu0 0.0
        %6309 = vmatmul.mubr.f32.gmra.mrb[0].mxu0 %v6179
        %v6310 = vpop.f32.mrb[0].mxu0
        %v6311 = vadd.f32 0.0, %v6310
        %v6312 = vpop.f32.mrb[0].mxu0
        %6313 = vmatprep.mubr.f32.mxu0 0.0
        %6314 = vmatmul.mubr.f32.gmra.mrb[0].mxu0 %v6182
        %v6315 = vpop.f32.mrb[0].mxu0
        %v6316 = vadd.f32 0.0, %v6315
        %v6317 = vpop.f32.mrb[0].mxu0
        %6318 = vmatprep.mubr.f32.mxu0 0.0
        %6319 = vmatmul.mubr.f32.gmra.mrb[0].mxu0 %v6185
        %v6320 = vpop.f32.mrb[0].mxu0
        %v6321 = vadd.f32 0.0, %v6320
        %v6322 = vpop.f32.mrb[0].mxu0
        %6323 = vmatprep.mubr.f32.mxu0 0.0
        %6324 = vmatmul.mubr.f32.gmra.mrb[0].mxu0 %v6188
        %v6325 = vpop.f32.mrb[0].mxu0
        %v6326 = vadd.f32 0.0, %v6325
        %v6327 = vpop.f32.mrb[0].mxu0
        %6328 = vmatprep.mubr.f32.mxu0 0.0
        %6329 = vmatmul.mubr.f32.gmra.mrb[0].mxu0 %v6191
        %v6330 = vpop.f32.mrb[0].mxu0
        %v6331 = vadd.f32 0.0, %v6330
        %v6332 = vpop.f32.mrb[0].mxu0
        %6333 = vmatprep.mubr.f32.mxu0 0.0
        %6334 = vmatmul.mubr.f32.gmra.mrb[0].mxu0 %v6194
        %v6335 = vpop.f32.mrb[0].mxu0
        %v6336 = vadd.f32 0.0, %v6335
        %v6337 = vpop.f32.mrb[0].mxu0
        %6338 = vmatprep.mubr.f32.mxu0 0.0
        %6339 = vmatmul.mubr.f32.gmra.mrb[0].mxu0 %v6197
        %v6340 = vpop.f32.mrb[0].mxu0
        %v6341 = vadd.f32 0.0, %v6340
        %v6342 = vpop.f32.mrb[0].mxu0
        %6343 = vdwg.mxu0
        %v6344 = vadd.f32 %v6116, %v6266
        %v6345 = vadd.f32 %v6117, %v6271
        %v6346 = vadd.f32 %v6118, %v6276
        %v6347 = vadd.f32 %v6119, %v6281
        %v6348 = vadd.f32 %v6120, %v6286
        %v6349 = vadd.f32 %v6121, %v6291
        %v6350 = vadd.f32 %v6122, %v6296
        %v6351 = vadd.f32 %v6123, %v6301
        %v6352 = vadd.f32 %v6124, %v6306
        %v6353 = vadd.f32 %v6125, %v6311
        %v6354 = vadd.f32 %v6126, %v6316
        %v6355 = vadd.f32 %v6127, %v6321
        %v6356 = vadd.f32 %v6128, %v6326
        %v6357 = vadd.f32 %v6129, %v6331
        %v6358 = vadd.f32 %v6130, %v6336
        %v6359 = vadd.f32 %v6131, %v6341
        %v6360 = vld [vmem:[%s5464 + $0x1] sm:$0xff]
        %v6361 = vld [vmem:[%s5464 + $0x11] sm:$0xff]
        %v6362 = vld [vmem:[%s5464 + $0x21] sm:$0xff]
        %v6363 = vld [vmem:[%s5464 + $0x31] sm:$0xff]
        %v6364 = vld [vmem:[%s5464 + $0x41] sm:$0xff]
        %v6365 = vld [vmem:[%s5464 + $0x51] sm:$0xff]
        %v6366 = vld [vmem:[%s5464 + $0x61] sm:$0xff]
        %v6367 = vld [vmem:[%s5464 + $0x71] sm:$0xff]
        %v6368 = vld [vmem:[%s5464 + $0xa1] sm:$0xff]
        %v6369 = vld [vmem:[%s5464 + $0xb1] sm:$0xff]
        %v6370 = vld [vmem:[%s5464 + $0xc1] sm:$0xff]
        %v6371 = vld [vmem:[%s5464 + $0xd1] sm:$0xff]
        %v6372 = vld [vmem:[%s5464 + $0xe1] sm:$0xff]
        %v6373 = vld [vmem:[%s5464 + $0xf1] sm:$0xff]
        %v6374 = vld [vmem:[%s5464 + $0x101] sm:$0xff]
        %v6375 = vld [vmem:[%s5464 + $0x111] sm:$0xff]
        %s6376 = scalar_lea.vmem [#allocation16], 64
        %v6377 = vld [vmem:[%s6376] sm:$0xff]
        %v6378 = vld [vmem:[%s6376 + $0x8] sm:$0xff]
        %v6380 = vsel %vm2471, %v6360, 0
        %v6383 = vsel %vm2471, %v6361, 0
        %v6386 = vsel %vm2471, %v6362, 0
        %v6389 = vsel %vm2471, %v6363, 0
        %v6392 = vsel %vm2471, %v6364, 0
        %v6395 = vsel %vm2471, %v6365, 0
        %v6398 = vsel %vm2471, %v6366, 0
        %v6401 = vsel %vm2471, %v6367, 0
        %v6404 = vsel %vm2471, %v6368, 0
        %v6407 = vsel %vm2471, %v6369, 0
        %v6410 = vsel %vm2471, %v6370, 0
        %v6413 = vsel %vm2471, %v6371, 0
        %v6416 = vsel %vm2471, %v6372, 0
        %v6419 = vsel %vm2471, %v6373, 0
        %v6422 = vsel %vm2471, %v6374, 0
        %v6425 = vsel %vm2471, %v6375, 0
        %6427 = vmatprep.subr.mxu0 0.0
        %6428 = vmatpush1.msra.mxu0 %v6377
        %6429 = vmatprep.subr.mxu0 0.0
        %6430 = vmatpush1.msra.mxu0 %v6378
        %6431 = vmatprep.subr.mxu0 0.0
        %6432 = vmatpush1.msra.mxu0 0.0
        %6433 = vmatprep.subr.mxu0 0.0
        %6434 = vmatpush1.msra.mxu0 0.0
        %6435 = vmatprep.subr.mxu0 0.0
        %6436 = vmatpush1.msra.mxu0 0.0
        %6437 = vmatprep.subr.mxu0 0.0
        %6438 = vmatpush1.msra.mxu0 0.0
        %6439 = vmatprep.subr.mxu0 0.0
        %6440 = vmatpush1.msra.mxu0 0.0
        %6441 = vmatprep.subr.mxu0 0.0
        %6442 = vmatpush1.msra.mxu0 0.0
        %6443 = vmatprep.subr.mxu0 0.0
        %6444 = vmatpush1.msra.mxu0 0.0
        %6445 = vmatprep.subr.mxu0 0.0
        %6446 = vmatpush1.msra.mxu0 0.0
        %6447 = vmatprep.subr.mxu0 0.0
        %6448 = vmatpush1.msra.mxu0 0.0
        %6449 = vmatprep.subr.mxu0 0.0
        %6450 = vmatpush1.msra.mxu0 0.0
        %6451 = vmatprep.subr.mxu0 0.0
        %6452 = vmatpush1.msra.mxu0 0.0
        %6453 = vmatprep.subr.mxu0 0.0
        %6454 = vmatpush1.msra.mxu0 0.0
        %6455 = vmatprep.subr.mxu0 0.0
        %6456 = vmatpush1.msra.mxu0 0.0
        %6457 = vmatprep.subr.mxu0 0.0
        %6458 = vmatpush1.msra.mxu0 0.0
        %6459 = vmatprep.subr.mxu0 0.0
        %6460 = vmatpush1.msra.mxu0 0.0
        %6461 = vmatprep.subr.mxu0 0.0
        %6462 = vmatpush1.msra.mxu0 0.0
        %6463 = vmatprep.subr.mxu0 0.0
        %6464 = vmatpush1.msra.mxu0 0.0
        %6465 = vmatprep.subr.mxu0 0.0
        %6466 = vmatpush1.msra.mxu0 0.0
        %6467 = vmatprep.subr.mxu0 0.0
        %6468 = vmatpush1.msra.mxu0 0.0
        %6469 = vmatprep.subr.mxu0 0.0
        %6470 = vmatpush1.msra.mxu0 0.0
        %6471 = vmatprep.subr.mxu0 0.0
        %6472 = vmatpush1.msra.mxu0 0.0
        %6473 = vmatprep.subr.mxu0 0.0
        %6474 = vmatpush1.msra.mxu0 0.0
        %6475 = vmatprep.subr.mxu0 0.0
        %6476 = vmatpush1.msra.mxu0 0.0
        %6477 = vmatprep.subr.mxu0 0.0
        %6478 = vmatpush1.msra.mxu0 0.0
        %6479 = vmatprep.subr.mxu0 0.0
        %6480 = vmatpush1.msra.mxu0 0.0
        %6481 = vmatprep.subr.mxu0 0.0
        %6482 = vmatpush1.msra.mxu0 0.0
        %6483 = vmatprep.subr.mxu0 0.0
        %6484 = vmatpush1.msra.mxu0 0.0
        %6485 = vmatprep.subr.mxu0 0.0
        %6486 = vmatpush1.msra.mxu0 0.0
        %6487 = vmatprep.subr.mxu0 0.0
        %6488 = vmatpush1.msra.mxu0 0.0
        %6489 = vmatprep.subr.mxu0 0.0
        %6490 = vmatpush1.msra.mxu0 0.0
        %6491 = vmatprep.mubr.f32.mxu0 0.0
        %6492 = vmatmul.mubr.f32.gmra.mrb[0].mxu0 %v6380
        %v6493 = vpop.f32.mrb[0].mxu0
        %v6494 = vadd.f32 0.0, %v6493
        %v6495 = vpop.f32.mrb[0].mxu0
        %6496 = vmatprep.mubr.f32.mxu0 0.0
        %6497 = vmatmul.mubr.f32.gmra.mrb[0].mxu0 %v6383
        %v6498 = vpop.f32.mrb[0].mxu0
        %v6499 = vadd.f32 0.0, %v6498
        %v6500 = vpop.f32.mrb[0].mxu0
        %6501 = vmatprep.mubr.f32.mxu0 0.0
        %6502 = vmatmul.mubr.f32.gmra.mrb[0].mxu0 %v6386
        %v6503 = vpop.f32.mrb[0].mxu0
        %v6504 = vadd.f32 0.0, %v6503
        %v6505 = vpop.f32.mrb[0].mxu0
        %6506 = vmatprep.mubr.f32.mxu0 0.0
        %6507 = vmatmul.mubr.f32.gmra.mrb[0].mxu0 %v6389
        %v6508 = vpop.f32.mrb[0].mxu0
        %v6509 = vadd.f32 0.0, %v6508
        %v6510 = vpop.f32.mrb[0].mxu0
        %6511 = vmatprep.mubr.f32.mxu0 0.0
        %6512 = vmatmul.mubr.f32.gmra.mrb[0].mxu0 %v6392
        %v6513 = vpop.f32.mrb[0].mxu0
        %v6514 = vadd.f32 0.0, %v6513
        %v6515 = vpop.f32.mrb[0].mxu0
        %6516 = vmatprep.mubr.f32.mxu0 0.0
        %6517 = vmatmul.mubr.f32.gmra.mrb[0].mxu0 %v6395
        %v6518 = vpop.f32.mrb[0].mxu0
        %v6519 = vadd.f32 0.0, %v6518
        %v6520 = vpop.f32.mrb[0].mxu0
        %6521 = vmatprep.mubr.f32.mxu0 0.0
        %6522 = vmatmul.mubr.f32.gmra.mrb[0].mxu0 %v6398
        %v6523 = vpop.f32.mrb[0].mxu0
        %v6524 = vadd.f32 0.0, %v6523
        %v6525 = vpop.f32.mrb[0].mxu0
        %6526 = vmatprep.mubr.f32.mxu0 0.0
        %6527 = vmatmul.mubr.f32.gmra.mrb[0].mxu0 %v6401
        %v6528 = vpop.f32.mrb[0].mxu0
        %v6529 = vadd.f32 0.0, %v6528
        %v6530 = vpop.f32.mrb[0].mxu0
        %6531 = vmatprep.mubr.f32.mxu0 0.0
        %6532 = vmatmul.mubr.f32.gmra.mrb[0].mxu0 %v6404
        %v6533 = vpop.f32.mrb[0].mxu0
        %v6534 = vadd.f32 0.0, %v6533
        %v6535 = vpop.f32.mrb[0].mxu0
        %6536 = vmatprep.mubr.f32.mxu0 0.0
        %6537 = vmatmul.mubr.f32.gmra.mrb[0].mxu0 %v6407
        %v6538 = vpop.f32.mrb[0].mxu0
        %v6539 = vadd.f32 0.0, %v6538
        %v6540 = vpop.f32.mrb[0].mxu0
        %6541 = vmatprep.mubr.f32.mxu0 0.0
        %6542 = vmatmul.mubr.f32.gmra.mrb[0].mxu0 %v6410
        %v6543 = vpop.f32.mrb[0].mxu0
        %v6544 = vadd.f32 0.0, %v6543
        %v6545 = vpop.f32.mrb[0].mxu0
        %6546 = vmatprep.mubr.f32.mxu0 0.0
        %6547 = vmatmul.mubr.f32.gmra.mrb[0].mxu0 %v6413
        %v6548 = vpop.f32.mrb[0].mxu0
        %v6549 = vadd.f32 0.0, %v6548
        %v6550 = vpop.f32.mrb[0].mxu0
        %6551 = vmatprep.mubr.f32.mxu0 0.0
        %6552 = vmatmul.mubr.f32.gmra.mrb[0].mxu0 %v6416
        %v6553 = vpop.f32.mrb[0].mxu0
        %v6554 = vadd.f32 0.0, %v6553
        %v6555 = vpop.f32.mrb[0].mxu0
        %6556 = vmatprep.mubr.f32.mxu0 0.0
        %6557 = vmatmul.mubr.f32.gmra.mrb[0].mxu0 %v6419
        %v6558 = vpop.f32.mrb[0].mxu0
        %v6559 = vadd.f32 0.0, %v6558
        %v6560 = vpop.f32.mrb[0].mxu0
        %6561 = vmatprep.mubr.f32.mxu0 0.0
        %6562 = vmatmul.mubr.f32.gmra.mrb[0].mxu0 %v6422
        %v6563 = vpop.f32.mrb[0].mxu0
        %v6564 = vadd.f32 0.0, %v6563
        %v6565 = vpop.f32.mrb[0].mxu0
        %6566 = vmatprep.mubr.f32.mxu0 0.0
        %6567 = vmatmul.mubr.f32.gmra.mrb[0].mxu0 %v6425
        %v6568 = vpop.f32.mrb[0].mxu0
        %v6569 = vadd.f32 0.0, %v6568
        %v6570 = vpop.f32.mrb[0].mxu0
        %6571 = vdwg.mxu0
        %v6572 = vadd.f32 %v6344, %v6494
        %v6573 = vadd.f32 %v6345, %v6499
        %v6574 = vadd.f32 %v6346, %v6504
        %v6575 = vadd.f32 %v6347, %v6509
        %v6576 = vadd.f32 %v6348, %v6514
        %v6577 = vadd.f32 %v6349, %v6519
        %v6578 = vadd.f32 %v6350, %v6524
        %v6579 = vadd.f32 %v6351, %v6529
        %v6580 = vadd.f32 %v6352, %v6534
        %v6581 = vadd.f32 %v6353, %v6539
        %v6582 = vadd.f32 %v6354, %v6544
        %v6583 = vadd.f32 %v6355, %v6549
        %v6584 = vadd.f32 %v6356, %v6554
        %v6585 = vadd.f32 %v6357, %v6559
        %v6586 = vadd.f32 %v6358, %v6564
        %v6587 = vadd.f32 %v6359, %v6569
        %v6588 = vld [vmem:[%s5464 + $0x2] sm:$0xff]
        %v6589 = vld [vmem:[%s5464 + $0x12] sm:$0xff]
        %v6590 = vld [vmem:[%s5464 + $0x22] sm:$0xff]
        %v6591 = vld [vmem:[%s5464 + $0x32] sm:$0xff]
        %v6592 = vld [vmem:[%s5464 + $0x42] sm:$0xff]
        %v6593 = vld [vmem:[%s5464 + $0x52] sm:$0xff]
        %v6594 = vld [vmem:[%s5464 + $0x62] sm:$0xff]
        %v6595 = vld [vmem:[%s5464 + $0x72] sm:$0xff]
        %v6596 = vld [vmem:[%s5464 + $0xa2] sm:$0xff]
        %v6597 = vld [vmem:[%s5464 + $0xb2] sm:$0xff]
        %v6598 = vld [vmem:[%s5464 + $0xc2] sm:$0xff]
        %v6599 = vld [vmem:[%s5464 + $0xd2] sm:$0xff]
        %v6600 = vld [vmem:[%s5464 + $0xe2] sm:$0xff]
        %v6601 = vld [vmem:[%s5464 + $0xf2] sm:$0xff]
        %v6602 = vld [vmem:[%s5464 + $0x102] sm:$0xff]
        %v6603 = vld [vmem:[%s5464 + $0x112] sm:$0xff]
        %s6604 = scalar_lea.vmem [#allocation16], 80
        %v6605 = vld [vmem:[%s6604] sm:$0xff]
        %v6606 = vld [vmem:[%s6604 + $0x8] sm:$0xff]
        %v6608 = vsel %vm2471, %v6588, 0
        %v6611 = vsel %vm2471, %v6589, 0
        %v6614 = vsel %vm2471, %v6590, 0
        %v6617 = vsel %vm2471, %v6591, 0
        %v6620 = vsel %vm2471, %v6592, 0
        %v6623 = vsel %vm2471, %v6593, 0
        %v6626 = vsel %vm2471, %v6594, 0
        %v6629 = vsel %vm2471, %v6595, 0
        %v6632 = vsel %vm2471, %v6596, 0
        %v6635 = vsel %vm2471, %v6597, 0
        %v6638 = vsel %vm2471, %v6598, 0
        %v6641 = vsel %vm2471, %v6599, 0
        %v6644 = vsel %vm2471, %v6600, 0
        %v6647 = vsel %vm2471, %v6601, 0
        %v6650 = vsel %vm2471, %v6602, 0
        %v6653 = vsel %vm2471, %v6603, 0
        %6655 = vmatprep.subr.mxu0 0.0
        %6656 = vmatpush1.msra.mxu0 %v6605
        %6657 = vmatprep.subr.mxu0 0.0
        %6658 = vmatpush1.msra.mxu0 %v6606
        %6659 = vmatprep.subr.mxu0 0.0
        %6660 = vmatpush1.msra.mxu0 0.0
        %6661 = vmatprep.subr.mxu0 0.0
        %6662 = vmatpush1.msra.mxu0 0.0
        %6663 = vmatprep.subr.mxu0 0.0
        %6664 = vmatpush1.msra.mxu0 0.0
        %6665 = vmatprep.subr.mxu0 0.0
        %6666 = vmatpush1.msra.mxu0 0.0
        %6667 = vmatprep.subr.mxu0 0.0
        %6668 = vmatpush1.msra.mxu0 0.0
        %6669 = vmatprep.subr.mxu0 0.0
        %6670 = vmatpush1.msra.mxu0 0.0
        %6671 = vmatprep.subr.mxu0 0.0
        %6672 = vmatpush1.msra.mxu0 0.0
        %6673 = vmatprep.subr.mxu0 0.0
        %6674 = vmatpush1.msra.mxu0 0.0
        %6675 = vmatprep.subr.mxu0 0.0
        %6676 = vmatpush1.msra.mxu0 0.0
        %6677 = vmatprep.subr.mxu0 0.0
        %6678 = vmatpush1.msra.mxu0 0.0
        %6679 = vmatprep.subr.mxu0 0.0
        %6680 = vmatpush1.msra.mxu0 0.0
        %6681 = vmatprep.subr.mxu0 0.0
        %6682 = vmatpush1.msra.mxu0 0.0
        %6683 = vmatprep.subr.mxu0 0.0
        %6684 = vmatpush1.msra.mxu0 0.0
        %6685 = vmatprep.subr.mxu0 0.0
        %6686 = vmatpush1.msra.mxu0 0.0
        %6687 = vmatprep.subr.mxu0 0.0
        %6688 = vmatpush1.msra.mxu0 0.0
        %6689 = vmatprep.subr.mxu0 0.0
        %6690 = vmatpush1.msra.mxu0 0.0
        %6691 = vmatprep.subr.mxu0 0.0
        %6692 = vmatpush1.msra.mxu0 0.0
        %6693 = vmatprep.subr.mxu0 0.0
        %6694 = vmatpush1.msra.mxu0 0.0
        %6695 = vmatprep.subr.mxu0 0.0
        %6696 = vmatpush1.msra.mxu0 0.0
        %6697 = vmatprep.subr.mxu0 0.0
        %6698 = vmatpush1.msra.mxu0 0.0
        %6699 = vmatprep.subr.mxu0 0.0
        %6700 = vmatpush1.msra.mxu0 0.0
        %6701 = vmatprep.subr.mxu0 0.0
        %6702 = vmatpush1.msra.mxu0 0.0
        %6703 = vmatprep.subr.mxu0 0.0
        %6704 = vmatpush1.msra.mxu0 0.0
        %6705 = vmatprep.subr.mxu0 0.0
        %6706 = vmatpush1.msra.mxu0 0.0
        %6707 = vmatprep.subr.mxu0 0.0
        %6708 = vmatpush1.msra.mxu0 0.0
        %6709 = vmatprep.subr.mxu0 0.0
        %6710 = vmatpush1.msra.mxu0 0.0
        %6711 = vmatprep.subr.mxu0 0.0
        %6712 = vmatpush1.msra.mxu0 0.0
        %6713 = vmatprep.subr.mxu0 0.0
        %6714 = vmatpush1.msra.mxu0 0.0
        %6715 = vmatprep.subr.mxu0 0.0
        %6716 = vmatpush1.msra.mxu0 0.0
        %6717 = vmatprep.subr.mxu0 0.0
        %6718 = vmatpush1.msra.mxu0 0.0
        %6719 = vmatprep.mubr.f32.mxu0 0.0
        %6720 = vmatmul.mubr.f32.gmra.mrb[0].mxu0 %v6608
        %v6721 = vpop.f32.mrb[0].mxu0
        %v6722 = vadd.f32 0.0, %v6721
        %v6723 = vpop.f32.mrb[0].mxu0
        %6724 = vmatprep.mubr.f32.mxu0 0.0
        %6725 = vmatmul.mubr.f32.gmra.mrb[0].mxu0 %v6611
        %v6726 = vpop.f32.mrb[0].mxu0
        %v6727 = vadd.f32 0.0, %v6726
        %v6728 = vpop.f32.mrb[0].mxu0
        %6729 = vmatprep.mubr.f32.mxu0 0.0
        %6730 = vmatmul.mubr.f32.gmra.mrb[0].mxu0 %v6614
        %v6731 = vpop.f32.mrb[0].mxu0
        %v6732 = vadd.f32 0.0, %v6731
        %v6733 = vpop.f32.mrb[0].mxu0
        %6734 = vmatprep.mubr.f32.mxu0 0.0
        %6735 = vmatmul.mubr.f32.gmra.mrb[0].mxu0 %v6617
        %v6736 = vpop.f32.mrb[0].mxu0
        %v6737 = vadd.f32 0.0, %v6736
        %v6738 = vpop.f32.mrb[0].mxu0
        %6739 = vmatprep.mubr.f32.mxu0 0.0
        %6740 = vmatmul.mubr.f32.gmra.mrb[0].mxu0 %v6620
        %v6741 = vpop.f32.mrb[0].mxu0
        %v6742 = vadd.f32 0.0, %v6741
        %v6743 = vpop.f32.mrb[0].mxu0
        %6744 = vmatprep.mubr.f32.mxu0 0.0
        %6745 = vmatmul.mubr.f32.gmra.mrb[0].mxu0 %v6623
        %v6746 = vpop.f32.mrb[0].mxu0
        %v6747 = vadd.f32 0.0, %v6746
        %v6748 = vpop.f32.mrb[0].mxu0
        %6749 = vmatprep.mubr.f32.mxu0 0.0
        %6750 = vmatmul.mubr.f32.gmra.mrb[0].mxu0 %v6626
        %v6751 = vpop.f32.mrb[0].mxu0
        %v6752 = vadd.f32 0.0, %v6751
        %v6753 = vpop.f32.mrb[0].mxu0
        %6754 = vmatprep.mubr.f32.mxu0 0.0
        %6755 = vmatmul.mubr.f32.gmra.mrb[0].mxu0 %v6629
        %v6756 = vpop.f32.mrb[0].mxu0
        %v6757 = vadd.f32 0.0, %v6756
        %v6758 = vpop.f32.mrb[0].mxu0
        %6759 = vmatprep.mubr.f32.mxu0 0.0
        %6760 = vmatmul.mubr.f32.gmra.mrb[0].mxu0 %v6632
        %v6761 = vpop.f32.mrb[0].mxu0
        %v6762 = vadd.f32 0.0, %v6761
        %v6763 = vpop.f32.mrb[0].mxu0
        %6764 = vmatprep.mubr.f32.mxu0 0.0
        %6765 = vmatmul.mubr.f32.gmra.mrb[0].mxu0 %v6635
        %v6766 = vpop.f32.mrb[0].mxu0
        %v6767 = vadd.f32 0.0, %v6766
        %v6768 = vpop.f32.mrb[0].mxu0
        %6769 = vmatprep.mubr.f32.mxu0 0.0
        %6770 = vmatmul.mubr.f32.gmra.mrb[0].mxu0 %v6638
        %v6771 = vpop.f32.mrb[0].mxu0
        %v6772 = vadd.f32 0.0, %v6771
        %v6773 = vpop.f32.mrb[0].mxu0
        %6774 = vmatprep.mubr.f32.mxu0 0.0
        %6775 = vmatmul.mubr.f32.gmra.mrb[0].mxu0 %v6641
        %v6776 = vpop.f32.mrb[0].mxu0
        %v6777 = vadd.f32 0.0, %v6776
        %v6778 = vpop.f32.mrb[0].mxu0
        %6779 = vmatprep.mubr.f32.mxu0 0.0
        %6780 = vmatmul.mubr.f32.gmra.mrb[0].mxu0 %v6644
        %v6781 = vpop.f32.mrb[0].mxu0
        %v6782 = vadd.f32 0.0, %v6781
        %v6783 = vpop.f32.mrb[0].mxu0
        %6784 = vmatprep.mubr.f32.mxu0 0.0
        %6785 = vmatmul.mubr.f32.gmra.mrb[0].mxu0 %v6647
        %v6786 = vpop.f32.mrb[0].mxu0
        %v6787 = vadd.f32 0.0, %v6786
        %v6788 = vpop.f32.mrb[0].mxu0
        %6789 = vmatprep.mubr.f32.mxu0 0.0
        %6790 = vmatmul.mubr.f32.gmra.mrb[0].mxu0 %v6650
        %v6791 = vpop.f32.mrb[0].mxu0
        %v6792 = vadd.f32 0.0, %v6791
        %v6793 = vpop.f32.mrb[0].mxu0
        %6794 = vmatprep.mubr.f32.mxu0 0.0
        %6795 = vmatmul.mubr.f32.gmra.mrb[0].mxu0 %v6653
        %v6796 = vpop.f32.mrb[0].mxu0
        %v6797 = vadd.f32 0.0, %v6796
        %v6798 = vpop.f32.mrb[0].mxu0
        %6799 = vdwg.mxu0
        %v6800 = vadd.f32 %v6572, %v6722
        %v6801 = vadd.f32 %v6573, %v6727
        %v6802 = vadd.f32 %v6574, %v6732
        %v6803 = vadd.f32 %v6575, %v6737
        %v6804 = vadd.f32 %v6576, %v6742
        %v6805 = vadd.f32 %v6577, %v6747
        %v6806 = vadd.f32 %v6578, %v6752
        %v6807 = vadd.f32 %v6579, %v6757
        %v6808 = vadd.f32 %v6580, %v6762
        %v6809 = vadd.f32 %v6581, %v6767
        %v6810 = vadd.f32 %v6582, %v6772
        %v6811 = vadd.f32 %v6583, %v6777
        %v6812 = vadd.f32 %v6584, %v6782
        %v6813 = vadd.f32 %v6585, %v6787
        %v6814 = vadd.f32 %v6586, %v6792
        %v6815 = vadd.f32 %v6587, %v6797
        %s6816 = scalar_lea.vmem [#allocation5], 32
        %v6817 = vld [vmem:[%s6816] sm:$0xff]
        %v6818 = vld [vmem:[%s6816 + $0x10] sm:$0xff]
        %v6819 = vld [vmem:[%s6816 + $0x20] sm:$0xff]
        %v6820 = vld [vmem:[%s6816 + $0x30] sm:$0xff]
        %v6821 = vld [vmem:[%s6816 + $0x40] sm:$0xff]
        %v6822 = vld [vmem:[%s6816 + $0x50] sm:$0xff]
        %v6823 = vld [vmem:[%s6816 + $0x60] sm:$0xff]
        %v6824 = vld [vmem:[%s6816 + $0x70] sm:$0xff]
        %v6825 = vld [vmem:[%s6816 + $0xa0] sm:$0xff]
        %v6826 = vld [vmem:[%s6816 + $0xb0] sm:$0xff]
        %v6827 = vld [vmem:[%s6816 + $0xc0] sm:$0xff]
        %v6828 = vld [vmem:[%s6816 + $0xd0] sm:$0xff]
        %v6829 = vld [vmem:[%s6816 + $0xe0] sm:$0xff]
        %v6830 = vld [vmem:[%s6816 + $0xf0] sm:$0xff]
        %v6831 = vld [vmem:[%s6816 + $0x100] sm:$0xff]
        %v6832 = vld [vmem:[%s6816 + $0x110] sm:$0xff]
        %s6833 = scalar_lea.vmem [#allocation16], 96
        %v6834 = vld [vmem:[%s6833] sm:$0xff]
        %v6835 = vld [vmem:[%s6833 + $0x8] sm:$0xff]
        %v6837 = vsel %vm2471, %v6817, 0
        %v6840 = vsel %vm2471, %v6818, 0
        %v6843 = vsel %vm2471, %v6819, 0
        %v6846 = vsel %vm2471, %v6820, 0
        %v6849 = vsel %vm2471, %v6821, 0
        %v6852 = vsel %vm2471, %v6822, 0
        %v6855 = vsel %vm2471, %v6823, 0
        %v6858 = vsel %vm2471, %v6824, 0
        %v6861 = vsel %vm2471, %v6825, 0
        %v6864 = vsel %vm2471, %v6826, 0
        %v6867 = vsel %vm2471, %v6827, 0
        %v6870 = vsel %vm2471, %v6828, 0
        %v6873 = vsel %vm2471, %v6829, 0
        %v6876 = vsel %vm2471, %v6830, 0
        %v6879 = vsel %vm2471, %v6831, 0
        %v6882 = vsel %vm2471, %v6832, 0
        %6884 = vmatprep.subr.mxu0 0.0
        %6885 = vmatpush1.msra.mxu0 %v6834
        %6886 = vmatprep.subr.mxu0 0.0
        %6887 = vmatpush1.msra.mxu0 %v6835
        %6888 = vmatprep.subr.mxu0 0.0
        %6889 = vmatpush1.msra.mxu0 0.0
        %6890 = vmatprep.subr.mxu0 0.0
        %6891 = vmatpush1.msra.mxu0 0.0
        %6892 = vmatprep.subr.mxu0 0.0
        %6893 = vmatpush1.msra.mxu0 0.0
        %6894 = vmatprep.subr.mxu0 0.0
        %6895 = vmatpush1.msra.mxu0 0.0
        %6896 = vmatprep.subr.mxu0 0.0
        %6897 = vmatpush1.msra.mxu0 0.0
        %6898 = vmatprep.subr.mxu0 0.0
        %6899 = vmatpush1.msra.mxu0 0.0
        %6900 = vmatprep.subr.mxu0 0.0
        %6901 = vmatpush1.msra.mxu0 0.0
        %6902 = vmatprep.subr.mxu0 0.0
        %6903 = vmatpush1.msra.mxu0 0.0
        %6904 = vmatprep.subr.mxu0 0.0
        %6905 = vmatpush1.msra.mxu0 0.0
        %6906 = vmatprep.subr.mxu0 0.0
        %6907 = vmatpush1.msra.mxu0 0.0
        %6908 = vmatprep.subr.mxu0 0.0
        %6909 = vmatpush1.msra.mxu0 0.0
        %6910 = vmatprep.subr.mxu0 0.0
        %6911 = vmatpush1.msra.mxu0 0.0
        %6912 = vmatprep.subr.mxu0 0.0
        %6913 = vmatpush1.msra.mxu0 0.0
        %6914 = vmatprep.subr.mxu0 0.0
        %6915 = vmatpush1.msra.mxu0 0.0
        %6916 = vmatprep.subr.mxu0 0.0
        %6917 = vmatpush1.msra.mxu0 0.0
        %6918 = vmatprep.subr.mxu0 0.0
        %6919 = vmatpush1.msra.mxu0 0.0
        %6920 = vmatprep.subr.mxu0 0.0
        %6921 = vmatpush1.msra.mxu0 0.0
        %6922 = vmatprep.subr.mxu0 0.0
        %6923 = vmatpush1.msra.mxu0 0.0
        %6924 = vmatprep.subr.mxu0 0.0
        %6925 = vmatpush1.msra.mxu0 0.0
        %6926 = vmatprep.subr.mxu0 0.0
        %6927 = vmatpush1.msra.mxu0 0.0
        %6928 = vmatprep.subr.mxu0 0.0
        %6929 = vmatpush1.msra.mxu0 0.0
        %6930 = vmatprep.subr.mxu0 0.0
        %6931 = vmatpush1.msra.mxu0 0.0
        %6932 = vmatprep.subr.mxu0 0.0
        %6933 = vmatpush1.msra.mxu0 0.0
        %6934 = vmatprep.subr.mxu0 0.0
        %6935 = vmatpush1.msra.mxu0 0.0
        %6936 = vmatprep.subr.mxu0 0.0
        %6937 = vmatpush1.msra.mxu0 0.0
        %6938 = vmatprep.subr.mxu0 0.0
        %6939 = vmatpush1.msra.mxu0 0.0
        %6940 = vmatprep.subr.mxu0 0.0
        %6941 = vmatpush1.msra.mxu0 0.0
        %6942 = vmatprep.subr.mxu0 0.0
        %6943 = vmatpush1.msra.mxu0 0.0
        %6944 = vmatprep.subr.mxu0 0.0
        %6945 = vmatpush1.msra.mxu0 0.0
        %6946 = vmatprep.subr.mxu0 0.0
        %6947 = vmatpush1.msra.mxu0 0.0
        %6948 = vmatprep.mubr.f32.mxu0 0.0
        %6949 = vmatmul.mubr.f32.gmra.mrb[0].mxu0 %v6837
        %v6950 = vpop.f32.mrb[0].mxu0
        %v6951 = vadd.f32 0.0, %v6950
        %v6952 = vpop.f32.mrb[0].mxu0
        %6953 = vmatprep.mubr.f32.mxu0 0.0
        %6954 = vmatmul.mubr.f32.gmra.mrb[0].mxu0 %v6840
        %v6955 = vpop.f32.mrb[0].mxu0
        %v6956 = vadd.f32 0.0, %v6955
        %v6957 = vpop.f32.mrb[0].mxu0
        %6958 = vmatprep.mubr.f32.mxu0 0.0
        %6959 = vmatmul.mubr.f32.gmra.mrb[0].mxu0 %v6843
        %v6960 = vpop.f32.mrb[0].mxu0
        %v6961 = vadd.f32 0.0, %v6960
        %v6962 = vpop.f32.mrb[0].mxu0
        %6963 = vmatprep.mubr.f32.mxu0 0.0
        %6964 = vmatmul.mubr.f32.gmra.mrb[0].mxu0 %v6846
        %v6965 = vpop.f32.mrb[0].mxu0
        %v6966 = vadd.f32 0.0, %v6965
        %v6967 = vpop.f32.mrb[0].mxu0
        %6968 = vmatprep.mubr.f32.mxu0 0.0
        %6969 = vmatmul.mubr.f32.gmra.mrb[0].mxu0 %v6849
        %v6970 = vpop.f32.mrb[0].mxu0
        %v6971 = vadd.f32 0.0, %v6970
        %v6972 = vpop.f32.mrb[0].mxu0
        %6973 = vmatprep.mubr.f32.mxu0 0.0
        %6974 = vmatmul.mubr.f32.gmra.mrb[0].mxu0 %v6852
        %v6975 = vpop.f32.mrb[0].mxu0
        %v6976 = vadd.f32 0.0, %v6975
        %v6977 = vpop.f32.mrb[0].mxu0
        %6978 = vmatprep.mubr.f32.mxu0 0.0
        %6979 = vmatmul.mubr.f32.gmra.mrb[0].mxu0 %v6855
        %v6980 = vpop.f32.mrb[0].mxu0
        %v6981 = vadd.f32 0.0, %v6980
        %v6982 = vpop.f32.mrb[0].mxu0
        %6983 = vmatprep.mubr.f32.mxu0 0.0
        %6984 = vmatmul.mubr.f32.gmra.mrb[0].mxu0 %v6858
        %v6985 = vpop.f32.mrb[0].mxu0
        %v6986 = vadd.f32 0.0, %v6985
        %v6987 = vpop.f32.mrb[0].mxu0
        %6988 = vmatprep.mubr.f32.mxu0 0.0
        %6989 = vmatmul.mubr.f32.gmra.mrb[0].mxu0 %v6861
        %v6990 = vpop.f32.mrb[0].mxu0
        %v6991 = vadd.f32 0.0, %v6990
        %v6992 = vpop.f32.mrb[0].mxu0
        %6993 = vmatprep.mubr.f32.mxu0 0.0
        %6994 = vmatmul.mubr.f32.gmra.mrb[0].mxu0 %v6864
        %v6995 = vpop.f32.mrb[0].mxu0
        %v6996 = vadd.f32 0.0, %v6995
        %v6997 = vpop.f32.mrb[0].mxu0
        %6998 = vmatprep.mubr.f32.mxu0 0.0
        %6999 = vmatmul.mubr.f32.gmra.mrb[0].mxu0 %v6867
        %v7000 = vpop.f32.mrb[0].mxu0
        %v7001 = vadd.f32 0.0, %v7000
        %v7002 = vpop.f32.mrb[0].mxu0
        %7003 = vmatprep.mubr.f32.mxu0 0.0
        %7004 = vmatmul.mubr.f32.gmra.mrb[0].mxu0 %v6870
        %v7005 = vpop.f32.mrb[0].mxu0
        %v7006 = vadd.f32 0.0, %v7005
        %v7007 = vpop.f32.mrb[0].mxu0
        %7008 = vmatprep.mubr.f32.mxu0 0.0
        %7009 = vmatmul.mubr.f32.gmra.mrb[0].mxu0 %v6873
        %v7010 = vpop.f32.mrb[0].mxu0
        %v7011 = vadd.f32 0.0, %v7010
        %v7012 = vpop.f32.mrb[0].mxu0
        %7013 = vmatprep.mubr.f32.mxu0 0.0
        %7014 = vmatmul.mubr.f32.gmra.mrb[0].mxu0 %v6876
        %v7015 = vpop.f32.mrb[0].mxu0
        %v7016 = vadd.f32 0.0, %v7015
        %v7017 = vpop.f32.mrb[0].mxu0
        %7018 = vmatprep.mubr.f32.mxu0 0.0
        %7019 = vmatmul.mubr.f32.gmra.mrb[0].mxu0 %v6879
        %v7020 = vpop.f32.mrb[0].mxu0
        %v7021 = vadd.f32 0.0, %v7020
        %v7022 = vpop.f32.mrb[0].mxu0
        %7023 = vmatprep.mubr.f32.mxu0 0.0
        %7024 = vmatmul.mubr.f32.gmra.mrb[0].mxu0 %v6882
        %v7025 = vpop.f32.mrb[0].mxu0
        %v7026 = vadd.f32 0.0, %v7025
        %v7027 = vpop.f32.mrb[0].mxu0
        %7028 = vdwg.mxu0
        %v7029 = vadd.f32 %v6800, %v6951
        %v7030 = vadd.f32 %v6801, %v6956
        %v7031 = vadd.f32 %v6802, %v6961
        %v7032 = vadd.f32 %v6803, %v6966
        %v7033 = vadd.f32 %v6804, %v6971
        %v7034 = vadd.f32 %v6805, %v6976
        %v7035 = vadd.f32 %v6806, %v6981
        %v7036 = vadd.f32 %v6807, %v6986
        %v7037 = vadd.f32 %v6808, %v6991
        %v7038 = vadd.f32 %v6809, %v6996
        %v7039 = vadd.f32 %v6810, %v7001
        %v7040 = vadd.f32 %v6811, %v7006
        %v7041 = vadd.f32 %v6812, %v7011
        %v7042 = vadd.f32 %v6813, %v7016
        %v7043 = vadd.f32 %v6814, %v7021
        %v7044 = vadd.f32 %v6815, %v7026
        %v7045 = vld [vmem:[%s6816 + $0x1] sm:$0xff]
        %v7046 = vld [vmem:[%s6816 + $0x11] sm:$0xff]
        %v7047 = vld [vmem:[%s6816 + $0x21] sm:$0xff]
        %v7048 = vld [vmem:[%s6816 + $0x31] sm:$0xff]
        %v7049 = vld [vmem:[%s6816 + $0x41] sm:$0xff]
        %v7050 = vld [vmem:[%s6816 + $0x51] sm:$0xff]
        %v7051 = vld [vmem:[%s6816 + $0x61] sm:$0xff]
        %v7052 = vld [vmem:[%s6816 + $0x71] sm:$0xff]
        %v7053 = vld [vmem:[%s6816 + $0xa1] sm:$0xff]
        %v7054 = vld [vmem:[%s6816 + $0xb1] sm:$0xff]
        %v7055 = vld [vmem:[%s6816 + $0xc1] sm:$0xff]
        %v7056 = vld [vmem:[%s6816 + $0xd1] sm:$0xff]
        %v7057 = vld [vmem:[%s6816 + $0xe1] sm:$0xff]
        %v7058 = vld [vmem:[%s6816 + $0xf1] sm:$0xff]
        %v7059 = vld [vmem:[%s6816 + $0x101] sm:$0xff]
        %v7060 = vld [vmem:[%s6816 + $0x111] sm:$0xff]
        %s7061 = scalar_lea.vmem [#allocation16], 112
        %v7062 = vld [vmem:[%s7061] sm:$0xff]
        %v7063 = vld [vmem:[%s7061 + $0x8] sm:$0xff]
        %v7065 = vsel %vm2471, %v7045, 0
        %v7068 = vsel %vm2471, %v7046, 0
        %v7071 = vsel %vm2471, %v7047, 0
        %v7074 = vsel %vm2471, %v7048, 0
        %v7077 = vsel %vm2471, %v7049, 0
        %v7080 = vsel %vm2471, %v7050, 0
        %v7083 = vsel %vm2471, %v7051, 0
        %v7086 = vsel %vm2471, %v7052, 0
        %v7089 = vsel %vm2471, %v7053, 0
        %v7092 = vsel %vm2471, %v7054, 0
        %v7095 = vsel %vm2471, %v7055, 0
        %v7098 = vsel %vm2471, %v7056, 0
        %v7101 = vsel %vm2471, %v7057, 0
        %v7104 = vsel %vm2471, %v7058, 0
        %v7107 = vsel %vm2471, %v7059, 0
        %v7110 = vsel %vm2471, %v7060, 0
        %7112 = vmatprep.subr.mxu0 0.0
        %7113 = vmatpush1.msra.mxu0 %v7062
        %7114 = vmatprep.subr.mxu0 0.0
        %7115 = vmatpush1.msra.mxu0 %v7063
        %7116 = vmatprep.subr.mxu0 0.0
        %7117 = vmatpush1.msra.mxu0 0.0
        %7118 = vmatprep.subr.mxu0 0.0
        %7119 = vmatpush1.msra.mxu0 0.0
        %7120 = vmatprep.subr.mxu0 0.0
        %7121 = vmatpush1.msra.mxu0 0.0
        %7122 = vmatprep.subr.mxu0 0.0
        %7123 = vmatpush1.msra.mxu0 0.0
        %7124 = vmatprep.subr.mxu0 0.0
        %7125 = vmatpush1.msra.mxu0 0.0
        %7126 = vmatprep.subr.mxu0 0.0
        %7127 = vmatpush1.msra.mxu0 0.0
        %7128 = vmatprep.subr.mxu0 0.0
        %7129 = vmatpush1.msra.mxu0 0.0
        %7130 = vmatprep.subr.mxu0 0.0
        %7131 = vmatpush1.msra.mxu0 0.0
        %7132 = vmatprep.subr.mxu0 0.0
        %7133 = vmatpush1.msra.mxu0 0.0
        %7134 = vmatprep.subr.mxu0 0.0
        %7135 = vmatpush1.msra.mxu0 0.0
        %7136 = vmatprep.subr.mxu0 0.0
        %7137 = vmatpush1.msra.mxu0 0.0
        %7138 = vmatprep.subr.mxu0 0.0
        %7139 = vmatpush1.msra.mxu0 0.0
        %7140 = vmatprep.subr.mxu0 0.0
        %7141 = vmatpush1.msra.mxu0 0.0
        %7142 = vmatprep.subr.mxu0 0.0
        %7143 = vmatpush1.msra.mxu0 0.0
        %7144 = vmatprep.subr.mxu0 0.0
        %7145 = vmatpush1.msra.mxu0 0.0
        %7146 = vmatprep.subr.mxu0 0.0
        %7147 = vmatpush1.msra.mxu0 0.0
        %7148 = vmatprep.subr.mxu0 0.0
        %7149 = vmatpush1.msra.mxu0 0.0
        %7150 = vmatprep.subr.mxu0 0.0
        %7151 = vmatpush1.msra.mxu0 0.0
        %7152 = vmatprep.subr.mxu0 0.0
        %7153 = vmatpush1.msra.mxu0 0.0
        %7154 = vmatprep.subr.mxu0 0.0
        %7155 = vmatpush1.msra.mxu0 0.0
        %7156 = vmatprep.subr.mxu0 0.0
        %7157 = vmatpush1.msra.mxu0 0.0
        %7158 = vmatprep.subr.mxu0 0.0
        %7159 = vmatpush1.msra.mxu0 0.0
        %7160 = vmatprep.subr.mxu0 0.0
        %7161 = vmatpush1.msra.mxu0 0.0
        %7162 = vmatprep.subr.mxu0 0.0
        %7163 = vmatpush1.msra.mxu0 0.0
        %7164 = vmatprep.subr.mxu0 0.0
        %7165 = vmatpush1.msra.mxu0 0.0
        %7166 = vmatprep.subr.mxu0 0.0
        %7167 = vmatpush1.msra.mxu0 0.0
        %7168 = vmatprep.subr.mxu0 0.0
        %7169 = vmatpush1.msra.mxu0 0.0
        %7170 = vmatprep.subr.mxu0 0.0
        %7171 = vmatpush1.msra.mxu0 0.0
        %7172 = vmatprep.subr.mxu0 0.0
        %7173 = vmatpush1.msra.mxu0 0.0
        %7174 = vmatprep.subr.mxu0 0.0
        %7175 = vmatpush1.msra.mxu0 0.0
        %7176 = vmatprep.mubr.f32.mxu0 0.0
        %7177 = vmatmul.mubr.f32.gmra.mrb[0].mxu0 %v7065
        %v7178 = vpop.f32.mrb[0].mxu0
        %v7179 = vadd.f32 0.0, %v7178
        %v7180 = vpop.f32.mrb[0].mxu0
        %7181 = vmatprep.mubr.f32.mxu0 0.0
        %7182 = vmatmul.mubr.f32.gmra.mrb[0].mxu0 %v7068
        %v7183 = vpop.f32.mrb[0].mxu0
        %v7184 = vadd.f32 0.0, %v7183
        %v7185 = vpop.f32.mrb[0].mxu0
        %7186 = vmatprep.mubr.f32.mxu0 0.0
        %7187 = vmatmul.mubr.f32.gmra.mrb[0].mxu0 %v7071
        %v7188 = vpop.f32.mrb[0].mxu0
        %v7189 = vadd.f32 0.0, %v7188
        %v7190 = vpop.f32.mrb[0].mxu0
        %7191 = vmatprep.mubr.f32.mxu0 0.0
        %7192 = vmatmul.mubr.f32.gmra.mrb[0].mxu0 %v7074
        %v7193 = vpop.f32.mrb[0].mxu0
        %v7194 = vadd.f32 0.0, %v7193
        %v7195 = vpop.f32.mrb[0].mxu0
        %7196 = vmatprep.mubr.f32.mxu0 0.0
        %7197 = vmatmul.mubr.f32.gmra.mrb[0].mxu0 %v7077
        %v7198 = vpop.f32.mrb[0].mxu0
        %v7199 = vadd.f32 0.0, %v7198
        %v7200 = vpop.f32.mrb[0].mxu0
        %7201 = vmatprep.mubr.f32.mxu0 0.0
        %7202 = vmatmul.mubr.f32.gmra.mrb[0].mxu0 %v7080
        %v7203 = vpop.f32.mrb[0].mxu0
        %v7204 = vadd.f32 0.0, %v7203
        %v7205 = vpop.f32.mrb[0].mxu0
        %7206 = vmatprep.mubr.f32.mxu0 0.0
        %7207 = vmatmul.mubr.f32.gmra.mrb[0].mxu0 %v7083
        %v7208 = vpop.f32.mrb[0].mxu0
        %v7209 = vadd.f32 0.0, %v7208
        %v7210 = vpop.f32.mrb[0].mxu0
        %7211 = vmatprep.mubr.f32.mxu0 0.0
        %7212 = vmatmul.mubr.f32.gmra.mrb[0].mxu0 %v7086
        %v7213 = vpop.f32.mrb[0].mxu0
        %v7214 = vadd.f32 0.0, %v7213
        %v7215 = vpop.f32.mrb[0].mxu0
        %7216 = vmatprep.mubr.f32.mxu0 0.0
        %7217 = vmatmul.mubr.f32.gmra.mrb[0].mxu0 %v7089
        %v7218 = vpop.f32.mrb[0].mxu0
        %v7219 = vadd.f32 0.0, %v7218
        %v7220 = vpop.f32.mrb[0].mxu0
        %7221 = vmatprep.mubr.f32.mxu0 0.0
        %7222 = vmatmul.mubr.f32.gmra.mrb[0].mxu0 %v7092
        %v7223 = vpop.f32.mrb[0].mxu0
        %v7224 = vadd.f32 0.0, %v7223
        %v7225 = vpop.f32.mrb[0].mxu0
        %7226 = vmatprep.mubr.f32.mxu0 0.0
        %7227 = vmatmul.mubr.f32.gmra.mrb[0].mxu0 %v7095
        %v7228 = vpop.f32.mrb[0].mxu0
        %v7229 = vadd.f32 0.0, %v7228
        %v7230 = vpop.f32.mrb[0].mxu0
        %7231 = vmatprep.mubr.f32.mxu0 0.0
        %7232 = vmatmul.mubr.f32.gmra.mrb[0].mxu0 %v7098
        %v7233 = vpop.f32.mrb[0].mxu0
        %v7234 = vadd.f32 0.0, %v7233
        %v7235 = vpop.f32.mrb[0].mxu0
        %7236 = vmatprep.mubr.f32.mxu0 0.0
        %7237 = vmatmul.mubr.f32.gmra.mrb[0].mxu0 %v7101
        %v7238 = vpop.f32.mrb[0].mxu0
        %v7239 = vadd.f32 0.0, %v7238
        %v7240 = vpop.f32.mrb[0].mxu0
        %7241 = vmatprep.mubr.f32.mxu0 0.0
        %7242 = vmatmul.mubr.f32.gmra.mrb[0].mxu0 %v7104
        %v7243 = vpop.f32.mrb[0].mxu0
        %v7244 = vadd.f32 0.0, %v7243
        %v7245 = vpop.f32.mrb[0].mxu0
        %7246 = vmatprep.mubr.f32.mxu0 0.0
        %7247 = vmatmul.mubr.f32.gmra.mrb[0].mxu0 %v7107
        %v7248 = vpop.f32.mrb[0].mxu0
        %v7249 = vadd.f32 0.0, %v7248
        %v7250 = vpop.f32.mrb[0].mxu0
        %7251 = vmatprep.mubr.f32.mxu0 0.0
        %7252 = vmatmul.mubr.f32.gmra.mrb[0].mxu0 %v7110
        %v7253 = vpop.f32.mrb[0].mxu0
        %v7254 = vadd.f32 0.0, %v7253
        %v7255 = vpop.f32.mrb[0].mxu0
        %7256 = vdwg.mxu0
        %v7257 = vadd.f32 %v7029, %v7179
        %v7258 = vadd.f32 %v7030, %v7184
        %v7259 = vadd.f32 %v7031, %v7189
        %v7260 = vadd.f32 %v7032, %v7194
        %v7261 = vadd.f32 %v7033, %v7199
        %v7262 = vadd.f32 %v7034, %v7204
        %v7263 = vadd.f32 %v7035, %v7209
        %v7264 = vadd.f32 %v7036, %v7214
        %v7265 = vadd.f32 %v7037, %v7219
        %v7266 = vadd.f32 %v7038, %v7224
        %v7267 = vadd.f32 %v7039, %v7229
        %v7268 = vadd.f32 %v7040, %v7234
        %v7269 = vadd.f32 %v7041, %v7239
        %v7270 = vadd.f32 %v7042, %v7244
        %v7271 = vadd.f32 %v7043, %v7249
        %v7272 = vadd.f32 %v7044, %v7254
        %v7273 = vld [vmem:[%s6816 + $0x2] sm:$0xff]
        %v7274 = vld [vmem:[%s6816 + $0x12] sm:$0xff]
        %v7275 = vld [vmem:[%s6816 + $0x22] sm:$0xff]
        %v7276 = vld [vmem:[%s6816 + $0x32] sm:$0xff]
        %v7277 = vld [vmem:[%s6816 + $0x42] sm:$0xff]
        %v7278 = vld [vmem:[%s6816 + $0x52] sm:$0xff]
        %v7279 = vld [vmem:[%s6816 + $0x62] sm:$0xff]
        %v7280 = vld [vmem:[%s6816 + $0x72] sm:$0xff]
        %v7281 = vld [vmem:[%s6816 + $0xa2] sm:$0xff]
        %v7282 = vld [vmem:[%s6816 + $0xb2] sm:$0xff]
        %v7283 = vld [vmem:[%s6816 + $0xc2] sm:$0xff]
        %v7284 = vld [vmem:[%s6816 + $0xd2] sm:$0xff]
        %v7285 = vld [vmem:[%s6816 + $0xe2] sm:$0xff]
        %v7286 = vld [vmem:[%s6816 + $0xf2] sm:$0xff]
        %v7287 = vld [vmem:[%s6816 + $0x102] sm:$0xff]
        %v7288 = vld [vmem:[%s6816 + $0x112] sm:$0xff]
        %s7289 = scalar_lea.vmem [#allocation16], 128
        %v7290 = vld [vmem:[%s7289] sm:$0xff]
        %v7291 = vld [vmem:[%s7289 + $0x8] sm:$0xff]
        %v7293 = vsel %vm2471, %v7273, 0
        %v7296 = vsel %vm2471, %v7274, 0
        %v7299 = vsel %vm2471, %v7275, 0
        %v7302 = vsel %vm2471, %v7276, 0
        %v7305 = vsel %vm2471, %v7277, 0
        %v7308 = vsel %vm2471, %v7278, 0
        %v7311 = vsel %vm2471, %v7279, 0
        %v7314 = vsel %vm2471, %v7280, 0
        %v7317 = vsel %vm2471, %v7281, 0
        %v7320 = vsel %vm2471, %v7282, 0
        %v7323 = vsel %vm2471, %v7283, 0
        %v7326 = vsel %vm2471, %v7284, 0
        %v7329 = vsel %vm2471, %v7285, 0
        %v7332 = vsel %vm2471, %v7286, 0
        %v7335 = vsel %vm2471, %v7287, 0
        %v7338 = vsel %vm2471, %v7288, 0
        %7340 = vmatprep.subr.mxu0 0.0
        %7341 = vmatpush1.msra.mxu0 %v7290
        %7342 = vmatprep.subr.mxu0 0.0
        %7343 = vmatpush1.msra.mxu0 %v7291
        %7344 = vmatprep.subr.mxu0 0.0
        %7345 = vmatpush1.msra.mxu0 0.0
        %7346 = vmatprep.subr.mxu0 0.0
        %7347 = vmatpush1.msra.mxu0 0.0
        %7348 = vmatprep.subr.mxu0 0.0
        %7349 = vmatpush1.msra.mxu0 0.0
        %7350 = vmatprep.subr.mxu0 0.0
        %7351 = vmatpush1.msra.mxu0 0.0
        %7352 = vmatprep.subr.mxu0 0.0
        %7353 = vmatpush1.msra.mxu0 0.0
        %7354 = vmatprep.subr.mxu0 0.0
        %7355 = vmatpush1.msra.mxu0 0.0
        %7356 = vmatprep.subr.mxu0 0.0
        %7357 = vmatpush1.msra.mxu0 0.0
        %7358 = vmatprep.subr.mxu0 0.0
        %7359 = vmatpush1.msra.mxu0 0.0
        %7360 = vmatprep.subr.mxu0 0.0
        %7361 = vmatpush1.msra.mxu0 0.0
        %7362 = vmatprep.subr.mxu0 0.0
        %7363 = vmatpush1.msra.mxu0 0.0
        %7364 = vmatprep.subr.mxu0 0.0
        %7365 = vmatpush1.msra.mxu0 0.0
        %7366 = vmatprep.subr.mxu0 0.0
        %7367 = vmatpush1.msra.mxu0 0.0
        %7368 = vmatprep.subr.mxu0 0.0
        %7369 = vmatpush1.msra.mxu0 0.0
        %7370 = vmatprep.subr.mxu0 0.0
        %7371 = vmatpush1.msra.mxu0 0.0
        %7372 = vmatprep.subr.mxu0 0.0
        %7373 = vmatpush1.msra.mxu0 0.0
        %7374 = vmatprep.subr.mxu0 0.0
        %7375 = vmatpush1.msra.mxu0 0.0
        %7376 = vmatprep.subr.mxu0 0.0
        %7377 = vmatpush1.msra.mxu0 0.0
        %7378 = vmatprep.subr.mxu0 0.0
        %7379 = vmatpush1.msra.mxu0 0.0
        %7380 = vmatprep.subr.mxu0 0.0
        %7381 = vmatpush1.msra.mxu0 0.0
        %7382 = vmatprep.subr.mxu0 0.0
        %7383 = vmatpush1.msra.mxu0 0.0
        %7384 = vmatprep.subr.mxu0 0.0
        %7385 = vmatpush1.msra.mxu0 0.0
        %7386 = vmatprep.subr.mxu0 0.0
        %7387 = vmatpush1.msra.mxu0 0.0
        %7388 = vmatprep.subr.mxu0 0.0
        %7389 = vmatpush1.msra.mxu0 0.0
        %7390 = vmatprep.subr.mxu0 0.0
        %7391 = vmatpush1.msra.mxu0 0.0
        %7392 = vmatprep.subr.mxu0 0.0
        %7393 = vmatpush1.msra.mxu0 0.0
        %7394 = vmatprep.subr.mxu0 0.0
        %7395 = vmatpush1.msra.mxu0 0.0
        %7396 = vmatprep.subr.mxu0 0.0
        %7397 = vmatpush1.msra.mxu0 0.0
        %7398 = vmatprep.subr.mxu0 0.0
        %7399 = vmatpush1.msra.mxu0 0.0
        %7400 = vmatprep.subr.mxu0 0.0
        %7401 = vmatpush1.msra.mxu0 0.0
        %7402 = vmatprep.subr.mxu0 0.0
        %7403 = vmatpush1.msra.mxu0 0.0
        %7404 = vmatprep.mubr.f32.mxu0 0.0
        %7405 = vmatmul.mubr.f32.gmra.mrb[0].mxu0 %v7293
        %v7406 = vpop.f32.mrb[0].mxu0
        %v7407 = vadd.f32 0.0, %v7406
        %v7408 = vpop.f32.mrb[0].mxu0
        %7409 = vmatprep.mubr.f32.mxu0 0.0
        %7410 = vmatmul.mubr.f32.gmra.mrb[0].mxu0 %v7296
        %v7411 = vpop.f32.mrb[0].mxu0
        %v7412 = vadd.f32 0.0, %v7411
        %v7413 = vpop.f32.mrb[0].mxu0
        %7414 = vmatprep.mubr.f32.mxu0 0.0
        %7415 = vmatmul.mubr.f32.gmra.mrb[0].mxu0 %v7299
        %v7416 = vpop.f32.mrb[0].mxu0
        %v7417 = vadd.f32 0.0, %v7416
        %v7418 = vpop.f32.mrb[0].mxu0
        %7419 = vmatprep.mubr.f32.mxu0 0.0
        %7420 = vmatmul.mubr.f32.gmra.mrb[0].mxu0 %v7302
        %v7421 = vpop.f32.mrb[0].mxu0
        %v7422 = vadd.f32 0.0, %v7421
        %v7423 = vpop.f32.mrb[0].mxu0
        %7424 = vmatprep.mubr.f32.mxu0 0.0
        %7425 = vmatmul.mubr.f32.gmra.mrb[0].mxu0 %v7305
        %v7426 = vpop.f32.mrb[0].mxu0
        %v7427 = vadd.f32 0.0, %v7426
        %v7428 = vpop.f32.mrb[0].mxu0
        %7429 = vmatprep.mubr.f32.mxu0 0.0
        %7430 = vmatmul.mubr.f32.gmra.mrb[0].mxu0 %v7308
        %v7431 = vpop.f32.mrb[0].mxu0
        %v7432 = vadd.f32 0.0, %v7431
        %v7433 = vpop.f32.mrb[0].mxu0
        %7434 = vmatprep.mubr.f32.mxu0 0.0
        %7435 = vmatmul.mubr.f32.gmra.mrb[0].mxu0 %v7311
        %v7436 = vpop.f32.mrb[0].mxu0
        %v7437 = vadd.f32 0.0, %v7436
        %v7438 = vpop.f32.mrb[0].mxu0
        %7439 = vmatprep.mubr.f32.mxu0 0.0
        %7440 = vmatmul.mubr.f32.gmra.mrb[0].mxu0 %v7314
        %v7441 = vpop.f32.mrb[0].mxu0
        %v7442 = vadd.f32 0.0, %v7441
        %v7443 = vpop.f32.mrb[0].mxu0
        %7444 = vmatprep.mubr.f32.mxu0 0.0
        %7445 = vmatmul.mubr.f32.gmra.mrb[0].mxu0 %v7317
        %v7446 = vpop.f32.mrb[0].mxu0
        %v7447 = vadd.f32 0.0, %v7446
        %v7448 = vpop.f32.mrb[0].mxu0
        %7449 = vmatprep.mubr.f32.mxu0 0.0
        %7450 = vmatmul.mubr.f32.gmra.mrb[0].mxu0 %v7320
        %v7451 = vpop.f32.mrb[0].mxu0
        %v7452 = vadd.f32 0.0, %v7451
        %v7453 = vpop.f32.mrb[0].mxu0
        %7454 = vmatprep.mubr.f32.mxu0 0.0
        %7455 = vmatmul.mubr.f32.gmra.mrb[0].mxu0 %v7323
        %v7456 = vpop.f32.mrb[0].mxu0
        %v7457 = vadd.f32 0.0, %v7456
        %v7458 = vpop.f32.mrb[0].mxu0
        %7459 = vmatprep.mubr.f32.mxu0 0.0
        %7460 = vmatmul.mubr.f32.gmra.mrb[0].mxu0 %v7326
        %v7461 = vpop.f32.mrb[0].mxu0
        %v7462 = vadd.f32 0.0, %v7461
        %v7463 = vpop.f32.mrb[0].mxu0
        %7464 = vmatprep.mubr.f32.mxu0 0.0
        %7465 = vmatmul.mubr.f32.gmra.mrb[0].mxu0 %v7329
        %v7466 = vpop.f32.mrb[0].mxu0
        %v7467 = vadd.f32 0.0, %v7466
        %v7468 = vpop.f32.mrb[0].mxu0
        %7469 = vmatprep.mubr.f32.mxu0 0.0
        %7470 = vmatmul.mubr.f32.gmra.mrb[0].mxu0 %v7332
        %v7471 = vpop.f32.mrb[0].mxu0
        %v7472 = vadd.f32 0.0, %v7471
        %v7473 = vpop.f32.mrb[0].mxu0
        %7474 = vmatprep.mubr.f32.mxu0 0.0
        %7475 = vmatmul.mubr.f32.gmra.mrb[0].mxu0 %v7335
        %v7476 = vpop.f32.mrb[0].mxu0
        %v7477 = vadd.f32 0.0, %v7476
        %v7478 = vpop.f32.mrb[0].mxu0
        %7479 = vmatprep.mubr.f32.mxu0 0.0
        %7480 = vmatmul.mubr.f32.gmra.mrb[0].mxu0 %v7338
        %v7481 = vpop.f32.mrb[0].mxu0
        %v7482 = vadd.f32 0.0, %v7481
        %v7483 = vpop.f32.mrb[0].mxu0
        %7484 = vdwg.mxu0
        %v7485 = vadd.f32 %v7257, %v7407
        %v7486 = vadd.f32 %v7258, %v7412
        %v7487 = vadd.f32 %v7259, %v7417
        %v7488 = vadd.f32 %v7260, %v7422
        %v7489 = vadd.f32 %v7261, %v7427
        %v7490 = vadd.f32 %v7262, %v7432
        %v7491 = vadd.f32 %v7263, %v7437
        %v7492 = vadd.f32 %v7264, %v7442
        %v7493 = vadd.f32 %v7265, %v7447
        %v7494 = vadd.f32 %v7266, %v7452
        %v7495 = vadd.f32 %v7267, %v7457
        %v7496 = vadd.f32 %v7268, %v7462
        %v7497 = vadd.f32 %v7269, %v7467
        %v7498 = vadd.f32 %v7270, %v7472
        %v7499 = vadd.f32 %v7271, %v7477
        %v7500 = vadd.f32 %v7272, %v7482
        %v7501 = vld [vmem:[%s15] sm:$0x1]
        %v7503 = vlaneseq
        %v7504 = vshrl.u32 %v7503, 7
        %v7505 = vsub.s32 0, %v7504
        %v7506 = vrot.slane %v7501, %v7505
        %v7508 = vmul.f32 %v7485, %v7506
        %v7509 = vmul.f32 %v7486, %v7506
        %v7510 = vmul.f32 %v7487, %v7506
        %v7511 = vmul.f32 %v7488, %v7506
        %v7512 = vmul.f32 %v7489, %v7506
        %v7513 = vmul.f32 %v7490, %v7506
        %v7514 = vmul.f32 %v7491, %v7506
        %v7515 = vmul.f32 %v7492, %v7506
        %v7516 = vmul.f32 %v7493, %v7506
        %v7517 = vmul.f32 %v7494, %v7506
        %v7518 = vmul.f32 %v7495, %v7506
        %v7519 = vmul.f32 %v7496, %v7506
        %v7520 = vmul.f32 %v7497, %v7506
        %v7521 = vmul.f32 %v7498, %v7506
        %v7522 = vmul.f32 %v7499, %v7506
        %v7523 = vmul.f32 %v7500, %v7506
        %v7524 = vld [vmem:[%s16] sm:$0x1]
        %v7526 = vlaneseq
        %v7527 = vshrl.u32 %v7526, 7
        %v7528 = vsub.s32 0, %v7527
        %v7529 = vrot.slane %v7524, %v7528
        %v7531 = vadd.f32 %v7508, %v7529
        %v7532 = vadd.f32 %v7509, %v7529
        %v7533 = vadd.f32 %v7510, %v7529
        %v7534 = vadd.f32 %v7511, %v7529
        %v7535 = vadd.f32 %v7512, %v7529
        %v7536 = vadd.f32 %v7513, %v7529
        %v7537 = vadd.f32 %v7514, %v7529
        %v7538 = vadd.f32 %v7515, %v7529
        %v7539 = vadd.f32 %v7516, %v7529
        %v7540 = vadd.f32 %v7517, %v7529
        %v7541 = vadd.f32 %v7518, %v7529
        %v7542 = vadd.f32 %v7519, %v7529
        %v7543 = vadd.f32 %v7520, %v7529
        %v7544 = vadd.f32 %v7521, %v7529
        %v7545 = vadd.f32 %v7522, %v7529
        %v7546 = vadd.f32 %v7523, %v7529
        %v7547 = vmax.f32 %v7531, 0.0
        %v7548 = vmax.f32 %v7532, 0.0
        %v7549 = vmax.f32 %v7533, 0.0
        %v7550 = vmax.f32 %v7534, 0.0
        %v7551 = vmax.f32 %v7535, 0.0
        %v7552 = vmax.f32 %v7536, 0.0
        %v7553 = vmax.f32 %v7537, 0.0
        %v7554 = vmax.f32 %v7538, 0.0
        %v7555 = vmax.f32 %v7539, 0.0
        %v7556 = vmax.f32 %v7540, 0.0
        %v7557 = vmax.f32 %v7541, 0.0
        %v7558 = vmax.f32 %v7542, 0.0
        %v7559 = vmax.f32 %v7543, 0.0
        %v7560 = vmax.f32 %v7544, 0.0
        %v7561 = vmax.f32 %v7545, 0.0
        %v7562 = vmax.f32 %v7546, 0.0
        %7579 = vrot.lane.b32.xlu0 %v7547, 24
        %v7580 = vpop.permute.xlu0 %7579
        %7581 = vrot.lane.b32.xlu0 %v7548, 24
        %v7582 = vpop.permute.xlu0 %7581
        %7583 = vrot.lane.b32.xlu0 %v7549, 24
        %v7584 = vpop.permute.xlu0 %7583
        %7585 = vrot.lane.b32.xlu0 %v7550, 24
        %v7586 = vpop.permute.xlu0 %7585
        %7587 = vrot.lane.b32.xlu0 %v7551, 24
        %v7588 = vpop.permute.xlu0 %7587
        %7589 = vrot.lane.b32.xlu0 %v7552, 24
        %v7590 = vpop.permute.xlu0 %7589
        %7591 = vrot.lane.b32.xlu0 %v7553, 24
        %v7592 = vpop.permute.xlu0 %7591
        %7593 = vrot.lane.b32.xlu0 %v7554, 24
        %v7594 = vpop.permute.xlu0 %7593
        %7595 = vrot.lane.b32.xlu0 %v7555, 24
        %v7596 = vpop.permute.xlu0 %7595
        %7597 = vrot.lane.b32.xlu0 %v7556, 24
        %v7598 = vpop.permute.xlu0 %7597
        %7599 = vrot.lane.b32.xlu0 %v7557, 24
        %v7600 = vpop.permute.xlu0 %7599
        %7601 = vrot.lane.b32.xlu0 %v7558, 24
        %v7602 = vpop.permute.xlu0 %7601
        %7603 = vrot.lane.b32.xlu0 %v7559, 24
        %v7604 = vpop.permute.xlu0 %7603
        %7605 = vrot.lane.b32.xlu0 %v7560, 24
        %v7606 = vpop.permute.xlu0 %7605
        %7607 = vrot.lane.b32.xlu0 %v7561, 24
        %v7608 = vpop.permute.xlu0 %7607
        %7609 = vrot.lane.b32.xlu0 %v7562, 24
        %v7610 = vpop.permute.xlu0 %7609
        %vm7627 = vcmask 326848
        %7628 = vst.msk [vmem:[%s770] sm:$0xff] %vm7627, %v7580
        %7629 = vst.msk [vmem:[%s770 + $0x8] sm:$0xff] %vm7627, %v7582
        %7630 = vst.msk [vmem:[%s770 + $0x10] sm:$0xff] %vm7627, %v7584
        %7631 = vst.msk [vmem:[%s770 + $0x18] sm:$0xff] %vm7627, %v7586
        %7632 = vst.msk [vmem:[%s770 + $0x20] sm:$0xff] %vm7627, %v7588
        %7633 = vst.msk [vmem:[%s770 + $0x28] sm:$0xff] %vm7627, %v7590
        %7634 = vst.msk [vmem:[%s770 + $0x30] sm:$0xff] %vm7627, %v7592
        %7635 = vst.msk [vmem:[%s770 + $0x38] sm:$0xff] %vm7627, %v7594
        %7636 = vst.msk [vmem:[%s770 + $0x40] sm:$0xff] %vm7627, %v7596
        %7637 = vst.msk [vmem:[%s770 + $0x48] sm:$0xff] %vm7627, %v7598
        %7638 = vst.msk [vmem:[%s770 + $0x50] sm:$0xff] %vm7627, %v7600
        %7639 = vst.msk [vmem:[%s770 + $0x58] sm:$0xff] %vm7627, %v7602
        %7640 = vst.msk [vmem:[%s770 + $0x60] sm:$0xff] %vm7627, %v7604
        %7641 = vst.msk [vmem:[%s770 + $0x68] sm:$0xff] %vm7627, %v7606
        %7642 = vst.msk [vmem:[%s770 + $0x70] sm:$0xff] %vm7627, %v7608
        %7643 = vst.msk [vmem:[%s770 + $0x78] sm:$0xff] %vm7627, %v7610
        %v7644 = vld [vmem:[#allocation6] sm:$0xff]
        %v7645 = vld [vmem:[#allocation6 + $0x8] sm:$0x3]
        %v7646 = vld [vmem:[#allocation6 + $0x10] sm:$0xff]
        %v7647 = vld [vmem:[#allocation6 + $0x18] sm:$0x3]
        %v7648 = vld [vmem:[#allocation6 + $0x20] sm:$0xff]
        %v7649 = vld [vmem:[#allocation6 + $0x28] sm:$0x3]
        %v7650 = vld [vmem:[#allocation6 + $0x30] sm:$0xff]
        %v7651 = vld [vmem:[#allocation6 + $0x38] sm:$0x3]
        %v7652 = vld [vmem:[#allocation6 + $0x40] sm:$0xff]
        %v7653 = vld [vmem:[#allocation6 + $0x48] sm:$0x3]
        %v7654 = vld [vmem:[#allocation6 + $0x50] sm:$0xff]
        %v7655 = vld [vmem:[#allocation6 + $0x58] sm:$0x3]
        %v7656 = vld [vmem:[#allocation6 + $0x60] sm:$0xff]
        %v7657 = vld [vmem:[#allocation6 + $0x68] sm:$0x3]
        %v7658 = vld [vmem:[#allocation6 + $0x70] sm:$0xff]
        %v7659 = vld [vmem:[#allocation6 + $0x78] sm:$0x3]
        %v7660 = vld [vmem:[#allocation6 + $0x80] sm:$0xff]
        %v7661 = vld [vmem:[#allocation6 + $0x88] sm:$0x3]
        %v7662 = vld [vmem:[#allocation6 + $0x90] sm:$0xff]
        %v7663 = vld [vmem:[#allocation6 + $0x98] sm:$0x3]
        %v7664 = vld [vmem:[#allocation6 + $0xa0] sm:$0xff]
        %v7665 = vld [vmem:[#allocation6 + $0xa8] sm:$0x3]
        %v7666 = vld [vmem:[#allocation6 + $0xb0] sm:$0xff]
        %v7667 = vld [vmem:[#allocation6 + $0xb8] sm:$0x3]
        %v7668 = vld [vmem:[#allocation6 + $0xc0] sm:$0xff]
        %v7669 = vld [vmem:[#allocation6 + $0xc8] sm:$0x3]
        %v7670 = vld [vmem:[#allocation6 + $0xd0] sm:$0xff]
        %v7671 = vld [vmem:[#allocation6 + $0xd8] sm:$0x3]
        %v7672 = vld [vmem:[#allocation6 + $0xe0] sm:$0xff]
        %v7673 = vld [vmem:[#allocation6 + $0xe8] sm:$0x3]
        %v7674 = vld [vmem:[#allocation6 + $0xf0] sm:$0xff]
        %v7675 = vld [vmem:[#allocation6 + $0xf8] sm:$0x3]
        %v7676 = vld [vmem:[#allocation6 + $0x100] sm:$0xff]
        %v7677 = vld [vmem:[#allocation6 + $0x108] sm:$0x3]
        %v7678 = vld [vmem:[#allocation6 + $0x110] sm:$0xff]
        %v7679 = vld [vmem:[#allocation6 + $0x118] sm:$0x3]
        %v7680 = vld [vmem:[#allocation6 + $0x120] sm:$0xff]
        %v7681 = vld [vmem:[#allocation6 + $0x128] sm:$0x3]
        %v7682 = vld [vmem:[#allocation6 + $0x130] sm:$0xff]
        %v7683 = vld [vmem:[#allocation6 + $0x138] sm:$0x3]
        %s7684 = scalar_lea.vmem [#allocation6], 160
        %v7685 = vld [vmem:[%s7684] sm:$0xff]
        %v7686 = vld [vmem:[%s7684 + $0x8] sm:$0x3]
        %v7687 = vld [vmem:[%s7684 + $0x10] sm:$0xff]
        %v7688 = vld [vmem:[%s7684 + $0x18] sm:$0x3]
        %v7689 = vld [vmem:[%s7684 + $0x20] sm:$0xff]
        %v7690 = vld [vmem:[%s7684 + $0x28] sm:$0x3]
        %v7691 = vld [vmem:[%s7684 + $0x30] sm:$0xff]
        %v7692 = vld [vmem:[%s7684 + $0x38] sm:$0x3]
        %v7693 = vld [vmem:[%s7684 + $0x40] sm:$0xff]
        %v7694 = vld [vmem:[%s7684 + $0x48] sm:$0x3]
        %v7695 = vld [vmem:[%s7684 + $0x50] sm:$0xff]
        %v7696 = vld [vmem:[%s7684 + $0x58] sm:$0x3]
        %v7697 = vld [vmem:[%s7684 + $0x60] sm:$0xff]
        %v7698 = vld [vmem:[%s7684 + $0x68] sm:$0x3]
        %v7699 = vld [vmem:[%s7684 + $0x70] sm:$0xff]
        %v7700 = vld [vmem:[%s7684 + $0x78] sm:$0x3]
        %v7701 = vld [vmem:[%s7684 + $0x80] sm:$0xff]
        %v7702 = vld [vmem:[%s7684 + $0x88] sm:$0x3]
        %v7703 = vld [vmem:[%s7684 + $0x90] sm:$0xff]
        %v7704 = vld [vmem:[%s7684 + $0x98] sm:$0x3]
        %v7705 = vld [vmem:[%s7684 + $0xa0] sm:$0xff]
        %v7706 = vld [vmem:[%s7684 + $0xa8] sm:$0x3]
        %v7707 = vld [vmem:[%s7684 + $0xb0] sm:$0xff]
        %v7708 = vld [vmem:[%s7684 + $0xb8] sm:$0x3]
        %v7709 = vld [vmem:[%s7684 + $0xc0] sm:$0xff]
        %v7710 = vld [vmem:[%s7684 + $0xc8] sm:$0x3]
        %v7711 = vld [vmem:[%s7684 + $0xd0] sm:$0xff]
        %v7712 = vld [vmem:[%s7684 + $0xd8] sm:$0x3]
        %v7713 = vld [vmem:[%s7684 + $0xe0] sm:$0xff]
        %v7714 = vld [vmem:[%s7684 + $0xe8] sm:$0x3]
        %v7715 = vld [vmem:[%s7684 + $0xf0] sm:$0xff]
        %v7716 = vld [vmem:[%s7684 + $0xf8] sm:$0x3]
        %v7717 = vld [vmem:[%s7684 + $0x100] sm:$0xff]
        %v7718 = vld [vmem:[%s7684 + $0x108] sm:$0x3]
        %v7719 = vld [vmem:[%s7684 + $0x110] sm:$0xff]
        %v7720 = vld [vmem:[%s7684 + $0x118] sm:$0x3]
        %v7721 = vld [vmem:[%s7684 + $0x120] sm:$0xff]
        %v7722 = vld [vmem:[%s7684 + $0x128] sm:$0x3]
        %v7723 = vld [vmem:[%s7684 + $0x130] sm:$0xff]
        %v7724 = vld [vmem:[%s7684 + $0x138] sm:$0x3]
        %v7725 = vmax.f32 %v7644, %v7685
        %v7726 = vmax.f32 %v7645, %v7686
        %v7727 = vmax.f32 %v7646, %v7687
        %v7728 = vmax.f32 %v7647, %v7688
        %v7729 = vmax.f32 %v7648, %v7689
        %v7730 = vmax.f32 %v7649, %v7690
        %v7731 = vmax.f32 %v7650, %v7691
        %v7732 = vmax.f32 %v7651, %v7692
        %v7733 = vmax.f32 %v7652, %v7693
        %v7734 = vmax.f32 %v7653, %v7694
        %v7735 = vmax.f32 %v7654, %v7695
        %v7736 = vmax.f32 %v7655, %v7696
        %v7737 = vmax.f32 %v7656, %v7697
        %v7738 = vmax.f32 %v7657, %v7698
        %v7739 = vmax.f32 %v7658, %v7699
        %v7740 = vmax.f32 %v7659, %v7700
        %v7741 = vmax.f32 %v7660, %v7701
        %v7742 = vmax.f32 %v7661, %v7702
        %v7743 = vmax.f32 %v7662, %v7703
        %v7744 = vmax.f32 %v7663, %v7704
        %v7745 = vmax.f32 %v7664, %v7705
        %v7746 = vmax.f32 %v7665, %v7706
        %v7747 = vmax.f32 %v7666, %v7707
        %v7748 = vmax.f32 %v7667, %v7708
        %v7749 = vmax.f32 %v7668, %v7709
        %v7750 = vmax.f32 %v7669, %v7710
        %v7751 = vmax.f32 %v7670, %v7711
        %v7752 = vmax.f32 %v7671, %v7712
        %v7753 = vmax.f32 %v7672, %v7713
        %v7754 = vmax.f32 %v7673, %v7714
        %v7755 = vmax.f32 %v7674, %v7715
        %v7756 = vmax.f32 %v7675, %v7716
        %v7757 = vmax.f32 %v7676, %v7717
        %v7758 = vmax.f32 %v7677, %v7718
        %v7759 = vmax.f32 %v7678, %v7719
        %v7760 = vmax.f32 %v7679, %v7720
        %v7761 = vmax.f32 %v7680, %v7721
        %v7762 = vmax.f32 %v7681, %v7722
        %v7763 = vmax.f32 %v7682, %v7723
        %v7764 = vmax.f32 %v7683, %v7724
        %s7765 = scalar_lea.vmem [#allocation6], 320
        %v7766 = vld [vmem:[%s7765] sm:$0xff]
        %v7767 = vld [vmem:[%s7765 + $0x8] sm:$0x3]
        %v7768 = vld [vmem:[%s7765 + $0x10] sm:$0xff]
        %v7769 = vld [vmem:[%s7765 + $0x18] sm:$0x3]
        %v7770 = vld [vmem:[%s7765 + $0x20] sm:$0xff]
        %v7771 = vld [vmem:[%s7765 + $0x28] sm:$0x3]
        %v7772 = vld [vmem:[%s7765 + $0x30] sm:$0xff]
        %v7773 = vld [vmem:[%s7765 + $0x38] sm:$0x3]
        %v7774 = vld [vmem:[%s7765 + $0x40] sm:$0xff]
        %v7775 = vld [vmem:[%s7765 + $0x48] sm:$0x3]
        %v7776 = vld [vmem:[%s7765 + $0x50] sm:$0xff]
        %v7777 = vld [vmem:[%s7765 + $0x58] sm:$0x3]
        %v7778 = vld [vmem:[%s7765 + $0x60] sm:$0xff]
        %v7779 = vld [vmem:[%s7765 + $0x68] sm:$0x3]
        %v7780 = vld [vmem:[%s7765 + $0x70] sm:$0xff]
        %v7781 = vld [vmem:[%s7765 + $0x78] sm:$0x3]
        %v7782 = vld [vmem:[%s7765 + $0x80] sm:$0xff]
        %v7783 = vld [vmem:[%s7765 + $0x88] sm:$0x3]
        %v7784 = vld [vmem:[%s7765 + $0x90] sm:$0xff]
        %v7785 = vld [vmem:[%s7765 + $0x98] sm:$0x3]
        %v7786 = vld [vmem:[%s7765 + $0xa0] sm:$0xff]
        %v7787 = vld [vmem:[%s7765 + $0xa8] sm:$0x3]
        %v7788 = vld [vmem:[%s7765 + $0xb0] sm:$0xff]
        %v7789 = vld [vmem:[%s7765 + $0xb8] sm:$0x3]
        %v7790 = vld [vmem:[%s7765 + $0xc0] sm:$0xff]
        %v7791 = vld [vmem:[%s7765 + $0xc8] sm:$0x3]
        %v7792 = vld [vmem:[%s7765 + $0xd0] sm:$0xff]
        %v7793 = vld [vmem:[%s7765 + $0xd8] sm:$0x3]
        %v7794 = vld [vmem:[%s7765 + $0xe0] sm:$0xff]
        %v7795 = vld [vmem:[%s7765 + $0xe8] sm:$0x3]
        %v7796 = vld [vmem:[%s7765 + $0xf0] sm:$0xff]
        %v7797 = vld [vmem:[%s7765 + $0xf8] sm:$0x3]
        %v7798 = vld [vmem:[%s7765 + $0x100] sm:$0xff]
        %v7799 = vld [vmem:[%s7765 + $0x108] sm:$0x3]
        %v7800 = vld [vmem:[%s7765 + $0x110] sm:$0xff]
        %v7801 = vld [vmem:[%s7765 + $0x118] sm:$0x3]
        %v7802 = vld [vmem:[%s7765 + $0x120] sm:$0xff]
        %v7803 = vld [vmem:[%s7765 + $0x128] sm:$0x3]
        %v7804 = vld [vmem:[%s7765 + $0x130] sm:$0xff]
        %v7805 = vld [vmem:[%s7765 + $0x138] sm:$0x3]
        %v7806 = vmax.f32 %v7725, %v7766
        %v7807 = vmax.f32 %v7726, %v7767
        %v7808 = vmax.f32 %v7727, %v7768
        %v7809 = vmax.f32 %v7728, %v7769
        %v7810 = vmax.f32 %v7729, %v7770
        %v7811 = vmax.f32 %v7730, %v7771
        %v7812 = vmax.f32 %v7731, %v7772
        %v7813 = vmax.f32 %v7732, %v7773
        %v7814 = vmax.f32 %v7733, %v7774
        %v7815 = vmax.f32 %v7734, %v7775
        %v7816 = vmax.f32 %v7735, %v7776
        %v7817 = vmax.f32 %v7736, %v7777
        %v7818 = vmax.f32 %v7737, %v7778
        %v7819 = vmax.f32 %v7738, %v7779
        %v7820 = vmax.f32 %v7739, %v7780
        %v7821 = vmax.f32 %v7740, %v7781
        %v7822 = vmax.f32 %v7741, %v7782
        %v7823 = vmax.f32 %v7742, %v7783
        %v7824 = vmax.f32 %v7743, %v7784
        %v7825 = vmax.f32 %v7744, %v7785
        %v7826 = vmax.f32 %v7745, %v7786
        %v7827 = vmax.f32 %v7746, %v7787
        %v7828 = vmax.f32 %v7747, %v7788
        %v7829 = vmax.f32 %v7748, %v7789
        %v7830 = vmax.f32 %v7749, %v7790
        %v7831 = vmax.f32 %v7750, %v7791
        %v7832 = vmax.f32 %v7751, %v7792
        %v7833 = vmax.f32 %v7752, %v7793
        %v7834 = vmax.f32 %v7753, %v7794
        %v7835 = vmax.f32 %v7754, %v7795
        %v7836 = vmax.f32 %v7755, %v7796
        %v7837 = vmax.f32 %v7756, %v7797
        %v7838 = vmax.f32 %v7757, %v7798
        %v7839 = vmax.f32 %v7758, %v7799
        %v7840 = vmax.f32 %v7759, %v7800
        %v7841 = vmax.f32 %v7760, %v7801
        %v7842 = vmax.f32 %v7761, %v7802
        %v7843 = vmax.f32 %v7762, %v7803
        %v7844 = vmax.f32 %v7763, %v7804
        %v7845 = vmax.f32 %v7764, %v7805
        %v7846 = vmax.f32 %v7806, %v7808
        %v7847 = vmax.f32 %v7807, %v7809
        %v7848 = vmax.f32 %v7808, %v7810
        %v7849 = vmax.f32 %v7809, %v7811
        %v7850 = vmax.f32 %v7810, %v7812
        %v7851 = vmax.f32 %v7811, %v7813
        %v7852 = vmax.f32 %v7812, %v7814
        %v7853 = vmax.f32 %v7813, %v7815
        %v7854 = vmax.f32 %v7814, %v7816
        %v7855 = vmax.f32 %v7815, %v7817
        %v7856 = vmax.f32 %v7816, %v7818
        %v7857 = vmax.f32 %v7817, %v7819
        %v7858 = vmax.f32 %v7818, %v7820
        %v7859 = vmax.f32 %v7819, %v7821
        %v7860 = vmax.f32 %v7820, %v7822
        %v7861 = vmax.f32 %v7821, %v7823
        %v7862 = vmax.f32 %v7826, %v7828
        %v7863 = vmax.f32 %v7827, %v7829
        %v7864 = vmax.f32 %v7828, %v7830
        %v7865 = vmax.f32 %v7829, %v7831
        %v7866 = vmax.f32 %v7830, %v7832
        %v7867 = vmax.f32 %v7831, %v7833
        %v7868 = vmax.f32 %v7832, %v7834
        %v7869 = vmax.f32 %v7833, %v7835
        %v7870 = vmax.f32 %v7834, %v7836
        %v7871 = vmax.f32 %v7835, %v7837
        %v7872 = vmax.f32 %v7836, %v7838
        %v7873 = vmax.f32 %v7837, %v7839
        %v7874 = vmax.f32 %v7838, %v7840
        %v7875 = vmax.f32 %v7839, %v7841
        %v7876 = vmax.f32 %v7840, %v7842
        %v7877 = vmax.f32 %v7841, %v7843
        %v7878 = vmax.f32 %v7846, %v7810
        %v7879 = vmax.f32 %v7847, %v7811
        %v7880 = vmax.f32 %v7848, %v7812
        %v7881 = vmax.f32 %v7849, %v7813
        %v7882 = vmax.f32 %v7850, %v7814
        %v7883 = vmax.f32 %v7851, %v7815
        %v7884 = vmax.f32 %v7852, %v7816
        %v7885 = vmax.f32 %v7853, %v7817
        %v7886 = vmax.f32 %v7854, %v7818
        %v7887 = vmax.f32 %v7855, %v7819
        %v7888 = vmax.f32 %v7856, %v7820
        %v7889 = vmax.f32 %v7857, %v7821
        %v7890 = vmax.f32 %v7858, %v7822
        %v7891 = vmax.f32 %v7859, %v7823
        %v7892 = vmax.f32 %v7860, %v7824
        %v7893 = vmax.f32 %v7861, %v7825
        %v7894 = vmax.f32 %v7862, %v7830
        %v7895 = vmax.f32 %v7863, %v7831
        %v7896 = vmax.f32 %v7864, %v7832
        %v7897 = vmax.f32 %v7865, %v7833
        %v7898 = vmax.f32 %v7866, %v7834
        %v7899 = vmax.f32 %v7867, %v7835
        %v7900 = vmax.f32 %v7868, %v7836
        %v7901 = vmax.f32 %v7869, %v7837
        %v7902 = vmax.f32 %v7870, %v7838
        %v7903 = vmax.f32 %v7871, %v7839
        %v7904 = vmax.f32 %v7872, %v7840
        %v7905 = vmax.f32 %v7873, %v7841
        %v7906 = vmax.f32 %v7874, %v7842
        %v7907 = vmax.f32 %v7875, %v7843
        %v7908 = vmax.f32 %v7876, %v7844
        %v7909 = vmax.f32 %v7877, %v7845
        %vm7942 = vcmask 1046528
        %v7943 = vrot.slane %v7878, 1
        %v7944 = vrot.slane %v7879, 1
        %v7945 = vsel %vm7942, %v7943, %v7944
        %v7946 = vrot.slane %v7880, 1
        %v7947 = vrot.slane %v7881, 1
        %v7948 = vsel %vm7942, %v7946, %v7947
        %v7949 = vrot.slane %v7882, 1
        %v7950 = vrot.slane %v7883, 1
        %v7951 = vsel %vm7942, %v7949, %v7950
        %v7952 = vrot.slane %v7884, 1
        %v7953 = vrot.slane %v7885, 1
        %v7954 = vsel %vm7942, %v7952, %v7953
        %v7955 = vrot.slane %v7886, 1
        %v7956 = vrot.slane %v7887, 1
        %v7957 = vsel %vm7942, %v7955, %v7956
        %v7958 = vrot.slane %v7888, 1
        %v7959 = vrot.slane %v7889, 1
        %v7960 = vsel %vm7942, %v7958, %v7959
        %v7961 = vrot.slane %v7890, 1
        %v7962 = vrot.slane %v7891, 1
        %v7963 = vsel %vm7942, %v7961, %v7962
        %v7964 = vrot.slane %v7892, 1
        %v7965 = vrot.slane %v7893, 1
        %v7966 = vsel %vm7942, %v7964, %v7965
        %v7967 = vrot.slane %v7894, 1
        %v7968 = vrot.slane %v7895, 1
        %v7969 = vsel %vm7942, %v7967, %v7968
        %v7970 = vrot.slane %v7896, 1
        %v7971 = vrot.slane %v7897, 1
        %v7972 = vsel %vm7942, %v7970, %v7971
        %v7973 = vrot.slane %v7898, 1
        %v7974 = vrot.slane %v7899, 1
        %v7975 = vsel %vm7942, %v7973, %v7974
        %v7976 = vrot.slane %v7900, 1
        %v7977 = vrot.slane %v7901, 1
        %v7978 = vsel %vm7942, %v7976, %v7977
        %v7979 = vrot.slane %v7902, 1
        %v7980 = vrot.slane %v7903, 1
        %v7981 = vsel %vm7942, %v7979, %v7980
        %v7982 = vrot.slane %v7904, 1
        %v7983 = vrot.slane %v7905, 1
        %v7984 = vsel %vm7942, %v7982, %v7983
        %v7985 = vrot.slane %v7906, 1
        %v7986 = vrot.slane %v7907, 1
        %v7987 = vsel %vm7942, %v7985, %v7986
        %v7988 = vrot.slane %v7908, 1
        %v7989 = vrot.slane %v7909, 1
        %v7990 = vsel %vm7942, %v7988, %v7989
        %v8007 = vmax.f32 %v7878, %v7945
        %v8008 = vmax.f32 %v7880, %v7948
        %v8009 = vmax.f32 %v7882, %v7951
        %v8010 = vmax.f32 %v7884, %v7954
        %v8011 = vmax.f32 %v7886, %v7957
        %v8012 = vmax.f32 %v7888, %v7960
        %v8013 = vmax.f32 %v7890, %v7963
        %v8014 = vmax.f32 %v7892, %v7966
        %v8015 = vmax.f32 %v7894, %v7969
        %v8016 = vmax.f32 %v7896, %v7972
        %v8017 = vmax.f32 %v7898, %v7975
        %v8018 = vmax.f32 %v7900, %v7978
        %v8019 = vmax.f32 %v7902, %v7981
        %v8020 = vmax.f32 %v7904, %v7984
        %v8021 = vmax.f32 %v7906, %v7987
        %v8022 = vmax.f32 %v7908, %v7990
        %vm8023 = vcmask 1045504
        %v8024 = vrot.slane %v7878, 2
        %v8025 = vrot.slane %v7879, 2
        %v8026 = vsel %vm8023, %v8024, %v8025
        %v8027 = vrot.slane %v7880, 2
        %v8028 = vrot.slane %v7881, 2
        %v8029 = vsel %vm8023, %v8027, %v8028
        %v8030 = vrot.slane %v7882, 2
        %v8031 = vrot.slane %v7883, 2
        %v8032 = vsel %vm8023, %v8030, %v8031
        %v8033 = vrot.slane %v7884, 2
        %v8034 = vrot.slane %v7885, 2
        %v8035 = vsel %vm8023, %v8033, %v8034
        %v8036 = vrot.slane %v7886, 2
        %v8037 = vrot.slane %v7887, 2
        %v8038 = vsel %vm8023, %v8036, %v8037
        %v8039 = vrot.slane %v7888, 2
        %v8040 = vrot.slane %v7889, 2
        %v8041 = vsel %vm8023, %v8039, %v8040
        %v8042 = vrot.slane %v7890, 2
        %v8043 = vrot.slane %v7891, 2
        %v8044 = vsel %vm8023, %v8042, %v8043
        %v8045 = vrot.slane %v7892, 2
        %v8046 = vrot.slane %v7893, 2
        %v8047 = vsel %vm8023, %v8045, %v8046
        %v8048 = vrot.slane %v7894, 2
        %v8049 = vrot.slane %v7895, 2
        %v8050 = vsel %vm8023, %v8048, %v8049
        %v8051 = vrot.slane %v7896, 2
        %v8052 = vrot.slane %v7897, 2
        %v8053 = vsel %vm8023, %v8051, %v8052
        %v8054 = vrot.slane %v7898, 2
        %v8055 = vrot.slane %v7899, 2
        %v8056 = vsel %vm8023, %v8054, %v8055
        %v8057 = vrot.slane %v7900, 2
        %v8058 = vrot.slane %v7901, 2
        %v8059 = vsel %vm8023, %v8057, %v8058
        %v8060 = vrot.slane %v7902, 2
        %v8061 = vrot.slane %v7903, 2
        %v8062 = vsel %vm8023, %v8060, %v8061
        %v8063 = vrot.slane %v7904, 2
        %v8064 = vrot.slane %v7905, 2
        %v8065 = vsel %vm8023, %v8063, %v8064
        %v8066 = vrot.slane %v7906, 2
        %v8067 = vrot.slane %v7907, 2
        %v8068 = vsel %vm8023, %v8066, %v8067
        %v8069 = vrot.slane %v7908, 2
        %v8070 = vrot.slane %v7909, 2
        %v8071 = vsel %vm8023, %v8069, %v8070
        %v8088 = vmax.f32 %v8007, %v8026
        %v8089 = vmax.f32 %v8008, %v8029
        %v8090 = vmax.f32 %v8009, %v8032
        %v8091 = vmax.f32 %v8010, %v8035
        %v8092 = vmax.f32 %v8011, %v8038
        %v8093 = vmax.f32 %v8012, %v8041
        %v8094 = vmax.f32 %v8013, %v8044
        %v8095 = vmax.f32 %v8014, %v8047
        %v8096 = vmax.f32 %v8015, %v8050
        %v8097 = vmax.f32 %v8016, %v8053
        %v8098 = vmax.f32 %v8017, %v8056
        %v8099 = vmax.f32 %v8018, %v8059
        %v8100 = vmax.f32 %v8019, %v8062
        %v8101 = vmax.f32 %v8020, %v8065
        %v8102 = vmax.f32 %v8021, %v8068
        %v8103 = vmax.f32 %v8022, %v8071
        %v8104 = vld [vmem:[%s17] sm:$0xff]
        %v8106 = vsel %vm808, %v8088, 0
        %v8109 = vsel %vm808, %v8089, 0
        %v8112 = vsel %vm808, %v8090, 0
        %v8115 = vsel %vm808, %v8091, 0
        %v8118 = vsel %vm808, %v8092, 0
        %v8121 = vsel %vm808, %v8093, 0
        %v8124 = vsel %vm808, %v8094, 0
        %v8127 = vsel %vm808, %v8095, 0
        %v8130 = vsel %vm808, %v8096, 0
        %v8133 = vsel %vm808, %v8097, 0
        %v8136 = vsel %vm808, %v8098, 0
        %v8139 = vsel %vm808, %v8099, 0
        %v8142 = vsel %vm808, %v8100, 0
        %v8145 = vsel %vm808, %v8101, 0
        %v8148 = vsel %vm808, %v8102, 0
        %v8151 = vsel %vm808, %v8103, 0
        %8153 = vmatprep.subr.mxu0 0.0
        %8154 = vmatpush1.msra.mxu0 %v8104
        %8155 = vmatprep.subr.mxu0 0.0
        %8156 = vmatpush1.msra.mxu0 0.0
        %8157 = vmatprep.subr.mxu0 0.0
        %8158 = vmatpush1.msra.mxu0 0.0
        %8159 = vmatprep.subr.mxu0 0.0
        %8160 = vmatpush1.msra.mxu0 0.0
        %8161 = vmatprep.subr.mxu0 0.0
        %8162 = vmatpush1.msra.mxu0 0.0
        %8163 = vmatprep.subr.mxu0 0.0
        %8164 = vmatpush1.msra.mxu0 0.0
        %8165 = vmatprep.subr.mxu0 0.0
        %8166 = vmatpush1.msra.mxu0 0.0
        %8167 = vmatprep.subr.mxu0 0.0
        %8168 = vmatpush1.msra.mxu0 0.0
        %8169 = vmatprep.subr.mxu0 0.0
        %8170 = vmatpush1.msra.mxu0 0.0
        %8171 = vmatprep.subr.mxu0 0.0
        %8172 = vmatpush1.msra.mxu0 0.0
        %8173 = vmatprep.subr.mxu0 0.0
        %8174 = vmatpush1.msra.mxu0 0.0
        %8175 = vmatprep.subr.mxu0 0.0
        %8176 = vmatpush1.msra.mxu0 0.0
        %8177 = vmatprep.subr.mxu0 0.0
        %8178 = vmatpush1.msra.mxu0 0.0
        %8179 = vmatprep.subr.mxu0 0.0
        %8180 = vmatpush1.msra.mxu0 0.0
        %8181 = vmatprep.subr.mxu0 0.0
        %8182 = vmatpush1.msra.mxu0 0.0
        %8183 = vmatprep.subr.mxu0 0.0
        %8184 = vmatpush1.msra.mxu0 0.0
        %8185 = vmatprep.subr.mxu0 0.0
        %8186 = vmatpush1.msra.mxu0 0.0
        %8187 = vmatprep.subr.mxu0 0.0
        %8188 = vmatpush1.msra.mxu0 0.0
        %8189 = vmatprep.subr.mxu0 0.0
        %8190 = vmatpush1.msra.mxu0 0.0
        %8191 = vmatprep.subr.mxu0 0.0
        %8192 = vmatpush1.msra.mxu0 0.0
        %8193 = vmatprep.subr.mxu0 0.0
        %8194 = vmatpush1.msra.mxu0 0.0
        %8195 = vmatprep.subr.mxu0 0.0
        %8196 = vmatpush1.msra.mxu0 0.0
        %8197 = vmatprep.subr.mxu0 0.0
        %8198 = vmatpush1.msra.mxu0 0.0
        %8199 = vmatprep.subr.mxu0 0.0
        %8200 = vmatpush1.msra.mxu0 0.0
        %8201 = vmatprep.subr.mxu0 0.0
        %8202 = vmatpush1.msra.mxu0 0.0
        %8203 = vmatprep.subr.mxu0 0.0
        %8204 = vmatpush1.msra.mxu0 0.0
        %8205 = vmatprep.subr.mxu0 0.0
        %8206 = vmatpush1.msra.mxu0 0.0
        %8207 = vmatprep.subr.mxu0 0.0
        %8208 = vmatpush1.msra.mxu0 0.0
        %8209 = vmatprep.subr.mxu0 0.0
        %8210 = vmatpush1.msra.mxu0 0.0
        %8211 = vmatprep.subr.mxu0 0.0
        %8212 = vmatpush1.msra.mxu0 0.0
        %8213 = vmatprep.subr.mxu0 0.0
        %8214 = vmatpush1.msra.mxu0 0.0
        %8215 = vmatprep.subr.mxu0 0.0
        %8216 = vmatpush1.msra.mxu0 0.0
        %8217 = vmatprep.mubr.f32.mxu0 0.0
        %8218 = vmatmul.mubr.f32.gmra.mrb[0].mxu0 %v8106
        %v8219 = vpop.f32.mrb[0].mxu0
        %v8220 = vadd.f32 0.0, %v8219
        %v8221 = vpop.f32.mrb[0].mxu0
        %8222 = vmatprep.mubr.f32.mxu0 0.0
        %8223 = vmatmul.mubr.f32.gmra.mrb[0].mxu0 %v8109
        %v8224 = vpop.f32.mrb[0].mxu0
        %v8225 = vadd.f32 0.0, %v8224
        %v8226 = vpop.f32.mrb[0].mxu0
        %8227 = vmatprep.mubr.f32.mxu0 0.0
        %8228 = vmatmul.mubr.f32.gmra.mrb[0].mxu0 %v8112
        %v8229 = vpop.f32.mrb[0].mxu0
        %v8230 = vadd.f32 0.0, %v8229
        %v8231 = vpop.f32.mrb[0].mxu0
        %8232 = vmatprep.mubr.f32.mxu0 0.0
        %8233 = vmatmul.mubr.f32.gmra.mrb[0].mxu0 %v8115
        %v8234 = vpop.f32.mrb[0].mxu0
        %v8235 = vadd.f32 0.0, %v8234
        %v8236 = vpop.f32.mrb[0].mxu0
        %8237 = vmatprep.mubr.f32.mxu0 0.0
        %8238 = vmatmul.mubr.f32.gmra.mrb[0].mxu0 %v8118
        %v8239 = vpop.f32.mrb[0].mxu0
        %v8240 = vadd.f32 0.0, %v8239
        %v8241 = vpop.f32.mrb[0].mxu0
        %8242 = vmatprep.mubr.f32.mxu0 0.0
        %8243 = vmatmul.mubr.f32.gmra.mrb[0].mxu0 %v8121
        %v8244 = vpop.f32.mrb[0].mxu0
        %v8245 = vadd.f32 0.0, %v8244
        %v8246 = vpop.f32.mrb[0].mxu0
        %8247 = vmatprep.mubr.f32.mxu0 0.0
        %8248 = vmatmul.mubr.f32.gmra.mrb[0].mxu0 %v8124
        %v8249 = vpop.f32.mrb[0].mxu0
        %v8250 = vadd.f32 0.0, %v8249
        %v8251 = vpop.f32.mrb[0].mxu0
        %8252 = vmatprep.mubr.f32.mxu0 0.0
        %8253 = vmatmul.mubr.f32.gmra.mrb[0].mxu0 %v8127
        %v8254 = vpop.f32.mrb[0].mxu0
        %v8255 = vadd.f32 0.0, %v8254
        %v8256 = vpop.f32.mrb[0].mxu0
        %8257 = vmatprep.mubr.f32.mxu0 0.0
        %8258 = vmatmul.mubr.f32.gmra.mrb[0].mxu0 %v8130
        %v8259 = vpop.f32.mrb[0].mxu0
        %v8260 = vadd.f32 0.0, %v8259
        %v8261 = vpop.f32.mrb[0].mxu0
        %8262 = vmatprep.mubr.f32.mxu0 0.0
        %8263 = vmatmul.mubr.f32.gmra.mrb[0].mxu0 %v8133
        %v8264 = vpop.f32.mrb[0].mxu0
        %v8265 = vadd.f32 0.0, %v8264
        %v8266 = vpop.f32.mrb[0].mxu0
        %8267 = vmatprep.mubr.f32.mxu0 0.0
        %8268 = vmatmul.mubr.f32.gmra.mrb[0].mxu0 %v8136
        %v8269 = vpop.f32.mrb[0].mxu0
        %v8270 = vadd.f32 0.0, %v8269
        %v8271 = vpop.f32.mrb[0].mxu0
        %8272 = vmatprep.mubr.f32.mxu0 0.0
        %8273 = vmatmul.mubr.f32.gmra.mrb[0].mxu0 %v8139
        %v8274 = vpop.f32.mrb[0].mxu0
        %v8275 = vadd.f32 0.0, %v8274
        %v8276 = vpop.f32.mrb[0].mxu0
        %8277 = vmatprep.mubr.f32.mxu0 0.0
        %8278 = vmatmul.mubr.f32.gmra.mrb[0].mxu0 %v8142
        %v8279 = vpop.f32.mrb[0].mxu0
        %v8280 = vadd.f32 0.0, %v8279
        %v8281 = vpop.f32.mrb[0].mxu0
        %8282 = vmatprep.mubr.f32.mxu0 0.0
        %8283 = vmatmul.mubr.f32.gmra.mrb[0].mxu0 %v8145
        %v8284 = vpop.f32.mrb[0].mxu0
        %v8285 = vadd.f32 0.0, %v8284
        %v8286 = vpop.f32.mrb[0].mxu0
        %8287 = vmatprep.mubr.f32.mxu0 0.0
        %8288 = vmatmul.mubr.f32.gmra.mrb[0].mxu0 %v8148
        %v8289 = vpop.f32.mrb[0].mxu0
        %v8290 = vadd.f32 0.0, %v8289
        %v8291 = vpop.f32.mrb[0].mxu0
        %8292 = vmatprep.mubr.f32.mxu0 0.0
        %8293 = vmatmul.mubr.f32.gmra.mrb[0].mxu0 %v8151
        %v8294 = vpop.f32.mrb[0].mxu0
        %v8295 = vadd.f32 0.0, %v8294
        %v8296 = vpop.f32.mrb[0].mxu0
        %8297 = vdwg.mxu0
        %v8298 = vld [vmem:[%s18] sm:$0x1]
        %v8300 = vlaneseq
        %v8301 = vshrl.u32 %v8300, 7
        %v8302 = vsub.s32 0, %v8301
        %v8303 = vrot.slane %v8298, %v8302
        %v8305 = vmul.f32 %v8220, %v8303
        %v8306 = vmul.f32 %v8225, %v8303
        %v8307 = vmul.f32 %v8230, %v8303
        %v8308 = vmul.f32 %v8235, %v8303
        %v8309 = vmul.f32 %v8240, %v8303
        %v8310 = vmul.f32 %v8245, %v8303
        %v8311 = vmul.f32 %v8250, %v8303
        %v8312 = vmul.f32 %v8255, %v8303
        %v8313 = vmul.f32 %v8260, %v8303
        %v8314 = vmul.f32 %v8265, %v8303
        %v8315 = vmul.f32 %v8270, %v8303
        %v8316 = vmul.f32 %v8275, %v8303
        %v8317 = vmul.f32 %v8280, %v8303
        %v8318 = vmul.f32 %v8285, %v8303
        %v8319 = vmul.f32 %v8290, %v8303
        %v8320 = vmul.f32 %v8295, %v8303
        %v8321 = vld [vmem:[%s19] sm:$0x1]
        %v8323 = vlaneseq
        %v8324 = vshrl.u32 %v8323, 7
        %v8325 = vsub.s32 0, %v8324
        %v8326 = vrot.slane %v8321, %v8325
        %v8328 = vadd.f32 %v8305, %v8326
        %v8329 = vadd.f32 %v8306, %v8326
        %v8330 = vadd.f32 %v8307, %v8326
        %v8331 = vadd.f32 %v8308, %v8326
        %v8332 = vadd.f32 %v8309, %v8326
        %v8333 = vadd.f32 %v8310, %v8326
        %v8334 = vadd.f32 %v8311, %v8326
        %v8335 = vadd.f32 %v8312, %v8326
        %v8336 = vadd.f32 %v8313, %v8326
        %v8337 = vadd.f32 %v8314, %v8326
        %v8338 = vadd.f32 %v8315, %v8326
        %v8339 = vadd.f32 %v8316, %v8326
        %v8340 = vadd.f32 %v8317, %v8326
        %v8341 = vadd.f32 %v8318, %v8326
        %v8342 = vadd.f32 %v8319, %v8326
        %v8343 = vadd.f32 %v8320, %v8326
        %v8344 = vmax.f32 %v8328, 0.0
        %v8345 = vmax.f32 %v8329, 0.0
        %v8346 = vmax.f32 %v8330, 0.0
        %v8347 = vmax.f32 %v8331, 0.0
        %v8348 = vmax.f32 %v8332, 0.0
        %v8349 = vmax.f32 %v8333, 0.0
        %v8350 = vmax.f32 %v8334, 0.0
        %v8351 = vmax.f32 %v8335, 0.0
        %v8352 = vmax.f32 %v8336, 0.0
        %v8353 = vmax.f32 %v8337, 0.0
        %v8354 = vmax.f32 %v8338, 0.0
        %v8355 = vmax.f32 %v8339, 0.0
        %v8356 = vmax.f32 %v8340, 0.0
        %v8357 = vmax.f32 %v8341, 0.0
        %v8358 = vmax.f32 %v8342, 0.0
        %v8359 = vmax.f32 %v8343, 0.0
        %8376 = vrot.lane.b32.xlu0 %v8344, 40
        %v8377 = vpop.permute.xlu0 %8376
        %8378 = vrot.lane.b32.xlu0 %v8345, 40
        %v8379 = vpop.permute.xlu0 %8378
        %8380 = vrot.lane.b32.xlu0 %v8346, 40
        %v8381 = vpop.permute.xlu0 %8380
        %8382 = vrot.lane.b32.xlu0 %v8347, 40
        %v8383 = vpop.permute.xlu0 %8382
        %8384 = vrot.lane.b32.xlu0 %v8348, 40
        %v8385 = vpop.permute.xlu0 %8384
        %8386 = vrot.lane.b32.xlu0 %v8349, 40
        %v8387 = vpop.permute.xlu0 %8386
        %8388 = vrot.lane.b32.xlu0 %v8350, 40
        %v8389 = vpop.permute.xlu0 %8388
        %8390 = vrot.lane.b32.xlu0 %v8351, 40
        %v8391 = vpop.permute.xlu0 %8390
        %8392 = vrot.lane.b32.xlu0 %v8352, 40
        %v8393 = vpop.permute.xlu0 %8392
        %8394 = vrot.lane.b32.xlu0 %v8353, 40
        %v8395 = vpop.permute.xlu0 %8394
        %8396 = vrot.lane.b32.xlu0 %v8354, 40
        %v8397 = vpop.permute.xlu0 %8396
        %8398 = vrot.lane.b32.xlu0 %v8355, 40
        %v8399 = vpop.permute.xlu0 %8398
        %8400 = vrot.lane.b32.xlu0 %v8356, 40
        %v8401 = vpop.permute.xlu0 %8400
        %8402 = vrot.lane.b32.xlu0 %v8357, 40
        %v8403 = vpop.permute.xlu0 %8402
        %8404 = vrot.lane.b32.xlu0 %v8358, 40
        %v8405 = vpop.permute.xlu0 %8404
        %8406 = vrot.lane.b32.xlu0 %v8359, 40
        %v8407 = vpop.permute.xlu0 %8406
        %vm8424 = vcmask 392512
        %8425 = vst.msk [vmem:[%s770] sm:$0xff] %vm8424, %v8377
        %8426 = vst.msk [vmem:[%s770 + $0x8] sm:$0xff] %vm8424, %v8379
        %8427 = vst.msk [vmem:[%s770 + $0x10] sm:$0xff] %vm8424, %v8381
        %8428 = vst.msk [vmem:[%s770 + $0x18] sm:$0xff] %vm8424, %v8383
        %8429 = vst.msk [vmem:[%s770 + $0x20] sm:$0xff] %vm8424, %v8385
        %8430 = vst.msk [vmem:[%s770 + $0x28] sm:$0xff] %vm8424, %v8387
        %8431 = vst.msk [vmem:[%s770 + $0x30] sm:$0xff] %vm8424, %v8389
        %8432 = vst.msk [vmem:[%s770 + $0x38] sm:$0xff] %vm8424, %v8391
        %8433 = vst.msk [vmem:[%s770 + $0x40] sm:$0xff] %vm8424, %v8393
        %8434 = vst.msk [vmem:[%s770 + $0x48] sm:$0xff] %vm8424, %v8395
        %8435 = vst.msk [vmem:[%s770 + $0x50] sm:$0xff] %vm8424, %v8397
        %8436 = vst.msk [vmem:[%s770 + $0x58] sm:$0xff] %vm8424, %v8399
        %8437 = vst.msk [vmem:[%s770 + $0x60] sm:$0xff] %vm8424, %v8401
        %8438 = vst.msk [vmem:[%s770 + $0x68] sm:$0xff] %vm8424, %v8403
        %8439 = vst.msk [vmem:[%s770 + $0x70] sm:$0xff] %vm8424, %v8405
        %8440 = vst.msk [vmem:[%s770 + $0x78] sm:$0xff] %vm8424, %v8407
        %s8441 = sand.u32 %s500, 1
        %s8442 = scalar_lea.sflag [#allocation9], %s8441
        %s8443 = sand.u32 %s500, 1
        %s8444 = smul.addr %s8443, 128
        %s8445 = scalar_lea.vmem [#allocation18], %s8444
        // Predicated region
        $region133: #{tpu_custom_call.1} parent=99 // pred_check
          %p8446 = pneg %p510
        $region134: #{tpu_custom_call.1} parent=99 // pred_check_branch
          %8448 = sbr.rel (%p8446) target = $region136
        $region135: #{tpu_custom_call.1} parent=99 // pred_region
          %s8449 = smul.u32 2, %s47
          %s8451 = ssub.s32 2048, 2048
          %8452 = vsyncadd %s8442, %s8451
          %s8453 = smul.addr %s8449, 8
          %s8454 = smul.addr %s46, 32
          %s8455 = sadd.s32 %s8453, %s8454
          %s8456 = smul.addr %s8455, 128
          %s8457 = scalar_lea.hbm %s20, %s8456
          %s8458 = sshll.u32 %s8445, 4
          %s8459 = int_to_ptr.vmem [resolvable:$true] %s8458
          %8464 = dma.vmem_to_hbm [thread:$0]  %s8459, 2048, %s8457, %s8442, 128, 128, 8
        $region136: #{tpu_custom_call.1} parent=99 // pred_fallthru
          _
      $region100: #{tpu_custom_call.1} parent=5 // pred_fallthru
        _
      %p8465 = scmp.le.s32.totalorder 2, %s37
      // Predicated region
      $region137: #{tpu_custom_call.1} parent=5 // pred_check
        %p8466 = pneg %p8465
      $region138: #{tpu_custom_call.1} parent=5 // pred_check_branch
        %8468 = sbr.rel (%p8466) target = $region140
      $region139: #{tpu_custom_call.1} parent=5 // pred_region
        %s8469 = ssub.s32 %s37, 2
        // Predicated region
        $region141: #{tpu_custom_call.1} parent=139 // pred_check
          %p8470 = pneg %p516
        $region142: #{tpu_custom_call.1} parent=139 // pred_check_branch
          %8472 = sbr.rel (%p8470) target = $region144
        $region143: #{tpu_custom_call.1} parent=139 // pred_region
          %s8473 = sand.u32 %s501, 1
          %s8474 = scalar_lea.sflag [#allocation9], %s8473
          %s8475 = sand.u32 %s501, 1
          %s8476 = smul.addr %s8475, 128
          %s8477 = scalar_lea.vmem [#allocation18], %s8476
          %8478 = dma.done %s8474, 2048
        $region144: #{tpu_custom_call.1} parent=139 // pred_fallthru
          _
      $region140: #{tpu_custom_call.1} parent=5 // pred_fallthru
        _
    $region6: #{tpu_custom_call.1} parent=1 // loop_footer
      %s41 = sadd.s32 1, %s37
    $region7: #{tpu_custom_call.1} parent=1 // loop_footer_branch
      %36 = sbr.rel target = $region3
    $region8: #{tpu_custom_call.1} parent=1 // loop_exit
      _
    %8479 = vsyncpa [#allocation8], 1
    %s8480 = scalar_lea.sflag [#allocation8], 1
    %8481 = vsyncpa %s8480, 1
    %8482 = vsyncpa [#allocation11], 1
    %s8483 = scalar_lea.sflag [#allocation11], 1
    %8484 = vsyncpa %s8483, 1
    %8485 = vsyncpa [#allocation14], 1
    %8486 = vsyncpa [#allocation17], 1
    %8487 = vsyncpa [#allocation9], 1
    %s8488 = scalar_lea.sflag [#allocation9], 1
    %8489 = vsyncpa %s8488, 1

</llo_original>
